<compile_context>
chip_gen: v6e
topology: v6e:2x2x1
jax: 0.10.0
libtpu: 0.0.40
codegen_flags: <defaults>
</compile_context>

<pallas_src>
import functools

import jax
import jax.numpy as jnp
import numpy as np
from jax import lax
from jax.experimental import pallas as pl
from jax.experimental.pallas import tpu as pltpu

IN_C = 3
MID_C = 24
LAYERS = 5
SLOPE = 0.2
EPS = 1e-5
DILATIONS = [1] + [2 ** l for l in range(1, LAYERS)] + [1]   # [1, 2, 4, 8, 16, 1]
NUM_DIL = len(DILATIONS)          # 6 x (conv3x3 -> ABN -> LeakyReLU), then 1x1 conv
PC = 16                           # column halo (>= max dilation)
PR = PC + 1                       # row halo (+1 keeps every flat tap slice in-bounds)


def _lrnet_kernel(x_ref, w0_ref, wdil_ref, sb_ref, w1_ref, b1_ref, o_ref,
                  a_ref, b_ref, *, H, W, TH):
    # x_ref:    (1, (H+2*PR)*Wp, IN_C) f32   zero-padded input, flat row-major layout
    # w0_ref:   (9, IN_C, MID_C)       bf16  layer-0 taps (tap-major, HWIO order)
    # wdil_ref: ((NUM_DIL-1)*9, MID_C, MID_C) bf16  layers 1..5 taps
    # sb_ref:   (2*NUM_DIL, MID_C)     f32   folded ABN scale/shift per layer
    # w1_ref:   (MID_C, IN_C)          bf16  final 1x1 conv weight
    # b1_ref:   (1, IN_C)              f32   final 1x1 conv bias
    # o_ref:    (1, H*W, IN_C)         f32   dense output slab
    # a_ref/b_ref: ((H+2*PR)*Wp, MID_C) f32  zero-haloed flat ping-pong scratches
    Wp = W + 2 * PC
    CH = TH * Wp                      # flat positions per chunk (whole padded rows)
    n_chunks = H // TH

    # ---- per-grid-step halo init (layer stores below never touch halo positions, so
    #      this is the only zeroing; done per step so megacore batch-splitting is safe).
    zrow = jnp.zeros((Wp, MID_C), jnp.float32)
    zrun = jnp.zeros((2 * PC, MID_C), jnp.float32)

    @pl.loop(0, PR)                   # top / bottom halo rows
    def _(t):
        top = pl.multiple_of(t * Wp, 8)
        bot = pl.multiple_of((PR + H + t) * Wp, 8)
        a_ref[pl.ds(top, Wp), :] = zrow
        b_ref[pl.ds(top, Wp), :] = zrow
        a_ref[pl.ds(bot, Wp), :] = zrow
        b_ref[pl.ds(bot, Wp), :] = zrow

    @pl.loop(0, H + 1)                # left+right column halos (contiguous 2*PC runs)
    def _(t):
        off = pl.multiple_of((PR + t) * Wp - PC, 8)
        a_ref[pl.ds(off, 2 * PC), :] = zrun
        b_ref[pl.ds(off, 2 * PC), :] = zrun

    def conv_block(l, load_src, dst_ref):
        d = DILATIONS[l]
        last = l == NUM_DIL - 1
        # Hoisted per-layer constants (loaded once per layer, not once per chunk).
        if l == 0:
            w_taps = [w0_ref[t] for t in range(9)]
        else:
            w_taps = [wdil_ref[(l - 1) * 9 + t] for t in range(9)]
        scale = sb_ref[pl.ds(2 * l, 1), :]          # (1, MID_C) folded ABN scale
        shift = sb_ref[pl.ds(2 * l + 1, 1), :]      # (1, MID_C) folded ABN shift
        if last:
            w1v = w1_ref[...]
            b1v = b1_ref[...]

        @pl.loop(0, n_chunks)
        def _(c):
            q0 = pl.multiple_of((PR + c * TH) * Wp, 8)     # dest flat start of chunk
            acc = None
            # Dilated 3x3 conv == 9 contiguous flat slices x (Cin, Cout) bf16 matmuls.
            for ky in range(3):
                for kx in range(3):
                    off = (ky - 1) * d * Wp + (kx - 1) * d
                    lhs = load_src(q0 + off)               # (CH, Cin), contiguous
                    r = jnp.dot(lhs.astype(jnp.bfloat16), w_taps[ky * 3 + kx],
                                preferred_element_type=jnp.float32)
                    acc = r if acc is None else acc + r
            y = scale * acc + shift                        # AdaptiveBatchNorm2d (folded)
            act = jnp.maximum(y, SLOPE * y)                # LeakyReLU(0.2)
            if not last:
                # Store only valid columns of each row (static 8-aligned sub-slices),
                # keeping the zero halo intact for the next layer.
                for t in range(TH):
                    dst = pl.multiple_of(q0 + t * Wp + PC, 8)
                    dst_ref[pl.ds(dst, W), :] = act[t * Wp + PC:t * Wp + PC + W]
            else:
                # Fused final 1x1 conv (+bias) straight to the dense output slab.
                out = jnp.dot(act.astype(jnp.bfloat16), w1v,
                              preferred_element_type=jnp.float32) + b1v
                for t in range(TH):
                    dst = pl.multiple_of((c * TH + t) * W, 8)
                    o_ref[0, pl.ds(dst, W), :] = out[t * Wp + PC:t * Wp + PC + W]

    # Layer 0 reads the (already padded, flat) input block directly.
    conv_block(0, lambda s: x_ref[0, pl.ds(s, CH), :], a_ref)
    # Layers 1..5 ping-pong between the two flat scratches (layer 5 writes o_ref).
    for l in range(1, NUM_DIL):
        src, dst = (a_ref, b_ref) if l % 2 == 1 else (b_ref, a_ref)
        conv_block(l, (lambda s, r=src: r[pl.ds(s, CH), :]), dst)


def _row_chunk(H, Wp, target=128):
    """Number of padded rows per chunk: ~target flat positions, dividing H."""
    th = max(1, min(H, target // Wp))
    while H % th:
        th -= 1
    return th


def _vmem_capacity_bytes():
    try:
        info = pltpu.get_tpu_info()
        return int(getattr(info, "vmem_capacity_bytes", 64 * 1024 * 1024))
    except Exception:
        return 64 * 1024 * 1024      # conservative (v7x per-core size)


def _pack_params(raw):
    """Repack raw (HWIO-layout) parameters into the kernel's operand layout."""
    w0 = raw["w_convs"][0].reshape(9, IN_C, MID_C).astype(jnp.bfloat16)
    wdil = jnp.stack(raw["w_convs"][1:], 0).reshape(
        (NUM_DIL - 1) * 9, MID_C, MID_C).astype(jnp.bfloat16)
    # Fold  a*y + b*BN(y)  into  scale*y + shift  (eval-mode running statistics).
    inv = lax.rsqrt(raw["var"] + EPS)
    scale = raw["a"] + raw["b"] * raw["gamma"] * inv
    shift = raw["b"] * (raw["beta"] - raw["gamma"] * raw["mean"] * inv)
    sb = jnp.stack([scale, shift], axis=1).reshape(NUM_DIL * 2, MID_C).astype(jnp.float32)
    w1 = raw["w1"].astype(jnp.bfloat16)
    b1 = raw["b1"].reshape(1, IN_C).astype(jnp.float32)
    return w0, wdil, sb, w1, b1


@jax.jit
def lrnet_forward(x, raw):
    """x: (B, H, W, IN_C) float32, NHWC."""
    B, H, W, _ = x.shape
    assert W % 8 == 0, "W must be a multiple of 8 (aligned stores / flat row width)"
    Wp = W + 2 * PC
    flat = (H + 2 * PR) * Wp
    TH = _row_chunk(H, Wp)
    w0, wdil, sb, w1, b1 = _pack_params(raw)

    # Zero-pad once and present the image in the kernel's flat row-major layout.
    xpad = jnp.pad(x, ((0, 0), (PR, PR), (PC, PC), (0, 0)))
    xflat = xpad.reshape(B, flat, IN_C)

    kernel = functools.partial(_lrnet_kernel, H=H, W=W, TH=TH)

    # VMEM estimate including the (8,128) lane padding of C<128 buffers.
    lane = 128
    vmem_est = (
        2 * flat * lane * 4          # double-buffered input block (f32)
        + 2 * H * W * lane * 4       # double-buffered output block (f32)
        + 2 * flat * lane * 4        # two f32 flat activation scratches
        + 2 * 2 * (w0.size + wdil.size + w1.size) + 2 * 4 * (sb.size + b1.size))
    cap = _vmem_capacity_bytes()
    vmem_limit = int(min(max(vmem_est * 1.25, 32 * 1024 * 1024), cap - 4 * 1024 * 1024))

    out = pl.pallas_call(
        kernel,
        out_shape=jax.ShapeDtypeStruct((B, H * W, IN_C), jnp.float32),
        grid_spec=pltpu.PrefetchScalarGridSpec(
            num_scalar_prefetch=0,
            grid=(B,),
            in_specs=[
                pl.BlockSpec((1, flat, IN_C), lambda b: (b, 0, 0)),
                pl.BlockSpec(w0.shape, lambda b: (0, 0, 0)),
                pl.BlockSpec(wdil.shape, lambda b: (0, 0, 0)),
                pl.BlockSpec(sb.shape, lambda b: (0, 0)),
                pl.BlockSpec(w1.shape, lambda b: (0, 0)),
                pl.BlockSpec(b1.shape, lambda b: (0, 0)),
            ],
            out_specs=pl.BlockSpec((1, H * W, IN_C), lambda b: (b, 0, 0)),
            scratch_shapes=[
                pltpu.VMEM((flat, MID_C), jnp.float32),
                pltpu.VMEM((flat, MID_C), jnp.float32),
            ],
        ),
        compiler_params=pltpu.CompilerParams(
            dimension_semantics=("parallel",),
            vmem_limit_bytes=vmem_limit),
    )(xflat, w0, wdil, sb, w1, b1)
    return out.reshape(B, H, W, IN_C)


def lrnet_reference(x, raw):
    """Pure-JAX reference: XLA dilated convolutions with the same bf16-operand /
    f32-accumulate precision the kernel uses on the MXU, unfolded ABN in f32."""
    act = x
    for l, d in enumerate(DILATIONS):
        y = lax.conv_general_dilated(
            act.astype(jnp.bfloat16), raw["w_convs"][l].astype(jnp.bfloat16),
            window_strides=(1, 1), padding=((d, d), (d, d)), rhs_dilation=(d, d),
            dimension_numbers=("NHWC", "HWIO", "NHWC"),
            preferred_element_type=jnp.float32)
        mean, var, gamma, beta, a, b = (raw[k][l][None, None, None, :]
                                        for k in ("mean", "var", "gamma", "beta", "a", "b"))
        bn = (y - mean) * lax.rsqrt(var + EPS) * gamma + beta
        y = a * y + b * bn                      # AdaptiveBatchNorm2d
        act = jnp.where(y >= 0, y, SLOPE * y)   # LeakyReLU(0.2)
    B, H, W, _ = act.shape
    out = jnp.dot(act.reshape(B * H * W, MID_C).astype(jnp.bfloat16),
                  raw["w1"].astype(jnp.bfloat16),
                  preferred_element_type=jnp.float32).reshape(B, H, W, IN_C)
    return out + raw["b1"][None, None, None, :]


def init_params(key):
    """Deterministic synthetic parameters matching the module's parameter shapes."""
    ks = jax.random.split(key, NUM_DIL + 2)
    w_convs = []
    for l in range(NUM_DIL):
        cin = IN_C if l == 0 else MID_C
        w_convs.append(jax.random.normal(ks[l], (3, 3, cin, MID_C), jnp.float32)
                       / np.sqrt(9.0 * cin))
    sub = jax.random.split(ks[NUM_DIL], 6)
    mean = 0.1 * jax.random.normal(sub[0], (NUM_DIL, MID_C), jnp.float32)
    var = 1.0 + 0.1 * jax.random.uniform(sub[1], (NUM_DIL, MID_C), jnp.float32)
    gamma = 1.0 + 0.1 * jax.random.normal(sub[2], (NUM_DIL, MID_C), jnp.float32)
    beta = 0.1 * jax.random.normal(sub[3], (NUM_DIL, MID_C), jnp.float32)
    a = jnp.broadcast_to(1.0 + 0.1 * jax.random.normal(sub[4], (NUM_DIL, 1), jnp.float32),
                         (NUM_DIL, MID_C))
    b = jnp.broadcast_to(0.5 * jax.random.normal(sub[5], (NUM_DIL, 1), jnp.float32),
                         (NUM_DIL, MID_C))
    kw1, kb1 = jax.random.split(ks[NUM_DIL + 1])
    limit = float(np.sqrt(6.0 / (MID_C + IN_C)))   # xavier_uniform, like the final conv
    w1 = jax.random.uniform(kw1, (MID_C, IN_C), jnp.float32, -limit, limit)
    b1 = 0.1 * jax.random.normal(kb1, (IN_C,), jnp.float32)
    return dict(w_convs=w_convs, mean=mean, var=var, gamma=gamma, beta=beta,
                a=a, b=b, w1=w1, b1=b1)


if __name__ == "__main__":
    B, H, W = 2, 32, 32
    key = jax.random.PRNGKey(0)
    kx, kp = jax.random.split(key)
    x = jax.random.normal(kx, (B, H, W, IN_C), jnp.float32)
    raw = init_params(kp)

    out = jax.block_until_ready(lrnet_forward(x, raw))
    ref = jax.block_until_ready(lrnet_reference(x, raw))

    assert out.shape == (B, H, W, IN_C)
    # Both paths use bf16 MXU operands with f32 accumulation; residual differences come
    # from accumulation order and occasional 1-ulp bf16 rounding flips across 7 matmul
    # stages, hence the 1e-2 tolerance.
    np.testing.assert_allclose(np.asarray(out), np.asarray(ref), rtol=1e-2, atol=1e-2)
    print("KERNEL_OK")
</pallas_src>

<mosaic_0001>
module attributes {stable_mosaic.version = 11 : i64} {
  func.func @_lrnet_kernel(%arg0: i32, %arg1: memref<1x4224x3xf32, #tpu.memory_space<vmem>>, %arg2: memref<9x3x24xbf16, #tpu.memory_space<vmem>>, %arg3: memref<45x24x24xbf16, #tpu.memory_space<vmem>>, %arg4: memref<12x24xf32, #tpu.memory_space<vmem>>, %arg5: memref<24x3xbf16, #tpu.memory_space<vmem>>, %arg6: memref<1x3xf32, #tpu.memory_space<vmem>>, %arg7: memref<1x1024x3xf32, #tpu.memory_space<vmem>>, %arg8: memref<4224x24xf32, #tpu.memory_space<vmem>>, %arg9: memref<4224x24xf32, #tpu.memory_space<vmem>>) attributes {dimension_semantics = [#tpu.dimension_semantics<parallel>], iteration_bounds = array<i64: 2>, scalar_prefetch = 0 : i64, scratch_operands = 2 : i64, tpu.core_type = #tpu.core_type<tc>, window_params = [{transform_indices = @transform_0, window_bounds = array<i64: 1, 4224, 3>}, {pipeline_mode = #tpu.pipeline_mode<synchronous>, transform_indices = @transform_1, window_bounds = array<i64: 9, 3, 24>}, {pipeline_mode = #tpu.pipeline_mode<synchronous>, transform_indices = @transform_2, window_bounds = array<i64: 45, 24, 24>}, {pipeline_mode = #tpu.pipeline_mode<synchronous>, transform_indices = @transform_3, window_bounds = array<i64: 12, 24>}, {pipeline_mode = #tpu.pipeline_mode<synchronous>, transform_indices = @transform_4, window_bounds = array<i64: 24, 3>}, {pipeline_mode = #tpu.pipeline_mode<synchronous>, transform_indices = @transform_5, window_bounds = array<i64: 1, 3>}, {transform_indices = @transform_6, window_bounds = array<i64: 1, 1024, 3>}]} {
    %cst = arith.constant 0.000000e+00 : f32
    %0 = vector.broadcast %cst : f32 to vector<64x24xf32>
    %cst_0 = arith.constant 0.000000e+00 : f32
    %1 = vector.broadcast %cst_0 : f32 to vector<32x24xf32>
    %c0_i32 = arith.constant 0 : i32
    %c17_i32 = arith.constant 17 : i32
    %2 = arith.addi %c0_i32, %c17_i32 : i32
    %c1_i32 = arith.constant 1 : i32
    scf.for %arg10 = %c0_i32 to %2 step %c1_i32  : i32 {
      %c1_i32_173 = arith.constant 1 : i32
      %132 = arith.muli %arg10, %c1_i32_173 : i32
      %c0_i32_174 = arith.constant 0 : i32
      %133 = arith.addi %c0_i32_174, %132 : i32
      %c64_i32 = arith.constant 64 : i32
      %134 = arith.muli %133, %c64_i32 : i32
      %135 = tpu.assume_multiple %134, 8 : i32
      %c49_i32 = arith.constant 49 : i32
      %136 = arith.addi %c49_i32, %133 : i32
      %c64_i32_175 = arith.constant 64 : i32
      %137 = arith.muli %136, %c64_i32_175 : i32
      %138 = tpu.assume_multiple %137, 8 : i32
      %139 = arith.index_cast %135 : i32 to index
      %c0_176 = arith.constant 0 : index
      %140 = vector.load %arg8[%139, %c0_176] : memref<4224x24xf32, #tpu.memory_space<vmem>>, vector<64x24xf32>
      tpu.vector_store %arg8[%139, %c0_176], %0 {strides = array<i32>} : memref<4224x24xf32, #tpu.memory_space<vmem>>, vector<64x24xf32>,
      %141 = arith.index_cast %135 : i32 to index
      %c0_177 = arith.constant 0 : index
      %142 = vector.load %arg9[%141, %c0_177] : memref<4224x24xf32, #tpu.memory_space<vmem>>, vector<64x24xf32>
      tpu.vector_store %arg9[%141, %c0_177], %0 {strides = array<i32>} : memref<4224x24xf32, #tpu.memory_space<vmem>>, vector<64x24xf32>,
      %143 = arith.index_cast %138 : i32 to index
      %c0_178 = arith.constant 0 : index
      %144 = vector.load %arg8[%143, %c0_178] : memref<4224x24xf32, #tpu.memory_space<vmem>>, vector<64x24xf32>
      tpu.vector_store %arg8[%143, %c0_178], %0 {strides = array<i32>} : memref<4224x24xf32, #tpu.memory_space<vmem>>, vector<64x24xf32>,
      %145 = arith.index_cast %138 : i32 to index
      %c0_179 = arith.constant 0 : index
      %146 = vector.load %arg9[%145, %c0_179] : memref<4224x24xf32, #tpu.memory_space<vmem>>, vector<64x24xf32>
      tpu.vector_store %arg9[%145, %c0_179], %0 {strides = array<i32>} : memref<4224x24xf32, #tpu.memory_space<vmem>>, vector<64x24xf32>,
    }
    %c17_i32_1 = arith.constant 17 : i32
    %c0_i32_2 = arith.constant 0 : i32
    %c33_i32 = arith.constant 33 : i32
    %3 = arith.addi %c0_i32_2, %c33_i32 : i32
    %c1_i32_3 = arith.constant 1 : i32
    scf.for %arg10 = %c0_i32_2 to %3 step %c1_i32_3  : i32 {
      %c1_i32_173 = arith.constant 1 : i32
      %132 = arith.muli %arg10, %c1_i32_173 : i32
      %c0_i32_174 = arith.constant 0 : i32
      %133 = arith.addi %c0_i32_174, %132 : i32
      %c17_i32_175 = arith.constant 17 : i32
      %134 = arith.addi %c17_i32_175, %133 : i32
      %c64_i32 = arith.constant 64 : i32
      %135 = arith.muli %134, %c64_i32 : i32
      %c16_i32_176 = arith.constant 16 : i32
      %136 = arith.subi %135, %c16_i32_176 : i32
      %137 = tpu.assume_multiple %136, 8 : i32
      %138 = arith.index_cast %137 : i32 to index
      %c0_177 = arith.constant 0 : index
      %139 = vector.load %arg8[%138, %c0_177] : memref<4224x24xf32, #tpu.memory_space<vmem>>, vector<32x24xf32>
      tpu.vector_store %arg8[%138, %c0_177], %1 {strides = array<i32>} : memref<4224x24xf32, #tpu.memory_space<vmem>>, vector<32x24xf32>,
      %140 = arith.index_cast %137 : i32 to index
      %c0_178 = arith.constant 0 : index
      %141 = vector.load %arg9[%140, %c0_178] : memref<4224x24xf32, #tpu.memory_space<vmem>>, vector<32x24xf32>
      tpu.vector_store %arg9[%140, %c0_178], %1 {strides = array<i32>} : memref<4224x24xf32, #tpu.memory_space<vmem>>, vector<32x24xf32>,
    }
    %c33_i32_4 = arith.constant 33 : i32
    %c0 = arith.constant 0 : index
    %c0_5 = arith.constant 0 : index
    %c0_6 = arith.constant 0 : index
    %4 = vector.load %arg2[%c0, %c0_5, %c0_6] : memref<9x3x24xbf16, #tpu.memory_space<vmem>>, vector<1x3x24xbf16>
    %5 = vector.shape_cast %4 : vector<1x3x24xbf16> to vector<3x24xbf16>
    %c1 = arith.constant 1 : index
    %c0_7 = arith.constant 0 : index
    %c0_8 = arith.constant 0 : index
    %6 = vector.load %arg2[%c1, %c0_7, %c0_8] : memref<9x3x24xbf16, #tpu.memory_space<vmem>>, vector<1x3x24xbf16>
    %7 = vector.shape_cast %6 : vector<1x3x24xbf16> to vector<3x24xbf16>
    %c2 = arith.constant 2 : index
    %c0_9 = arith.constant 0 : index
    %c0_10 = arith.constant 0 : index
    %8 = vector.load %arg2[%c2, %c0_9, %c0_10] : memref<9x3x24xbf16, #tpu.memory_space<vmem>>, vector<1x3x24xbf16>
    %9 = vector.shape_cast %8 : vector<1x3x24xbf16> to vector<3x24xbf16>
    %c3 = arith.constant 3 : index
    %c0_11 = arith.constant 0 : index
    %c0_12 = arith.constant 0 : index
    %10 = vector.load %arg2[%c3, %c0_11, %c0_12] : memref<9x3x24xbf16, #tpu.memory_space<vmem>>, vector<1x3x24xbf16>
    %11 = vector.shape_cast %10 : vector<1x3x24xbf16> to vector<3x24xbf16>
    %c4 = arith.constant 4 : index
    %c0_13 = arith.constant 0 : index
    %c0_14 = arith.constant 0 : index
    %12 = vector.load %arg2[%c4, %c0_13, %c0_14] : memref<9x3x24xbf16, #tpu.memory_space<vmem>>, vector<1x3x24xbf16>
    %13 = vector.shape_cast %12 : vector<1x3x24xbf16> to vector<3x24xbf16>
    %c5 = arith.constant 5 : index
    %c0_15 = arith.constant 0 : index
    %c0_16 = arith.constant 0 : index
    %14 = vector.load %arg2[%c5, %c0_15, %c0_16] : memref<9x3x24xbf16, #tpu.memory_space<vmem>>, vector<1x3x24xbf16>
    %15 = vector.shape_cast %14 : vector<1x3x24xbf16> to vector<3x24xbf16>
    %c6 = arith.constant 6 : index
    %c0_17 = arith.constant 0 : index
    %c0_18 = arith.constant 0 : index
    %16 = vector.load %arg2[%c6, %c0_17, %c0_18] : memref<9x3x24xbf16, #tpu.memory_space<vmem>>, vector<1x3x24xbf16>
    %17 = vector.shape_cast %16 : vector<1x3x24xbf16> to vector<3x24xbf16>
    %c7 = arith.constant 7 : index
    %c0_19 = arith.constant 0 : index
    %c0_20 = arith.constant 0 : index
    %18 = vector.load %arg2[%c7, %c0_19, %c0_20] : memref<9x3x24xbf16, #tpu.memory_space<vmem>>, vector<1x3x24xbf16>
    %19 = vector.shape_cast %18 : vector<1x3x24xbf16> to vector<3x24xbf16>
    %c8 = arith.constant 8 : index
    %c0_21 = arith.constant 0 : index
    %c0_22 = arith.constant 0 : index
    %20 = vector.load %arg2[%c8, %c0_21, %c0_22] : memref<9x3x24xbf16, #tpu.memory_space<vmem>>, vector<1x3x24xbf16>
    %21 = vector.shape_cast %20 : vector<1x3x24xbf16> to vector<3x24xbf16>
    %c0_23 = arith.constant 0 : index
    %c0_24 = arith.constant 0 : index
    %22 = vector.load %arg4[%c0_23, %c0_24] : memref<12x24xf32, #tpu.memory_space<vmem>>, vector<1x24xf32>
    %c1_25 = arith.constant 1 : index
    %c0_26 = arith.constant 0 : index
    %23 = vector.load %arg4[%c1_25, %c0_26] : memref<12x24xf32, #tpu.memory_space<vmem>>, vector<1x24xf32>
    %c0_i32_27 = arith.constant 0 : i32
    %c16_i32 = arith.constant 16 : i32
    %24 = arith.addi %c0_i32_27, %c16_i32 : i32
    %c1_i32_28 = arith.constant 1 : i32
    scf.for %arg10 = %c0_i32_27 to %24 step %c1_i32_28  : i32 {
      %c1_i32_173 = arith.constant 1 : i32
      %132 = arith.muli %arg10, %c1_i32_173 : i32
      %c0_i32_174 = arith.constant 0 : i32
      %133 = arith.addi %c0_i32_174, %132 : i32
      %c2_i32 = arith.constant 2 : i32
      %134 = arith.muli %133, %c2_i32 : i32
      %c17_i32_175 = arith.constant 17 : i32
      %135 = arith.addi %c17_i32_175, %134 : i32
      %c64_i32 = arith.constant 64 : i32
      %136 = arith.muli %135, %c64_i32 : i32
      %137 = tpu.assume_multiple %136, 8 : i32
      %c-65_i32 = arith.constant -65 : i32
      %138 = arith.addi %137, %c-65_i32 : i32
      %c0_176 = arith.constant 0 : index
      %139 = arith.index_cast %138 : i32 to index
      %c0_177 = arith.constant 0 : index
      %140 = vector.load %arg1[%c0_176, %139, %c0_177] : memref<1x4224x3xf32, #tpu.memory_space<vmem>>, vector<1x128x3xf32>
      %141 = vector.shape_cast %140 : vector<1x128x3xf32> to vector<128x3xf32>
      %142 = arith.truncf %141 : vector<128x3xf32> to vector<128x3xbf16>
      %cst_178 = arith.constant dense<0.000000e+00> : vector<128x24xf32>
      %143 = tpu.matmul %142, %5, %cst_178 {dimension_numbers = #tpu.dot_dimension_numbers<[1], [0], [0], [1], [0, 0, 1, 1], [], []>} : vector<128x3xbf16>, vector<3x24xbf16>, vector<128x24xf32> -> vector<128x24xf32>
      %c-64_i32 = arith.constant -64 : i32
      %144 = arith.addi %137, %c-64_i32 : i32
      %c0_179 = arith.constant 0 : index
      %145 = arith.index_cast %144 : i32 to index
      %c0_180 = arith.constant 0 : index
      %146 = vector.load %arg1[%c0_179, %145, %c0_180] : memref<1x4224x3xf32, #tpu.memory_space<vmem>>, vector<1x128x3xf32>
      %147 = vector.shape_cast %146 : vector<1x128x3xf32> to vector<128x3xf32>
      %148 = arith.truncf %147 : vector<128x3xf32> to vector<128x3xbf16>
      %cst_181 = arith.constant dense<0.000000e+00> : vector<128x24xf32>
      %149 = tpu.matmul %148, %7, %cst_181 {dimension_numbers = #tpu.dot_dimension_numbers<[1], [0], [0], [1], [0, 0, 1, 1], [], []>} : vector<128x3xbf16>, vector<3x24xbf16>, vector<128x24xf32> -> vector<128x24xf32>
      %150 = arith.addf %143, %149 : vector<128x24xf32>
      %c-63_i32 = arith.constant -63 : i32
      %151 = arith.addi %137, %c-63_i32 : i32
      %c0_182 = arith.constant 0 : index
      %152 = arith.index_cast %151 : i32 to index
      %c0_183 = arith.constant 0 : index
      %153 = vector.load %arg1[%c0_182, %152, %c0_183] : memref<1x4224x3xf32, #tpu.memory_space<vmem>>, vector<1x128x3xf32>
      %154 = vector.shape_cast %153 : vector<1x128x3xf32> to vector<128x3xf32>
      %155 = arith.truncf %154 : vector<128x3xf32> to vector<128x3xbf16>
      %cst_184 = arith.constant dense<0.000000e+00> : vector<128x24xf32>
      %156 = tpu.matmul %155, %9, %cst_184 {dimension_numbers = #tpu.dot_dimension_numbers<[1], [0], [0], [1], [0, 0, 1, 1], [], []>} : vector<128x3xbf16>, vector<3x24xbf16>, vector<128x24xf32> -> vector<128x24xf32>
      %157 = arith.addf %150, %156 : vector<128x24xf32>
      %c-1_i32 = arith.constant -1 : i32
      %158 = arith.addi %137, %c-1_i32 : i32
      %c0_185 = arith.constant 0 : index
      %159 = arith.index_cast %158 : i32 to index
      %c0_186 = arith.constant 0 : index
      %160 = vector.load %arg1[%c0_185, %159, %c0_186] : memref<1x4224x3xf32, #tpu.memory_space<vmem>>, vector<1x128x3xf32>
      %161 = vector.shape_cast %160 : vector<1x128x3xf32> to vector<128x3xf32>
      %162 = arith.truncf %161 : vector<128x3xf32> to vector<128x3xbf16>
      %cst_187 = arith.constant dense<0.000000e+00> : vector<128x24xf32>
      %163 = tpu.matmul %162, %11, %cst_187 {dimension_numbers = #tpu.dot_dimension_numbers<[1], [0], [0], [1], [0, 0, 1, 1], [], []>} : vector<128x3xbf16>, vector<3x24xbf16>, vector<128x24xf32> -> vector<128x24xf32>
      %164 = arith.addf %157, %163 : vector<128x24xf32>
      %c0_i32_188 = arith.constant 0 : i32
      %165 = arith.addi %137, %c0_i32_188 : i32
      %c0_189 = arith.constant 0 : index
      %166 = arith.index_cast %165 : i32 to index
      %c0_190 = arith.constant 0 : index
      %167 = vector.load %arg1[%c0_189, %166, %c0_190] : memref<1x4224x3xf32, #tpu.memory_space<vmem>>, vector<1x128x3xf32>
      %168 = vector.shape_cast %167 : vector<1x128x3xf32> to vector<128x3xf32>
      %169 = arith.truncf %168 : vector<128x3xf32> to vector<128x3xbf16>
      %cst_191 = arith.constant dense<0.000000e+00> : vector<128x24xf32>
      %170 = tpu.matmul %169, %13, %cst_191 {dimension_numbers = #tpu.dot_dimension_numbers<[1], [0], [0], [1], [0, 0, 1, 1], [], []>} : vector<128x3xbf16>, vector<3x24xbf16>, vector<128x24xf32> -> vector<128x24xf32>
      %171 = arith.addf %164, %170 : vector<128x24xf32>
      %c1_i32_192 = arith.constant 1 : i32
      %172 = arith.addi %137, %c1_i32_192 : i32
      %c0_193 = arith.constant 0 : index
      %173 = arith.index_cast %172 : i32 to index
      %c0_194 = arith.constant 0 : index
      %174 = vector.load %arg1[%c0_193, %173, %c0_194] : memref<1x4224x3xf32, #tpu.memory_space<vmem>>, vector<1x128x3xf32>
      %175 = vector.shape_cast %174 : vector<1x128x3xf32> to vector<128x3xf32>
      %176 = arith.truncf %175 : vector<128x3xf32> to vector<128x3xbf16>
      %cst_195 = arith.constant dense<0.000000e+00> : vector<128x24xf32>
      %177 = tpu.matmul %176, %15, %cst_195 {dimension_numbers = #tpu.dot_dimension_numbers<[1], [0], [0], [1], [0, 0, 1, 1], [], []>} : vector<128x3xbf16>, vector<3x24xbf16>, vector<128x24xf32> -> vector<128x24xf32>
      %178 = arith.addf %171, %177 : vector<128x24xf32>
      %c63_i32 = arith.constant 63 : i32
      %179 = arith.addi %137, %c63_i32 : i32
      %c0_196 = arith.constant 0 : index
      %180 = arith.index_cast %179 : i32 to index
      %c0_197 = arith.constant 0 : index
      %181 = vector.load %arg1[%c0_196, %180, %c0_197] : memref<1x4224x3xf32, #tpu.memory_space<vmem>>, vector<1x128x3xf32>
      %182 = vector.shape_cast %181 : vector<1x128x3xf32> to vector<128x3xf32>
      %183 = arith.truncf %182 : vector<128x3xf32> to vector<128x3xbf16>
      %cst_198 = arith.constant dense<0.000000e+00> : vector<128x24xf32>
      %184 = tpu.matmul %183, %17, %cst_198 {dimension_numbers = #tpu.dot_dimension_numbers<[1], [0], [0], [1], [0, 0, 1, 1], [], []>} : vector<128x3xbf16>, vector<3x24xbf16>, vector<128x24xf32> -> vector<128x24xf32>
      %185 = arith.addf %178, %184 : vector<128x24xf32>
      %c64_i32_199 = arith.constant 64 : i32
      %186 = arith.addi %137, %c64_i32_199 : i32
      %c0_200 = arith.constant 0 : index
      %187 = arith.index_cast %186 : i32 to index
      %c0_201 = arith.constant 0 : index
      %188 = vector.load %arg1[%c0_200, %187, %c0_201] : memref<1x4224x3xf32, #tpu.memory_space<vmem>>, vector<1x128x3xf32>
      %189 = vector.shape_cast %188 : vector<1x128x3xf32> to vector<128x3xf32>
      %190 = arith.truncf %189 : vector<128x3xf32> to vector<128x3xbf16>
      %cst_202 = arith.constant dense<0.000000e+00> : vector<128x24xf32>
      %191 = tpu.matmul %190, %19, %cst_202 {dimension_numbers = #tpu.dot_dimension_numbers<[1], [0], [0], [1], [0, 0, 1, 1], [], []>} : vector<128x3xbf16>, vector<3x24xbf16>, vector<128x24xf32> -> vector<128x24xf32>
      %192 = arith.addf %185, %191 : vector<128x24xf32>
      %c65_i32 = arith.constant 65 : i32
      %193 = arith.addi %137, %c65_i32 : i32
      %c0_203 = arith.constant 0 : index
      %194 = arith.index_cast %193 : i32 to index
      %c0_204 = arith.constant 0 : index
      %195 = vector.load %arg1[%c0_203, %194, %c0_204] : memref<1x4224x3xf32, #tpu.memory_space<vmem>>, vector<1x128x3xf32>
      %196 = vector.shape_cast %195 : vector<1x128x3xf32> to vector<128x3xf32>
      %197 = arith.truncf %196 : vector<128x3xf32> to vector<128x3xbf16>
      %cst_205 = arith.constant dense<0.000000e+00> : vector<128x24xf32>
      %198 = tpu.matmul %197, %21, %cst_205 {dimension_numbers = #tpu.dot_dimension_numbers<[1], [0], [0], [1], [0, 0, 1, 1], [], []>} : vector<128x3xbf16>, vector<3x24xbf16>, vector<128x24xf32> -> vector<128x24xf32>
      %199 = arith.addf %192, %198 : vector<128x24xf32>
      %200 = vector.broadcast %22 : vector<1x24xf32> to vector<128x24xf32>
      %201 = arith.mulf %200, %199 : vector<128x24xf32>
      %202 = vector.broadcast %23 : vector<1x24xf32> to vector<128x24xf32>
      %203 = arith.addf %201, %202 : vector<128x24xf32>
      %cst_206 = arith.constant 2.000000e-01 : f32
      %204 = vector.broadcast %cst_206 : f32 to vector<128x24xf32>
      %205 = arith.mulf %204, %203 : vector<128x24xf32>
      %206 = arith.maximumf %203, %205 : vector<128x24xf32>
      %c0_i32_207 = arith.constant 0 : i32
      %207 = arith.addi %137, %c0_i32_207 : i32
      %c16_i32_208 = arith.constant 16 : i32
      %208 = arith.addi %207, %c16_i32_208 : i32
      %209 = tpu.assume_multiple %208, 8 : i32
      %210 = vector.extract_strided_slice %206 {offsets = [16, 0], sizes = [32, 24], strides = [1, 1]} : vector<128x24xf32> to vector<32x24xf32>
      %211 = arith.index_cast %209 : i32 to index
      %c0_209 = arith.constant 0 : index
      %212 = vector.load %arg8[%211, %c0_209] : memref<4224x24xf32, #tpu.memory_space<vmem>>, vector<32x24xf32>
      tpu.vector_store %arg8[%211, %c0_209], %210 {strides = array<i32>} : memref<4224x24xf32, #tpu.memory_space<vmem>>, vector<32x24xf32>,
      %c64_i32_210 = arith.constant 64 : i32
      %213 = arith.addi %137, %c64_i32_210 : i32
      %c16_i32_211 = arith.constant 16 : i32
      %214 = arith.addi %213, %c16_i32_211 : i32
      %215 = tpu.assume_multiple %214, 8 : i32
      %216 = vector.extract_strided_slice %206 {offsets = [80, 0], sizes = [32, 24], strides = [1, 1]} : vector<128x24xf32> to vector<32x24xf32>
      %217 = arith.index_cast %215 : i32 to index
      %c0_212 = arith.constant 0 : index
      %218 = vector.load %arg8[%217, %c0_212] : memref<4224x24xf32, #tpu.memory_space<vmem>>, vector<32x24xf32>
      tpu.vector_store %arg8[%217, %c0_212], %216 {strides = array<i32>} : memref<4224x24xf32, #tpu.memory_space<vmem>>, vector<32x24xf32>,
    }
    %c16_i32_29 = arith.constant 16 : i32
    %c0_30 = arith.constant 0 : index
    %c0_31 = arith.constant 0 : index
    %c0_32 = arith.constant 0 : index
    %25 = vector.load %arg3[%c0_30, %c0_31, %c0_32] : memref<45x24x24xbf16, #tpu.memory_space<vmem>>, vector<1x24x24xbf16>
    %26 = vector.shape_cast %25 : vector<1x24x24xbf16> to vector<24x24xbf16>
    %c1_33 = arith.constant 1 : index
    %c0_34 = arith.constant 0 : index
    %c0_35 = arith.constant 0 : index
    %27 = vector.load %arg3[%c1_33, %c0_34, %c0_35] : memref<45x24x24xbf16, #tpu.memory_space<vmem>>, vector<1x24x24xbf16>
    %28 = vector.shape_cast %27 : vector<1x24x24xbf16> to vector<24x24xbf16>
    %c2_36 = arith.constant 2 : index
    %c0_37 = arith.constant 0 : index
    %c0_38 = arith.constant 0 : index
    %29 = vector.load %arg3[%c2_36, %c0_37, %c0_38] : memref<45x24x24xbf16, #tpu.memory_space<vmem>>, vector<1x24x24xbf16>
    %30 = vector.shape_cast %29 : vector<1x24x24xbf16> to vector<24x24xbf16>
    %c3_39 = arith.constant 3 : index
    %c0_40 = arith.constant 0 : index
    %c0_41 = arith.constant 0 : index
    %31 = vector.load %arg3[%c3_39, %c0_40, %c0_41] : memref<45x24x24xbf16, #tpu.memory_space<vmem>>, vector<1x24x24xbf16>
    %32 = vector.shape_cast %31 : vector<1x24x24xbf16> to vector<24x24xbf16>
    %c4_42 = arith.constant 4 : index
    %c0_43 = arith.constant 0 : index
    %c0_44 = arith.constant 0 : index
    %33 = vector.load %arg3[%c4_42, %c0_43, %c0_44] : memref<45x24x24xbf16, #tpu.memory_space<vmem>>, vector<1x24x24xbf16>
    %34 = vector.shape_cast %33 : vector<1x24x24xbf16> to vector<24x24xbf16>
    %c5_45 = arith.constant 5 : index
    %c0_46 = arith.constant 0 : index
    %c0_47 = arith.constant 0 : index
    %35 = vector.load %arg3[%c5_45, %c0_46, %c0_47] : memref<45x24x24xbf16, #tpu.memory_space<vmem>>, vector<1x24x24xbf16>
    %36 = vector.shape_cast %35 : vector<1x24x24xbf16> to vector<24x24xbf16>
    %c6_48 = arith.constant 6 : index
    %c0_49 = arith.constant 0 : index
    %c0_50 = arith.constant 0 : index
    %37 = vector.load %arg3[%c6_48, %c0_49, %c0_50] : memref<45x24x24xbf16, #tpu.memory_space<vmem>>, vector<1x24x24xbf16>
    %38 = vector.shape_cast %37 : vector<1x24x24xbf16> to vector<24x24xbf16>
    %c7_51 = arith.constant 7 : index
    %c0_52 = arith.constant 0 : index
    %c0_53 = arith.constant 0 : index
    %39 = vector.load %arg3[%c7_51, %c0_52, %c0_53] : memref<45x24x24xbf16, #tpu.memory_space<vmem>>, vector<1x24x24xbf16>
    %40 = vector.shape_cast %39 : vector<1x24x24xbf16> to vector<24x24xbf16>
    %c8_54 = arith.constant 8 : index
    %c0_55 = arith.constant 0 : index
    %c0_56 = arith.constant 0 : index
    %41 = vector.load %arg3[%c8_54, %c0_55, %c0_56] : memref<45x24x24xbf16, #tpu.memory_space<vmem>>, vector<1x24x24xbf16>
    %42 = vector.shape_cast %41 : vector<1x24x24xbf16> to vector<24x24xbf16>
    %c2_57 = arith.constant 2 : index
    %c0_58 = arith.constant 0 : index
    %43 = vector.load %arg4[%c2_57, %c0_58] : memref<12x24xf32, #tpu.memory_space<vmem>>, vector<1x24xf32>
    %c3_59 = arith.constant 3 : index
    %c0_60 = arith.constant 0 : index
    %44 = vector.load %arg4[%c3_59, %c0_60] : memref<12x24xf32, #tpu.memory_space<vmem>>, vector<1x24xf32>
    %c0_i32_61 = arith.constant 0 : i32
    %c16_i32_62 = arith.constant 16 : i32
    %45 = arith.addi %c0_i32_61, %c16_i32_62 : i32
    %c1_i32_63 = arith.constant 1 : i32
    scf.for %arg10 = %c0_i32_61 to %45 step %c1_i32_63  : i32 {
      %c1_i32_173 = arith.constant 1 : i32
      %132 = arith.muli %arg10, %c1_i32_173 : i32
      %c0_i32_174 = arith.constant 0 : i32
      %133 = arith.addi %c0_i32_174, %132 : i32
      %c2_i32 = arith.constant 2 : i32
      %134 = arith.muli %133, %c2_i32 : i32
      %c17_i32_175 = arith.constant 17 : i32
      %135 = arith.addi %c17_i32_175, %134 : i32
      %c64_i32 = arith.constant 64 : i32
      %136 = arith.muli %135, %c64_i32 : i32
      %137 = tpu.assume_multiple %136, 8 : i32
      %c-130_i32 = arith.constant -130 : i32
      %138 = arith.addi %137, %c-130_i32 : i32
      %139 = arith.index_cast %138 : i32 to index
      %c0_176 = arith.constant 0 : index
      %140 = vector.load %arg8[%139, %c0_176] : memref<4224x24xf32, #tpu.memory_space<vmem>>, vector<128x24xf32>
      %141 = arith.truncf %140 : vector<128x24xf32> to vector<128x24xbf16>
      %cst_177 = arith.constant dense<0.000000e+00> : vector<128x24xf32>
      %142 = tpu.matmul %141, %26, %cst_177 {dimension_numbers = #tpu.dot_dimension_numbers<[1], [0], [0], [1], [0, 0, 1, 1], [], []>} : vector<128x24xbf16>, vector<24x24xbf16>, vector<128x24xf32> -> vector<128x24xf32>
      %c-128_i32 = arith.constant -128 : i32
      %143 = arith.addi %137, %c-128_i32 : i32
      %144 = arith.index_cast %143 : i32 to index
      %c0_178 = arith.constant 0 : index
      %145 = vector.load %arg8[%144, %c0_178] : memref<4224x24xf32, #tpu.memory_space<vmem>>, vector<128x24xf32>
      %146 = arith.truncf %145 : vector<128x24xf32> to vector<128x24xbf16>
      %cst_179 = arith.constant dense<0.000000e+00> : vector<128x24xf32>
      %147 = tpu.matmul %146, %28, %cst_179 {dimension_numbers = #tpu.dot_dimension_numbers<[1], [0], [0], [1], [0, 0, 1, 1], [], []>} : vector<128x24xbf16>, vector<24x24xbf16>, vector<128x24xf32> -> vector<128x24xf32>
      %148 = arith.addf %142, %147 : vector<128x24xf32>
      %c-126_i32 = arith.constant -126 : i32
      %149 = arith.addi %137, %c-126_i32 : i32
      %150 = arith.index_cast %149 : i32 to index
      %c0_180 = arith.constant 0 : index
      %151 = vector.load %arg8[%150, %c0_180] : memref<4224x24xf32, #tpu.memory_space<vmem>>, vector<128x24xf32>
      %152 = arith.truncf %151 : vector<128x24xf32> to vector<128x24xbf16>
      %cst_181 = arith.constant dense<0.000000e+00> : vector<128x24xf32>
      %153 = tpu.matmul %152, %30, %cst_181 {dimension_numbers = #tpu.dot_dimension_numbers<[1], [0], [0], [1], [0, 0, 1, 1], [], []>} : vector<128x24xbf16>, vector<24x24xbf16>, vector<128x24xf32> -> vector<128x24xf32>
      %154 = arith.addf %148, %153 : vector<128x24xf32>
      %c-2_i32 = arith.constant -2 : i32
      %155 = arith.addi %137, %c-2_i32 : i32
      %156 = arith.index_cast %155 : i32 to index
      %c0_182 = arith.constant 0 : index
      %157 = vector.load %arg8[%156, %c0_182] : memref<4224x24xf32, #tpu.memory_space<vmem>>, vector<128x24xf32>
      %158 = arith.truncf %157 : vector<128x24xf32> to vector<128x24xbf16>
      %cst_183 = arith.constant dense<0.000000e+00> : vector<128x24xf32>
      %159 = tpu.matmul %158, %32, %cst_183 {dimension_numbers = #tpu.dot_dimension_numbers<[1], [0], [0], [1], [0, 0, 1, 1], [], []>} : vector<128x24xbf16>, vector<24x24xbf16>, vector<128x24xf32> -> vector<128x24xf32>
      %160 = arith.addf %154, %159 : vector<128x24xf32>
      %c0_i32_184 = arith.constant 0 : i32
      %161 = arith.addi %137, %c0_i32_184 : i32
      %162 = arith.index_cast %161 : i32 to index
      %c0_185 = arith.constant 0 : index
      %163 = vector.load %arg8[%162, %c0_185] : memref<4224x24xf32, #tpu.memory_space<vmem>>, vector<128x24xf32>
      %164 = arith.truncf %163 : vector<128x24xf32> to vector<128x24xbf16>
      %cst_186 = arith.constant dense<0.000000e+00> : vector<128x24xf32>
      %165 = tpu.matmul %164, %34, %cst_186 {dimension_numbers = #tpu.dot_dimension_numbers<[1], [0], [0], [1], [0, 0, 1, 1], [], []>} : vector<128x24xbf16>, vector<24x24xbf16>, vector<128x24xf32> -> vector<128x24xf32>
      %166 = arith.addf %160, %165 : vector<128x24xf32>
      %c2_i32_187 = arith.constant 2 : i32
      %167 = arith.addi %137, %c2_i32_187 : i32
      %168 = arith.index_cast %167 : i32 to index
      %c0_188 = arith.constant 0 : index
      %169 = vector.load %arg8[%168, %c0_188] : memref<4224x24xf32, #tpu.memory_space<vmem>>, vector<128x24xf32>
      %170 = arith.truncf %169 : vector<128x24xf32> to vector<128x24xbf16>
      %cst_189 = arith.constant dense<0.000000e+00> : vector<128x24xf32>
      %171 = tpu.matmul %170, %36, %cst_189 {dimension_numbers = #tpu.dot_dimension_numbers<[1], [0], [0], [1], [0, 0, 1, 1], [], []>} : vector<128x24xbf16>, vector<24x24xbf16>, vector<128x24xf32> -> vector<128x24xf32>
      %172 = arith.addf %166, %171 : vector<128x24xf32>
      %c126_i32 = arith.constant 126 : i32
      %173 = arith.addi %137, %c126_i32 : i32
      %174 = arith.index_cast %173 : i32 to index
      %c0_190 = arith.constant 0 : index
      %175 = vector.load %arg8[%174, %c0_190] : memref<4224x24xf32, #tpu.memory_space<vmem>>, vector<128x24xf32>
      %176 = arith.truncf %175 : vector<128x24xf32> to vector<128x24xbf16>
      %cst_191 = arith.constant dense<0.000000e+00> : vector<128x24xf32>
      %177 = tpu.matmul %176, %38, %cst_191 {dimension_numbers = #tpu.dot_dimension_numbers<[1], [0], [0], [1], [0, 0, 1, 1], [], []>} : vector<128x24xbf16>, vector<24x24xbf16>, vector<128x24xf32> -> vector<128x24xf32>
      %178 = arith.addf %172, %177 : vector<128x24xf32>
      %c128_i32 = arith.constant 128 : i32
      %179 = arith.addi %137, %c128_i32 : i32
      %180 = arith.index_cast %179 : i32 to index
      %c0_192 = arith.constant 0 : index
      %181 = vector.load %arg8[%180, %c0_192] : memref<4224x24xf32, #tpu.memory_space<vmem>>, vector<128x24xf32>
      %182 = arith.truncf %181 : vector<128x24xf32> to vector<128x24xbf16>
      %cst_193 = arith.constant dense<0.000000e+00> : vector<128x24xf32>
      %183 = tpu.matmul %182, %40, %cst_193 {dimension_numbers = #tpu.dot_dimension_numbers<[1], [0], [0], [1], [0, 0, 1, 1], [], []>} : vector<128x24xbf16>, vector<24x24xbf16>, vector<128x24xf32> -> vector<128x24xf32>
      %184 = arith.addf %178, %183 : vector<128x24xf32>
      %c130_i32 = arith.constant 130 : i32
      %185 = arith.addi %137, %c130_i32 : i32
      %186 = arith.index_cast %185 : i32 to index
      %c0_194 = arith.constant 0 : index
      %187 = vector.load %arg8[%186, %c0_194] : memref<4224x24xf32, #tpu.memory_space<vmem>>, vector<128x24xf32>
      %188 = arith.truncf %187 : vector<128x24xf32> to vector<128x24xbf16>
      %cst_195 = arith.constant dense<0.000000e+00> : vector<128x24xf32>
      %189 = tpu.matmul %188, %42, %cst_195 {dimension_numbers = #tpu.dot_dimension_numbers<[1], [0], [0], [1], [0, 0, 1, 1], [], []>} : vector<128x24xbf16>, vector<24x24xbf16>, vector<128x24xf32> -> vector<128x24xf32>
      %190 = arith.addf %184, %189 : vector<128x24xf32>
      %191 = vector.broadcast %43 : vector<1x24xf32> to vector<128x24xf32>
      %192 = arith.mulf %191, %190 : vector<128x24xf32>
      %193 = vector.broadcast %44 : vector<1x24xf32> to vector<128x24xf32>
      %194 = arith.addf %192, %193 : vector<128x24xf32>
      %cst_196 = arith.constant 2.000000e-01 : f32
      %195 = vector.broadcast %cst_196 : f32 to vector<128x24xf32>
      %196 = arith.mulf %195, %194 : vector<128x24xf32>
      %197 = arith.maximumf %194, %196 : vector<128x24xf32>
      %c0_i32_197 = arith.constant 0 : i32
      %198 = arith.addi %137, %c0_i32_197 : i32
      %c16_i32_198 = arith.constant 16 : i32
      %199 = arith.addi %198, %c16_i32_198 : i32
      %200 = tpu.assume_multiple %199, 8 : i32
      %201 = vector.extract_strided_slice %197 {offsets = [16, 0], sizes = [32, 24], strides = [1, 1]} : vector<128x24xf32> to vector<32x24xf32>
      %202 = arith.index_cast %200 : i32 to index
      %c0_199 = arith.constant 0 : index
      %203 = vector.load %arg9[%202, %c0_199] : memref<4224x24xf32, #tpu.memory_space<vmem>>, vector<32x24xf32>
      tpu.vector_store %arg9[%202, %c0_199], %201 {strides = array<i32>} : memref<4224x24xf32, #tpu.memory_space<vmem>>, vector<32x24xf32>,
      %c64_i32_200 = arith.constant 64 : i32
      %204 = arith.addi %137, %c64_i32_200 : i32
      %c16_i32_201 = arith.constant 16 : i32
      %205 = arith.addi %204, %c16_i32_201 : i32
      %206 = tpu.assume_multiple %205, 8 : i32
      %207 = vector.extract_strided_slice %197 {offsets = [80, 0], sizes = [32, 24], strides = [1, 1]} : vector<128x24xf32> to vector<32x24xf32>
      %208 = arith.index_cast %206 : i32 to index
      %c0_202 = arith.constant 0 : index
      %209 = vector.load %arg9[%208, %c0_202] : memref<4224x24xf32, #tpu.memory_space<vmem>>, vector<32x24xf32>
      tpu.vector_store %arg9[%208, %c0_202], %207 {strides = array<i32>} : memref<4224x24xf32, #tpu.memory_space<vmem>>, vector<32x24xf32>,
    }
    %c16_i32_64 = arith.constant 16 : i32
    %c9 = arith.constant 9 : index
    %c0_65 = arith.constant 0 : index
    %c0_66 = arith.constant 0 : index
    %46 = vector.load %arg3[%c9, %c0_65, %c0_66] : memref<45x24x24xbf16, #tpu.memory_space<vmem>>, vector<1x24x24xbf16>
    %47 = vector.shape_cast %46 : vector<1x24x24xbf16> to vector<24x24xbf16>
    %c10 = arith.constant 10 : index
    %c0_67 = arith.constant 0 : index
    %c0_68 = arith.constant 0 : index
    %48 = vector.load %arg3[%c10, %c0_67, %c0_68] : memref<45x24x24xbf16, #tpu.memory_space<vmem>>, vector<1x24x24xbf16>
    %49 = vector.shape_cast %48 : vector<1x24x24xbf16> to vector<24x24xbf16>
    %c11 = arith.constant 11 : index
    %c0_69 = arith.constant 0 : index
    %c0_70 = arith.constant 0 : index
    %50 = vector.load %arg3[%c11, %c0_69, %c0_70] : memref<45x24x24xbf16, #tpu.memory_space<vmem>>, vector<1x24x24xbf16>
    %51 = vector.shape_cast %50 : vector<1x24x24xbf16> to vector<24x24xbf16>
    %c12 = arith.constant 12 : index
    %c0_71 = arith.constant 0 : index
    %c0_72 = arith.constant 0 : index
    %52 = vector.load %arg3[%c12, %c0_71, %c0_72] : memref<45x24x24xbf16, #tpu.memory_space<vmem>>, vector<1x24x24xbf16>
    %53 = vector.shape_cast %52 : vector<1x24x24xbf16> to vector<24x24xbf16>
    %c13 = arith.constant 13 : index
    %c0_73 = arith.constant 0 : index
    %c0_74 = arith.constant 0 : index
    %54 = vector.load %arg3[%c13, %c0_73, %c0_74] : memref<45x24x24xbf16, #tpu.memory_space<vmem>>, vector<1x24x24xbf16>
    %55 = vector.shape_cast %54 : vector<1x24x24xbf16> to vector<24x24xbf16>
    %c14 = arith.constant 14 : index
    %c0_75 = arith.constant 0 : index
    %c0_76 = arith.constant 0 : index
    %56 = vector.load %arg3[%c14, %c0_75, %c0_76] : memref<45x24x24xbf16, #tpu.memory_space<vmem>>, vector<1x24x24xbf16>
    %57 = vector.shape_cast %56 : vector<1x24x24xbf16> to vector<24x24xbf16>
    %c15 = arith.constant 15 : index
    %c0_77 = arith.constant 0 : index
    %c0_78 = arith.constant 0 : index
    %58 = vector.load %arg3[%c15, %c0_77, %c0_78] : memref<45x24x24xbf16, #tpu.memory_space<vmem>>, vector<1x24x24xbf16>
    %59 = vector.shape_cast %58 : vector<1x24x24xbf16> to vector<24x24xbf16>
    %c16 = arith.constant 16 : index
    %c0_79 = arith.constant 0 : index
    %c0_80 = arith.constant 0 : index
    %60 = vector.load %arg3[%c16, %c0_79, %c0_80] : memref<45x24x24xbf16, #tpu.memory_space<vmem>>, vector<1x24x24xbf16>
    %61 = vector.shape_cast %60 : vector<1x24x24xbf16> to vector<24x24xbf16>
    %c17 = arith.constant 17 : index
    %c0_81 = arith.constant 0 : index
    %c0_82 = arith.constant 0 : index
    %62 = vector.load %arg3[%c17, %c0_81, %c0_82] : memref<45x24x24xbf16, #tpu.memory_space<vmem>>, vector<1x24x24xbf16>
    %63 = vector.shape_cast %62 : vector<1x24x24xbf16> to vector<24x24xbf16>
    %c4_83 = arith.constant 4 : index
    %c0_84 = arith.constant 0 : index
    %64 = vector.load %arg4[%c4_83, %c0_84] : memref<12x24xf32, #tpu.memory_space<vmem>>, vector<1x24xf32>
    %c5_85 = arith.constant 5 : index
    %c0_86 = arith.constant 0 : index
    %65 = vector.load %arg4[%c5_85, %c0_86] : memref<12x24xf32, #tpu.memory_space<vmem>>, vector<1x24xf32>
    %c0_i32_87 = arith.constant 0 : i32
    %c16_i32_88 = arith.constant 16 : i32
    %66 = arith.addi %c0_i32_87, %c16_i32_88 : i32
    %c1_i32_89 = arith.constant 1 : i32
    scf.for %arg10 = %c0_i32_87 to %66 step %c1_i32_89  : i32 {
      %c1_i32_173 = arith.constant 1 : i32
      %132 = arith.muli %arg10, %c1_i32_173 : i32
      %c0_i32_174 = arith.constant 0 : i32
      %133 = arith.addi %c0_i32_174, %132 : i32
      %c2_i32 = arith.constant 2 : i32
      %134 = arith.muli %133, %c2_i32 : i32
      %c17_i32_175 = arith.constant 17 : i32
      %135 = arith.addi %c17_i32_175, %134 : i32
      %c64_i32 = arith.constant 64 : i32
      %136 = arith.muli %135, %c64_i32 : i32
      %137 = tpu.assume_multiple %136, 8 : i32
      %c-260_i32 = arith.constant -260 : i32
      %138 = arith.addi %137, %c-260_i32 : i32
      %139 = arith.index_cast %138 : i32 to index
      %c0_176 = arith.constant 0 : index
      %140 = vector.load %arg9[%139, %c0_176] : memref<4224x24xf32, #tpu.memory_space<vmem>>, vector<128x24xf32>
      %141 = arith.truncf %140 : vector<128x24xf32> to vector<128x24xbf16>
      %cst_177 = arith.constant dense<0.000000e+00> : vector<128x24xf32>
      %142 = tpu.matmul %141, %47, %cst_177 {dimension_numbers = #tpu.dot_dimension_numbers<[1], [0], [0], [1], [0, 0, 1, 1], [], []>} : vector<128x24xbf16>, vector<24x24xbf16>, vector<128x24xf32> -> vector<128x24xf32>
      %c-256_i32 = arith.constant -256 : i32
      %143 = arith.addi %137, %c-256_i32 : i32
      %144 = arith.index_cast %143 : i32 to index
      %c0_178 = arith.constant 0 : index
      %145 = vector.load %arg9[%144, %c0_178] : memref<4224x24xf32, #tpu.memory_space<vmem>>, vector<128x24xf32>
      %146 = arith.truncf %145 : vector<128x24xf32> to vector<128x24xbf16>
      %cst_179 = arith.constant dense<0.000000e+00> : vector<128x24xf32>
      %147 = tpu.matmul %146, %49, %cst_179 {dimension_numbers = #tpu.dot_dimension_numbers<[1], [0], [0], [1], [0, 0, 1, 1], [], []>} : vector<128x24xbf16>, vector<24x24xbf16>, vector<128x24xf32> -> vector<128x24xf32>
      %148 = arith.addf %142, %147 : vector<128x24xf32>
      %c-252_i32 = arith.constant -252 : i32
      %149 = arith.addi %137, %c-252_i32 : i32
      %150 = arith.index_cast %149 : i32 to index
      %c0_180 = arith.constant 0 : index
      %151 = vector.load %arg9[%150, %c0_180] : memref<4224x24xf32, #tpu.memory_space<vmem>>, vector<128x24xf32>
      %152 = arith.truncf %151 : vector<128x24xf32> to vector<128x24xbf16>
      %cst_181 = arith.constant dense<0.000000e+00> : vector<128x24xf32>
      %153 = tpu.matmul %152, %51, %cst_181 {dimension_numbers = #tpu.dot_dimension_numbers<[1], [0], [0], [1], [0, 0, 1, 1], [], []>} : vector<128x24xbf16>, vector<24x24xbf16>, vector<128x24xf32> -> vector<128x24xf32>
      %154 = arith.addf %148, %153 : vector<128x24xf32>
      %c-4_i32 = arith.constant -4 : i32
      %155 = arith.addi %137, %c-4_i32 : i32
      %156 = arith.index_cast %155 : i32 to index
      %c0_182 = arith.constant 0 : index
      %157 = vector.load %arg9[%156, %c0_182] : memref<4224x24xf32, #tpu.memory_space<vmem>>, vector<128x24xf32>
      %158 = arith.truncf %157 : vector<128x24xf32> to vector<128x24xbf16>
      %cst_183 = arith.constant dense<0.000000e+00> : vector<128x24xf32>
      %159 = tpu.matmul %158, %53, %cst_183 {dimension_numbers = #tpu.dot_dimension_numbers<[1], [0], [0], [1], [0, 0, 1, 1], [], []>} : vector<128x24xbf16>, vector<24x24xbf16>, vector<128x24xf32> -> vector<128x24xf32>
      %160 = arith.addf %154, %159 : vector<128x24xf32>
      %c0_i32_184 = arith.constant 0 : i32
      %161 = arith.addi %137, %c0_i32_184 : i32
      %162 = arith.index_cast %161 : i32 to index
      %c0_185 = arith.constant 0 : index
      %163 = vector.load %arg9[%162, %c0_185] : memref<4224x24xf32, #tpu.memory_space<vmem>>, vector<128x24xf32>
      %164 = arith.truncf %163 : vector<128x24xf32> to vector<128x24xbf16>
      %cst_186 = arith.constant dense<0.000000e+00> : vector<128x24xf32>
      %165 = tpu.matmul %164, %55, %cst_186 {dimension_numbers = #tpu.dot_dimension_numbers<[1], [0], [0], [1], [0, 0, 1, 1], [], []>} : vector<128x24xbf16>, vector<24x24xbf16>, vector<128x24xf32> -> vector<128x24xf32>
      %166 = arith.addf %160, %165 : vector<128x24xf32>
      %c4_i32 = arith.constant 4 : i32
      %167 = arith.addi %137, %c4_i32 : i32
      %168 = arith.index_cast %167 : i32 to index
      %c0_187 = arith.constant 0 : index
      %169 = vector.load %arg9[%168, %c0_187] : memref<4224x24xf32, #tpu.memory_space<vmem>>, vector<128x24xf32>
      %170 = arith.truncf %169 : vector<128x24xf32> to vector<128x24xbf16>
      %cst_188 = arith.constant dense<0.000000e+00> : vector<128x24xf32>
      %171 = tpu.matmul %170, %57, %cst_188 {dimension_numbers = #tpu.dot_dimension_numbers<[1], [0], [0], [1], [0, 0, 1, 1], [], []>} : vector<128x24xbf16>, vector<24x24xbf16>, vector<128x24xf32> -> vector<128x24xf32>
      %172 = arith.addf %166, %171 : vector<128x24xf32>
      %c252_i32 = arith.constant 252 : i32
      %173 = arith.addi %137, %c252_i32 : i32
      %174 = arith.index_cast %173 : i32 to index
      %c0_189 = arith.constant 0 : index
      %175 = vector.load %arg9[%174, %c0_189] : memref<4224x24xf32, #tpu.memory_space<vmem>>, vector<128x24xf32>
      %176 = arith.truncf %175 : vector<128x24xf32> to vector<128x24xbf16>
      %cst_190 = arith.constant dense<0.000000e+00> : vector<128x24xf32>
      %177 = tpu.matmul %176, %59, %cst_190 {dimension_numbers = #tpu.dot_dimension_numbers<[1], [0], [0], [1], [0, 0, 1, 1], [], []>} : vector<128x24xbf16>, vector<24x24xbf16>, vector<128x24xf32> -> vector<128x24xf32>
      %178 = arith.addf %172, %177 : vector<128x24xf32>
      %c256_i32 = arith.constant 256 : i32
      %179 = arith.addi %137, %c256_i32 : i32
      %180 = arith.index_cast %179 : i32 to index
      %c0_191 = arith.constant 0 : index
      %181 = vector.load %arg9[%180, %c0_191] : memref<4224x24xf32, #tpu.memory_space<vmem>>, vector<128x24xf32>
      %182 = arith.truncf %181 : vector<128x24xf32> to vector<128x24xbf16>
      %cst_192 = arith.constant dense<0.000000e+00> : vector<128x24xf32>
      %183 = tpu.matmul %182, %61, %cst_192 {dimension_numbers = #tpu.dot_dimension_numbers<[1], [0], [0], [1], [0, 0, 1, 1], [], []>} : vector<128x24xbf16>, vector<24x24xbf16>, vector<128x24xf32> -> vector<128x24xf32>
      %184 = arith.addf %178, %183 : vector<128x24xf32>
      %c260_i32 = arith.constant 260 : i32
      %185 = arith.addi %137, %c260_i32 : i32
      %186 = arith.index_cast %185 : i32 to index
      %c0_193 = arith.constant 0 : index
      %187 = vector.load %arg9[%186, %c0_193] : memref<4224x24xf32, #tpu.memory_space<vmem>>, vector<128x24xf32>
      %188 = arith.truncf %187 : vector<128x24xf32> to vector<128x24xbf16>
      %cst_194 = arith.constant dense<0.000000e+00> : vector<128x24xf32>
      %189 = tpu.matmul %188, %63, %cst_194 {dimension_numbers = #tpu.dot_dimension_numbers<[1], [0], [0], [1], [0, 0, 1, 1], [], []>} : vector<128x24xbf16>, vector<24x24xbf16>, vector<128x24xf32> -> vector<128x24xf32>
      %190 = arith.addf %184, %189 : vector<128x24xf32>
      %191 = vector.broadcast %64 : vector<1x24xf32> to vector<128x24xf32>
      %192 = arith.mulf %191, %190 : vector<128x24xf32>
      %193 = vector.broadcast %65 : vector<1x24xf32> to vector<128x24xf32>
      %194 = arith.addf %192, %193 : vector<128x24xf32>
      %cst_195 = arith.constant 2.000000e-01 : f32
      %195 = vector.broadcast %cst_195 : f32 to vector<128x24xf32>
      %196 = arith.mulf %195, %194 : vector<128x24xf32>
      %197 = arith.maximumf %194, %196 : vector<128x24xf32>
      %c0_i32_196 = arith.constant 0 : i32
      %198 = arith.addi %137, %c0_i32_196 : i32
      %c16_i32_197 = arith.constant 16 : i32
      %199 = arith.addi %198, %c16_i32_197 : i32
      %200 = tpu.assume_multiple %199, 8 : i32
      %201 = vector.extract_strided_slice %197 {offsets = [16, 0], sizes = [32, 24], strides = [1, 1]} : vector<128x24xf32> to vector<32x24xf32>
      %202 = arith.index_cast %200 : i32 to index
      %c0_198 = arith.constant 0 : index
      %203 = vector.load %arg8[%202, %c0_198] : memref<4224x24xf32, #tpu.memory_space<vmem>>, vector<32x24xf32>
      tpu.vector_store %arg8[%202, %c0_198], %201 {strides = array<i32>} : memref<4224x24xf32, #tpu.memory_space<vmem>>, vector<32x24xf32>,
      %c64_i32_199 = arith.constant 64 : i32
      %204 = arith.addi %137, %c64_i32_199 : i32
      %c16_i32_200 = arith.constant 16 : i32
      %205 = arith.addi %204, %c16_i32_200 : i32
      %206 = tpu.assume_multiple %205, 8 : i32
      %207 = vector.extract_strided_slice %197 {offsets = [80, 0], sizes = [32, 24], strides = [1, 1]} : vector<128x24xf32> to vector<32x24xf32>
      %208 = arith.index_cast %206 : i32 to index
      %c0_201 = arith.constant 0 : index
      %209 = vector.load %arg8[%208, %c0_201] : memref<4224x24xf32, #tpu.memory_space<vmem>>, vector<32x24xf32>
      tpu.vector_store %arg8[%208, %c0_201], %207 {strides = array<i32>} : memref<4224x24xf32, #tpu.memory_space<vmem>>, vector<32x24xf32>,
    }
    %c16_i32_90 = arith.constant 16 : i32
    %c18 = arith.constant 18 : index
    %c0_91 = arith.constant 0 : index
    %c0_92 = arith.constant 0 : index
    %67 = vector.load %arg3[%c18, %c0_91, %c0_92] : memref<45x24x24xbf16, #tpu.memory_space<vmem>>, vector<1x24x24xbf16>
    %68 = vector.shape_cast %67 : vector<1x24x24xbf16> to vector<24x24xbf16>
    %c19 = arith.constant 19 : index
    %c0_93 = arith.constant 0 : index
    %c0_94 = arith.constant 0 : index
    %69 = vector.load %arg3[%c19, %c0_93, %c0_94] : memref<45x24x24xbf16, #tpu.memory_space<vmem>>, vector<1x24x24xbf16>
    %70 = vector.shape_cast %69 : vector<1x24x24xbf16> to vector<24x24xbf16>
    %c20 = arith.constant 20 : index
    %c0_95 = arith.constant 0 : index
    %c0_96 = arith.constant 0 : index
    %71 = vector.load %arg3[%c20, %c0_95, %c0_96] : memref<45x24x24xbf16, #tpu.memory_space<vmem>>, vector<1x24x24xbf16>
    %72 = vector.shape_cast %71 : vector<1x24x24xbf16> to vector<24x24xbf16>
    %c21 = arith.constant 21 : index
    %c0_97 = arith.constant 0 : index
    %c0_98 = arith.constant 0 : index
    %73 = vector.load %arg3[%c21, %c0_97, %c0_98] : memref<45x24x24xbf16, #tpu.memory_space<vmem>>, vector<1x24x24xbf16>
    %74 = vector.shape_cast %73 : vector<1x24x24xbf16> to vector<24x24xbf16>
    %c22 = arith.constant 22 : index
    %c0_99 = arith.constant 0 : index
    %c0_100 = arith.constant 0 : index
    %75 = vector.load %arg3[%c22, %c0_99, %c0_100] : memref<45x24x24xbf16, #tpu.memory_space<vmem>>, vector<1x24x24xbf16>
    %76 = vector.shape_cast %75 : vector<1x24x24xbf16> to vector<24x24xbf16>
    %c23 = arith.constant 23 : index
    %c0_101 = arith.constant 0 : index
    %c0_102 = arith.constant 0 : index
    %77 = vector.load %arg3[%c23, %c0_101, %c0_102] : memref<45x24x24xbf16, #tpu.memory_space<vmem>>, vector<1x24x24xbf16>
    %78 = vector.shape_cast %77 : vector<1x24x24xbf16> to vector<24x24xbf16>
    %c24 = arith.constant 24 : index
    %c0_103 = arith.constant 0 : index
    %c0_104 = arith.constant 0 : index
    %79 = vector.load %arg3[%c24, %c0_103, %c0_104] : memref<45x24x24xbf16, #tpu.memory_space<vmem>>, vector<1x24x24xbf16>
    %80 = vector.shape_cast %79 : vector<1x24x24xbf16> to vector<24x24xbf16>
    %c25 = arith.constant 25 : index
    %c0_105 = arith.constant 0 : index
    %c0_106 = arith.constant 0 : index
    %81 = vector.load %arg3[%c25, %c0_105, %c0_106] : memref<45x24x24xbf16, #tpu.memory_space<vmem>>, vector<1x24x24xbf16>
    %82 = vector.shape_cast %81 : vector<1x24x24xbf16> to vector<24x24xbf16>
    %c26 = arith.constant 26 : index
    %c0_107 = arith.constant 0 : index
    %c0_108 = arith.constant 0 : index
    %83 = vector.load %arg3[%c26, %c0_107, %c0_108] : memref<45x24x24xbf16, #tpu.memory_space<vmem>>, vector<1x24x24xbf16>
    %84 = vector.shape_cast %83 : vector<1x24x24xbf16> to vector<24x24xbf16>
    %c6_109 = arith.constant 6 : index
    %c0_110 = arith.constant 0 : index
    %85 = vector.load %arg4[%c6_109, %c0_110] : memref<12x24xf32, #tpu.memory_space<vmem>>, vector<1x24xf32>
    %c7_111 = arith.constant 7 : index
    %c0_112 = arith.constant 0 : index
    %86 = vector.load %arg4[%c7_111, %c0_112] : memref<12x24xf32, #tpu.memory_space<vmem>>, vector<1x24xf32>
    %c0_i32_113 = arith.constant 0 : i32
    %c16_i32_114 = arith.constant 16 : i32
    %87 = arith.addi %c0_i32_113, %c16_i32_114 : i32
    %c1_i32_115 = arith.constant 1 : i32
    scf.for %arg10 = %c0_i32_113 to %87 step %c1_i32_115  : i32 {
      %c1_i32_173 = arith.constant 1 : i32
      %132 = arith.muli %arg10, %c1_i32_173 : i32
      %c0_i32_174 = arith.constant 0 : i32
      %133 = arith.addi %c0_i32_174, %132 : i32
      %c2_i32 = arith.constant 2 : i32
      %134 = arith.muli %133, %c2_i32 : i32
      %c17_i32_175 = arith.constant 17 : i32
      %135 = arith.addi %c17_i32_175, %134 : i32
      %c64_i32 = arith.constant 64 : i32
      %136 = arith.muli %135, %c64_i32 : i32
      %137 = tpu.assume_multiple %136, 8 : i32
      %c-520_i32 = arith.constant -520 : i32
      %138 = arith.addi %137, %c-520_i32 : i32
      %139 = arith.index_cast %138 : i32 to index
      %c0_176 = arith.constant 0 : index
      %140 = vector.load %arg8[%139, %c0_176] : memref<4224x24xf32, #tpu.memory_space<vmem>>, vector<128x24xf32>
      %141 = arith.truncf %140 : vector<128x24xf32> to vector<128x24xbf16>
      %cst_177 = arith.constant dense<0.000000e+00> : vector<128x24xf32>
      %142 = tpu.matmul %141, %68, %cst_177 {dimension_numbers = #tpu.dot_dimension_numbers<[1], [0], [0], [1], [0, 0, 1, 1], [], []>} : vector<128x24xbf16>, vector<24x24xbf16>, vector<128x24xf32> -> vector<128x24xf32>
      %c-512_i32 = arith.constant -512 : i32
      %143 = arith.addi %137, %c-512_i32 : i32
      %144 = arith.index_cast %143 : i32 to index
      %c0_178 = arith.constant 0 : index
      %145 = vector.load %arg8[%144, %c0_178] : memref<4224x24xf32, #tpu.memory_space<vmem>>, vector<128x24xf32>
      %146 = arith.truncf %145 : vector<128x24xf32> to vector<128x24xbf16>
      %cst_179 = arith.constant dense<0.000000e+00> : vector<128x24xf32>
      %147 = tpu.matmul %146, %70, %cst_179 {dimension_numbers = #tpu.dot_dimension_numbers<[1], [0], [0], [1], [0, 0, 1, 1], [], []>} : vector<128x24xbf16>, vector<24x24xbf16>, vector<128x24xf32> -> vector<128x24xf32>
      %148 = arith.addf %142, %147 : vector<128x24xf32>
      %c-504_i32 = arith.constant -504 : i32
      %149 = arith.addi %137, %c-504_i32 : i32
      %150 = arith.index_cast %149 : i32 to index
      %c0_180 = arith.constant 0 : index
      %151 = vector.load %arg8[%150, %c0_180] : memref<4224x24xf32, #tpu.memory_space<vmem>>, vector<128x24xf32>
      %152 = arith.truncf %151 : vector<128x24xf32> to vector<128x24xbf16>
      %cst_181 = arith.constant dense<0.000000e+00> : vector<128x24xf32>
      %153 = tpu.matmul %152, %72, %cst_181 {dimension_numbers = #tpu.dot_dimension_numbers<[1], [0], [0], [1], [0, 0, 1, 1], [], []>} : vector<128x24xbf16>, vector<24x24xbf16>, vector<128x24xf32> -> vector<128x24xf32>
      %154 = arith.addf %148, %153 : vector<128x24xf32>
      %c-8_i32 = arith.constant -8 : i32
      %155 = arith.addi %137, %c-8_i32 : i32
      %156 = arith.index_cast %155 : i32 to index
      %c0_182 = arith.constant 0 : index
      %157 = vector.load %arg8[%156, %c0_182] : memref<4224x24xf32, #tpu.memory_space<vmem>>, vector<128x24xf32>
      %158 = arith.truncf %157 : vector<128x24xf32> to vector<128x24xbf16>
      %cst_183 = arith.constant dense<0.000000e+00> : vector<128x24xf32>
      %159 = tpu.matmul %158, %74, %cst_183 {dimension_numbers = #tpu.dot_dimension_numbers<[1], [0], [0], [1], [0, 0, 1, 1], [], []>} : vector<128x24xbf16>, vector<24x24xbf16>, vector<128x24xf32> -> vector<128x24xf32>
      %160 = arith.addf %154, %159 : vector<128x24xf32>
      %c0_i32_184 = arith.constant 0 : i32
      %161 = arith.addi %137, %c0_i32_184 : i32
      %162 = arith.index_cast %161 : i32 to index
      %c0_185 = arith.constant 0 : index
      %163 = vector.load %arg8[%162, %c0_185] : memref<4224x24xf32, #tpu.memory_space<vmem>>, vector<128x24xf32>
      %164 = arith.truncf %163 : vector<128x24xf32> to vector<128x24xbf16>
      %cst_186 = arith.constant dense<0.000000e+00> : vector<128x24xf32>
      %165 = tpu.matmul %164, %76, %cst_186 {dimension_numbers = #tpu.dot_dimension_numbers<[1], [0], [0], [1], [0, 0, 1, 1], [], []>} : vector<128x24xbf16>, vector<24x24xbf16>, vector<128x24xf32> -> vector<128x24xf32>
      %166 = arith.addf %160, %165 : vector<128x24xf32>
      %c8_i32 = arith.constant 8 : i32
      %167 = arith.addi %137, %c8_i32 : i32
      %168 = arith.index_cast %167 : i32 to index
      %c0_187 = arith.constant 0 : index
      %169 = vector.load %arg8[%168, %c0_187] : memref<4224x24xf32, #tpu.memory_space<vmem>>, vector<128x24xf32>
      %170 = arith.truncf %169 : vector<128x24xf32> to vector<128x24xbf16>
      %cst_188 = arith.constant dense<0.000000e+00> : vector<128x24xf32>
      %171 = tpu.matmul %170, %78, %cst_188 {dimension_numbers = #tpu.dot_dimension_numbers<[1], [0], [0], [1], [0, 0, 1, 1], [], []>} : vector<128x24xbf16>, vector<24x24xbf16>, vector<128x24xf32> -> vector<128x24xf32>
      %172 = arith.addf %166, %171 : vector<128x24xf32>
      %c504_i32 = arith.constant 504 : i32
      %173 = arith.addi %137, %c504_i32 : i32
      %174 = arith.index_cast %173 : i32 to index
      %c0_189 = arith.constant 0 : index
      %175 = vector.load %arg8[%174, %c0_189] : memref<4224x24xf32, #tpu.memory_space<vmem>>, vector<128x24xf32>
      %176 = arith.truncf %175 : vector<128x24xf32> to vector<128x24xbf16>
      %cst_190 = arith.constant dense<0.000000e+00> : vector<128x24xf32>
      %177 = tpu.matmul %176, %80, %cst_190 {dimension_numbers = #tpu.dot_dimension_numbers<[1], [0], [0], [1], [0, 0, 1, 1], [], []>} : vector<128x24xbf16>, vector<24x24xbf16>, vector<128x24xf32> -> vector<128x24xf32>
      %178 = arith.addf %172, %177 : vector<128x24xf32>
      %c512_i32 = arith.constant 512 : i32
      %179 = arith.addi %137, %c512_i32 : i32
      %180 = arith.index_cast %179 : i32 to index
      %c0_191 = arith.constant 0 : index
      %181 = vector.load %arg8[%180, %c0_191] : memref<4224x24xf32, #tpu.memory_space<vmem>>, vector<128x24xf32>
      %182 = arith.truncf %181 : vector<128x24xf32> to vector<128x24xbf16>
      %cst_192 = arith.constant dense<0.000000e+00> : vector<128x24xf32>
      %183 = tpu.matmul %182, %82, %cst_192 {dimension_numbers = #tpu.dot_dimension_numbers<[1], [0], [0], [1], [0, 0, 1, 1], [], []>} : vector<128x24xbf16>, vector<24x24xbf16>, vector<128x24xf32> -> vector<128x24xf32>
      %184 = arith.addf %178, %183 : vector<128x24xf32>
      %c520_i32 = arith.constant 520 : i32
      %185 = arith.addi %137, %c520_i32 : i32
      %186 = arith.index_cast %185 : i32 to index
      %c0_193 = arith.constant 0 : index
      %187 = vector.load %arg8[%186, %c0_193] : memref<4224x24xf32, #tpu.memory_space<vmem>>, vector<128x24xf32>
      %188 = arith.truncf %187 : vector<128x24xf32> to vector<128x24xbf16>
      %cst_194 = arith.constant dense<0.000000e+00> : vector<128x24xf32>
      %189 = tpu.matmul %188, %84, %cst_194 {dimension_numbers = #tpu.dot_dimension_numbers<[1], [0], [0], [1], [0, 0, 1, 1], [], []>} : vector<128x24xbf16>, vector<24x24xbf16>, vector<128x24xf32> -> vector<128x24xf32>
      %190 = arith.addf %184, %189 : vector<128x24xf32>
      %191 = vector.broadcast %85 : vector<1x24xf32> to vector<128x24xf32>
      %192 = arith.mulf %191, %190 : vector<128x24xf32>
      %193 = vector.broadcast %86 : vector<1x24xf32> to vector<128x24xf32>
      %194 = arith.addf %192, %193 : vector<128x24xf32>
      %cst_195 = arith.constant 2.000000e-01 : f32
      %195 = vector.broadcast %cst_195 : f32 to vector<128x24xf32>
      %196 = arith.mulf %195, %194 : vector<128x24xf32>
      %197 = arith.maximumf %194, %196 : vector<128x24xf32>
      %c0_i32_196 = arith.constant 0 : i32
      %198 = arith.addi %137, %c0_i32_196 : i32
      %c16_i32_197 = arith.constant 16 : i32
      %199 = arith.addi %198, %c16_i32_197 : i32
      %200 = tpu.assume_multiple %199, 8 : i32
      %201 = vector.extract_strided_slice %197 {offsets = [16, 0], sizes = [32, 24], strides = [1, 1]} : vector<128x24xf32> to vector<32x24xf32>
      %202 = arith.index_cast %200 : i32 to index
      %c0_198 = arith.constant 0 : index
      %203 = vector.load %arg9[%202, %c0_198] : memref<4224x24xf32, #tpu.memory_space<vmem>>, vector<32x24xf32>
      tpu.vector_store %arg9[%202, %c0_198], %201 {strides = array<i32>} : memref<4224x24xf32, #tpu.memory_space<vmem>>, vector<32x24xf32>,
      %c64_i32_199 = arith.constant 64 : i32
      %204 = arith.addi %137, %c64_i32_199 : i32
      %c16_i32_200 = arith.constant 16 : i32
      %205 = arith.addi %204, %c16_i32_200 : i32
      %206 = tpu.assume_multiple %205, 8 : i32
      %207 = vector.extract_strided_slice %197 {offsets = [80, 0], sizes = [32, 24], strides = [1, 1]} : vector<128x24xf32> to vector<32x24xf32>
      %208 = arith.index_cast %206 : i32 to index
      %c0_201 = arith.constant 0 : index
      %209 = vector.load %arg9[%208, %c0_201] : memref<4224x24xf32, #tpu.memory_space<vmem>>, vector<32x24xf32>
      tpu.vector_store %arg9[%208, %c0_201], %207 {strides = array<i32>} : memref<4224x24xf32, #tpu.memory_space<vmem>>, vector<32x24xf32>,
    }
    %c16_i32_116 = arith.constant 16 : i32
    %c27 = arith.constant 27 : index
    %c0_117 = arith.constant 0 : index
    %c0_118 = arith.constant 0 : index
    %88 = vector.load %arg3[%c27, %c0_117, %c0_118] : memref<45x24x24xbf16, #tpu.memory_space<vmem>>, vector<1x24x24xbf16>
    %89 = vector.shape_cast %88 : vector<1x24x24xbf16> to vector<24x24xbf16>
    %c28 = arith.constant 28 : index
    %c0_119 = arith.constant 0 : index
    %c0_120 = arith.constant 0 : index
    %90 = vector.load %arg3[%c28, %c0_119, %c0_120] : memref<45x24x24xbf16, #tpu.memory_space<vmem>>, vector<1x24x24xbf16>
    %91 = vector.shape_cast %90 : vector<1x24x24xbf16> to vector<24x24xbf16>
    %c29 = arith.constant 29 : index
    %c0_121 = arith.constant 0 : index
    %c0_122 = arith.constant 0 : index
    %92 = vector.load %arg3[%c29, %c0_121, %c0_122] : memref<45x24x24xbf16, #tpu.memory_space<vmem>>, vector<1x24x24xbf16>
    %93 = vector.shape_cast %92 : vector<1x24x24xbf16> to vector<24x24xbf16>
    %c30 = arith.constant 30 : index
    %c0_123 = arith.constant 0 : index
    %c0_124 = arith.constant 0 : index
    %94 = vector.load %arg3[%c30, %c0_123, %c0_124] : memref<45x24x24xbf16, #tpu.memory_space<vmem>>, vector<1x24x24xbf16>
    %95 = vector.shape_cast %94 : vector<1x24x24xbf16> to vector<24x24xbf16>
    %c31 = arith.constant 31 : index
    %c0_125 = arith.constant 0 : index
    %c0_126 = arith.constant 0 : index
    %96 = vector.load %arg3[%c31, %c0_125, %c0_126] : memref<45x24x24xbf16, #tpu.memory_space<vmem>>, vector<1x24x24xbf16>
    %97 = vector.shape_cast %96 : vector<1x24x24xbf16> to vector<24x24xbf16>
    %c32 = arith.constant 32 : index
    %c0_127 = arith.constant 0 : index
    %c0_128 = arith.constant 0 : index
    %98 = vector.load %arg3[%c32, %c0_127, %c0_128] : memref<45x24x24xbf16, #tpu.memory_space<vmem>>, vector<1x24x24xbf16>
    %99 = vector.shape_cast %98 : vector<1x24x24xbf16> to vector<24x24xbf16>
    %c33 = arith.constant 33 : index
    %c0_129 = arith.constant 0 : index
    %c0_130 = arith.constant 0 : index
    %100 = vector.load %arg3[%c33, %c0_129, %c0_130] : memref<45x24x24xbf16, #tpu.memory_space<vmem>>, vector<1x24x24xbf16>
    %101 = vector.shape_cast %100 : vector<1x24x24xbf16> to vector<24x24xbf16>
    %c34 = arith.constant 34 : index
    %c0_131 = arith.constant 0 : index
    %c0_132 = arith.constant 0 : index
    %102 = vector.load %arg3[%c34, %c0_131, %c0_132] : memref<45x24x24xbf16, #tpu.memory_space<vmem>>, vector<1x24x24xbf16>
    %103 = vector.shape_cast %102 : vector<1x24x24xbf16> to vector<24x24xbf16>
    %c35 = arith.constant 35 : index
    %c0_133 = arith.constant 0 : index
    %c0_134 = arith.constant 0 : index
    %104 = vector.load %arg3[%c35, %c0_133, %c0_134] : memref<45x24x24xbf16, #tpu.memory_space<vmem>>, vector<1x24x24xbf16>
    %105 = vector.shape_cast %104 : vector<1x24x24xbf16> to vector<24x24xbf16>
    %c8_135 = arith.constant 8 : index
    %c0_136 = arith.constant 0 : index
    %106 = vector.load %arg4[%c8_135, %c0_136] : memref<12x24xf32, #tpu.memory_space<vmem>>, vector<1x24xf32>
    %c9_137 = arith.constant 9 : index
    %c0_138 = arith.constant 0 : index
    %107 = vector.load %arg4[%c9_137, %c0_138] : memref<12x24xf32, #tpu.memory_space<vmem>>, vector<1x24xf32>
    %c0_i32_139 = arith.constant 0 : i32
    %c16_i32_140 = arith.constant 16 : i32
    %108 = arith.addi %c0_i32_139, %c16_i32_140 : i32
    %c1_i32_141 = arith.constant 1 : i32
    scf.for %arg10 = %c0_i32_139 to %108 step %c1_i32_141  : i32 {
      %c1_i32_173 = arith.constant 1 : i32
      %132 = arith.muli %arg10, %c1_i32_173 : i32
      %c0_i32_174 = arith.constant 0 : i32
      %133 = arith.addi %c0_i32_174, %132 : i32
      %c2_i32 = arith.constant 2 : i32
      %134 = arith.muli %133, %c2_i32 : i32
      %c17_i32_175 = arith.constant 17 : i32
      %135 = arith.addi %c17_i32_175, %134 : i32
      %c64_i32 = arith.constant 64 : i32
      %136 = arith.muli %135, %c64_i32 : i32
      %137 = tpu.assume_multiple %136, 8 : i32
      %c-1040_i32 = arith.constant -1040 : i32
      %138 = arith.addi %137, %c-1040_i32 : i32
      %139 = arith.index_cast %138 : i32 to index
      %c0_176 = arith.constant 0 : index
      %140 = vector.load %arg9[%139, %c0_176] : memref<4224x24xf32, #tpu.memory_space<vmem>>, vector<128x24xf32>
      %141 = arith.truncf %140 : vector<128x24xf32> to vector<128x24xbf16>
      %cst_177 = arith.constant dense<0.000000e+00> : vector<128x24xf32>
      %142 = tpu.matmul %141, %89, %cst_177 {dimension_numbers = #tpu.dot_dimension_numbers<[1], [0], [0], [1], [0, 0, 1, 1], [], []>} : vector<128x24xbf16>, vector<24x24xbf16>, vector<128x24xf32> -> vector<128x24xf32>
      %c-1024_i32 = arith.constant -1024 : i32
      %143 = arith.addi %137, %c-1024_i32 : i32
      %144 = arith.index_cast %143 : i32 to index
      %c0_178 = arith.constant 0 : index
      %145 = vector.load %arg9[%144, %c0_178] : memref<4224x24xf32, #tpu.memory_space<vmem>>, vector<128x24xf32>
      %146 = arith.truncf %145 : vector<128x24xf32> to vector<128x24xbf16>
      %cst_179 = arith.constant dense<0.000000e+00> : vector<128x24xf32>
      %147 = tpu.matmul %146, %91, %cst_179 {dimension_numbers = #tpu.dot_dimension_numbers<[1], [0], [0], [1], [0, 0, 1, 1], [], []>} : vector<128x24xbf16>, vector<24x24xbf16>, vector<128x24xf32> -> vector<128x24xf32>
      %148 = arith.addf %142, %147 : vector<128x24xf32>
      %c-1008_i32 = arith.constant -1008 : i32
      %149 = arith.addi %137, %c-1008_i32 : i32
      %150 = arith.index_cast %149 : i32 to index
      %c0_180 = arith.constant 0 : index
      %151 = vector.load %arg9[%150, %c0_180] : memref<4224x24xf32, #tpu.memory_space<vmem>>, vector<128x24xf32>
      %152 = arith.truncf %151 : vector<128x24xf32> to vector<128x24xbf16>
      %cst_181 = arith.constant dense<0.000000e+00> : vector<128x24xf32>
      %153 = tpu.matmul %152, %93, %cst_181 {dimension_numbers = #tpu.dot_dimension_numbers<[1], [0], [0], [1], [0, 0, 1, 1], [], []>} : vector<128x24xbf16>, vector<24x24xbf16>, vector<128x24xf32> -> vector<128x24xf32>
      %154 = arith.addf %148, %153 : vector<128x24xf32>
      %c-16_i32 = arith.constant -16 : i32
      %155 = arith.addi %137, %c-16_i32 : i32
      %156 = arith.index_cast %155 : i32 to index
      %c0_182 = arith.constant 0 : index
      %157 = vector.load %arg9[%156, %c0_182] : memref<4224x24xf32, #tpu.memory_space<vmem>>, vector<128x24xf32>
      %158 = arith.truncf %157 : vector<128x24xf32> to vector<128x24xbf16>
      %cst_183 = arith.constant dense<0.000000e+00> : vector<128x24xf32>
      %159 = tpu.matmul %158, %95, %cst_183 {dimension_numbers = #tpu.dot_dimension_numbers<[1], [0], [0], [1], [0, 0, 1, 1], [], []>} : vector<128x24xbf16>, vector<24x24xbf16>, vector<128x24xf32> -> vector<128x24xf32>
      %160 = arith.addf %154, %159 : vector<128x24xf32>
      %c0_i32_184 = arith.constant 0 : i32
      %161 = arith.addi %137, %c0_i32_184 : i32
      %162 = arith.index_cast %161 : i32 to index
      %c0_185 = arith.constant 0 : index
      %163 = vector.load %arg9[%162, %c0_185] : memref<4224x24xf32, #tpu.memory_space<vmem>>, vector<128x24xf32>
      %164 = arith.truncf %163 : vector<128x24xf32> to vector<128x24xbf16>
      %cst_186 = arith.constant dense<0.000000e+00> : vector<128x24xf32>
      %165 = tpu.matmul %164, %97, %cst_186 {dimension_numbers = #tpu.dot_dimension_numbers<[1], [0], [0], [1], [0, 0, 1, 1], [], []>} : vector<128x24xbf16>, vector<24x24xbf16>, vector<128x24xf32> -> vector<128x24xf32>
      %166 = arith.addf %160, %165 : vector<128x24xf32>
      %c16_i32_187 = arith.constant 16 : i32
      %167 = arith.addi %137, %c16_i32_187 : i32
      %168 = arith.index_cast %167 : i32 to index
      %c0_188 = arith.constant 0 : index
      %169 = vector.load %arg9[%168, %c0_188] : memref<4224x24xf32, #tpu.memory_space<vmem>>, vector<128x24xf32>
      %170 = arith.truncf %169 : vector<128x24xf32> to vector<128x24xbf16>
      %cst_189 = arith.constant dense<0.000000e+00> : vector<128x24xf32>
      %171 = tpu.matmul %170, %99, %cst_189 {dimension_numbers = #tpu.dot_dimension_numbers<[1], [0], [0], [1], [0, 0, 1, 1], [], []>} : vector<128x24xbf16>, vector<24x24xbf16>, vector<128x24xf32> -> vector<128x24xf32>
      %172 = arith.addf %166, %171 : vector<128x24xf32>
      %c1008_i32 = arith.constant 1008 : i32
      %173 = arith.addi %137, %c1008_i32 : i32
      %174 = arith.index_cast %173 : i32 to index
      %c0_190 = arith.constant 0 : index
      %175 = vector.load %arg9[%174, %c0_190] : memref<4224x24xf32, #tpu.memory_space<vmem>>, vector<128x24xf32>
      %176 = arith.truncf %175 : vector<128x24xf32> to vector<128x24xbf16>
      %cst_191 = arith.constant dense<0.000000e+00> : vector<128x24xf32>
      %177 = tpu.matmul %176, %101, %cst_191 {dimension_numbers = #tpu.dot_dimension_numbers<[1], [0], [0], [1], [0, 0, 1, 1], [], []>} : vector<128x24xbf16>, vector<24x24xbf16>, vector<128x24xf32> -> vector<128x24xf32>
      %178 = arith.addf %172, %177 : vector<128x24xf32>
      %c1024_i32 = arith.constant 1024 : i32
      %179 = arith.addi %137, %c1024_i32 : i32
      %180 = arith.index_cast %179 : i32 to index
      %c0_192 = arith.constant 0 : index
      %181 = vector.load %arg9[%180, %c0_192] : memref<4224x24xf32, #tpu.memory_space<vmem>>, vector<128x24xf32>
      %182 = arith.truncf %181 : vector<128x24xf32> to vector<128x24xbf16>
      %cst_193 = arith.constant dense<0.000000e+00> : vector<128x24xf32>
      %183 = tpu.matmul %182, %103, %cst_193 {dimension_numbers = #tpu.dot_dimension_numbers<[1], [0], [0], [1], [0, 0, 1, 1], [], []>} : vector<128x24xbf16>, vector<24x24xbf16>, vector<128x24xf32> -> vector<128x24xf32>
      %184 = arith.addf %178, %183 : vector<128x24xf32>
      %c1040_i32 = arith.constant 1040 : i32
      %185 = arith.addi %137, %c1040_i32 : i32
      %186 = arith.index_cast %185 : i32 to index
      %c0_194 = arith.constant 0 : index
      %187 = vector.load %arg9[%186, %c0_194] : memref<4224x24xf32, #tpu.memory_space<vmem>>, vector<128x24xf32>
      %188 = arith.truncf %187 : vector<128x24xf32> to vector<128x24xbf16>
      %cst_195 = arith.constant dense<0.000000e+00> : vector<128x24xf32>
      %189 = tpu.matmul %188, %105, %cst_195 {dimension_numbers = #tpu.dot_dimension_numbers<[1], [0], [0], [1], [0, 0, 1, 1], [], []>} : vector<128x24xbf16>, vector<24x24xbf16>, vector<128x24xf32> -> vector<128x24xf32>
      %190 = arith.addf %184, %189 : vector<128x24xf32>
      %191 = vector.broadcast %106 : vector<1x24xf32> to vector<128x24xf32>
      %192 = arith.mulf %191, %190 : vector<128x24xf32>
      %193 = vector.broadcast %107 : vector<1x24xf32> to vector<128x24xf32>
      %194 = arith.addf %192, %193 : vector<128x24xf32>
      %cst_196 = arith.constant 2.000000e-01 : f32
      %195 = vector.broadcast %cst_196 : f32 to vector<128x24xf32>
      %196 = arith.mulf %195, %194 : vector<128x24xf32>
      %197 = arith.maximumf %194, %196 : vector<128x24xf32>
      %c0_i32_197 = arith.constant 0 : i32
      %198 = arith.addi %137, %c0_i32_197 : i32
      %c16_i32_198 = arith.constant 16 : i32
      %199 = arith.addi %198, %c16_i32_198 : i32
      %200 = tpu.assume_multiple %199, 8 : i32
      %201 = vector.extract_strided_slice %197 {offsets = [16, 0], sizes = [32, 24], strides = [1, 1]} : vector<128x24xf32> to vector<32x24xf32>
      %202 = arith.index_cast %200 : i32 to index
      %c0_199 = arith.constant 0 : index
      %203 = vector.load %arg8[%202, %c0_199] : memref<4224x24xf32, #tpu.memory_space<vmem>>, vector<32x24xf32>
      tpu.vector_store %arg8[%202, %c0_199], %201 {strides = array<i32>} : memref<4224x24xf32, #tpu.memory_space<vmem>>, vector<32x24xf32>,
      %c64_i32_200 = arith.constant 64 : i32
      %204 = arith.addi %137, %c64_i32_200 : i32
      %c16_i32_201 = arith.constant 16 : i32
      %205 = arith.addi %204, %c16_i32_201 : i32
      %206 = tpu.assume_multiple %205, 8 : i32
      %207 = vector.extract_strided_slice %197 {offsets = [80, 0], sizes = [32, 24], strides = [1, 1]} : vector<128x24xf32> to vector<32x24xf32>
      %208 = arith.index_cast %206 : i32 to index
      %c0_202 = arith.constant 0 : index
      %209 = vector.load %arg8[%208, %c0_202] : memref<4224x24xf32, #tpu.memory_space<vmem>>, vector<32x24xf32>
      tpu.vector_store %arg8[%208, %c0_202], %207 {strides = array<i32>} : memref<4224x24xf32, #tpu.memory_space<vmem>>, vector<32x24xf32>,
    }
    %c16_i32_142 = arith.constant 16 : i32
    %c36 = arith.constant 36 : index
    %c0_143 = arith.constant 0 : index
    %c0_144 = arith.constant 0 : index
    %109 = vector.load %arg3[%c36, %c0_143, %c0_144] : memref<45x24x24xbf16, #tpu.memory_space<vmem>>, vector<1x24x24xbf16>
    %110 = vector.shape_cast %109 : vector<1x24x24xbf16> to vector<24x24xbf16>
    %c37 = arith.constant 37 : index
    %c0_145 = arith.constant 0 : index
    %c0_146 = arith.constant 0 : index
    %111 = vector.load %arg3[%c37, %c0_145, %c0_146] : memref<45x24x24xbf16, #tpu.memory_space<vmem>>, vector<1x24x24xbf16>
    %112 = vector.shape_cast %111 : vector<1x24x24xbf16> to vector<24x24xbf16>
    %c38 = arith.constant 38 : index
    %c0_147 = arith.constant 0 : index
    %c0_148 = arith.constant 0 : index
    %113 = vector.load %arg3[%c38, %c0_147, %c0_148] : memref<45x24x24xbf16, #tpu.memory_space<vmem>>, vector<1x24x24xbf16>
    %114 = vector.shape_cast %113 : vector<1x24x24xbf16> to vector<24x24xbf16>
    %c39 = arith.constant 39 : index
    %c0_149 = arith.constant 0 : index
    %c0_150 = arith.constant 0 : index
    %115 = vector.load %arg3[%c39, %c0_149, %c0_150] : memref<45x24x24xbf16, #tpu.memory_space<vmem>>, vector<1x24x24xbf16>
    %116 = vector.shape_cast %115 : vector<1x24x24xbf16> to vector<24x24xbf16>
    %c40 = arith.constant 40 : index
    %c0_151 = arith.constant 0 : index
    %c0_152 = arith.constant 0 : index
    %117 = vector.load %arg3[%c40, %c0_151, %c0_152] : memref<45x24x24xbf16, #tpu.memory_space<vmem>>, vector<1x24x24xbf16>
    %118 = vector.shape_cast %117 : vector<1x24x24xbf16> to vector<24x24xbf16>
    %c41 = arith.constant 41 : index
    %c0_153 = arith.constant 0 : index
    %c0_154 = arith.constant 0 : index
    %119 = vector.load %arg3[%c41, %c0_153, %c0_154] : memref<45x24x24xbf16, #tpu.memory_space<vmem>>, vector<1x24x24xbf16>
    %120 = vector.shape_cast %119 : vector<1x24x24xbf16> to vector<24x24xbf16>
    %c42 = arith.constant 42 : index
    %c0_155 = arith.constant 0 : index
    %c0_156 = arith.constant 0 : index
    %121 = vector.load %arg3[%c42, %c0_155, %c0_156] : memref<45x24x24xbf16, #tpu.memory_space<vmem>>, vector<1x24x24xbf16>
    %122 = vector.shape_cast %121 : vector<1x24x24xbf16> to vector<24x24xbf16>
    %c43 = arith.constant 43 : index
    %c0_157 = arith.constant 0 : index
    %c0_158 = arith.constant 0 : index
    %123 = vector.load %arg3[%c43, %c0_157, %c0_158] : memref<45x24x24xbf16, #tpu.memory_space<vmem>>, vector<1x24x24xbf16>
    %124 = vector.shape_cast %123 : vector<1x24x24xbf16> to vector<24x24xbf16>
    %c44 = arith.constant 44 : index
    %c0_159 = arith.constant 0 : index
    %c0_160 = arith.constant 0 : index
    %125 = vector.load %arg3[%c44, %c0_159, %c0_160] : memref<45x24x24xbf16, #tpu.memory_space<vmem>>, vector<1x24x24xbf16>
    %126 = vector.shape_cast %125 : vector<1x24x24xbf16> to vector<24x24xbf16>
    %c10_161 = arith.constant 10 : index
    %c0_162 = arith.constant 0 : index
    %127 = vector.load %arg4[%c10_161, %c0_162] : memref<12x24xf32, #tpu.memory_space<vmem>>, vector<1x24xf32>
    %c11_163 = arith.constant 11 : index
    %c0_164 = arith.constant 0 : index
    %128 = vector.load %arg4[%c11_163, %c0_164] : memref<12x24xf32, #tpu.memory_space<vmem>>, vector<1x24xf32>
    %c0_165 = arith.constant 0 : index
    %c0_166 = arith.constant 0 : index
    %129 = vector.load %arg5[%c0_165, %c0_166] : memref<24x3xbf16, #tpu.memory_space<vmem>>, vector<24x3xbf16>
    %c0_167 = arith.constant 0 : index
    %c0_168 = arith.constant 0 : index
    %130 = vector.load %arg6[%c0_167, %c0_168] : memref<1x3xf32, #tpu.memory_space<vmem>>, vector<1x3xf32>
    %c0_i32_169 = arith.constant 0 : i32
    %c16_i32_170 = arith.constant 16 : i32
    %131 = arith.addi %c0_i32_169, %c16_i32_170 : i32
    %c1_i32_171 = arith.constant 1 : i32
    scf.for %arg10 = %c0_i32_169 to %131 step %c1_i32_171  : i32 {
      %c1_i32_173 = arith.constant 1 : i32
      %132 = arith.muli %arg10, %c1_i32_173 : i32
      %c0_i32_174 = arith.constant 0 : i32
      %133 = arith.addi %c0_i32_174, %132 : i32
      %c2_i32 = arith.constant 2 : i32
      %134 = arith.muli %133, %c2_i32 : i32
      %c17_i32_175 = arith.constant 17 : i32
      %135 = arith.addi %c17_i32_175, %134 : i32
      %c64_i32 = arith.constant 64 : i32
      %136 = arith.muli %135, %c64_i32 : i32
      %137 = tpu.assume_multiple %136, 8 : i32
      %c-65_i32 = arith.constant -65 : i32
      %138 = arith.addi %137, %c-65_i32 : i32
      %139 = arith.index_cast %138 : i32 to index
      %c0_176 = arith.constant 0 : index
      %140 = vector.load %arg8[%139, %c0_176] : memref<4224x24xf32, #tpu.memory_space<vmem>>, vector<128x24xf32>
      %141 = arith.truncf %140 : vector<128x24xf32> to vector<128x24xbf16>
      %cst_177 = arith.constant dense<0.000000e+00> : vector<128x24xf32>
      %142 = tpu.matmul %141, %110, %cst_177 {dimension_numbers = #tpu.dot_dimension_numbers<[1], [0], [0], [1], [0, 0, 1, 1], [], []>} : vector<128x24xbf16>, vector<24x24xbf16>, vector<128x24xf32> -> vector<128x24xf32>
      %c-64_i32 = arith.constant -64 : i32
      %143 = arith.addi %137, %c-64_i32 : i32
      %144 = arith.index_cast %143 : i32 to index
      %c0_178 = arith.constant 0 : index
      %145 = vector.load %arg8[%144, %c0_178] : memref<4224x24xf32, #tpu.memory_space<vmem>>, vector<128x24xf32>
      %146 = arith.truncf %145 : vector<128x24xf32> to vector<128x24xbf16>
      %cst_179 = arith.constant dense<0.000000e+00> : vector<128x24xf32>
      %147 = tpu.matmul %146, %112, %cst_179 {dimension_numbers = #tpu.dot_dimension_numbers<[1], [0], [0], [1], [0, 0, 1, 1], [], []>} : vector<128x24xbf16>, vector<24x24xbf16>, vector<128x24xf32> -> vector<128x24xf32>
      %148 = arith.addf %142, %147 : vector<128x24xf32>
      %c-63_i32 = arith.constant -63 : i32
      %149 = arith.addi %137, %c-63_i32 : i32
      %150 = arith.index_cast %149 : i32 to index
      %c0_180 = arith.constant 0 : index
      %151 = vector.load %arg8[%150, %c0_180] : memref<4224x24xf32, #tpu.memory_space<vmem>>, vector<128x24xf32>
      %152 = arith.truncf %151 : vector<128x24xf32> to vector<128x24xbf16>
      %cst_181 = arith.constant dense<0.000000e+00> : vector<128x24xf32>
      %153 = tpu.matmul %152, %114, %cst_181 {dimension_numbers = #tpu.dot_dimension_numbers<[1], [0], [0], [1], [0, 0, 1, 1], [], []>} : vector<128x24xbf16>, vector<24x24xbf16>, vector<128x24xf32> -> vector<128x24xf32>
      %154 = arith.addf %148, %153 : vector<128x24xf32>
      %c-1_i32 = arith.constant -1 : i32
      %155 = arith.addi %137, %c-1_i32 : i32
      %156 = arith.index_cast %155 : i32 to index
      %c0_182 = arith.constant 0 : index
      %157 = vector.load %arg8[%156, %c0_182] : memref<4224x24xf32, #tpu.memory_space<vmem>>, vector<128x24xf32>
      %158 = arith.truncf %157 : vector<128x24xf32> to vector<128x24xbf16>
      %cst_183 = arith.constant dense<0.000000e+00> : vector<128x24xf32>
      %159 = tpu.matmul %158, %116, %cst_183 {dimension_numbers = #tpu.dot_dimension_numbers<[1], [0], [0], [1], [0, 0, 1, 1], [], []>} : vector<128x24xbf16>, vector<24x24xbf16>, vector<128x24xf32> -> vector<128x24xf32>
      %160 = arith.addf %154, %159 : vector<128x24xf32>
      %c0_i32_184 = arith.constant 0 : i32
      %161 = arith.addi %137, %c0_i32_184 : i32
      %162 = arith.index_cast %161 : i32 to index
      %c0_185 = arith.constant 0 : index
      %163 = vector.load %arg8[%162, %c0_185] : memref<4224x24xf32, #tpu.memory_space<vmem>>, vector<128x24xf32>
      %164 = arith.truncf %163 : vector<128x24xf32> to vector<128x24xbf16>
      %cst_186 = arith.constant dense<0.000000e+00> : vector<128x24xf32>
      %165 = tpu.matmul %164, %118, %cst_186 {dimension_numbers = #tpu.dot_dimension_numbers<[1], [0], [0], [1], [0, 0, 1, 1], [], []>} : vector<128x24xbf16>, vector<24x24xbf16>, vector<128x24xf32> -> vector<128x24xf32>
      %166 = arith.addf %160, %165 : vector<128x24xf32>
      %c1_i32_187 = arith.constant 1 : i32
      %167 = arith.addi %137, %c1_i32_187 : i32
      %168 = arith.index_cast %167 : i32 to index
      %c0_188 = arith.constant 0 : index
      %169 = vector.load %arg8[%168, %c0_188] : memref<4224x24xf32, #tpu.memory_space<vmem>>, vector<128x24xf32>
      %170 = arith.truncf %169 : vector<128x24xf32> to vector<128x24xbf16>
      %cst_189 = arith.constant dense<0.000000e+00> : vector<128x24xf32>
      %171 = tpu.matmul %170, %120, %cst_189 {dimension_numbers = #tpu.dot_dimension_numbers<[1], [0], [0], [1], [0, 0, 1, 1], [], []>} : vector<128x24xbf16>, vector<24x24xbf16>, vector<128x24xf32> -> vector<128x24xf32>
      %172 = arith.addf %166, %171 : vector<128x24xf32>
      %c63_i32 = arith.constant 63 : i32
      %173 = arith.addi %137, %c63_i32 : i32
      %174 = arith.index_cast %173 : i32 to index
      %c0_190 = arith.constant 0 : index
      %175 = vector.load %arg8[%174, %c0_190] : memref<4224x24xf32, #tpu.memory_space<vmem>>, vector<128x24xf32>
      %176 = arith.truncf %175 : vector<128x24xf32> to vector<128x24xbf16>
      %cst_191 = arith.constant dense<0.000000e+00> : vector<128x24xf32>
      %177 = tpu.matmul %176, %122, %cst_191 {dimension_numbers = #tpu.dot_dimension_numbers<[1], [0], [0], [1], [0, 0, 1, 1], [], []>} : vector<128x24xbf16>, vector<24x24xbf16>, vector<128x24xf32> -> vector<128x24xf32>
      %178 = arith.addf %172, %177 : vector<128x24xf32>
      %c64_i32_192 = arith.constant 64 : i32
      %179 = arith.addi %137, %c64_i32_192 : i32
      %180 = arith.index_cast %179 : i32 to index
      %c0_193 = arith.constant 0 : index
      %181 = vector.load %arg8[%180, %c0_193] : memref<4224x24xf32, #tpu.memory_space<vmem>>, vector<128x24xf32>
      %182 = arith.truncf %181 : vector<128x24xf32> to vector<128x24xbf16>
      %cst_194 = arith.constant dense<0.000000e+00> : vector<128x24xf32>
      %183 = tpu.matmul %182, %124, %cst_194 {dimension_numbers = #tpu.dot_dimension_numbers<[1], [0], [0], [1], [0, 0, 1, 1], [], []>} : vector<128x24xbf16>, vector<24x24xbf16>, vector<128x24xf32> -> vector<128x24xf32>
      %184 = arith.addf %178, %183 : vector<128x24xf32>
      %c65_i32 = arith.constant 65 : i32
      %185 = arith.addi %137, %c65_i32 : i32
      %186 = arith.index_cast %185 : i32 to index
      %c0_195 = arith.constant 0 : index
      %187 = vector.load %arg8[%186, %c0_195] : memref<4224x24xf32, #tpu.memory_space<vmem>>, vector<128x24xf32>
      %188 = arith.truncf %187 : vector<128x24xf32> to vector<128x24xbf16>
      %cst_196 = arith.constant dense<0.000000e+00> : vector<128x24xf32>
      %189 = tpu.matmul %188, %126, %cst_196 {dimension_numbers = #tpu.dot_dimension_numbers<[1], [0], [0], [1], [0, 0, 1, 1], [], []>} : vector<128x24xbf16>, vector<24x24xbf16>, vector<128x24xf32> -> vector<128x24xf32>
      %190 = arith.addf %184, %189 : vector<128x24xf32>
      %191 = vector.broadcast %127 : vector<1x24xf32> to vector<128x24xf32>
      %192 = arith.mulf %191, %190 : vector<128x24xf32>
      %193 = vector.broadcast %128 : vector<1x24xf32> to vector<128x24xf32>
      %194 = arith.addf %192, %193 : vector<128x24xf32>
      %cst_197 = arith.constant 2.000000e-01 : f32
      %195 = vector.broadcast %cst_197 : f32 to vector<128x24xf32>
      %196 = arith.mulf %195, %194 : vector<128x24xf32>
      %197 = arith.maximumf %194, %196 : vector<128x24xf32>
      %198 = arith.truncf %197 : vector<128x24xf32> to vector<128x24xbf16>
      %cst_198 = arith.constant dense<0.000000e+00> : vector<128x3xf32>
      %199 = tpu.matmul %198, %129, %cst_198 {dimension_numbers = #tpu.dot_dimension_numbers<[1], [0], [0], [1], [0, 0, 1, 1], [], []>} : vector<128x24xbf16>, vector<24x3xbf16>, vector<128x3xf32> -> vector<128x3xf32>
      %200 = vector.broadcast %130 : vector<1x3xf32> to vector<128x3xf32>
      %201 = arith.addf %199, %200 : vector<128x3xf32>
      %c2_i32_199 = arith.constant 2 : i32
      %202 = arith.muli %133, %c2_i32_199 : i32
      %c0_i32_200 = arith.constant 0 : i32
      %203 = arith.addi %202, %c0_i32_200 : i32
      %c32_i32 = arith.constant 32 : i32
      %204 = arith.muli %203, %c32_i32 : i32
      %205 = tpu.assume_multiple %204, 8 : i32
      %206 = vector.extract_strided_slice %201 {offsets = [16, 0], sizes = [32, 3], strides = [1, 1]} : vector<128x3xf32> to vector<32x3xf32>
      %c0_201 = arith.constant 0 : index
      %207 = arith.index_cast %205 : i32 to index
      %c0_202 = arith.constant 0 : index
      %208 = vector.load %arg7[%c0_201, %207, %c0_202] : memref<1x1024x3xf32, #tpu.memory_space<vmem>>, vector<1x32x3xf32>
      %209 = vector.shape_cast %208 : vector<1x32x3xf32> to vector<32x3xf32>
      %210 = vector.shape_cast %206 : vector<32x3xf32> to vector<1x32x3xf32>
      tpu.vector_store %arg7[%c0_201, %207, %c0_202], %210 {strides = array<i32>} : memref<1x1024x3xf32, #tpu.memory_space<vmem>>, vector<1x32x3xf32>,
      %c2_i32_203 = arith.constant 2 : i32
      %211 = arith.muli %133, %c2_i32_203 : i32
      %c1_i32_204 = arith.constant 1 : i32
      %212 = arith.addi %211, %c1_i32_204 : i32
      %c32_i32_205 = arith.constant 32 : i32
      %213 = arith.muli %212, %c32_i32_205 : i32
      %214 = tpu.assume_multiple %213, 8 : i32
      %215 = vector.extract_strided_slice %201 {offsets = [80, 0], sizes = [32, 3], strides = [1, 1]} : vector<128x3xf32> to vector<32x3xf32>
      %c0_206 = arith.constant 0 : index
      %216 = arith.index_cast %214 : i32 to index
      %c0_207 = arith.constant 0 : index
      %217 = vector.load %arg7[%c0_206, %216, %c0_207] : memref<1x1024x3xf32, #tpu.memory_space<vmem>>, vector<1x32x3xf32>
      %218 = vector.shape_cast %217 : vector<1x32x3xf32> to vector<32x3xf32>
      %219 = vector.shape_cast %215 : vector<32x3xf32> to vector<1x32x3xf32>
      tpu.vector_store %arg7[%c0_206, %216, %c0_207], %219 {strides = array<i32>} : memref<1x1024x3xf32, #tpu.memory_space<vmem>>, vector<1x32x3xf32>,
    }
    %c16_i32_172 = arith.constant 16 : i32
    return
  }
  func.func @transform_0(%arg0: i32) -> (i32, i32, i32) {
    %c0_i32 = arith.constant 0 : i32
    %c0_i32_0 = arith.constant 0 : i32
    %c0_i32_1 = arith.constant 0 : i32
    return %arg0, %c0_i32, %c0_i32_0 : i32, i32, i32
  }
  func.func @transform_1(%arg0: i32) -> (i32, i32, i32) {
    %c0_i32 = arith.constant 0 : i32
    %c0_i32_0 = arith.constant 0 : i32
    %c0_i32_1 = arith.constant 0 : i32
    %c0_i32_2 = arith.constant 0 : i32
    return %c0_i32, %c0_i32_0, %c0_i32_1 : i32, i32, i32
  }
  func.func @transform_2(%arg0: i32) -> (i32, i32, i32) {
    %c0_i32 = arith.constant 0 : i32
    %c0_i32_0 = arith.constant 0 : i32
    %c0_i32_1 = arith.constant 0 : i32
    %c0_i32_2 = arith.constant 0 : i32
    return %c0_i32, %c0_i32_0, %c0_i32_1 : i32, i32, i32
  }
  func.func @transform_3(%arg0: i32) -> (i32, i32) {
    %c0_i32 = arith.constant 0 : i32
    %c0_i32_0 = arith.constant 0 : i32
    %c0_i32_1 = arith.constant 0 : i32
    return %c0_i32, %c0_i32_0 : i32, i32
  }
  func.func @transform_4(%arg0: i32) -> (i32, i32) {
    %c0_i32 = arith.constant 0 : i32
    %c0_i32_0 = arith.constant 0 : i32
    %c0_i32_1 = arith.constant 0 : i32
    return %c0_i32, %c0_i32_0 : i32, i32
  }
  func.func @transform_5(%arg0: i32) -> (i32, i32) {
    %c0_i32 = arith.constant 0 : i32
    %c0_i32_0 = arith.constant 0 : i32
    %c0_i32_1 = arith.constant 0 : i32
    return %c0_i32, %c0_i32_0 : i32, i32
  }
  func.func @transform_6(%arg0: i32) -> (i32, i32, i32) {
    %c0_i32 = arith.constant 0 : i32
    %c0_i32_0 = arith.constant 0 : i32
    %c0_i32_1 = arith.constant 0 : i32
    return %arg0, %c0_i32, %c0_i32_0 : i32, i32, i32
  }
}

</mosaic_0001>

<llo_original>
// kernel: lrnet_forward.1
$region0: #{lrnet_forward.1}
  #allocation0 [shape = 'u32[]', space=smem, size = 0x4, offset = 0x4, fixed_abs, tag = 'smem constant byte address 0x4 - core index']
  #allocation1 [shape = 'u32[144,128]{1,0:T(1,128)}', space=vmem, size = 0x12000, scoped, tag = 'internal scratch']
  #allocation2 [shape = 'f32[4224,24]{1,0:T(8,128)}', space=vmem, size = 0x210000, scoped, tag = 'scratch operand']
  #allocation3 [shape = 'f32[4224,24]{1,0:T(8,128)}', space=vmem, size = 0x210000, scoped, tag = 'scratch operand']
  %s0 = inlined_call_operand.vmem [shape: f32[2,4224,3], index: 0, kind: input, shape index: {}]
  %s1 = inlined_call_operand.vmem [shape: bf16[9,3,24], index: 1, kind: input, shape index: {}]
  %s2 = inlined_call_operand.vmem [shape: bf16[45,24,24], index: 2, kind: input, shape index: {}]
  %s3 = inlined_call_operand.vmem [shape: f32[12,24], index: 3, kind: input, shape index: {}]
  %s4 = inlined_call_operand.vmem [shape: bf16[24,3], index: 4, kind: input, shape index: {}]
  %s5 = inlined_call_operand.vmem [shape: f32[1,3], index: 5, kind: input, shape index: {}]
  %s6 = inlined_call_operand.vmem [shape: f32[2,1024,3], index: 6, kind: output, shape index: {}]
  %s7 = sld [smem:[#allocation0]]
  $region113: #{lrnet_forward.1} parent=0
    _
  %s9 = ssub.s32 1, %s7
  %s10 = scalar_select 0, %s9, %s7
  loop: start=0, step=1, limit=4
  $region2: #{lrnet_forward.1} parent=0 // loop_pre_header
    _
  $region3: #{lrnet_forward.1} parent=0 // loop_header
    %s12 = sphi 0, %s16
    %p13 = scmp.ge.s32.totalorder %s12, 4
    %s22 = sphi 0, %s24
    %s25 = sphi 0, %s22
    %s26 = sphi 0, %s25
    %s42 = sphi 0, %s26
    %s46 = sphi 0, %s46
    %s48 = sphi 0, %s46
    %s49 = sphi 0, %s48
    %s63 = sphi 0, %s49
    %s67 = sphi 0, %s67
    %s69 = sphi 0, %s67
    %s70 = sphi 0, %s69
    %s84 = sphi 0, %s70
    %s88 = sphi 0, %s88
    %s90 = sphi 0, %s88
    %s91 = sphi 0, %s90
    %s105 = sphi 0, %s91
    %s109 = sphi 0, %s109
    %s111 = sphi 0, %s109
    %s112 = sphi 0, %s111
    %s126 = sphi 0, %s112
    %s130 = sphi 0, %s130
    %s132 = sphi 0, %s130
    %s133 = sphi 0, %s132
    %s147 = sphi 0, %s133
    %s153 = sphi 0, %s155
    %s156 = sphi 0, %s153
    %s157 = sphi 0, %s156
    %s173 = sphi 0, %s157
  $region4: #{lrnet_forward.1} parent=0 // loop_header_branch
    %15 = sbr.rel (%p13) target = $region8
  $region5: #{lrnet_forward.1} parent=0 // loop_body
    %s17 = ssub.s32 %s12, 1
    %s18 = ssub.s32 %s12, 2
    %s19 = sadd.s32 %s12, 1
    %s20 = ssub.s32 %s12, %s19
    %p21 = scmp.eq.s32.totalorder %s20, 0
    %s23 = sadd.s32 %s22, 1
    %s24 = scalar_select %p21, %s22, %s23
    %p27 = pneg %p21
    %p28 = scmp.eq.s32.totalorder %s12, 1
    %p29 = por %p27, %p28
    %p30 = scmp.ne.s32.totalorder %s22, %s25
    %p31 = scmp.eq.s32.totalorder %s12, 0
    %p32 = por %p30, %p31
    %p33 = scmp.ne.s32.totalorder %s22, %s25
    %p34 = scmp.eq.s32.totalorder %s17, 1
    %p35 = por %p33, %p34
    %p36 = scmp.ne.s32.totalorder %s25, %s26
    %p37 = scmp.eq.s32.totalorder %s17, 0
    %p38 = por %p36, %p37
    %p39 = scmp.ne.s32.totalorder %s25, %s26
    %p40 = scmp.eq.s32.totalorder %s18, 1
    %p41 = por %p39, %p40
    %p43 = scmp.ne.s32.totalorder %s26, %s42
    %p44 = scmp.eq.s32.totalorder %s18, 0
    %p45 = por %p43, %p44
    %s47 = sadd.s32 %s46, 1
    %p50 = scmp.eq.s32.totalorder %s12, 1
    %p51 = scmp.ne.s32.totalorder %s46, %s48
    %p52 = scmp.eq.s32.totalorder %s12, 0
    %p53 = por %p51, %p52
    %p54 = scmp.ne.s32.totalorder %s46, %s48
    %p55 = scmp.eq.s32.totalorder %s17, 1
    %p56 = por %p54, %p55
    %p57 = scmp.ne.s32.totalorder %s48, %s49
    %p58 = scmp.eq.s32.totalorder %s17, 0
    %p59 = por %p57, %p58
    %p60 = scmp.ne.s32.totalorder %s48, %s49
    %p61 = scmp.eq.s32.totalorder %s18, 1
    %p62 = por %p60, %p61
    %p64 = scmp.ne.s32.totalorder %s49, %s63
    %p65 = scmp.eq.s32.totalorder %s18, 0
    %p66 = por %p64, %p65
    %s68 = sadd.s32 %s67, 1
    %p71 = scmp.eq.s32.totalorder %s12, 1
    %p72 = scmp.ne.s32.totalorder %s67, %s69
    %p73 = scmp.eq.s32.totalorder %s12, 0
    %p74 = por %p72, %p73
    %p75 = scmp.ne.s32.totalorder %s67, %s69
    %p76 = scmp.eq.s32.totalorder %s17, 1
    %p77 = por %p75, %p76
    %p78 = scmp.ne.s32.totalorder %s69, %s70
    %p79 = scmp.eq.s32.totalorder %s17, 0
    %p80 = por %p78, %p79
    %p81 = scmp.ne.s32.totalorder %s69, %s70
    %p82 = scmp.eq.s32.totalorder %s18, 1
    %p83 = por %p81, %p82
    %p85 = scmp.ne.s32.totalorder %s70, %s84
    %p86 = scmp.eq.s32.totalorder %s18, 0
    %p87 = por %p85, %p86
    %s89 = sadd.s32 %s88, 1
    %p92 = scmp.eq.s32.totalorder %s12, 1
    %p93 = scmp.ne.s32.totalorder %s88, %s90
    %p94 = scmp.eq.s32.totalorder %s12, 0
    %p95 = por %p93, %p94
    %p96 = scmp.ne.s32.totalorder %s88, %s90
    %p97 = scmp.eq.s32.totalorder %s17, 1
    %p98 = por %p96, %p97
    %p99 = scmp.ne.s32.totalorder %s90, %s91
    %p100 = scmp.eq.s32.totalorder %s17, 0
    %p101 = por %p99, %p100
    %p102 = scmp.ne.s32.totalorder %s90, %s91
    %p103 = scmp.eq.s32.totalorder %s18, 1
    %p104 = por %p102, %p103
    %p106 = scmp.ne.s32.totalorder %s91, %s105
    %p107 = scmp.eq.s32.totalorder %s18, 0
    %p108 = por %p106, %p107
    %s110 = sadd.s32 %s109, 1
    %p113 = scmp.eq.s32.totalorder %s12, 1
    %p114 = scmp.ne.s32.totalorder %s109, %s111
    %p115 = scmp.eq.s32.totalorder %s12, 0
    %p116 = por %p114, %p115
    %p117 = scmp.ne.s32.totalorder %s109, %s111
    %p118 = scmp.eq.s32.totalorder %s17, 1
    %p119 = por %p117, %p118
    %p120 = scmp.ne.s32.totalorder %s111, %s112
    %p121 = scmp.eq.s32.totalorder %s17, 0
    %p122 = por %p120, %p121
    %p123 = scmp.ne.s32.totalorder %s111, %s112
    %p124 = scmp.eq.s32.totalorder %s18, 1
    %p125 = por %p123, %p124
    %p127 = scmp.ne.s32.totalorder %s112, %s126
    %p128 = scmp.eq.s32.totalorder %s18, 0
    %p129 = por %p127, %p128
    %s131 = sadd.s32 %s130, 1
    %p134 = scmp.eq.s32.totalorder %s12, 1
    %p135 = scmp.ne.s32.totalorder %s130, %s132
    %p136 = scmp.eq.s32.totalorder %s12, 0
    %p137 = por %p135, %p136
    %p138 = scmp.ne.s32.totalorder %s130, %s132
    %p139 = scmp.eq.s32.totalorder %s17, 1
    %p140 = por %p138, %p139
    %p141 = scmp.ne.s32.totalorder %s132, %s133
    %p142 = scmp.eq.s32.totalorder %s17, 0
    %p143 = por %p141, %p142
    %p144 = scmp.ne.s32.totalorder %s132, %s133
    %p145 = scmp.eq.s32.totalorder %s18, 1
    %p146 = por %p144, %p145
    %p148 = scmp.ne.s32.totalorder %s133, %s147
    %p149 = scmp.eq.s32.totalorder %s18, 0
    %p150 = por %p148, %p149
    %s151 = ssub.s32 %s12, %s19
    %p152 = scmp.eq.s32.totalorder %s151, 0
    %s154 = sadd.s32 %s153, 1
    %s155 = scalar_select %p152, %s153, %s154
    %p158 = pneg %p152
    %p159 = scmp.eq.s32.totalorder %s12, 1
    %p160 = por %p158, %p159
    %p161 = scmp.ne.s32.totalorder %s153, %s156
    %p162 = scmp.eq.s32.totalorder %s12, 0
    %p163 = por %p161, %p162
    %p164 = scmp.ne.s32.totalorder %s153, %s156
    %p165 = scmp.eq.s32.totalorder %s17, 1
    %p166 = por %p164, %p165
    %p167 = scmp.ne.s32.totalorder %s156, %s157
    %p168 = scmp.eq.s32.totalorder %s17, 0
    %p169 = por %p167, %p168
    %p170 = scmp.ne.s32.totalorder %s156, %s157
    %p171 = scmp.eq.s32.totalorder %s18, 1
    %p172 = por %p170, %p171
    %p174 = scmp.ne.s32.totalorder %s157, %s173
    %p175 = scmp.eq.s32.totalorder %s18, 0
    %p176 = por %p174, %p175
    %p177 = scmp.le.s32.totalorder 1, %s12
    %p178 = scmp.lt.s32.totalorder %s12, 3
    %p179 = pnand %p177, %p178
    %p180 = pneg %p179
    // Predicated region
    $region9: #{lrnet_forward.1} parent=5 // pred_check
      _
    $region10: #{lrnet_forward.1} parent=5 // pred_check_branch
      %182 = sbr.rel (%p179) target = $region12
    $region11: #{lrnet_forward.1} parent=5 // pred_region
      %s183 = ssub.s32 %s12, 1
      // Predicated region
      $region13: #{lrnet_forward.1} parent=11 // pred_check
        %p184 = pneg %p59
      $region14: #{lrnet_forward.1} parent=11 // pred_check_branch
        %186 = sbr.rel (%p184) target = $region16
      $region15: #{lrnet_forward.1} parent=11 // pred_region
        _
      $region16: #{lrnet_forward.1} parent=11 // pred_fallthru
        _
      // Predicated region
      $region17: #{lrnet_forward.1} parent=11 // pred_check
        %p187 = pneg %p80
      $region18: #{lrnet_forward.1} parent=11 // pred_check_branch
        %189 = sbr.rel (%p187) target = $region20
      $region19: #{lrnet_forward.1} parent=11 // pred_region
        _
      $region20: #{lrnet_forward.1} parent=11 // pred_fallthru
        _
      // Predicated region
      $region21: #{lrnet_forward.1} parent=11 // pred_check
        %p190 = pneg %p101
      $region22: #{lrnet_forward.1} parent=11 // pred_check_branch
        %192 = sbr.rel (%p190) target = $region24
      $region23: #{lrnet_forward.1} parent=11 // pred_region
        _
      $region24: #{lrnet_forward.1} parent=11 // pred_fallthru
        _
      // Predicated region
      $region25: #{lrnet_forward.1} parent=11 // pred_check
        %p193 = pneg %p122
      $region26: #{lrnet_forward.1} parent=11 // pred_check_branch
        %195 = sbr.rel (%p193) target = $region28
      $region27: #{lrnet_forward.1} parent=11 // pred_region
        _
      $region28: #{lrnet_forward.1} parent=11 // pred_fallthru
        _
      // Predicated region
      $region29: #{lrnet_forward.1} parent=11 // pred_check
        %p196 = pneg %p143
      $region30: #{lrnet_forward.1} parent=11 // pred_check_branch
        %198 = sbr.rel (%p196) target = $region32
      $region31: #{lrnet_forward.1} parent=11 // pred_region
        _
      $region32: #{lrnet_forward.1} parent=11 // pred_fallthru
        _
    $region12: #{lrnet_forward.1} parent=5 // pred_fallthru
      _
    %p199 = scmp.lt.s32.totalorder %s12, 2
    // Predicated region
    $region33: #{lrnet_forward.1} parent=5 // pred_check
      %p200 = pneg %p199
    $region34: #{lrnet_forward.1} parent=5 // pred_check_branch
      %202 = sbr.rel (%p200) target = $region36
    $region35: #{lrnet_forward.1} parent=5 // pred_region
      // Predicated region
      $region37: #{lrnet_forward.1} parent=35 // pred_check
        %p203 = pneg %p32
      $region38: #{lrnet_forward.1} parent=35 // pred_check_branch
        %205 = sbr.rel (%p203) target = $region40
      $region39: #{lrnet_forward.1} parent=35 // pred_region
        %p206 = scmp.lt.s32.totalorder %s12, 1
        %s207 = scalar_select %p206, %s12, 1
        %s208 = smul.addr %s207, 528
        %s209 = smul.addr %s208, 8
        %s210 = scalar_lea.vmem %s0, %s209
      $region40: #{lrnet_forward.1} parent=35 // pred_fallthru
        _
    $region36: #{lrnet_forward.1} parent=5 // pred_fallthru
      _
    %p211 = scmp.le.s32.totalorder 1, %s12
    %p212 = scmp.lt.s32.totalorder %s12, 3
    %p213 = pnand %p211, %p212
    %p214 = pneg %p213
    // Predicated region
    $region41: #{lrnet_forward.1} parent=5 // pred_check
      _
    $region42: #{lrnet_forward.1} parent=5 // pred_check_branch
      %216 = sbr.rel (%p213) target = $region44
    $region43: #{lrnet_forward.1} parent=5 // pred_region
      %s217 = ssub.s32 %s12, 1
      %p218 = scmp.lt.s32.totalorder %s17, 1
      %s219 = scalar_select %p218, %s17, 1
      %s220 = smul.addr %s219, 528
      %s221 = smul.addr %s220, 8
      %s222 = scalar_lea.vmem %s0, %s221
      %p223 = pneg %p38
      %p224 = pneg %p35
      %p225 = pneg %p59
      %p226 = pneg %p56
      %p227 = pneg %p80
      %p228 = pneg %p77
      %p229 = pneg %p101
      %p230 = pneg %p98
      %p231 = pneg %p122
      %p232 = pneg %p119
      %p233 = pneg %p143
      %p234 = pneg %p140
      %p235 = pneg %p169
      %p236 = pneg %p166
      %p237 = scmp.lt.s32.totalorder %s17, 1
      %s238 = scalar_select %p237, %s17, 1
      %s239 = smul.addr %s238, 128
      %s240 = smul.addr %s239, 8
      %s241 = scalar_lea.vmem %s6, %s240
      %p242 = scmp.lt.s32.totalorder %s17, 1
      %s243 = scalar_select %p242, %s17, 1
      %s244 = smul.addr %s243, 528
      %s245 = smul.addr %s244, 8
      %s246 = scalar_lea.vmem %s0, %s245
      %p247 = scmp.lt.s32.totalorder %s17, 1
      %s248 = scalar_select %p247, %s17, 1
      %s249 = smul.addr %s248, 128
      %s250 = smul.addr %s249, 8
      %s251 = scalar_lea.vmem %s6, %s250
      loop: start=0, step=1, limit=17
      $region45: #{lrnet_forward.1} parent=43 // loop_pre_header
        _
      $region46: #{lrnet_forward.1} parent=43 // loop_header
        %s254 = sphi 0, %s258
        %p255 = scmp.ge.s32.totalorder %s254, 17
      $region47: #{lrnet_forward.1} parent=43 // loop_header_branch
        %257 = sbr.rel (%p255) target = $region51
      $region48: #{lrnet_forward.1} parent=43 // loop_body
        %s259 = smul.u32 %s254, 64
        %s260 = sadd.s32 %s254, 49
        %s261 = smul.u32 %s260, 64
        %s262 = scalar_lea.vmem [#allocation2], %s259
        %vm263 = vcmask 195584
        %264 = vst.msk [vmem:[%s262] sm:$0xff] %vm263, 0.0
        %265 = vst.msk [vmem:[%s262 + $0x8] sm:$0xff] %vm263, 0.0
        %266 = vst.msk [vmem:[%s262 + $0x10] sm:$0xff] %vm263, 0.0
        %267 = vst.msk [vmem:[%s262 + $0x18] sm:$0xff] %vm263, 0.0
        %268 = vst.msk [vmem:[%s262 + $0x20] sm:$0xff] %vm263, 0.0
        %269 = vst.msk [vmem:[%s262 + $0x28] sm:$0xff] %vm263, 0.0
        %270 = vst.msk [vmem:[%s262 + $0x30] sm:$0xff] %vm263, 0.0
        %271 = vst.msk [vmem:[%s262 + $0x38] sm:$0xff] %vm263, 0.0
        %s272 = scalar_lea.vmem [#allocation3], %s259
        %273 = vst.msk [vmem:[%s272] sm:$0xff] %vm263, 0.0
        %274 = vst.msk [vmem:[%s272 + $0x8] sm:$0xff] %vm263, 0.0
        %275 = vst.msk [vmem:[%s272 + $0x10] sm:$0xff] %vm263, 0.0
        %276 = vst.msk [vmem:[%s272 + $0x18] sm:$0xff] %vm263, 0.0
        %277 = vst.msk [vmem:[%s272 + $0x20] sm:$0xff] %vm263, 0.0
        %278 = vst.msk [vmem:[%s272 + $0x28] sm:$0xff] %vm263, 0.0
        %279 = vst.msk [vmem:[%s272 + $0x30] sm:$0xff] %vm263, 0.0
        %280 = vst.msk [vmem:[%s272 + $0x38] sm:$0xff] %vm263, 0.0
        %s281 = scalar_lea.vmem [#allocation2], %s261
        %282 = vst.msk [vmem:[%s281] sm:$0xff] %vm263, 0.0
        %283 = vst.msk [vmem:[%s281 + $0x8] sm:$0xff] %vm263, 0.0
        %284 = vst.msk [vmem:[%s281 + $0x10] sm:$0xff] %vm263, 0.0
        %285 = vst.msk [vmem:[%s281 + $0x18] sm:$0xff] %vm263, 0.0
        %286 = vst.msk [vmem:[%s281 + $0x20] sm:$0xff] %vm263, 0.0
        %287 = vst.msk [vmem:[%s281 + $0x28] sm:$0xff] %vm263, 0.0
        %288 = vst.msk [vmem:[%s281 + $0x30] sm:$0xff] %vm263, 0.0
        %289 = vst.msk [vmem:[%s281 + $0x38] sm:$0xff] %vm263, 0.0
        %s290 = scalar_lea.vmem [#allocation3], %s261
        %291 = vst.msk [vmem:[%s290] sm:$0xff] %vm263, 0.0
        %292 = vst.msk [vmem:[%s290 + $0x8] sm:$0xff] %vm263, 0.0
        %293 = vst.msk [vmem:[%s290 + $0x10] sm:$0xff] %vm263, 0.0
        %294 = vst.msk [vmem:[%s290 + $0x18] sm:$0xff] %vm263, 0.0
        %295 = vst.msk [vmem:[%s290 + $0x20] sm:$0xff] %vm263, 0.0
        %296 = vst.msk [vmem:[%s290 + $0x28] sm:$0xff] %vm263, 0.0
        %297 = vst.msk [vmem:[%s290 + $0x30] sm:$0xff] %vm263, 0.0
        %298 = vst.msk [vmem:[%s290 + $0x38] sm:$0xff] %vm263, 0.0
      $region49: #{lrnet_forward.1} parent=43 // loop_footer
        %s258 = sadd.s32 1, %s254
      $region50: #{lrnet_forward.1} parent=43 // loop_footer_branch
        %253 = sbr.rel target = $region46
      $region51: #{lrnet_forward.1} parent=43 // loop_exit
        _
      loop: start=0, step=1, limit=33
      $region52: #{lrnet_forward.1} parent=43 // loop_pre_header
        _
      $region53: #{lrnet_forward.1} parent=43 // loop_header
        %s300 = sphi 0, %s304
        %p301 = scmp.ge.s32.totalorder %s300, 33
      $region54: #{lrnet_forward.1} parent=43 // loop_header_branch
        %303 = sbr.rel (%p301) target = $region58
      $region55: #{lrnet_forward.1} parent=43 // loop_body
        %s305 = sadd.s32 %s300, 17
        %s306 = smul.u32 %s305, 64
        %s307 = ssub.s32 %s306, 16
        %s308 = scalar_lea.vmem [#allocation2], %s307
        %vm309 = vcmask 195584
        %310 = vst.msk [vmem:[%s308] sm:$0xff] %vm309, 0.0
        %311 = vst.msk [vmem:[%s308 + $0x8] sm:$0xff] %vm309, 0.0
        %312 = vst.msk [vmem:[%s308 + $0x10] sm:$0xff] %vm309, 0.0
        %313 = vst.msk [vmem:[%s308 + $0x18] sm:$0xff] %vm309, 0.0
        %s314 = scalar_lea.vmem [#allocation3], %s307
        %315 = vst.msk [vmem:[%s314] sm:$0xff] %vm309, 0.0
        %316 = vst.msk [vmem:[%s314 + $0x8] sm:$0xff] %vm309, 0.0
        %317 = vst.msk [vmem:[%s314 + $0x10] sm:$0xff] %vm309, 0.0
        %318 = vst.msk [vmem:[%s314 + $0x18] sm:$0xff] %vm309, 0.0
      $region56: #{lrnet_forward.1} parent=43 // loop_footer
        %s304 = sadd.s32 1, %s300
      $region57: #{lrnet_forward.1} parent=43 // loop_footer_branch
        %299 = sbr.rel target = $region53
      $region58: #{lrnet_forward.1} parent=43 // loop_exit
        _
      %v319 = vld [vmem:[%s1] sm:$0x3]
      %s320 = scalar_lea.vmem %s1, 2
      %v321 = vld [vmem:[%s320] sm:$0x3]
      %s322 = scalar_lea.vmem %s1, 4
      %v323 = vld [vmem:[%s322] sm:$0x3]
      %s324 = scalar_lea.vmem %s1, 6
      %v325 = vld [vmem:[%s324] sm:$0x3]
      %s326 = scalar_lea.vmem %s1, 8
      %v327 = vld [vmem:[%s326] sm:$0x3]
      %s328 = scalar_lea.vmem %s1, 10
      %v329 = vld [vmem:[%s328] sm:$0x3]
      %s330 = scalar_lea.vmem %s1, 12
      %v331 = vld [vmem:[%s330] sm:$0x3]
      %s332 = scalar_lea.vmem %s1, 14
      %v333 = vld [vmem:[%s332] sm:$0x3]
      %s334 = scalar_lea.vmem %s1, 16
      %v335 = vld [vmem:[%s334] sm:$0x3]
      %v336 = vld [vmem:[%s3] sm:$0x1]
      %v337 = vld [vmem:[%s3 + $0x1] sm:$0x1]
      loop: start=0, step=1, limit=16
      $region59: #{lrnet_forward.1} parent=43 // loop_pre_header
        _
      $region60: #{lrnet_forward.1} parent=43 // loop_header
        %s339 = sphi 0, %s343
        %p340 = scmp.ge.s32.totalorder %s339, 16
      $region61: #{lrnet_forward.1} parent=43 // loop_header_branch
        %342 = sbr.rel (%p340) target = $region65
      $region62: #{lrnet_forward.1} parent=43 // loop_body
        %s344 = smul.u32 %s339, 2
        %s345 = sadd.s32 %s344, 17
        %s346 = smul.u32 %s345, 64
        %s347 = sadd.s32 %s346, 4294967231
        %s348 = scalar_lea.vmem %s246, %s347
        %v349 = vld [vmem:[%s348] sm:$0xff]
        %v350 = vld [vmem:[%s348 + $0x8] sm:$0xff]
        %v351 = vld [vmem:[%s348 + $0x10] sm:$0xff]
        %v352 = vld [vmem:[%s348 + $0x18] sm:$0xff]
        %v353 = vld [vmem:[%s348 + $0x20] sm:$0xff]
        %v354 = vld [vmem:[%s348 + $0x28] sm:$0xff]
        %v355 = vld [vmem:[%s348 + $0x30] sm:$0xff]
        %v356 = vld [vmem:[%s348 + $0x38] sm:$0xff]
        %v357 = vld [vmem:[%s348 + $0x40] sm:$0xff]
        %v358 = vld [vmem:[%s348 + $0x48] sm:$0xff]
        %v359 = vld [vmem:[%s348 + $0x50] sm:$0xff]
        %v360 = vld [vmem:[%s348 + $0x58] sm:$0xff]
        %v361 = vld [vmem:[%s348 + $0x60] sm:$0xff]
        %v362 = vld [vmem:[%s348 + $0x68] sm:$0xff]
        %v363 = vld [vmem:[%s348 + $0x70] sm:$0xff]
        %v364 = vld [vmem:[%s348 + $0x78] sm:$0xff]
        %v365 = vpack.c.bf16 %v350, %v349
        %v366 = vpack.c.bf16 %v352, %v351
        %v367 = vpack.c.bf16 %v354, %v353
        %v368 = vpack.c.bf16 %v356, %v355
        %v369 = vpack.c.bf16 %v358, %v357
        %v370 = vpack.c.bf16 %v360, %v359
        %v371 = vpack.c.bf16 %v362, %v361
        %v372 = vpack.c.bf16 %v364, %v363
        %s373 = sadd.s32 %s346, 4294967232
        %s374 = scalar_lea.vmem %s246, %s373
        %v375 = vld [vmem:[%s374] sm:$0xff]
        %v376 = vld [vmem:[%s374 + $0x8] sm:$0xff]
        %v377 = vld [vmem:[%s374 + $0x10] sm:$0xff]
        %v378 = vld [vmem:[%s374 + $0x18] sm:$0xff]
        %v379 = vld [vmem:[%s374 + $0x20] sm:$0xff]
        %v380 = vld [vmem:[%s374 + $0x28] sm:$0xff]
        %v381 = vld [vmem:[%s374 + $0x30] sm:$0xff]
        %v382 = vld [vmem:[%s374 + $0x38] sm:$0xff]
        %v383 = vld [vmem:[%s374 + $0x40] sm:$0xff]
        %v384 = vld [vmem:[%s374 + $0x48] sm:$0xff]
        %v385 = vld [vmem:[%s374 + $0x50] sm:$0xff]
        %v386 = vld [vmem:[%s374 + $0x58] sm:$0xff]
        %v387 = vld [vmem:[%s374 + $0x60] sm:$0xff]
        %v388 = vld [vmem:[%s374 + $0x68] sm:$0xff]
        %v389 = vld [vmem:[%s374 + $0x70] sm:$0xff]
        %v390 = vld [vmem:[%s374 + $0x78] sm:$0xff]
        %v391 = vpack.c.bf16 %v376, %v375
        %v392 = vpack.c.bf16 %v378, %v377
        %v393 = vpack.c.bf16 %v380, %v379
        %v394 = vpack.c.bf16 %v382, %v381
        %v395 = vpack.c.bf16 %v384, %v383
        %v396 = vpack.c.bf16 %v386, %v385
        %v397 = vpack.c.bf16 %v388, %v387
        %v398 = vpack.c.bf16 %v390, %v389
        %vm399 = vcmask 23552
        %v401 = vsel %vm399, %v391, 0
        %v404 = vsel %vm399, %v392, 0
        %v407 = vsel %vm399, %v393, 0
        %v410 = vsel %vm399, %v394, 0
        %v413 = vsel %vm399, %v395, 0
        %v416 = vsel %vm399, %v396, 0
        %v419 = vsel %vm399, %v397, 0
        %v422 = vsel %vm399, %v398, 0
        %vm424 = vcmask 1040384
        %vm425 = vcmask 1041408
        %v426 = vsel %vm424, 4294967295, 65535
        %v427 = vsel %vm425, %v426, 0
        %v429 = vand.u32 %v321, %v427
        %431 = vmatprep.subr.bf16.mxu0 0
        %432 = vmatpush1.bf16.msra.mxu0 0
        %433 = vmatprep.subr.bf16.mxu0 0
        %434 = vmatpush1.bf16.msra.mxu0 0
        %435 = vmatprep.subr.bf16.mxu0 0
        %436 = vmatpush1.bf16.msra.mxu0 0
        %437 = vmatprep.subr.bf16.mxu0 0
        %438 = vmatpush1.bf16.msra.mxu0 0
        %439 = vmatprep.subr.bf16.mxu0 0
        %440 = vmatpush1.bf16.msra.mxu0 0
        %441 = vmatprep.subr.bf16.mxu0 0
        %442 = vmatpush1.bf16.msra.mxu0 0
        %443 = vmatprep.subr.bf16.mxu0 0
        %444 = vmatpush1.bf16.msra.mxu0 0
        %445 = vmatprep.subr.bf16.mxu0 0
        %446 = vmatpush1.bf16.msra.mxu0 %v429
        %447 = vmatprep.subr.bf16.mxu0 0
        %448 = vmatpush2.bf16.msra.mxu0 0
        %449 = vmatprep.subr.bf16.mxu0 0
        %450 = vmatpush2.bf16.msra.mxu0 0
        %451 = vmatprep.subr.bf16.mxu0 0
        %452 = vmatpush2.bf16.msra.mxu0 0
        %453 = vmatprep.subr.bf16.mxu0 0
        %454 = vmatpush2.bf16.msra.mxu0 0
        %455 = vmatprep.subr.bf16.mxu0 0
        %456 = vmatpush2.bf16.msra.mxu0 0
        %457 = vmatprep.subr.bf16.mxu0 0
        %458 = vmatpush2.bf16.msra.mxu0 0
        %459 = vmatprep.subr.bf16.mxu0 0
        %460 = vmatpush2.bf16.msra.mxu0 0
        %461 = vmatprep.subr.bf16.mxu0 0
        %462 = vmatpush2.bf16.msra.mxu0 0
        %463 = vmatprep.mubr.bf16.mxu0 0
        %464 = vmatmul.mubr.bf16.gmra.mxu0 %v401
        %v465 = vpop.f32.mrf.mxu0
        %v466 = vpop.f32.mrf.mxu0
        %v467 = vpop.f32.mrf.mxu0
        %v468 = vpop.f32.mrf.mxu0
        %469 = vmatprep.mubr.bf16.mxu0 0
        %470 = vmatmul.mubr.bf16.gmra.mxu0 %v404
        %v471 = vpop.f32.mrf.mxu0
        %v472 = vadd.f32 0.0, %v471
        %v473 = vpop.f32.mrf.mxu0
        %v474 = vpop.f32.mrf.mxu0
        %v475 = vadd.f32 0.0, %v474
        %v476 = vpop.f32.mrf.mxu0
        %477 = vmatprep.mubr.bf16.mxu0 0
        %478 = vmatmul.mubr.bf16.gmra.mxu0 %v407
        %v479 = vpop.f32.mrf.mxu0
        %v480 = vadd.f32 0.0, %v479
        %v481 = vpop.f32.mrf.mxu0
        %v482 = vpop.f32.mrf.mxu0
        %v483 = vadd.f32 0.0, %v482
        %v484 = vpop.f32.mrf.mxu0
        %485 = vmatprep.mubr.bf16.mxu0 0
        %486 = vmatmul.mubr.bf16.gmra.mxu0 %v410
        %v487 = vpop.f32.mrf.mxu0
        %v488 = vpop.f32.mrf.mxu0
        %v489 = vpop.f32.mrf.mxu0
        %v490 = vpop.f32.mrf.mxu0
        %491 = vmatprep.mubr.bf16.mxu0 0
        %492 = vmatmul.mubr.bf16.gmra.mxu0 %v413
        %v493 = vpop.f32.mrf.mxu0
        %v494 = vpop.f32.mrf.mxu0
        %v495 = vpop.f32.mrf.mxu0
        %v496 = vpop.f32.mrf.mxu0
        %497 = vmatprep.mubr.bf16.mxu0 0
        %498 = vmatmul.mubr.bf16.gmra.mxu0 %v416
        %v499 = vpop.f32.mrf.mxu0
        %v500 = vadd.f32 0.0, %v499
        %v501 = vpop.f32.mrf.mxu0
        %v502 = vpop.f32.mrf.mxu0
        %v503 = vadd.f32 0.0, %v502
        %v504 = vpop.f32.mrf.mxu0
        %505 = vmatprep.mubr.bf16.mxu0 0
        %506 = vmatmul.mubr.bf16.gmra.mxu0 %v419
        %v507 = vpop.f32.mrf.mxu0
        %v508 = vadd.f32 0.0, %v507
        %v509 = vpop.f32.mrf.mxu0
        %v510 = vpop.f32.mrf.mxu0
        %v511 = vadd.f32 0.0, %v510
        %v512 = vpop.f32.mrf.mxu0
        %513 = vmatprep.mubr.bf16.mxu0 0
        %514 = vmatmul.mubr.bf16.gmra.mxu0 %v422
        %v515 = vpop.f32.mrf.mxu0
        %v516 = vpop.f32.mrf.mxu0
        %v517 = vpop.f32.mrf.mxu0
        %v518 = vpop.f32.mrf.mxu0
        %519 = vdwg.mxu0
        %v521 = vsel %vm399, %v365, 0
        %v524 = vsel %vm399, %v366, 0
        %v527 = vsel %vm399, %v367, 0
        %v530 = vsel %vm399, %v368, 0
        %v533 = vsel %vm399, %v369, 0
        %v536 = vsel %vm399, %v370, 0
        %v539 = vsel %vm399, %v371, 0
        %v542 = vsel %vm399, %v372, 0
        %v545 = vand.u32 %v319, %v427
        %547 = vmatprep.subr.bf16.mxu0 0
        %548 = vmatpush1.bf16.msra.mxu0 0
        %549 = vmatprep.subr.bf16.mxu0 0
        %550 = vmatpush1.bf16.msra.mxu0 0
        %551 = vmatprep.subr.bf16.mxu0 0
        %552 = vmatpush1.bf16.msra.mxu0 0
        %553 = vmatprep.subr.bf16.mxu0 0
        %554 = vmatpush1.bf16.msra.mxu0 0
        %555 = vmatprep.subr.bf16.mxu0 0
        %556 = vmatpush1.bf16.msra.mxu0 0
        %557 = vmatprep.subr.bf16.mxu0 0
        %558 = vmatpush1.bf16.msra.mxu0 0
        %559 = vmatprep.subr.bf16.mxu0 0
        %560 = vmatpush1.bf16.msra.mxu0 0
        %561 = vmatprep.subr.bf16.mxu0 0
        %562 = vmatpush1.bf16.msra.mxu0 %v545
        %563 = vmatprep.subr.bf16.mxu0 0
        %564 = vmatpush2.bf16.msra.mxu0 0
        %565 = vmatprep.subr.bf16.mxu0 0
        %566 = vmatpush2.bf16.msra.mxu0 0
        %567 = vmatprep.subr.bf16.mxu0 0
        %568 = vmatpush2.bf16.msra.mxu0 0
        %569 = vmatprep.subr.bf16.mxu0 0
        %570 = vmatpush2.bf16.msra.mxu0 0
        %571 = vmatprep.subr.bf16.mxu0 0
        %572 = vmatpush2.bf16.msra.mxu0 0
        %573 = vmatprep.subr.bf16.mxu0 0
        %574 = vmatpush2.bf16.msra.mxu0 0
        %575 = vmatprep.subr.bf16.mxu0 0
        %576 = vmatpush2.bf16.msra.mxu0 0
        %577 = vmatprep.subr.bf16.mxu0 0
        %578 = vmatpush2.bf16.msra.mxu0 0
        %579 = vmatprep.mubr.bf16.mxu0 0
        %580 = vmatmul.mubr.bf16.gmra.mxu0 %v521
        %v581 = vpop.f32.mrf.mxu0
        %v582 = vpop.f32.mrf.mxu0
        %v583 = vpop.f32.mrf.mxu0
        %v584 = vpop.f32.mrf.mxu0
        %585 = vmatprep.mubr.bf16.mxu0 0
        %586 = vmatmul.mubr.bf16.gmra.mxu0 %v524
        %v587 = vpop.f32.mrf.mxu0
        %v588 = vadd.f32 %v472, %v587
        %v589 = vpop.f32.mrf.mxu0
        %v590 = vpop.f32.mrf.mxu0
        %v591 = vadd.f32 %v475, %v590
        %v592 = vpop.f32.mrf.mxu0
        %593 = vmatprep.mubr.bf16.mxu0 0
        %594 = vmatmul.mubr.bf16.gmra.mxu0 %v527
        %v595 = vpop.f32.mrf.mxu0
        %v596 = vadd.f32 %v480, %v595
        %v597 = vpop.f32.mrf.mxu0
        %v598 = vpop.f32.mrf.mxu0
        %v599 = vadd.f32 %v483, %v598
        %v600 = vpop.f32.mrf.mxu0
        %601 = vmatprep.mubr.bf16.mxu0 0
        %602 = vmatmul.mubr.bf16.gmra.mxu0 %v530
        %v603 = vpop.f32.mrf.mxu0
        %v604 = vpop.f32.mrf.mxu0
        %v605 = vpop.f32.mrf.mxu0
        %v606 = vpop.f32.mrf.mxu0
        %607 = vmatprep.mubr.bf16.mxu0 0
        %608 = vmatmul.mubr.bf16.gmra.mxu0 %v533
        %v609 = vpop.f32.mrf.mxu0
        %v610 = vpop.f32.mrf.mxu0
        %v611 = vpop.f32.mrf.mxu0
        %v612 = vpop.f32.mrf.mxu0
        %613 = vmatprep.mubr.bf16.mxu0 0
        %614 = vmatmul.mubr.bf16.gmra.mxu0 %v536
        %v615 = vpop.f32.mrf.mxu0
        %v616 = vadd.f32 %v500, %v615
        %v617 = vpop.f32.mrf.mxu0
        %v618 = vpop.f32.mrf.mxu0
        %v619 = vadd.f32 %v503, %v618
        %v620 = vpop.f32.mrf.mxu0
        %621 = vmatprep.mubr.bf16.mxu0 0
        %622 = vmatmul.mubr.bf16.gmra.mxu0 %v539
        %v623 = vpop.f32.mrf.mxu0
        %v624 = vadd.f32 %v508, %v623
        %v625 = vpop.f32.mrf.mxu0
        %v626 = vpop.f32.mrf.mxu0
        %v627 = vadd.f32 %v511, %v626
        %v628 = vpop.f32.mrf.mxu0
        %629 = vmatprep.mubr.bf16.mxu0 0
        %630 = vmatmul.mubr.bf16.gmra.mxu0 %v542
        %v631 = vpop.f32.mrf.mxu0
        %v632 = vpop.f32.mrf.mxu0
        %v633 = vpop.f32.mrf.mxu0
        %v634 = vpop.f32.mrf.mxu0
        %635 = vdwg.mxu0
        %s636 = sadd.s32 %s346, 4294967233
        %s637 = scalar_lea.vmem %s246, %s636
        %v638 = vld [vmem:[%s637] sm:$0xff]
        %v639 = vld [vmem:[%s637 + $0x8] sm:$0xff]
        %v640 = vld [vmem:[%s637 + $0x10] sm:$0xff]
        %v641 = vld [vmem:[%s637 + $0x18] sm:$0xff]
        %v642 = vld [vmem:[%s637 + $0x20] sm:$0xff]
        %v643 = vld [vmem:[%s637 + $0x28] sm:$0xff]
        %v644 = vld [vmem:[%s637 + $0x30] sm:$0xff]
        %v645 = vld [vmem:[%s637 + $0x38] sm:$0xff]
        %v646 = vld [vmem:[%s637 + $0x40] sm:$0xff]
        %v647 = vld [vmem:[%s637 + $0x48] sm:$0xff]
        %v648 = vld [vmem:[%s637 + $0x50] sm:$0xff]
        %v649 = vld [vmem:[%s637 + $0x58] sm:$0xff]
        %v650 = vld [vmem:[%s637 + $0x60] sm:$0xff]
        %v651 = vld [vmem:[%s637 + $0x68] sm:$0xff]
        %v652 = vld [vmem:[%s637 + $0x70] sm:$0xff]
        %v653 = vld [vmem:[%s637 + $0x78] sm:$0xff]
        %v654 = vpack.c.bf16 %v639, %v638
        %v655 = vpack.c.bf16 %v641, %v640
        %v656 = vpack.c.bf16 %v643, %v642
        %v657 = vpack.c.bf16 %v645, %v644
        %v658 = vpack.c.bf16 %v647, %v646
        %v659 = vpack.c.bf16 %v649, %v648
        %v660 = vpack.c.bf16 %v651, %v650
        %v661 = vpack.c.bf16 %v653, %v652
        %v663 = vsel %vm399, %v654, 0
        %v666 = vsel %vm399, %v655, 0
        %v669 = vsel %vm399, %v656, 0
        %v672 = vsel %vm399, %v657, 0
        %v675 = vsel %vm399, %v658, 0
        %v678 = vsel %vm399, %v659, 0
        %v681 = vsel %vm399, %v660, 0
        %v684 = vsel %vm399, %v661, 0
        %v687 = vand.u32 %v323, %v427
        %689 = vmatprep.subr.bf16.mxu0 0
        %690 = vmatpush1.bf16.msra.mxu0 0
        %691 = vmatprep.subr.bf16.mxu0 0
        %692 = vmatpush1.bf16.msra.mxu0 0
        %693 = vmatprep.subr.bf16.mxu0 0
        %694 = vmatpush1.bf16.msra.mxu0 0
        %695 = vmatprep.subr.bf16.mxu0 0
        %696 = vmatpush1.bf16.msra.mxu0 0
        %697 = vmatprep.subr.bf16.mxu0 0
        %698 = vmatpush1.bf16.msra.mxu0 0
        %699 = vmatprep.subr.bf16.mxu0 0
        %700 = vmatpush1.bf16.msra.mxu0 0
        %701 = vmatprep.subr.bf16.mxu0 0
        %702 = vmatpush1.bf16.msra.mxu0 0
        %703 = vmatprep.subr.bf16.mxu0 0
        %704 = vmatpush1.bf16.msra.mxu0 %v687
        %705 = vmatprep.subr.bf16.mxu0 0
        %706 = vmatpush2.bf16.msra.mxu0 0
        %707 = vmatprep.subr.bf16.mxu0 0
        %708 = vmatpush2.bf16.msra.mxu0 0
        %709 = vmatprep.subr.bf16.mxu0 0
        %710 = vmatpush2.bf16.msra.mxu0 0
        %711 = vmatprep.subr.bf16.mxu0 0
        %712 = vmatpush2.bf16.msra.mxu0 0
        %713 = vmatprep.subr.bf16.mxu0 0
        %714 = vmatpush2.bf16.msra.mxu0 0
        %715 = vmatprep.subr.bf16.mxu0 0
        %716 = vmatpush2.bf16.msra.mxu0 0
        %717 = vmatprep.subr.bf16.mxu0 0
        %718 = vmatpush2.bf16.msra.mxu0 0
        %719 = vmatprep.subr.bf16.mxu0 0
        %720 = vmatpush2.bf16.msra.mxu0 0
        %721 = vmatprep.mubr.bf16.mxu0 0
        %722 = vmatmul.mubr.bf16.gmra.mxu0 %v663
        %v723 = vpop.f32.mrf.mxu0
        %v724 = vpop.f32.mrf.mxu0
        %v725 = vpop.f32.mrf.mxu0
        %v726 = vpop.f32.mrf.mxu0
        %727 = vmatprep.mubr.bf16.mxu0 0
        %728 = vmatmul.mubr.bf16.gmra.mxu0 %v666
        %v729 = vpop.f32.mrf.mxu0
        %v730 = vadd.f32 0.0, %v729
        %v731 = vpop.f32.mrf.mxu0
        %v732 = vpop.f32.mrf.mxu0
        %v733 = vadd.f32 0.0, %v732
        %v734 = vpop.f32.mrf.mxu0
        %735 = vmatprep.mubr.bf16.mxu0 0
        %736 = vmatmul.mubr.bf16.gmra.mxu0 %v669
        %v737 = vpop.f32.mrf.mxu0
        %v738 = vadd.f32 0.0, %v737
        %v739 = vpop.f32.mrf.mxu0
        %v740 = vpop.f32.mrf.mxu0
        %v741 = vadd.f32 0.0, %v740
        %v742 = vpop.f32.mrf.mxu0
        %743 = vmatprep.mubr.bf16.mxu0 0
        %744 = vmatmul.mubr.bf16.gmra.mxu0 %v672
        %v745 = vpop.f32.mrf.mxu0
        %v746 = vpop.f32.mrf.mxu0
        %v747 = vpop.f32.mrf.mxu0
        %v748 = vpop.f32.mrf.mxu0
        %749 = vmatprep.mubr.bf16.mxu0 0
        %750 = vmatmul.mubr.bf16.gmra.mxu0 %v675
        %v751 = vpop.f32.mrf.mxu0
        %v752 = vpop.f32.mrf.mxu0
        %v753 = vpop.f32.mrf.mxu0
        %v754 = vpop.f32.mrf.mxu0
        %755 = vmatprep.mubr.bf16.mxu0 0
        %756 = vmatmul.mubr.bf16.gmra.mxu0 %v678
        %v757 = vpop.f32.mrf.mxu0
        %v758 = vadd.f32 0.0, %v757
        %v759 = vpop.f32.mrf.mxu0
        %v760 = vpop.f32.mrf.mxu0
        %v761 = vadd.f32 0.0, %v760
        %v762 = vpop.f32.mrf.mxu0
        %763 = vmatprep.mubr.bf16.mxu0 0
        %764 = vmatmul.mubr.bf16.gmra.mxu0 %v681
        %v765 = vpop.f32.mrf.mxu0
        %v766 = vadd.f32 0.0, %v765
        %v767 = vpop.f32.mrf.mxu0
        %v768 = vpop.f32.mrf.mxu0
        %v769 = vadd.f32 0.0, %v768
        %v770 = vpop.f32.mrf.mxu0
        %771 = vmatprep.mubr.bf16.mxu0 0
        %772 = vmatmul.mubr.bf16.gmra.mxu0 %v684
        %v773 = vpop.f32.mrf.mxu0
        %v774 = vpop.f32.mrf.mxu0
        %v775 = vpop.f32.mrf.mxu0
        %v776 = vpop.f32.mrf.mxu0
        %777 = vdwg.mxu0
        %v778 = vadd.f32 %v588, %v730
        %v779 = vadd.f32 %v591, %v733
        %v780 = vadd.f32 %v596, %v738
        %v781 = vadd.f32 %v599, %v741
        %v782 = vadd.f32 %v616, %v758
        %v783 = vadd.f32 %v619, %v761
        %v784 = vadd.f32 %v624, %v766
        %v785 = vadd.f32 %v627, %v769
        %s786 = sadd.s32 %s346, 4294967295
        %s787 = scalar_lea.vmem %s246, %s786
        %v788 = vld [vmem:[%s787] sm:$0xff]
        %v789 = vld [vmem:[%s787 + $0x8] sm:$0xff]
        %v790 = vld [vmem:[%s787 + $0x10] sm:$0xff]
        %v791 = vld [vmem:[%s787 + $0x18] sm:$0xff]
        %v792 = vld [vmem:[%s787 + $0x20] sm:$0xff]
        %v793 = vld [vmem:[%s787 + $0x28] sm:$0xff]
        %v794 = vld [vmem:[%s787 + $0x30] sm:$0xff]
        %v795 = vld [vmem:[%s787 + $0x38] sm:$0xff]
        %v796 = vld [vmem:[%s787 + $0x40] sm:$0xff]
        %v797 = vld [vmem:[%s787 + $0x48] sm:$0xff]
        %v798 = vld [vmem:[%s787 + $0x50] sm:$0xff]
        %v799 = vld [vmem:[%s787 + $0x58] sm:$0xff]
        %v800 = vld [vmem:[%s787 + $0x60] sm:$0xff]
        %v801 = vld [vmem:[%s787 + $0x68] sm:$0xff]
        %v802 = vld [vmem:[%s787 + $0x70] sm:$0xff]
        %v803 = vld [vmem:[%s787 + $0x78] sm:$0xff]
        %v804 = vpack.c.bf16 %v789, %v788
        %v805 = vpack.c.bf16 %v791, %v790
        %v806 = vpack.c.bf16 %v793, %v792
        %v807 = vpack.c.bf16 %v795, %v794
        %v808 = vpack.c.bf16 %v797, %v796
        %v809 = vpack.c.bf16 %v799, %v798
        %v810 = vpack.c.bf16 %v801, %v800
        %v811 = vpack.c.bf16 %v803, %v802
        %v813 = vsel %vm399, %v804, 0
        %v816 = vsel %vm399, %v805, 0
        %v819 = vsel %vm399, %v806, 0
        %v822 = vsel %vm399, %v807, 0
        %v825 = vsel %vm399, %v808, 0
        %v828 = vsel %vm399, %v809, 0
        %v831 = vsel %vm399, %v810, 0
        %v834 = vsel %vm399, %v811, 0
        %v837 = vand.u32 %v325, %v427
        %839 = vmatprep.subr.bf16.mxu0 0
        %840 = vmatpush1.bf16.msra.mxu0 0
        %841 = vmatprep.subr.bf16.mxu0 0
        %842 = vmatpush1.bf16.msra.mxu0 0
        %843 = vmatprep.subr.bf16.mxu0 0
        %844 = vmatpush1.bf16.msra.mxu0 0
        %845 = vmatprep.subr.bf16.mxu0 0
        %846 = vmatpush1.bf16.msra.mxu0 0
        %847 = vmatprep.subr.bf16.mxu0 0
        %848 = vmatpush1.bf16.msra.mxu0 0
        %849 = vmatprep.subr.bf16.mxu0 0
        %850 = vmatpush1.bf16.msra.mxu0 0
        %851 = vmatprep.subr.bf16.mxu0 0
        %852 = vmatpush1.bf16.msra.mxu0 0
        %853 = vmatprep.subr.bf16.mxu0 0
        %854 = vmatpush1.bf16.msra.mxu0 %v837
        %855 = vmatprep.subr.bf16.mxu0 0
        %856 = vmatpush2.bf16.msra.mxu0 0
        %857 = vmatprep.subr.bf16.mxu0 0
        %858 = vmatpush2.bf16.msra.mxu0 0
        %859 = vmatprep.subr.bf16.mxu0 0
        %860 = vmatpush2.bf16.msra.mxu0 0
        %861 = vmatprep.subr.bf16.mxu0 0
        %862 = vmatpush2.bf16.msra.mxu0 0
        %863 = vmatprep.subr.bf16.mxu0 0
        %864 = vmatpush2.bf16.msra.mxu0 0
        %865 = vmatprep.subr.bf16.mxu0 0
        %866 = vmatpush2.bf16.msra.mxu0 0
        %867 = vmatprep.subr.bf16.mxu0 0
        %868 = vmatpush2.bf16.msra.mxu0 0
        %869 = vmatprep.subr.bf16.mxu0 0
        %870 = vmatpush2.bf16.msra.mxu0 0
        %871 = vmatprep.mubr.bf16.mxu0 0
        %872 = vmatmul.mubr.bf16.gmra.mxu0 %v813
        %v873 = vpop.f32.mrf.mxu0
        %v874 = vpop.f32.mrf.mxu0
        %v875 = vpop.f32.mrf.mxu0
        %v876 = vpop.f32.mrf.mxu0
        %877 = vmatprep.mubr.bf16.mxu0 0
        %878 = vmatmul.mubr.bf16.gmra.mxu0 %v816
        %v879 = vpop.f32.mrf.mxu0
        %v880 = vadd.f32 0.0, %v879
        %v881 = vpop.f32.mrf.mxu0
        %v882 = vpop.f32.mrf.mxu0
        %v883 = vadd.f32 0.0, %v882
        %v884 = vpop.f32.mrf.mxu0
        %885 = vmatprep.mubr.bf16.mxu0 0
        %886 = vmatmul.mubr.bf16.gmra.mxu0 %v819
        %v887 = vpop.f32.mrf.mxu0
        %v888 = vadd.f32 0.0, %v887
        %v889 = vpop.f32.mrf.mxu0
        %v890 = vpop.f32.mrf.mxu0
        %v891 = vadd.f32 0.0, %v890
        %v892 = vpop.f32.mrf.mxu0
        %893 = vmatprep.mubr.bf16.mxu0 0
        %894 = vmatmul.mubr.bf16.gmra.mxu0 %v822
        %v895 = vpop.f32.mrf.mxu0
        %v896 = vpop.f32.mrf.mxu0
        %v897 = vpop.f32.mrf.mxu0
        %v898 = vpop.f32.mrf.mxu0
        %899 = vmatprep.mubr.bf16.mxu0 0
        %900 = vmatmul.mubr.bf16.gmra.mxu0 %v825
        %v901 = vpop.f32.mrf.mxu0
        %v902 = vpop.f32.mrf.mxu0
        %v903 = vpop.f32.mrf.mxu0
        %v904 = vpop.f32.mrf.mxu0
        %905 = vmatprep.mubr.bf16.mxu0 0
        %906 = vmatmul.mubr.bf16.gmra.mxu0 %v828
        %v907 = vpop.f32.mrf.mxu0
        %v908 = vadd.f32 0.0, %v907
        %v909 = vpop.f32.mrf.mxu0
        %v910 = vpop.f32.mrf.mxu0
        %v911 = vadd.f32 0.0, %v910
        %v912 = vpop.f32.mrf.mxu0
        %913 = vmatprep.mubr.bf16.mxu0 0
        %914 = vmatmul.mubr.bf16.gmra.mxu0 %v831
        %v915 = vpop.f32.mrf.mxu0
        %v916 = vadd.f32 0.0, %v915
        %v917 = vpop.f32.mrf.mxu0
        %v918 = vpop.f32.mrf.mxu0
        %v919 = vadd.f32 0.0, %v918
        %v920 = vpop.f32.mrf.mxu0
        %921 = vmatprep.mubr.bf16.mxu0 0
        %922 = vmatmul.mubr.bf16.gmra.mxu0 %v834
        %v923 = vpop.f32.mrf.mxu0
        %v924 = vpop.f32.mrf.mxu0
        %v925 = vpop.f32.mrf.mxu0
        %v926 = vpop.f32.mrf.mxu0
        %927 = vdwg.mxu0
        %v928 = vadd.f32 %v778, %v880
        %v929 = vadd.f32 %v779, %v883
        %v930 = vadd.f32 %v780, %v888
        %v931 = vadd.f32 %v781, %v891
        %v932 = vadd.f32 %v782, %v908
        %v933 = vadd.f32 %v783, %v911
        %v934 = vadd.f32 %v784, %v916
        %v935 = vadd.f32 %v785, %v919
        %s936 = scalar_lea.vmem %s246, %s346
        %v937 = vld [vmem:[%s936] sm:$0xff]
        %v938 = vld [vmem:[%s936 + $0x8] sm:$0xff]
        %v939 = vld [vmem:[%s936 + $0x10] sm:$0xff]
        %v940 = vld [vmem:[%s936 + $0x18] sm:$0xff]
        %v941 = vld [vmem:[%s936 + $0x20] sm:$0xff]
        %v942 = vld [vmem:[%s936 + $0x28] sm:$0xff]
        %v943 = vld [vmem:[%s936 + $0x30] sm:$0xff]
        %v944 = vld [vmem:[%s936 + $0x38] sm:$0xff]
        %v945 = vld [vmem:[%s936 + $0x40] sm:$0xff]
        %v946 = vld [vmem:[%s936 + $0x48] sm:$0xff]
        %v947 = vld [vmem:[%s936 + $0x50] sm:$0xff]
        %v948 = vld [vmem:[%s936 + $0x58] sm:$0xff]
        %v949 = vld [vmem:[%s936 + $0x60] sm:$0xff]
        %v950 = vld [vmem:[%s936 + $0x68] sm:$0xff]
        %v951 = vld [vmem:[%s936 + $0x70] sm:$0xff]
        %v952 = vld [vmem:[%s936 + $0x78] sm:$0xff]
        %v953 = vpack.c.bf16 %v938, %v937
        %v954 = vpack.c.bf16 %v940, %v939
        %v955 = vpack.c.bf16 %v942, %v941
        %v956 = vpack.c.bf16 %v944, %v943
        %v957 = vpack.c.bf16 %v946, %v945
        %v958 = vpack.c.bf16 %v948, %v947
        %v959 = vpack.c.bf16 %v950, %v949
        %v960 = vpack.c.bf16 %v952, %v951
        %v962 = vsel %vm399, %v953, 0
        %v965 = vsel %vm399, %v954, 0
        %v968 = vsel %vm399, %v955, 0
        %v971 = vsel %vm399, %v956, 0
        %v974 = vsel %vm399, %v957, 0
        %v977 = vsel %vm399, %v958, 0
        %v980 = vsel %vm399, %v959, 0
        %v983 = vsel %vm399, %v960, 0
        %v986 = vand.u32 %v327, %v427
        %988 = vmatprep.subr.bf16.mxu0 0
        %989 = vmatpush1.bf16.msra.mxu0 0
        %990 = vmatprep.subr.bf16.mxu0 0
        %991 = vmatpush1.bf16.msra.mxu0 0
        %992 = vmatprep.subr.bf16.mxu0 0
        %993 = vmatpush1.bf16.msra.mxu0 0
        %994 = vmatprep.subr.bf16.mxu0 0
        %995 = vmatpush1.bf16.msra.mxu0 0
        %996 = vmatprep.subr.bf16.mxu0 0
        %997 = vmatpush1.bf16.msra.mxu0 0
        %998 = vmatprep.subr.bf16.mxu0 0
        %999 = vmatpush1.bf16.msra.mxu0 0
        %1000 = vmatprep.subr.bf16.mxu0 0
        %1001 = vmatpush1.bf16.msra.mxu0 0
        %1002 = vmatprep.subr.bf16.mxu0 0
        %1003 = vmatpush1.bf16.msra.mxu0 %v986
        %1004 = vmatprep.subr.bf16.mxu0 0
        %1005 = vmatpush2.bf16.msra.mxu0 0
        %1006 = vmatprep.subr.bf16.mxu0 0
        %1007 = vmatpush2.bf16.msra.mxu0 0
        %1008 = vmatprep.subr.bf16.mxu0 0
        %1009 = vmatpush2.bf16.msra.mxu0 0
        %1010 = vmatprep.subr.bf16.mxu0 0
        %1011 = vmatpush2.bf16.msra.mxu0 0
        %1012 = vmatprep.subr.bf16.mxu0 0
        %1013 = vmatpush2.bf16.msra.mxu0 0
        %1014 = vmatprep.subr.bf16.mxu0 0
        %1015 = vmatpush2.bf16.msra.mxu0 0
        %1016 = vmatprep.subr.bf16.mxu0 0
        %1017 = vmatpush2.bf16.msra.mxu0 0
        %1018 = vmatprep.subr.bf16.mxu0 0
        %1019 = vmatpush2.bf16.msra.mxu0 0
        %1020 = vmatprep.mubr.bf16.mxu0 0
        %1021 = vmatmul.mubr.bf16.gmra.mxu0 %v962
        %v1022 = vpop.f32.mrf.mxu0
        %v1023 = vpop.f32.mrf.mxu0
        %v1024 = vpop.f32.mrf.mxu0
        %v1025 = vpop.f32.mrf.mxu0
        %1026 = vmatprep.mubr.bf16.mxu0 0
        %1027 = vmatmul.mubr.bf16.gmra.mxu0 %v965
        %v1028 = vpop.f32.mrf.mxu0
        %v1029 = vadd.f32 0.0, %v1028
        %v1030 = vpop.f32.mrf.mxu0
        %v1031 = vpop.f32.mrf.mxu0
        %v1032 = vadd.f32 0.0, %v1031
        %v1033 = vpop.f32.mrf.mxu0
        %1034 = vmatprep.mubr.bf16.mxu0 0
        %1035 = vmatmul.mubr.bf16.gmra.mxu0 %v968
        %v1036 = vpop.f32.mrf.mxu0
        %v1037 = vadd.f32 0.0, %v1036
        %v1038 = vpop.f32.mrf.mxu0
        %v1039 = vpop.f32.mrf.mxu0
        %v1040 = vadd.f32 0.0, %v1039
        %v1041 = vpop.f32.mrf.mxu0
        %1042 = vmatprep.mubr.bf16.mxu0 0
        %1043 = vmatmul.mubr.bf16.gmra.mxu0 %v971
        %v1044 = vpop.f32.mrf.mxu0
        %v1045 = vpop.f32.mrf.mxu0
        %v1046 = vpop.f32.mrf.mxu0
        %v1047 = vpop.f32.mrf.mxu0
        %1048 = vmatprep.mubr.bf16.mxu0 0
        %1049 = vmatmul.mubr.bf16.gmra.mxu0 %v974
        %v1050 = vpop.f32.mrf.mxu0
        %v1051 = vpop.f32.mrf.mxu0
        %v1052 = vpop.f32.mrf.mxu0
        %v1053 = vpop.f32.mrf.mxu0
        %1054 = vmatprep.mubr.bf16.mxu0 0
        %1055 = vmatmul.mubr.bf16.gmra.mxu0 %v977
        %v1056 = vpop.f32.mrf.mxu0
        %v1057 = vadd.f32 0.0, %v1056
        %v1058 = vpop.f32.mrf.mxu0
        %v1059 = vpop.f32.mrf.mxu0
        %v1060 = vadd.f32 0.0, %v1059
        %v1061 = vpop.f32.mrf.mxu0
        %1062 = vmatprep.mubr.bf16.mxu0 0
        %1063 = vmatmul.mubr.bf16.gmra.mxu0 %v980
        %v1064 = vpop.f32.mrf.mxu0
        %v1065 = vadd.f32 0.0, %v1064
        %v1066 = vpop.f32.mrf.mxu0
        %v1067 = vpop.f32.mrf.mxu0
        %v1068 = vadd.f32 0.0, %v1067
        %v1069 = vpop.f32.mrf.mxu0
        %1070 = vmatprep.mubr.bf16.mxu0 0
        %1071 = vmatmul.mubr.bf16.gmra.mxu0 %v983
        %v1072 = vpop.f32.mrf.mxu0
        %v1073 = vpop.f32.mrf.mxu0
        %v1074 = vpop.f32.mrf.mxu0
        %v1075 = vpop.f32.mrf.mxu0
        %1076 = vdwg.mxu0
        %v1077 = vadd.f32 %v928, %v1029
        %v1078 = vadd.f32 %v929, %v1032
        %v1079 = vadd.f32 %v930, %v1037
        %v1080 = vadd.f32 %v931, %v1040
        %v1081 = vadd.f32 %v932, %v1057
        %v1082 = vadd.f32 %v933, %v1060
        %v1083 = vadd.f32 %v934, %v1065
        %v1084 = vadd.f32 %v935, %v1068
        %s1085 = sadd.s32 %s346, 1
        %s1086 = scalar_lea.vmem %s246, %s1085
        %v1087 = vld [vmem:[%s1086] sm:$0xff]
        %v1088 = vld [vmem:[%s1086 + $0x8] sm:$0xff]
        %v1089 = vld [vmem:[%s1086 + $0x10] sm:$0xff]
        %v1090 = vld [vmem:[%s1086 + $0x18] sm:$0xff]
        %v1091 = vld [vmem:[%s1086 + $0x20] sm:$0xff]
        %v1092 = vld [vmem:[%s1086 + $0x28] sm:$0xff]
        %v1093 = vld [vmem:[%s1086 + $0x30] sm:$0xff]
        %v1094 = vld [vmem:[%s1086 + $0x38] sm:$0xff]
        %v1095 = vld [vmem:[%s1086 + $0x40] sm:$0xff]
        %v1096 = vld [vmem:[%s1086 + $0x48] sm:$0xff]
        %v1097 = vld [vmem:[%s1086 + $0x50] sm:$0xff]
        %v1098 = vld [vmem:[%s1086 + $0x58] sm:$0xff]
        %v1099 = vld [vmem:[%s1086 + $0x60] sm:$0xff]
        %v1100 = vld [vmem:[%s1086 + $0x68] sm:$0xff]
        %v1101 = vld [vmem:[%s1086 + $0x70] sm:$0xff]
        %v1102 = vld [vmem:[%s1086 + $0x78] sm:$0xff]
        %v1103 = vpack.c.bf16 %v1088, %v1087
        %v1104 = vpack.c.bf16 %v1090, %v1089
        %v1105 = vpack.c.bf16 %v1092, %v1091
        %v1106 = vpack.c.bf16 %v1094, %v1093
        %v1107 = vpack.c.bf16 %v1096, %v1095
        %v1108 = vpack.c.bf16 %v1098, %v1097
        %v1109 = vpack.c.bf16 %v1100, %v1099
        %v1110 = vpack.c.bf16 %v1102, %v1101
        %v1112 = vsel %vm399, %v1103, 0
        %v1115 = vsel %vm399, %v1104, 0
        %v1118 = vsel %vm399, %v1105, 0
        %v1121 = vsel %vm399, %v1106, 0
        %v1124 = vsel %vm399, %v1107, 0
        %v1127 = vsel %vm399, %v1108, 0
        %v1130 = vsel %vm399, %v1109, 0
        %v1133 = vsel %vm399, %v1110, 0
        %v1136 = vand.u32 %v329, %v427
        %1138 = vmatprep.subr.bf16.mxu0 0
        %1139 = vmatpush1.bf16.msra.mxu0 0
        %1140 = vmatprep.subr.bf16.mxu0 0
        %1141 = vmatpush1.bf16.msra.mxu0 0
        %1142 = vmatprep.subr.bf16.mxu0 0
        %1143 = vmatpush1.bf16.msra.mxu0 0
        %1144 = vmatprep.subr.bf16.mxu0 0
        %1145 = vmatpush1.bf16.msra.mxu0 0
        %1146 = vmatprep.subr.bf16.mxu0 0
        %1147 = vmatpush1.bf16.msra.mxu0 0
        %1148 = vmatprep.subr.bf16.mxu0 0
        %1149 = vmatpush1.bf16.msra.mxu0 0
        %1150 = vmatprep.subr.bf16.mxu0 0
        %1151 = vmatpush1.bf16.msra.mxu0 0
        %1152 = vmatprep.subr.bf16.mxu0 0
        %1153 = vmatpush1.bf16.msra.mxu0 %v1136
        %1154 = vmatprep.subr.bf16.mxu0 0
        %1155 = vmatpush2.bf16.msra.mxu0 0
        %1156 = vmatprep.subr.bf16.mxu0 0
        %1157 = vmatpush2.bf16.msra.mxu0 0
        %1158 = vmatprep.subr.bf16.mxu0 0
        %1159 = vmatpush2.bf16.msra.mxu0 0
        %1160 = vmatprep.subr.bf16.mxu0 0
        %1161 = vmatpush2.bf16.msra.mxu0 0
        %1162 = vmatprep.subr.bf16.mxu0 0
        %1163 = vmatpush2.bf16.msra.mxu0 0
        %1164 = vmatprep.subr.bf16.mxu0 0
        %1165 = vmatpush2.bf16.msra.mxu0 0
        %1166 = vmatprep.subr.bf16.mxu0 0
        %1167 = vmatpush2.bf16.msra.mxu0 0
        %1168 = vmatprep.subr.bf16.mxu0 0
        %1169 = vmatpush2.bf16.msra.mxu0 0
        %1170 = vmatprep.mubr.bf16.mxu0 0
        %1171 = vmatmul.mubr.bf16.gmra.mxu0 %v1112
        %v1172 = vpop.f32.mrf.mxu0
        %v1173 = vpop.f32.mrf.mxu0
        %v1174 = vpop.f32.mrf.mxu0
        %v1175 = vpop.f32.mrf.mxu0
        %1176 = vmatprep.mubr.bf16.mxu0 0
        %1177 = vmatmul.mubr.bf16.gmra.mxu0 %v1115
        %v1178 = vpop.f32.mrf.mxu0
        %v1179 = vadd.f32 0.0, %v1178
        %v1180 = vpop.f32.mrf.mxu0
        %v1181 = vpop.f32.mrf.mxu0
        %v1182 = vadd.f32 0.0, %v1181
        %v1183 = vpop.f32.mrf.mxu0
        %1184 = vmatprep.mubr.bf16.mxu0 0
        %1185 = vmatmul.mubr.bf16.gmra.mxu0 %v1118
        %v1186 = vpop.f32.mrf.mxu0
        %v1187 = vadd.f32 0.0, %v1186
        %v1188 = vpop.f32.mrf.mxu0
        %v1189 = vpop.f32.mrf.mxu0
        %v1190 = vadd.f32 0.0, %v1189
        %v1191 = vpop.f32.mrf.mxu0
        %1192 = vmatprep.mubr.bf16.mxu0 0
        %1193 = vmatmul.mubr.bf16.gmra.mxu0 %v1121
        %v1194 = vpop.f32.mrf.mxu0
        %v1195 = vpop.f32.mrf.mxu0
        %v1196 = vpop.f32.mrf.mxu0
        %v1197 = vpop.f32.mrf.mxu0
        %1198 = vmatprep.mubr.bf16.mxu0 0
        %1199 = vmatmul.mubr.bf16.gmra.mxu0 %v1124
        %v1200 = vpop.f32.mrf.mxu0
        %v1201 = vpop.f32.mrf.mxu0
        %v1202 = vpop.f32.mrf.mxu0
        %v1203 = vpop.f32.mrf.mxu0
        %1204 = vmatprep.mubr.bf16.mxu0 0
        %1205 = vmatmul.mubr.bf16.gmra.mxu0 %v1127
        %v1206 = vpop.f32.mrf.mxu0
        %v1207 = vadd.f32 0.0, %v1206
        %v1208 = vpop.f32.mrf.mxu0
        %v1209 = vpop.f32.mrf.mxu0
        %v1210 = vadd.f32 0.0, %v1209
        %v1211 = vpop.f32.mrf.mxu0
        %1212 = vmatprep.mubr.bf16.mxu0 0
        %1213 = vmatmul.mubr.bf16.gmra.mxu0 %v1130
        %v1214 = vpop.f32.mrf.mxu0
        %v1215 = vadd.f32 0.0, %v1214
        %v1216 = vpop.f32.mrf.mxu0
        %v1217 = vpop.f32.mrf.mxu0
        %v1218 = vadd.f32 0.0, %v1217
        %v1219 = vpop.f32.mrf.mxu0
        %1220 = vmatprep.mubr.bf16.mxu0 0
        %1221 = vmatmul.mubr.bf16.gmra.mxu0 %v1133
        %v1222 = vpop.f32.mrf.mxu0
        %v1223 = vpop.f32.mrf.mxu0
        %v1224 = vpop.f32.mrf.mxu0
        %v1225 = vpop.f32.mrf.mxu0
        %1226 = vdwg.mxu0
        %v1227 = vadd.f32 %v1077, %v1179
        %v1228 = vadd.f32 %v1078, %v1182
        %v1229 = vadd.f32 %v1079, %v1187
        %v1230 = vadd.f32 %v1080, %v1190
        %v1231 = vadd.f32 %v1081, %v1207
        %v1232 = vadd.f32 %v1082, %v1210
        %v1233 = vadd.f32 %v1083, %v1215
        %v1234 = vadd.f32 %v1084, %v1218
        %s1235 = sadd.s32 %s346, 63
        %s1236 = scalar_lea.vmem %s246, %s1235
        %v1237 = vld [vmem:[%s1236] sm:$0xff]
        %v1238 = vld [vmem:[%s1236 + $0x8] sm:$0xff]
        %v1239 = vld [vmem:[%s1236 + $0x10] sm:$0xff]
        %v1240 = vld [vmem:[%s1236 + $0x18] sm:$0xff]
        %v1241 = vld [vmem:[%s1236 + $0x20] sm:$0xff]
        %v1242 = vld [vmem:[%s1236 + $0x28] sm:$0xff]
        %v1243 = vld [vmem:[%s1236 + $0x30] sm:$0xff]
        %v1244 = vld [vmem:[%s1236 + $0x38] sm:$0xff]
        %v1245 = vld [vmem:[%s1236 + $0x40] sm:$0xff]
        %v1246 = vld [vmem:[%s1236 + $0x48] sm:$0xff]
        %v1247 = vld [vmem:[%s1236 + $0x50] sm:$0xff]
        %v1248 = vld [vmem:[%s1236 + $0x58] sm:$0xff]
        %v1249 = vld [vmem:[%s1236 + $0x60] sm:$0xff]
        %v1250 = vld [vmem:[%s1236 + $0x68] sm:$0xff]
        %v1251 = vld [vmem:[%s1236 + $0x70] sm:$0xff]
        %v1252 = vld [vmem:[%s1236 + $0x78] sm:$0xff]
        %v1253 = vpack.c.bf16 %v1238, %v1237
        %v1254 = vpack.c.bf16 %v1240, %v1239
        %v1255 = vpack.c.bf16 %v1242, %v1241
        %v1256 = vpack.c.bf16 %v1244, %v1243
        %v1257 = vpack.c.bf16 %v1246, %v1245
        %v1258 = vpack.c.bf16 %v1248, %v1247
        %v1259 = vpack.c.bf16 %v1250, %v1249
        %v1260 = vpack.c.bf16 %v1252, %v1251
        %v1262 = vsel %vm399, %v1253, 0
        %v1265 = vsel %vm399, %v1254, 0
        %v1268 = vsel %vm399, %v1255, 0
        %v1271 = vsel %vm399, %v1256, 0
        %v1274 = vsel %vm399, %v1257, 0
        %v1277 = vsel %vm399, %v1258, 0
        %v1280 = vsel %vm399, %v1259, 0
        %v1283 = vsel %vm399, %v1260, 0
        %v1286 = vand.u32 %v331, %v427
        %1288 = vmatprep.subr.bf16.mxu0 0
        %1289 = vmatpush1.bf16.msra.mxu0 0
        %1290 = vmatprep.subr.bf16.mxu0 0
        %1291 = vmatpush1.bf16.msra.mxu0 0
        %1292 = vmatprep.subr.bf16.mxu0 0
        %1293 = vmatpush1.bf16.msra.mxu0 0
        %1294 = vmatprep.subr.bf16.mxu0 0
        %1295 = vmatpush1.bf16.msra.mxu0 0
        %1296 = vmatprep.subr.bf16.mxu0 0
        %1297 = vmatpush1.bf16.msra.mxu0 0
        %1298 = vmatprep.subr.bf16.mxu0 0
        %1299 = vmatpush1.bf16.msra.mxu0 0
        %1300 = vmatprep.subr.bf16.mxu0 0
        %1301 = vmatpush1.bf16.msra.mxu0 0
        %1302 = vmatprep.subr.bf16.mxu0 0
        %1303 = vmatpush1.bf16.msra.mxu0 %v1286
        %1304 = vmatprep.subr.bf16.mxu0 0
        %1305 = vmatpush2.bf16.msra.mxu0 0
        %1306 = vmatprep.subr.bf16.mxu0 0
        %1307 = vmatpush2.bf16.msra.mxu0 0
        %1308 = vmatprep.subr.bf16.mxu0 0
        %1309 = vmatpush2.bf16.msra.mxu0 0
        %1310 = vmatprep.subr.bf16.mxu0 0
        %1311 = vmatpush2.bf16.msra.mxu0 0
        %1312 = vmatprep.subr.bf16.mxu0 0
        %1313 = vmatpush2.bf16.msra.mxu0 0
        %1314 = vmatprep.subr.bf16.mxu0 0
        %1315 = vmatpush2.bf16.msra.mxu0 0
        %1316 = vmatprep.subr.bf16.mxu0 0
        %1317 = vmatpush2.bf16.msra.mxu0 0
        %1318 = vmatprep.subr.bf16.mxu0 0
        %1319 = vmatpush2.bf16.msra.mxu0 0
        %1320 = vmatprep.mubr.bf16.mxu0 0
        %1321 = vmatmul.mubr.bf16.gmra.mxu0 %v1262
        %v1322 = vpop.f32.mrf.mxu0
        %v1323 = vpop.f32.mrf.mxu0
        %v1324 = vpop.f32.mrf.mxu0
        %v1325 = vpop.f32.mrf.mxu0
        %1326 = vmatprep.mubr.bf16.mxu0 0
        %1327 = vmatmul.mubr.bf16.gmra.mxu0 %v1265
        %v1328 = vpop.f32.mrf.mxu0
        %v1329 = vadd.f32 0.0, %v1328
        %v1330 = vpop.f32.mrf.mxu0
        %v1331 = vpop.f32.mrf.mxu0
        %v1332 = vadd.f32 0.0, %v1331
        %v1333 = vpop.f32.mrf.mxu0
        %1334 = vmatprep.mubr.bf16.mxu0 0
        %1335 = vmatmul.mubr.bf16.gmra.mxu0 %v1268
        %v1336 = vpop.f32.mrf.mxu0
        %v1337 = vadd.f32 0.0, %v1336
        %v1338 = vpop.f32.mrf.mxu0
        %v1339 = vpop.f32.mrf.mxu0
        %v1340 = vadd.f32 0.0, %v1339
        %v1341 = vpop.f32.mrf.mxu0
        %1342 = vmatprep.mubr.bf16.mxu0 0
        %1343 = vmatmul.mubr.bf16.gmra.mxu0 %v1271
        %v1344 = vpop.f32.mrf.mxu0
        %v1345 = vpop.f32.mrf.mxu0
        %v1346 = vpop.f32.mrf.mxu0
        %v1347 = vpop.f32.mrf.mxu0
        %1348 = vmatprep.mubr.bf16.mxu0 0
        %1349 = vmatmul.mubr.bf16.gmra.mxu0 %v1274
        %v1350 = vpop.f32.mrf.mxu0
        %v1351 = vpop.f32.mrf.mxu0
        %v1352 = vpop.f32.mrf.mxu0
        %v1353 = vpop.f32.mrf.mxu0
        %1354 = vmatprep.mubr.bf16.mxu0 0
        %1355 = vmatmul.mubr.bf16.gmra.mxu0 %v1277
        %v1356 = vpop.f32.mrf.mxu0
        %v1357 = vadd.f32 0.0, %v1356
        %v1358 = vpop.f32.mrf.mxu0
        %v1359 = vpop.f32.mrf.mxu0
        %v1360 = vadd.f32 0.0, %v1359
        %v1361 = vpop.f32.mrf.mxu0
        %1362 = vmatprep.mubr.bf16.mxu0 0
        %1363 = vmatmul.mubr.bf16.gmra.mxu0 %v1280
        %v1364 = vpop.f32.mrf.mxu0
        %v1365 = vadd.f32 0.0, %v1364
        %v1366 = vpop.f32.mrf.mxu0
        %v1367 = vpop.f32.mrf.mxu0
        %v1368 = vadd.f32 0.0, %v1367
        %v1369 = vpop.f32.mrf.mxu0
        %1370 = vmatprep.mubr.bf16.mxu0 0
        %1371 = vmatmul.mubr.bf16.gmra.mxu0 %v1283
        %v1372 = vpop.f32.mrf.mxu0
        %v1373 = vpop.f32.mrf.mxu0
        %v1374 = vpop.f32.mrf.mxu0
        %v1375 = vpop.f32.mrf.mxu0
        %1376 = vdwg.mxu0
        %v1377 = vadd.f32 %v1227, %v1329
        %v1378 = vadd.f32 %v1228, %v1332
        %v1379 = vadd.f32 %v1229, %v1337
        %v1380 = vadd.f32 %v1230, %v1340
        %v1381 = vadd.f32 %v1231, %v1357
        %v1382 = vadd.f32 %v1232, %v1360
        %v1383 = vadd.f32 %v1233, %v1365
        %v1384 = vadd.f32 %v1234, %v1368
        %s1385 = sadd.s32 %s346, 64
        %s1386 = scalar_lea.vmem %s246, %s1385
        %v1387 = vld [vmem:[%s1386] sm:$0xff]
        %v1388 = vld [vmem:[%s1386 + $0x8] sm:$0xff]
        %v1389 = vld [vmem:[%s1386 + $0x10] sm:$0xff]
        %v1390 = vld [vmem:[%s1386 + $0x18] sm:$0xff]
        %v1391 = vld [vmem:[%s1386 + $0x20] sm:$0xff]
        %v1392 = vld [vmem:[%s1386 + $0x28] sm:$0xff]
        %v1393 = vld [vmem:[%s1386 + $0x30] sm:$0xff]
        %v1394 = vld [vmem:[%s1386 + $0x38] sm:$0xff]
        %v1395 = vld [vmem:[%s1386 + $0x40] sm:$0xff]
        %v1396 = vld [vmem:[%s1386 + $0x48] sm:$0xff]
        %v1397 = vld [vmem:[%s1386 + $0x50] sm:$0xff]
        %v1398 = vld [vmem:[%s1386 + $0x58] sm:$0xff]
        %v1399 = vld [vmem:[%s1386 + $0x60] sm:$0xff]
        %v1400 = vld [vmem:[%s1386 + $0x68] sm:$0xff]
        %v1401 = vld [vmem:[%s1386 + $0x70] sm:$0xff]
        %v1402 = vld [vmem:[%s1386 + $0x78] sm:$0xff]
        %v1403 = vpack.c.bf16 %v1388, %v1387
        %v1404 = vpack.c.bf16 %v1390, %v1389
        %v1405 = vpack.c.bf16 %v1392, %v1391
        %v1406 = vpack.c.bf16 %v1394, %v1393
        %v1407 = vpack.c.bf16 %v1396, %v1395
        %v1408 = vpack.c.bf16 %v1398, %v1397
        %v1409 = vpack.c.bf16 %v1400, %v1399
        %v1410 = vpack.c.bf16 %v1402, %v1401
        %v1412 = vsel %vm399, %v1403, 0
        %v1415 = vsel %vm399, %v1404, 0
        %v1418 = vsel %vm399, %v1405, 0
        %v1421 = vsel %vm399, %v1406, 0
        %v1424 = vsel %vm399, %v1407, 0
        %v1427 = vsel %vm399, %v1408, 0
        %v1430 = vsel %vm399, %v1409, 0
        %v1433 = vsel %vm399, %v1410, 0
        %v1436 = vand.u32 %v333, %v427
        %1438 = vmatprep.subr.bf16.mxu0 0
        %1439 = vmatpush1.bf16.msra.mxu0 0
        %1440 = vmatprep.subr.bf16.mxu0 0
        %1441 = vmatpush1.bf16.msra.mxu0 0
        %1442 = vmatprep.subr.bf16.mxu0 0
        %1443 = vmatpush1.bf16.msra.mxu0 0
        %1444 = vmatprep.subr.bf16.mxu0 0
        %1445 = vmatpush1.bf16.msra.mxu0 0
        %1446 = vmatprep.subr.bf16.mxu0 0
        %1447 = vmatpush1.bf16.msra.mxu0 0
        %1448 = vmatprep.subr.bf16.mxu0 0
        %1449 = vmatpush1.bf16.msra.mxu0 0
        %1450 = vmatprep.subr.bf16.mxu0 0
        %1451 = vmatpush1.bf16.msra.mxu0 0
        %1452 = vmatprep.subr.bf16.mxu0 0
        %1453 = vmatpush1.bf16.msra.mxu0 %v1436
        %1454 = vmatprep.subr.bf16.mxu0 0
        %1455 = vmatpush2.bf16.msra.mxu0 0
        %1456 = vmatprep.subr.bf16.mxu0 0
        %1457 = vmatpush2.bf16.msra.mxu0 0
        %1458 = vmatprep.subr.bf16.mxu0 0
        %1459 = vmatpush2.bf16.msra.mxu0 0
        %1460 = vmatprep.subr.bf16.mxu0 0
        %1461 = vmatpush2.bf16.msra.mxu0 0
        %1462 = vmatprep.subr.bf16.mxu0 0
        %1463 = vmatpush2.bf16.msra.mxu0 0
        %1464 = vmatprep.subr.bf16.mxu0 0
        %1465 = vmatpush2.bf16.msra.mxu0 0
        %1466 = vmatprep.subr.bf16.mxu0 0
        %1467 = vmatpush2.bf16.msra.mxu0 0
        %1468 = vmatprep.subr.bf16.mxu0 0
        %1469 = vmatpush2.bf16.msra.mxu0 0
        %1470 = vmatprep.mubr.bf16.mxu0 0
        %1471 = vmatmul.mubr.bf16.gmra.mxu0 %v1412
        %v1472 = vpop.f32.mrf.mxu0
        %v1473 = vpop.f32.mrf.mxu0
        %v1474 = vpop.f32.mrf.mxu0
        %v1475 = vpop.f32.mrf.mxu0
        %1476 = vmatprep.mubr.bf16.mxu0 0
        %1477 = vmatmul.mubr.bf16.gmra.mxu0 %v1415
        %v1478 = vpop.f32.mrf.mxu0
        %v1479 = vadd.f32 0.0, %v1478
        %v1480 = vpop.f32.mrf.mxu0
        %v1481 = vpop.f32.mrf.mxu0
        %v1482 = vadd.f32 0.0, %v1481
        %v1483 = vpop.f32.mrf.mxu0
        %1484 = vmatprep.mubr.bf16.mxu0 0
        %1485 = vmatmul.mubr.bf16.gmra.mxu0 %v1418
        %v1486 = vpop.f32.mrf.mxu0
        %v1487 = vadd.f32 0.0, %v1486
        %v1488 = vpop.f32.mrf.mxu0
        %v1489 = vpop.f32.mrf.mxu0
        %v1490 = vadd.f32 0.0, %v1489
        %v1491 = vpop.f32.mrf.mxu0
        %1492 = vmatprep.mubr.bf16.mxu0 0
        %1493 = vmatmul.mubr.bf16.gmra.mxu0 %v1421
        %v1494 = vpop.f32.mrf.mxu0
        %v1495 = vpop.f32.mrf.mxu0
        %v1496 = vpop.f32.mrf.mxu0
        %v1497 = vpop.f32.mrf.mxu0
        %1498 = vmatprep.mubr.bf16.mxu0 0
        %1499 = vmatmul.mubr.bf16.gmra.mxu0 %v1424
        %v1500 = vpop.f32.mrf.mxu0
        %v1501 = vpop.f32.mrf.mxu0
        %v1502 = vpop.f32.mrf.mxu0
        %v1503 = vpop.f32.mrf.mxu0
        %1504 = vmatprep.mubr.bf16.mxu0 0
        %1505 = vmatmul.mubr.bf16.gmra.mxu0 %v1427
        %v1506 = vpop.f32.mrf.mxu0
        %v1507 = vadd.f32 0.0, %v1506
        %v1508 = vpop.f32.mrf.mxu0
        %v1509 = vpop.f32.mrf.mxu0
        %v1510 = vadd.f32 0.0, %v1509
        %v1511 = vpop.f32.mrf.mxu0
        %1512 = vmatprep.mubr.bf16.mxu0 0
        %1513 = vmatmul.mubr.bf16.gmra.mxu0 %v1430
        %v1514 = vpop.f32.mrf.mxu0
        %v1515 = vadd.f32 0.0, %v1514
        %v1516 = vpop.f32.mrf.mxu0
        %v1517 = vpop.f32.mrf.mxu0
        %v1518 = vadd.f32 0.0, %v1517
        %v1519 = vpop.f32.mrf.mxu0
        %1520 = vmatprep.mubr.bf16.mxu0 0
        %1521 = vmatmul.mubr.bf16.gmra.mxu0 %v1433
        %v1522 = vpop.f32.mrf.mxu0
        %v1523 = vpop.f32.mrf.mxu0
        %v1524 = vpop.f32.mrf.mxu0
        %v1525 = vpop.f32.mrf.mxu0
        %1526 = vdwg.mxu0
        %v1527 = vadd.f32 %v1377, %v1479
        %v1528 = vadd.f32 %v1378, %v1482
        %v1529 = vadd.f32 %v1379, %v1487
        %v1530 = vadd.f32 %v1380, %v1490
        %v1531 = vadd.f32 %v1381, %v1507
        %v1532 = vadd.f32 %v1382, %v1510
        %v1533 = vadd.f32 %v1383, %v1515
        %v1534 = vadd.f32 %v1384, %v1518
        %s1535 = sadd.s32 %s346, 65
        %s1536 = scalar_lea.vmem %s246, %s1535
        %v1537 = vld [vmem:[%s1536] sm:$0xff]
        %v1538 = vld [vmem:[%s1536 + $0x8] sm:$0xff]
        %v1539 = vld [vmem:[%s1536 + $0x10] sm:$0xff]
        %v1540 = vld [vmem:[%s1536 + $0x18] sm:$0xff]
        %v1541 = vld [vmem:[%s1536 + $0x20] sm:$0xff]
        %v1542 = vld [vmem:[%s1536 + $0x28] sm:$0xff]
        %v1543 = vld [vmem:[%s1536 + $0x30] sm:$0xff]
        %v1544 = vld [vmem:[%s1536 + $0x38] sm:$0xff]
        %v1545 = vld [vmem:[%s1536 + $0x40] sm:$0xff]
        %v1546 = vld [vmem:[%s1536 + $0x48] sm:$0xff]
        %v1547 = vld [vmem:[%s1536 + $0x50] sm:$0xff]
        %v1548 = vld [vmem:[%s1536 + $0x58] sm:$0xff]
        %v1549 = vld [vmem:[%s1536 + $0x60] sm:$0xff]
        %v1550 = vld [vmem:[%s1536 + $0x68] sm:$0xff]
        %v1551 = vld [vmem:[%s1536 + $0x70] sm:$0xff]
        %v1552 = vld [vmem:[%s1536 + $0x78] sm:$0xff]
        %v1553 = vpack.c.bf16 %v1538, %v1537
        %v1554 = vpack.c.bf16 %v1540, %v1539
        %v1555 = vpack.c.bf16 %v1542, %v1541
        %v1556 = vpack.c.bf16 %v1544, %v1543
        %v1557 = vpack.c.bf16 %v1546, %v1545
        %v1558 = vpack.c.bf16 %v1548, %v1547
        %v1559 = vpack.c.bf16 %v1550, %v1549
        %v1560 = vpack.c.bf16 %v1552, %v1551
        %v1562 = vsel %vm399, %v1553, 0
        %v1565 = vsel %vm399, %v1554, 0
        %v1568 = vsel %vm399, %v1555, 0
        %v1571 = vsel %vm399, %v1556, 0
        %v1574 = vsel %vm399, %v1557, 0
        %v1577 = vsel %vm399, %v1558, 0
        %v1580 = vsel %vm399, %v1559, 0
        %v1583 = vsel %vm399, %v1560, 0
        %v1586 = vand.u32 %v335, %v427
        %1588 = vmatprep.subr.bf16.mxu0 0
        %1589 = vmatpush1.bf16.msra.mxu0 0
        %1590 = vmatprep.subr.bf16.mxu0 0
        %1591 = vmatpush1.bf16.msra.mxu0 0
        %1592 = vmatprep.subr.bf16.mxu0 0
        %1593 = vmatpush1.bf16.msra.mxu0 0
        %1594 = vmatprep.subr.bf16.mxu0 0
        %1595 = vmatpush1.bf16.msra.mxu0 0
        %1596 = vmatprep.subr.bf16.mxu0 0
        %1597 = vmatpush1.bf16.msra.mxu0 0
        %1598 = vmatprep.subr.bf16.mxu0 0
        %1599 = vmatpush1.bf16.msra.mxu0 0
        %1600 = vmatprep.subr.bf16.mxu0 0
        %1601 = vmatpush1.bf16.msra.mxu0 0
        %1602 = vmatprep.subr.bf16.mxu0 0
        %1603 = vmatpush1.bf16.msra.mxu0 %v1586
        %1604 = vmatprep.subr.bf16.mxu0 0
        %1605 = vmatpush2.bf16.msra.mxu0 0
        %1606 = vmatprep.subr.bf16.mxu0 0
        %1607 = vmatpush2.bf16.msra.mxu0 0
        %1608 = vmatprep.subr.bf16.mxu0 0
        %1609 = vmatpush2.bf16.msra.mxu0 0
        %1610 = vmatprep.subr.bf16.mxu0 0
        %1611 = vmatpush2.bf16.msra.mxu0 0
        %1612 = vmatprep.subr.bf16.mxu0 0
        %1613 = vmatpush2.bf16.msra.mxu0 0
        %1614 = vmatprep.subr.bf16.mxu0 0
        %1615 = vmatpush2.bf16.msra.mxu0 0
        %1616 = vmatprep.subr.bf16.mxu0 0
        %1617 = vmatpush2.bf16.msra.mxu0 0
        %1618 = vmatprep.subr.bf16.mxu0 0
        %1619 = vmatpush2.bf16.msra.mxu0 0
        %1620 = vmatprep.mubr.bf16.mxu0 0
        %1621 = vmatmul.mubr.bf16.gmra.mxu0 %v1562
        %v1622 = vpop.f32.mrf.mxu0
        %v1623 = vpop.f32.mrf.mxu0
        %v1624 = vpop.f32.mrf.mxu0
        %v1625 = vpop.f32.mrf.mxu0
        %1626 = vmatprep.mubr.bf16.mxu0 0
        %1627 = vmatmul.mubr.bf16.gmra.mxu0 %v1565
        %v1628 = vpop.f32.mrf.mxu0
        %v1629 = vadd.f32 0.0, %v1628
        %v1630 = vpop.f32.mrf.mxu0
        %v1631 = vpop.f32.mrf.mxu0
        %v1632 = vadd.f32 0.0, %v1631
        %v1633 = vpop.f32.mrf.mxu0
        %1634 = vmatprep.mubr.bf16.mxu0 0
        %1635 = vmatmul.mubr.bf16.gmra.mxu0 %v1568
        %v1636 = vpop.f32.mrf.mxu0
        %v1637 = vadd.f32 0.0, %v1636
        %v1638 = vpop.f32.mrf.mxu0
        %v1639 = vpop.f32.mrf.mxu0
        %v1640 = vadd.f32 0.0, %v1639
        %v1641 = vpop.f32.mrf.mxu0
        %1642 = vmatprep.mubr.bf16.mxu0 0
        %1643 = vmatmul.mubr.bf16.gmra.mxu0 %v1571
        %v1644 = vpop.f32.mrf.mxu0
        %v1645 = vpop.f32.mrf.mxu0
        %v1646 = vpop.f32.mrf.mxu0
        %v1647 = vpop.f32.mrf.mxu0
        %1648 = vmatprep.mubr.bf16.mxu0 0
        %1649 = vmatmul.mubr.bf16.gmra.mxu0 %v1574
        %v1650 = vpop.f32.mrf.mxu0
        %v1651 = vpop.f32.mrf.mxu0
        %v1652 = vpop.f32.mrf.mxu0
        %v1653 = vpop.f32.mrf.mxu0
        %1654 = vmatprep.mubr.bf16.mxu0 0
        %1655 = vmatmul.mubr.bf16.gmra.mxu0 %v1577
        %v1656 = vpop.f32.mrf.mxu0
        %v1657 = vadd.f32 0.0, %v1656
        %v1658 = vpop.f32.mrf.mxu0
        %v1659 = vpop.f32.mrf.mxu0
        %v1660 = vadd.f32 0.0, %v1659
        %v1661 = vpop.f32.mrf.mxu0
        %1662 = vmatprep.mubr.bf16.mxu0 0
        %1663 = vmatmul.mubr.bf16.gmra.mxu0 %v1580
        %v1664 = vpop.f32.mrf.mxu0
        %v1665 = vadd.f32 0.0, %v1664
        %v1666 = vpop.f32.mrf.mxu0
        %v1667 = vpop.f32.mrf.mxu0
        %v1668 = vadd.f32 0.0, %v1667
        %v1669 = vpop.f32.mrf.mxu0
        %1670 = vmatprep.mubr.bf16.mxu0 0
        %1671 = vmatmul.mubr.bf16.gmra.mxu0 %v1583
        %v1672 = vpop.f32.mrf.mxu0
        %v1673 = vpop.f32.mrf.mxu0
        %v1674 = vpop.f32.mrf.mxu0
        %v1675 = vpop.f32.mrf.mxu0
        %1676 = vdwg.mxu0
        %v1677 = vadd.f32 %v1527, %v1629
        %v1678 = vadd.f32 %v1528, %v1632
        %v1679 = vadd.f32 %v1529, %v1637
        %v1680 = vadd.f32 %v1530, %v1640
        %v1681 = vadd.f32 %v1531, %v1657
        %v1682 = vadd.f32 %v1532, %v1660
        %v1683 = vadd.f32 %v1533, %v1665
        %v1684 = vadd.f32 %v1534, %v1668
        %v1685 = vlaneseq
        %v1686 = vshrl.u32 %v1685, 7
        %v1687 = vsub.s32 0, %v1686
        %v1688 = vrot.slane %v336, %v1687
        %v1689 = vmul.f32 %v1688, %v1677
        %v1690 = vmul.f32 %v1688, %v1678
        %v1691 = vmul.f32 %v1688, %v1679
        %v1692 = vmul.f32 %v1688, %v1680
        %v1693 = vmul.f32 %v1688, %v1681
        %v1694 = vmul.f32 %v1688, %v1682
        %v1695 = vmul.f32 %v1688, %v1683
        %v1696 = vmul.f32 %v1688, %v1684
        %v1697 = vlaneseq
        %v1698 = vshrl.u32 %v1697, 7
        %v1699 = vsub.s32 0, %v1698
        %v1700 = vrot.slane %v337, %v1699
        %v1701 = vadd.f32 %v1689, %v1700
        %v1702 = vadd.f32 %v1690, %v1700
        %v1703 = vadd.f32 %v1691, %v1700
        %v1704 = vadd.f32 %v1692, %v1700
        %v1705 = vadd.f32 %v1693, %v1700
        %v1706 = vadd.f32 %v1694, %v1700
        %v1707 = vadd.f32 %v1695, %v1700
        %v1708 = vadd.f32 %v1696, %v1700
        %v1709 = vmul.f32 %v1701, 0.2
        %v1710 = vmul.f32 %v1702, 0.2
        %v1711 = vmul.f32 %v1703, 0.2
        %v1712 = vmul.f32 %v1704, 0.2
        %v1713 = vmul.f32 %v1705, 0.2
        %v1714 = vmul.f32 %v1706, 0.2
        %v1715 = vmul.f32 %v1707, 0.2
        %v1716 = vmul.f32 %v1708, 0.2
        %v1717 = vmax.f32 %v1701, %v1709
        %v1718 = vmax.f32 %v1702, %v1710
        %v1719 = vmax.f32 %v1703, %v1711
        %v1720 = vmax.f32 %v1704, %v1712
        %v1721 = vmax.f32 %v1705, %v1713
        %v1722 = vmax.f32 %v1706, %v1714
        %v1723 = vmax.f32 %v1707, %v1715
        %v1724 = vmax.f32 %v1708, %v1716
        %s1725 = sadd.s32 %s346, 16
        %s1726 = scalar_lea.vmem [#allocation2], %s1725
        %vm1727 = vcmask 195584
        %1728 = vst.msk [vmem:[%s1726] sm:$0xff] %vm1727, %v1717
        %1729 = vst.msk [vmem:[%s1726 + $0x8] sm:$0xff] %vm1727, %v1718
        %1730 = vst.msk [vmem:[%s1726 + $0x10] sm:$0xff] %vm1727, %v1719
        %1731 = vst.msk [vmem:[%s1726 + $0x18] sm:$0xff] %vm1727, %v1720
        %s1732 = sadd.s32 %s346, 80
        %s1733 = scalar_lea.vmem [#allocation2], %s1732
        %1734 = vst.msk [vmem:[%s1733] sm:$0xff] %vm1727, %v1721
        %1735 = vst.msk [vmem:[%s1733 + $0x8] sm:$0xff] %vm1727, %v1722
        %1736 = vst.msk [vmem:[%s1733 + $0x10] sm:$0xff] %vm1727, %v1723
        %1737 = vst.msk [vmem:[%s1733 + $0x18] sm:$0xff] %vm1727, %v1724
      $region63: #{lrnet_forward.1} parent=43 // loop_footer
        %s343 = sadd.s32 1, %s339
      $region64: #{lrnet_forward.1} parent=43 // loop_footer_branch
        %338 = sbr.rel target = $region60
      $region65: #{lrnet_forward.1} parent=43 // loop_exit
        _
      %v1738 = vld [vmem:[%s2] sm:$0xf]
      %v1739 = vld [vmem:[%s2 + $0x4] sm:$0xf]
      %v1740 = vld [vmem:[%s2 + $0x8] sm:$0xf]
      %s1741 = scalar_lea.vmem %s2, 12
      %v1742 = vld [vmem:[%s1741] sm:$0xf]
      %v1743 = vld [vmem:[%s1741 + $0x4] sm:$0xf]
      %v1744 = vld [vmem:[%s1741 + $0x8] sm:$0xf]
      %s1745 = scalar_lea.vmem %s2, 24
      %v1746 = vld [vmem:[%s1745] sm:$0xf]
      %v1747 = vld [vmem:[%s1745 + $0x4] sm:$0xf]
      %v1748 = vld [vmem:[%s1745 + $0x8] sm:$0xf]
      %s1749 = scalar_lea.vmem %s2, 36
      %v1750 = vld [vmem:[%s1749] sm:$0xf]
      %v1751 = vld [vmem:[%s1749 + $0x4] sm:$0xf]
      %v1752 = vld [vmem:[%s1749 + $0x8] sm:$0xf]
      %s1753 = scalar_lea.vmem %s2, 48
      %v1754 = vld [vmem:[%s1753] sm:$0xf]
      %v1755 = vld [vmem:[%s1753 + $0x4] sm:$0xf]
      %v1756 = vld [vmem:[%s1753 + $0x8] sm:$0xf]
      %s1757 = scalar_lea.vmem %s2, 60
      %v1758 = vld [vmem:[%s1757] sm:$0xf]
      %v1759 = vld [vmem:[%s1757 + $0x4] sm:$0xf]
      %v1760 = vld [vmem:[%s1757 + $0x8] sm:$0xf]
      %s1761 = scalar_lea.vmem %s2, 72
      %v1762 = vld [vmem:[%s1761] sm:$0xf]
      %v1763 = vld [vmem:[%s1761 + $0x4] sm:$0xf]
      %v1764 = vld [vmem:[%s1761 + $0x8] sm:$0xf]
      %s1765 = scalar_lea.vmem %s2, 84
      %v1766 = vld [vmem:[%s1765] sm:$0xf]
      %v1767 = vld [vmem:[%s1765 + $0x4] sm:$0xf]
      %v1768 = vld [vmem:[%s1765 + $0x8] sm:$0xf]
      %s1769 = scalar_lea.vmem %s2, 96
      %v1770 = vld [vmem:[%s1769] sm:$0xf]
      %v1771 = vld [vmem:[%s1769 + $0x4] sm:$0xf]
      %v1772 = vld [vmem:[%s1769 + $0x8] sm:$0xf]
      %v1773 = vld [vmem:[%s3 + $0x2] sm:$0x1]
      %v1774 = vld [vmem:[%s3 + $0x3] sm:$0x1]
      loop: start=0, step=1, limit=16
      $region66: #{lrnet_forward.1} parent=43 // loop_pre_header
        _
      $region67: #{lrnet_forward.1} parent=43 // loop_header
        %s1776 = sphi 0, %s1780
        %p1777 = scmp.ge.s32.totalorder %s1776, 16
      $region68: #{lrnet_forward.1} parent=43 // loop_header_branch
        %1779 = sbr.rel (%p1777) target = $region72
      $region69: #{lrnet_forward.1} parent=43 // loop_body
        %s1781 = smul.u32 %s1776, 2
        %s1782 = sadd.s32 %s1781, 17
        %s1783 = smul.u32 %s1782, 64
        %s1784 = sadd.s32 %s1783, 4294967166
        %s1785 = scalar_lea.vmem [#allocation2], %s1784
        %v1786 = vld [vmem:[%s1785] sm:$0xff]
        %v1787 = vld [vmem:[%s1785 + $0x8] sm:$0xff]
        %v1788 = vld [vmem:[%s1785 + $0x10] sm:$0xff]
        %v1789 = vld [vmem:[%s1785 + $0x18] sm:$0xff]
        %v1790 = vld [vmem:[%s1785 + $0x20] sm:$0xff]
        %v1791 = vld [vmem:[%s1785 + $0x28] sm:$0xff]
        %v1792 = vld [vmem:[%s1785 + $0x30] sm:$0xff]
        %v1793 = vld [vmem:[%s1785 + $0x38] sm:$0xff]
        %v1794 = vld [vmem:[%s1785 + $0x40] sm:$0xff]
        %v1795 = vld [vmem:[%s1785 + $0x48] sm:$0xff]
        %v1796 = vld [vmem:[%s1785 + $0x50] sm:$0xff]
        %v1797 = vld [vmem:[%s1785 + $0x58] sm:$0xff]
        %v1798 = vld [vmem:[%s1785 + $0x60] sm:$0xff]
        %v1799 = vld [vmem:[%s1785 + $0x68] sm:$0xff]
        %v1800 = vld [vmem:[%s1785 + $0x70] sm:$0xff]
        %v1801 = vld [vmem:[%s1785 + $0x78] sm:$0xff]
        %v1802 = vpack.c.bf16 %v1787, %v1786
        %v1803 = vpack.c.bf16 %v1789, %v1788
        %v1804 = vpack.c.bf16 %v1791, %v1790
        %v1805 = vpack.c.bf16 %v1793, %v1792
        %v1806 = vpack.c.bf16 %v1795, %v1794
        %v1807 = vpack.c.bf16 %v1797, %v1796
        %v1808 = vpack.c.bf16 %v1799, %v1798
        %v1809 = vpack.c.bf16 %v1801, %v1800
        %s1810 = sadd.s32 %s1783, 4294967168
        %s1811 = scalar_lea.vmem [#allocation2], %s1810
        %v1812 = vld [vmem:[%s1811] sm:$0xff]
        %v1813 = vld [vmem:[%s1811 + $0x8] sm:$0xff]
        %v1814 = vld [vmem:[%s1811 + $0x10] sm:$0xff]
        %v1815 = vld [vmem:[%s1811 + $0x18] sm:$0xff]
        %v1816 = vld [vmem:[%s1811 + $0x20] sm:$0xff]
        %v1817 = vld [vmem:[%s1811 + $0x28] sm:$0xff]
        %v1818 = vld [vmem:[%s1811 + $0x30] sm:$0xff]
        %v1819 = vld [vmem:[%s1811 + $0x38] sm:$0xff]
        %v1820 = vld [vmem:[%s1811 + $0x40] sm:$0xff]
        %v1821 = vld [vmem:[%s1811 + $0x48] sm:$0xff]
        %v1822 = vld [vmem:[%s1811 + $0x50] sm:$0xff]
        %v1823 = vld [vmem:[%s1811 + $0x58] sm:$0xff]
        %v1824 = vld [vmem:[%s1811 + $0x60] sm:$0xff]
        %v1825 = vld [vmem:[%s1811 + $0x68] sm:$0xff]
        %v1826 = vld [vmem:[%s1811 + $0x70] sm:$0xff]
        %v1827 = vld [vmem:[%s1811 + $0x78] sm:$0xff]
        %v1828 = vpack.c.bf16 %v1813, %v1812
        %v1829 = vpack.c.bf16 %v1815, %v1814
        %v1830 = vpack.c.bf16 %v1817, %v1816
        %v1831 = vpack.c.bf16 %v1819, %v1818
        %v1832 = vpack.c.bf16 %v1821, %v1820
        %v1833 = vpack.c.bf16 %v1823, %v1822
        %v1834 = vpack.c.bf16 %v1825, %v1824
        %v1835 = vpack.c.bf16 %v1827, %v1826
        %v1839 = vunpack.c.l.b16 %v1742
        %v1840 = vunpack.c.l.b16 %v1743
        %v1841 = vunpack.c.l.b16 %v1744
        %v1842 = vpack.c.b16 %v1840, %v1839
        %v1843 = vpack.c.b16 %v1841, %v1841
        %vm1845 = vcmask 195584
        %v1847 = vsel %vm1845, %v1828, 0
        %v1850 = vsel %vm1845, %v1829, 0
        %v1853 = vsel %vm1845, %v1830, 0
        %v1856 = vsel %vm1845, %v1831, 0
        %v1859 = vsel %vm1845, %v1832, 0
        %v1862 = vsel %vm1845, %v1833, 0
        %v1865 = vsel %vm1845, %v1834, 0
        %v1868 = vsel %vm1845, %v1835, 0
        %vm1870 = vcmask 1043456
        %v1872 = vsel %vm1870, %v1843, 0
        %1874 = vmatprep.subr.bf16.mxu0 0
        %1875 = vmatpush1.bf16.msra.mxu0 0
        %1876 = vmatprep.subr.bf16.mxu0 0
        %1877 = vmatpush1.bf16.msra.mxu0 0
        %1878 = vmatprep.subr.bf16.mxu0 0
        %1879 = vmatpush1.bf16.msra.mxu0 0
        %1880 = vmatprep.subr.bf16.mxu0 0
        %1881 = vmatpush1.bf16.msra.mxu0 0
        %1882 = vmatprep.subr.bf16.mxu0 0
        %1883 = vmatpush1.bf16.msra.mxu0 0
        %1884 = vmatprep.subr.bf16.mxu0 0
        %1885 = vmatpush1.bf16.msra.mxu0 0
        %1886 = vmatprep.subr.bf16.mxu0 0
        %1887 = vmatpush1.bf16.msra.mxu0 %v1872
        %1888 = vmatprep.subr.bf16.mxu0 0
        %1889 = vmatpush1.bf16.msra.mxu0 %v1842
        %1890 = vmatprep.subr.bf16.mxu0 0
        %1891 = vmatpush2.bf16.msra.mxu0 0
        %1892 = vmatprep.subr.bf16.mxu0 0
        %1893 = vmatpush2.bf16.msra.mxu0 0
        %1894 = vmatprep.subr.bf16.mxu0 0
        %1895 = vmatpush2.bf16.msra.mxu0 0
        %1896 = vmatprep.subr.bf16.mxu0 0
        %1897 = vmatpush2.bf16.msra.mxu0 0
        %1898 = vmatprep.subr.bf16.mxu0 0
        %1899 = vmatpush2.bf16.msra.mxu0 0
        %1900 = vmatprep.subr.bf16.mxu0 0
        %1901 = vmatpush2.bf16.msra.mxu0 0
        %1902 = vmatprep.subr.bf16.mxu0 0
        %1903 = vmatpush2.bf16.msra.mxu0 0
        %1904 = vmatprep.subr.bf16.mxu0 0
        %1905 = vmatpush2.bf16.msra.mxu0 0
        %1906 = vmatprep.mubr.bf16.mxu0 0
        %1907 = vmatmul.mubr.bf16.gmra.mxu0 %v1847
        %v1908 = vpop.f32.mrf.mxu0
        %v1909 = vpop.f32.mrf.mxu0
        %v1910 = vpop.f32.mrf.mxu0
        %v1911 = vpop.f32.mrf.mxu0
        %1912 = vmatprep.mubr.bf16.mxu0 0
        %1913 = vmatmul.mubr.bf16.gmra.mxu0 %v1850
        %v1914 = vpop.f32.mrf.mxu0
        %v1915 = vadd.f32 0.0, %v1914
        %v1916 = vpop.f32.mrf.mxu0
        %v1917 = vpop.f32.mrf.mxu0
        %v1918 = vadd.f32 0.0, %v1917
        %v1919 = vpop.f32.mrf.mxu0
        %1920 = vmatprep.mubr.bf16.mxu0 0
        %1921 = vmatmul.mubr.bf16.gmra.mxu0 %v1853
        %v1922 = vpop.f32.mrf.mxu0
        %v1923 = vadd.f32 0.0, %v1922
        %v1924 = vpop.f32.mrf.mxu0
        %v1925 = vpop.f32.mrf.mxu0
        %v1926 = vadd.f32 0.0, %v1925
        %v1927 = vpop.f32.mrf.mxu0
        %1928 = vmatprep.mubr.bf16.mxu0 0
        %1929 = vmatmul.mubr.bf16.gmra.mxu0 %v1856
        %v1930 = vpop.f32.mrf.mxu0
        %v1931 = vpop.f32.mrf.mxu0
        %v1932 = vpop.f32.mrf.mxu0
        %v1933 = vpop.f32.mrf.mxu0
        %1934 = vmatprep.mubr.bf16.mxu0 0
        %1935 = vmatmul.mubr.bf16.gmra.mxu0 %v1859
        %v1936 = vpop.f32.mrf.mxu0
        %v1937 = vpop.f32.mrf.mxu0
        %v1938 = vpop.f32.mrf.mxu0
        %v1939 = vpop.f32.mrf.mxu0
        %1940 = vmatprep.mubr.bf16.mxu0 0
        %1941 = vmatmul.mubr.bf16.gmra.mxu0 %v1862
        %v1942 = vpop.f32.mrf.mxu0
        %v1943 = vadd.f32 0.0, %v1942
        %v1944 = vpop.f32.mrf.mxu0
        %v1945 = vpop.f32.mrf.mxu0
        %v1946 = vadd.f32 0.0, %v1945
        %v1947 = vpop.f32.mrf.mxu0
        %1948 = vmatprep.mubr.bf16.mxu0 0
        %1949 = vmatmul.mubr.bf16.gmra.mxu0 %v1865
        %v1950 = vpop.f32.mrf.mxu0
        %v1951 = vadd.f32 0.0, %v1950
        %v1952 = vpop.f32.mrf.mxu0
        %v1953 = vpop.f32.mrf.mxu0
        %v1954 = vadd.f32 0.0, %v1953
        %v1955 = vpop.f32.mrf.mxu0
        %1956 = vmatprep.mubr.bf16.mxu0 0
        %1957 = vmatmul.mubr.bf16.gmra.mxu0 %v1868
        %v1958 = vpop.f32.mrf.mxu0
        %v1959 = vpop.f32.mrf.mxu0
        %v1960 = vpop.f32.mrf.mxu0
        %v1961 = vpop.f32.mrf.mxu0
        %1962 = vdwg.mxu0
        %v1966 = vunpack.c.l.b16 %v1738
        %v1967 = vunpack.c.l.b16 %v1739
        %v1968 = vunpack.c.l.b16 %v1740
        %v1969 = vpack.c.b16 %v1967, %v1966
        %v1970 = vpack.c.b16 %v1968, %v1968
        %v1973 = vsel %vm1845, %v1802, 0
        %v1976 = vsel %vm1845, %v1803, 0
        %v1979 = vsel %vm1845, %v1804, 0
        %v1982 = vsel %vm1845, %v1805, 0
        %v1985 = vsel %vm1845, %v1806, 0
        %v1988 = vsel %vm1845, %v1807, 0
        %v1991 = vsel %vm1845, %v1808, 0
        %v1994 = vsel %vm1845, %v1809, 0
        %v1997 = vsel %vm1870, %v1970, 0
        %1999 = vmatprep.subr.bf16.mxu0 0
        %2000 = vmatpush1.bf16.msra.mxu0 0
        %2001 = vmatprep.subr.bf16.mxu0 0
        %2002 = vmatpush1.bf16.msra.mxu0 0
        %2003 = vmatprep.subr.bf16.mxu0 0
        %2004 = vmatpush1.bf16.msra.mxu0 0
        %2005 = vmatprep.subr.bf16.mxu0 0
        %2006 = vmatpush1.bf16.msra.mxu0 0
        %2007 = vmatprep.subr.bf16.mxu0 0
        %2008 = vmatpush1.bf16.msra.mxu0 0
        %2009 = vmatprep.subr.bf16.mxu0 0
        %2010 = vmatpush1.bf16.msra.mxu0 0
        %2011 = vmatprep.subr.bf16.mxu0 0
        %2012 = vmatpush1.bf16.msra.mxu0 %v1997
        %2013 = vmatprep.subr.bf16.mxu0 0
        %2014 = vmatpush1.bf16.msra.mxu0 %v1969
        %2015 = vmatprep.subr.bf16.mxu0 0
        %2016 = vmatpush2.bf16.msra.mxu0 0
        %2017 = vmatprep.subr.bf16.mxu0 0
        %2018 = vmatpush2.bf16.msra.mxu0 0
        %2019 = vmatprep.subr.bf16.mxu0 0
        %2020 = vmatpush2.bf16.msra.mxu0 0
        %2021 = vmatprep.subr.bf16.mxu0 0
        %2022 = vmatpush2.bf16.msra.mxu0 0
        %2023 = vmatprep.subr.bf16.mxu0 0
        %2024 = vmatpush2.bf16.msra.mxu0 0
        %2025 = vmatprep.subr.bf16.mxu0 0
        %2026 = vmatpush2.bf16.msra.mxu0 0
        %2027 = vmatprep.subr.bf16.mxu0 0
        %2028 = vmatpush2.bf16.msra.mxu0 0
        %2029 = vmatprep.subr.bf16.mxu0 0
        %2030 = vmatpush2.bf16.msra.mxu0 0
        %2031 = vmatprep.mubr.bf16.mxu0 0
        %2032 = vmatmul.mubr.bf16.gmra.mxu0 %v1973
        %v2033 = vpop.f32.mrf.mxu0
        %v2034 = vpop.f32.mrf.mxu0
        %v2035 = vpop.f32.mrf.mxu0
        %v2036 = vpop.f32.mrf.mxu0
        %2037 = vmatprep.mubr.bf16.mxu0 0
        %2038 = vmatmul.mubr.bf16.gmra.mxu0 %v1976
        %v2039 = vpop.f32.mrf.mxu0
        %v2040 = vadd.f32 %v1915, %v2039
        %v2041 = vpop.f32.mrf.mxu0
        %v2042 = vpop.f32.mrf.mxu0
        %v2043 = vadd.f32 %v1918, %v2042
        %v2044 = vpop.f32.mrf.mxu0
        %2045 = vmatprep.mubr.bf16.mxu0 0
        %2046 = vmatmul.mubr.bf16.gmra.mxu0 %v1979
        %v2047 = vpop.f32.mrf.mxu0
        %v2048 = vadd.f32 %v1923, %v2047
        %v2049 = vpop.f32.mrf.mxu0
        %v2050 = vpop.f32.mrf.mxu0
        %v2051 = vadd.f32 %v1926, %v2050
        %v2052 = vpop.f32.mrf.mxu0
        %2053 = vmatprep.mubr.bf16.mxu0 0
        %2054 = vmatmul.mubr.bf16.gmra.mxu0 %v1982
        %v2055 = vpop.f32.mrf.mxu0
        %v2056 = vpop.f32.mrf.mxu0
        %v2057 = vpop.f32.mrf.mxu0
        %v2058 = vpop.f32.mrf.mxu0
        %2059 = vmatprep.mubr.bf16.mxu0 0
        %2060 = vmatmul.mubr.bf16.gmra.mxu0 %v1985
        %v2061 = vpop.f32.mrf.mxu0
        %v2062 = vpop.f32.mrf.mxu0
        %v2063 = vpop.f32.mrf.mxu0
        %v2064 = vpop.f32.mrf.mxu0
        %2065 = vmatprep.mubr.bf16.mxu0 0
        %2066 = vmatmul.mubr.bf16.gmra.mxu0 %v1988
        %v2067 = vpop.f32.mrf.mxu0
        %v2068 = vadd.f32 %v1943, %v2067
        %v2069 = vpop.f32.mrf.mxu0
        %v2070 = vpop.f32.mrf.mxu0
        %v2071 = vadd.f32 %v1946, %v2070
        %v2072 = vpop.f32.mrf.mxu0
        %2073 = vmatprep.mubr.bf16.mxu0 0
        %2074 = vmatmul.mubr.bf16.gmra.mxu0 %v1991
        %v2075 = vpop.f32.mrf.mxu0
        %v2076 = vadd.f32 %v1951, %v2075
        %v2077 = vpop.f32.mrf.mxu0
        %v2078 = vpop.f32.mrf.mxu0
        %v2079 = vadd.f32 %v1954, %v2078
        %v2080 = vpop.f32.mrf.mxu0
        %2081 = vmatprep.mubr.bf16.mxu0 0
        %2082 = vmatmul.mubr.bf16.gmra.mxu0 %v1994
        %v2083 = vpop.f32.mrf.mxu0
        %v2084 = vpop.f32.mrf.mxu0
        %v2085 = vpop.f32.mrf.mxu0
        %v2086 = vpop.f32.mrf.mxu0
        %2087 = vdwg.mxu0
        %s2088 = sadd.s32 %s1783, 4294967170
        %s2089 = scalar_lea.vmem [#allocation2], %s2088
        %v2090 = vld [vmem:[%s2089] sm:$0xff]
        %v2091 = vld [vmem:[%s2089 + $0x8] sm:$0xff]
        %v2092 = vld [vmem:[%s2089 + $0x10] sm:$0xff]
        %v2093 = vld [vmem:[%s2089 + $0x18] sm:$0xff]
        %v2094 = vld [vmem:[%s2089 + $0x20] sm:$0xff]
        %v2095 = vld [vmem:[%s2089 + $0x28] sm:$0xff]
        %v2096 = vld [vmem:[%s2089 + $0x30] sm:$0xff]
        %v2097 = vld [vmem:[%s2089 + $0x38] sm:$0xff]
        %v2098 = vld [vmem:[%s2089 + $0x40] sm:$0xff]
        %v2099 = vld [vmem:[%s2089 + $0x48] sm:$0xff]
        %v2100 = vld [vmem:[%s2089 + $0x50] sm:$0xff]
        %v2101 = vld [vmem:[%s2089 + $0x58] sm:$0xff]
        %v2102 = vld [vmem:[%s2089 + $0x60] sm:$0xff]
        %v2103 = vld [vmem:[%s2089 + $0x68] sm:$0xff]
        %v2104 = vld [vmem:[%s2089 + $0x70] sm:$0xff]
        %v2105 = vld [vmem:[%s2089 + $0x78] sm:$0xff]
        %v2106 = vpack.c.bf16 %v2091, %v2090
        %v2107 = vpack.c.bf16 %v2093, %v2092
        %v2108 = vpack.c.bf16 %v2095, %v2094
        %v2109 = vpack.c.bf16 %v2097, %v2096
        %v2110 = vpack.c.bf16 %v2099, %v2098
        %v2111 = vpack.c.bf16 %v2101, %v2100
        %v2112 = vpack.c.bf16 %v2103, %v2102
        %v2113 = vpack.c.bf16 %v2105, %v2104
        %v2117 = vunpack.c.l.b16 %v1746
        %v2118 = vunpack.c.l.b16 %v1747
        %v2119 = vunpack.c.l.b16 %v1748
        %v2120 = vpack.c.b16 %v2118, %v2117
        %v2121 = vpack.c.b16 %v2119, %v2119
        %v2124 = vsel %vm1845, %v2106, 0
        %v2127 = vsel %vm1845, %v2107, 0
        %v2130 = vsel %vm1845, %v2108, 0
        %v2133 = vsel %vm1845, %v2109, 0
        %v2136 = vsel %vm1845, %v2110, 0
        %v2139 = vsel %vm1845, %v2111, 0
        %v2142 = vsel %vm1845, %v2112, 0
        %v2145 = vsel %vm1845, %v2113, 0
        %v2148 = vsel %vm1870, %v2121, 0
        %2150 = vmatprep.subr.bf16.mxu0 0
        %2151 = vmatpush1.bf16.msra.mxu0 0
        %2152 = vmatprep.subr.bf16.mxu0 0
        %2153 = vmatpush1.bf16.msra.mxu0 0
        %2154 = vmatprep.subr.bf16.mxu0 0
        %2155 = vmatpush1.bf16.msra.mxu0 0
        %2156 = vmatprep.subr.bf16.mxu0 0
        %2157 = vmatpush1.bf16.msra.mxu0 0
        %2158 = vmatprep.subr.bf16.mxu0 0
        %2159 = vmatpush1.bf16.msra.mxu0 0
        %2160 = vmatprep.subr.bf16.mxu0 0
        %2161 = vmatpush1.bf16.msra.mxu0 0
        %2162 = vmatprep.subr.bf16.mxu0 0
        %2163 = vmatpush1.bf16.msra.mxu0 %v2148
        %2164 = vmatprep.subr.bf16.mxu0 0
        %2165 = vmatpush1.bf16.msra.mxu0 %v2120
        %2166 = vmatprep.subr.bf16.mxu0 0
        %2167 = vmatpush2.bf16.msra.mxu0 0
        %2168 = vmatprep.subr.bf16.mxu0 0
        %2169 = vmatpush2.bf16.msra.mxu0 0
        %2170 = vmatprep.subr.bf16.mxu0 0
        %2171 = vmatpush2.bf16.msra.mxu0 0
        %2172 = vmatprep.subr.bf16.mxu0 0
        %2173 = vmatpush2.bf16.msra.mxu0 0
        %2174 = vmatprep.subr.bf16.mxu0 0
        %2175 = vmatpush2.bf16.msra.mxu0 0
        %2176 = vmatprep.subr.bf16.mxu0 0
        %2177 = vmatpush2.bf16.msra.mxu0 0
        %2178 = vmatprep.subr.bf16.mxu0 0
        %2179 = vmatpush2.bf16.msra.mxu0 0
        %2180 = vmatprep.subr.bf16.mxu0 0
        %2181 = vmatpush2.bf16.msra.mxu0 0
        %2182 = vmatprep.mubr.bf16.mxu0 0
        %2183 = vmatmul.mubr.bf16.gmra.mxu0 %v2124
        %v2184 = vpop.f32.mrf.mxu0
        %v2185 = vpop.f32.mrf.mxu0
        %v2186 = vpop.f32.mrf.mxu0
        %v2187 = vpop.f32.mrf.mxu0
        %2188 = vmatprep.mubr.bf16.mxu0 0
        %2189 = vmatmul.mubr.bf16.gmra.mxu0 %v2127
        %v2190 = vpop.f32.mrf.mxu0
        %v2191 = vadd.f32 0.0, %v2190
        %v2192 = vpop.f32.mrf.mxu0
        %v2193 = vpop.f32.mrf.mxu0
        %v2194 = vadd.f32 0.0, %v2193
        %v2195 = vpop.f32.mrf.mxu0
        %2196 = vmatprep.mubr.bf16.mxu0 0
        %2197 = vmatmul.mubr.bf16.gmra.mxu0 %v2130
        %v2198 = vpop.f32.mrf.mxu0
        %v2199 = vadd.f32 0.0, %v2198
        %v2200 = vpop.f32.mrf.mxu0
        %v2201 = vpop.f32.mrf.mxu0
        %v2202 = vadd.f32 0.0, %v2201
        %v2203 = vpop.f32.mrf.mxu0
        %2204 = vmatprep.mubr.bf16.mxu0 0
        %2205 = vmatmul.mubr.bf16.gmra.mxu0 %v2133
        %v2206 = vpop.f32.mrf.mxu0
        %v2207 = vpop.f32.mrf.mxu0
        %v2208 = vpop.f32.mrf.mxu0
        %v2209 = vpop.f32.mrf.mxu0
        %2210 = vmatprep.mubr.bf16.mxu0 0
        %2211 = vmatmul.mubr.bf16.gmra.mxu0 %v2136
        %v2212 = vpop.f32.mrf.mxu0
        %v2213 = vpop.f32.mrf.mxu0
        %v2214 = vpop.f32.mrf.mxu0
        %v2215 = vpop.f32.mrf.mxu0
        %2216 = vmatprep.mubr.bf16.mxu0 0
        %2217 = vmatmul.mubr.bf16.gmra.mxu0 %v2139
        %v2218 = vpop.f32.mrf.mxu0
        %v2219 = vadd.f32 0.0, %v2218
        %v2220 = vpop.f32.mrf.mxu0
        %v2221 = vpop.f32.mrf.mxu0
        %v2222 = vadd.f32 0.0, %v2221
        %v2223 = vpop.f32.mrf.mxu0
        %2224 = vmatprep.mubr.bf16.mxu0 0
        %2225 = vmatmul.mubr.bf16.gmra.mxu0 %v2142
        %v2226 = vpop.f32.mrf.mxu0
        %v2227 = vadd.f32 0.0, %v2226
        %v2228 = vpop.f32.mrf.mxu0
        %v2229 = vpop.f32.mrf.mxu0
        %v2230 = vadd.f32 0.0, %v2229
        %v2231 = vpop.f32.mrf.mxu0
        %2232 = vmatprep.mubr.bf16.mxu0 0
        %2233 = vmatmul.mubr.bf16.gmra.mxu0 %v2145
        %v2234 = vpop.f32.mrf.mxu0
        %v2235 = vpop.f32.mrf.mxu0
        %v2236 = vpop.f32.mrf.mxu0
        %v2237 = vpop.f32.mrf.mxu0
        %2238 = vdwg.mxu0
        %v2239 = vadd.f32 %v2040, %v2191
        %v2240 = vadd.f32 %v2043, %v2194
        %v2241 = vadd.f32 %v2048, %v2199
        %v2242 = vadd.f32 %v2051, %v2202
        %v2243 = vadd.f32 %v2068, %v2219
        %v2244 = vadd.f32 %v2071, %v2222
        %v2245 = vadd.f32 %v2076, %v2227
        %v2246 = vadd.f32 %v2079, %v2230
        %s2247 = sadd.s32 %s1783, 4294967294
        %s2248 = scalar_lea.vmem [#allocation2], %s2247
        %v2249 = vld [vmem:[%s2248] sm:$0xff]
        %v2250 = vld [vmem:[%s2248 + $0x8] sm:$0xff]
        %v2251 = vld [vmem:[%s2248 + $0x10] sm:$0xff]
        %v2252 = vld [vmem:[%s2248 + $0x18] sm:$0xff]
        %v2253 = vld [vmem:[%s2248 + $0x20] sm:$0xff]
        %v2254 = vld [vmem:[%s2248 + $0x28] sm:$0xff]
        %v2255 = vld [vmem:[%s2248 + $0x30] sm:$0xff]
        %v2256 = vld [vmem:[%s2248 + $0x38] sm:$0xff]
        %v2257 = vld [vmem:[%s2248 + $0x40] sm:$0xff]
        %v2258 = vld [vmem:[%s2248 + $0x48] sm:$0xff]
        %v2259 = vld [vmem:[%s2248 + $0x50] sm:$0xff]
        %v2260 = vld [vmem:[%s2248 + $0x58] sm:$0xff]
        %v2261 = vld [vmem:[%s2248 + $0x60] sm:$0xff]
        %v2262 = vld [vmem:[%s2248 + $0x68] sm:$0xff]
        %v2263 = vld [vmem:[%s2248 + $0x70] sm:$0xff]
        %v2264 = vld [vmem:[%s2248 + $0x78] sm:$0xff]
        %v2265 = vpack.c.bf16 %v2250, %v2249
        %v2266 = vpack.c.bf16 %v2252, %v2251
        %v2267 = vpack.c.bf16 %v2254, %v2253
        %v2268 = vpack.c.bf16 %v2256, %v2255
        %v2269 = vpack.c.bf16 %v2258, %v2257
        %v2270 = vpack.c.bf16 %v2260, %v2259
        %v2271 = vpack.c.bf16 %v2262, %v2261
        %v2272 = vpack.c.bf16 %v2264, %v2263
        %v2276 = vunpack.c.l.b16 %v1750
        %v2277 = vunpack.c.l.b16 %v1751
        %v2278 = vunpack.c.l.b16 %v1752
        %v2279 = vpack.c.b16 %v2277, %v2276
        %v2280 = vpack.c.b16 %v2278, %v2278
        %v2283 = vsel %vm1845, %v2265, 0
        %v2286 = vsel %vm1845, %v2266, 0
        %v2289 = vsel %vm1845, %v2267, 0
        %v2292 = vsel %vm1845, %v2268, 0
        %v2295 = vsel %vm1845, %v2269, 0
        %v2298 = vsel %vm1845, %v2270, 0
        %v2301 = vsel %vm1845, %v2271, 0
        %v2304 = vsel %vm1845, %v2272, 0
        %v2307 = vsel %vm1870, %v2280, 0
        %2309 = vmatprep.subr.bf16.mxu0 0
        %2310 = vmatpush1.bf16.msra.mxu0 0
        %2311 = vmatprep.subr.bf16.mxu0 0
        %2312 = vmatpush1.bf16.msra.mxu0 0
        %2313 = vmatprep.subr.bf16.mxu0 0
        %2314 = vmatpush1.bf16.msra.mxu0 0
        %2315 = vmatprep.subr.bf16.mxu0 0
        %2316 = vmatpush1.bf16.msra.mxu0 0
        %2317 = vmatprep.subr.bf16.mxu0 0
        %2318 = vmatpush1.bf16.msra.mxu0 0
        %2319 = vmatprep.subr.bf16.mxu0 0
        %2320 = vmatpush1.bf16.msra.mxu0 0
        %2321 = vmatprep.subr.bf16.mxu0 0
        %2322 = vmatpush1.bf16.msra.mxu0 %v2307
        %2323 = vmatprep.subr.bf16.mxu0 0
        %2324 = vmatpush1.bf16.msra.mxu0 %v2279
        %2325 = vmatprep.subr.bf16.mxu0 0
        %2326 = vmatpush2.bf16.msra.mxu0 0
        %2327 = vmatprep.subr.bf16.mxu0 0
        %2328 = vmatpush2.bf16.msra.mxu0 0
        %2329 = vmatprep.subr.bf16.mxu0 0
        %2330 = vmatpush2.bf16.msra.mxu0 0
        %2331 = vmatprep.subr.bf16.mxu0 0
        %2332 = vmatpush2.bf16.msra.mxu0 0
        %2333 = vmatprep.subr.bf16.mxu0 0
        %2334 = vmatpush2.bf16.msra.mxu0 0
        %2335 = vmatprep.subr.bf16.mxu0 0
        %2336 = vmatpush2.bf16.msra.mxu0 0
        %2337 = vmatprep.subr.bf16.mxu0 0
        %2338 = vmatpush2.bf16.msra.mxu0 0
        %2339 = vmatprep.subr.bf16.mxu0 0
        %2340 = vmatpush2.bf16.msra.mxu0 0
        %2341 = vmatprep.mubr.bf16.mxu0 0
        %2342 = vmatmul.mubr.bf16.gmra.mxu0 %v2283
        %v2343 = vpop.f32.mrf.mxu0
        %v2344 = vpop.f32.mrf.mxu0
        %v2345 = vpop.f32.mrf.mxu0
        %v2346 = vpop.f32.mrf.mxu0
        %2347 = vmatprep.mubr.bf16.mxu0 0
        %2348 = vmatmul.mubr.bf16.gmra.mxu0 %v2286
        %v2349 = vpop.f32.mrf.mxu0
        %v2350 = vadd.f32 0.0, %v2349
        %v2351 = vpop.f32.mrf.mxu0
        %v2352 = vpop.f32.mrf.mxu0
        %v2353 = vadd.f32 0.0, %v2352
        %v2354 = vpop.f32.mrf.mxu0
        %2355 = vmatprep.mubr.bf16.mxu0 0
        %2356 = vmatmul.mubr.bf16.gmra.mxu0 %v2289
        %v2357 = vpop.f32.mrf.mxu0
        %v2358 = vadd.f32 0.0, %v2357
        %v2359 = vpop.f32.mrf.mxu0
        %v2360 = vpop.f32.mrf.mxu0
        %v2361 = vadd.f32 0.0, %v2360
        %v2362 = vpop.f32.mrf.mxu0
        %2363 = vmatprep.mubr.bf16.mxu0 0
        %2364 = vmatmul.mubr.bf16.gmra.mxu0 %v2292
        %v2365 = vpop.f32.mrf.mxu0
        %v2366 = vpop.f32.mrf.mxu0
        %v2367 = vpop.f32.mrf.mxu0
        %v2368 = vpop.f32.mrf.mxu0
        %2369 = vmatprep.mubr.bf16.mxu0 0
        %2370 = vmatmul.mubr.bf16.gmra.mxu0 %v2295
        %v2371 = vpop.f32.mrf.mxu0
        %v2372 = vpop.f32.mrf.mxu0
        %v2373 = vpop.f32.mrf.mxu0
        %v2374 = vpop.f32.mrf.mxu0
        %2375 = vmatprep.mubr.bf16.mxu0 0
        %2376 = vmatmul.mubr.bf16.gmra.mxu0 %v2298
        %v2377 = vpop.f32.mrf.mxu0
        %v2378 = vadd.f32 0.0, %v2377
        %v2379 = vpop.f32.mrf.mxu0
        %v2380 = vpop.f32.mrf.mxu0
        %v2381 = vadd.f32 0.0, %v2380
        %v2382 = vpop.f32.mrf.mxu0
        %2383 = vmatprep.mubr.bf16.mxu0 0
        %2384 = vmatmul.mubr.bf16.gmra.mxu0 %v2301
        %v2385 = vpop.f32.mrf.mxu0
        %v2386 = vadd.f32 0.0, %v2385
        %v2387 = vpop.f32.mrf.mxu0
        %v2388 = vpop.f32.mrf.mxu0
        %v2389 = vadd.f32 0.0, %v2388
        %v2390 = vpop.f32.mrf.mxu0
        %2391 = vmatprep.mubr.bf16.mxu0 0
        %2392 = vmatmul.mubr.bf16.gmra.mxu0 %v2304
        %v2393 = vpop.f32.mrf.mxu0
        %v2394 = vpop.f32.mrf.mxu0
        %v2395 = vpop.f32.mrf.mxu0
        %v2396 = vpop.f32.mrf.mxu0
        %2397 = vdwg.mxu0
        %v2398 = vadd.f32 %v2239, %v2350
        %v2399 = vadd.f32 %v2240, %v2353
        %v2400 = vadd.f32 %v2241, %v2358
        %v2401 = vadd.f32 %v2242, %v2361
        %v2402 = vadd.f32 %v2243, %v2378
        %v2403 = vadd.f32 %v2244, %v2381
        %v2404 = vadd.f32 %v2245, %v2386
        %v2405 = vadd.f32 %v2246, %v2389
        %s2406 = scalar_lea.vmem [#allocation2], %s1783
        %v2407 = vld [vmem:[%s2406] sm:$0xff]
        %v2408 = vld [vmem:[%s2406 + $0x8] sm:$0xff]
        %v2409 = vld [vmem:[%s2406 + $0x10] sm:$0xff]
        %v2410 = vld [vmem:[%s2406 + $0x18] sm:$0xff]
        %v2411 = vld [vmem:[%s2406 + $0x20] sm:$0xff]
        %v2412 = vld [vmem:[%s2406 + $0x28] sm:$0xff]
        %v2413 = vld [vmem:[%s2406 + $0x30] sm:$0xff]
        %v2414 = vld [vmem:[%s2406 + $0x38] sm:$0xff]
        %v2415 = vld [vmem:[%s2406 + $0x40] sm:$0xff]
        %v2416 = vld [vmem:[%s2406 + $0x48] sm:$0xff]
        %v2417 = vld [vmem:[%s2406 + $0x50] sm:$0xff]
        %v2418 = vld [vmem:[%s2406 + $0x58] sm:$0xff]
        %v2419 = vld [vmem:[%s2406 + $0x60] sm:$0xff]
        %v2420 = vld [vmem:[%s2406 + $0x68] sm:$0xff]
        %v2421 = vld [vmem:[%s2406 + $0x70] sm:$0xff]
        %v2422 = vld [vmem:[%s2406 + $0x78] sm:$0xff]
        %v2423 = vpack.c.bf16 %v2408, %v2407
        %v2424 = vpack.c.bf16 %v2410, %v2409
        %v2425 = vpack.c.bf16 %v2412, %v2411
        %v2426 = vpack.c.bf16 %v2414, %v2413
        %v2427 = vpack.c.bf16 %v2416, %v2415
        %v2428 = vpack.c.bf16 %v2418, %v2417
        %v2429 = vpack.c.bf16 %v2420, %v2419
        %v2430 = vpack.c.bf16 %v2422, %v2421
        %v2434 = vunpack.c.l.b16 %v1754
        %v2435 = vunpack.c.l.b16 %v1755
        %v2436 = vunpack.c.l.b16 %v1756
        %v2437 = vpack.c.b16 %v2435, %v2434
        %v2438 = vpack.c.b16 %v2436, %v2436
        %v2441 = vsel %vm1845, %v2423, 0
        %v2444 = vsel %vm1845, %v2424, 0
        %v2447 = vsel %vm1845, %v2425, 0
        %v2450 = vsel %vm1845, %v2426, 0
        %v2453 = vsel %vm1845, %v2427, 0
        %v2456 = vsel %vm1845, %v2428, 0
        %v2459 = vsel %vm1845, %v2429, 0
        %v2462 = vsel %vm1845, %v2430, 0
        %v2465 = vsel %vm1870, %v2438, 0
        %2467 = vmatprep.subr.bf16.mxu0 0
        %2468 = vmatpush1.bf16.msra.mxu0 0
        %2469 = vmatprep.subr.bf16.mxu0 0
        %2470 = vmatpush1.bf16.msra.mxu0 0
        %2471 = vmatprep.subr.bf16.mxu0 0
        %2472 = vmatpush1.bf16.msra.mxu0 0
        %2473 = vmatprep.subr.bf16.mxu0 0
        %2474 = vmatpush1.bf16.msra.mxu0 0
        %2475 = vmatprep.subr.bf16.mxu0 0
        %2476 = vmatpush1.bf16.msra.mxu0 0
        %2477 = vmatprep.subr.bf16.mxu0 0
        %2478 = vmatpush1.bf16.msra.mxu0 0
        %2479 = vmatprep.subr.bf16.mxu0 0
        %2480 = vmatpush1.bf16.msra.mxu0 %v2465
        %2481 = vmatprep.subr.bf16.mxu0 0
        %2482 = vmatpush1.bf16.msra.mxu0 %v2437
        %2483 = vmatprep.subr.bf16.mxu0 0
        %2484 = vmatpush2.bf16.msra.mxu0 0
        %2485 = vmatprep.subr.bf16.mxu0 0
        %2486 = vmatpush2.bf16.msra.mxu0 0
        %2487 = vmatprep.subr.bf16.mxu0 0
        %2488 = vmatpush2.bf16.msra.mxu0 0
        %2489 = vmatprep.subr.bf16.mxu0 0
        %2490 = vmatpush2.bf16.msra.mxu0 0
        %2491 = vmatprep.subr.bf16.mxu0 0
        %2492 = vmatpush2.bf16.msra.mxu0 0
        %2493 = vmatprep.subr.bf16.mxu0 0
        %2494 = vmatpush2.bf16.msra.mxu0 0
        %2495 = vmatprep.subr.bf16.mxu0 0
        %2496 = vmatpush2.bf16.msra.mxu0 0
        %2497 = vmatprep.subr.bf16.mxu0 0
        %2498 = vmatpush2.bf16.msra.mxu0 0
        %2499 = vmatprep.mubr.bf16.mxu0 0
        %2500 = vmatmul.mubr.bf16.gmra.mxu0 %v2441
        %v2501 = vpop.f32.mrf.mxu0
        %v2502 = vpop.f32.mrf.mxu0
        %v2503 = vpop.f32.mrf.mxu0
        %v2504 = vpop.f32.mrf.mxu0
        %2505 = vmatprep.mubr.bf16.mxu0 0
        %2506 = vmatmul.mubr.bf16.gmra.mxu0 %v2444
        %v2507 = vpop.f32.mrf.mxu0
        %v2508 = vadd.f32 0.0, %v2507
        %v2509 = vpop.f32.mrf.mxu0
        %v2510 = vpop.f32.mrf.mxu0
        %v2511 = vadd.f32 0.0, %v2510
        %v2512 = vpop.f32.mrf.mxu0
        %2513 = vmatprep.mubr.bf16.mxu0 0
        %2514 = vmatmul.mubr.bf16.gmra.mxu0 %v2447
        %v2515 = vpop.f32.mrf.mxu0
        %v2516 = vadd.f32 0.0, %v2515
        %v2517 = vpop.f32.mrf.mxu0
        %v2518 = vpop.f32.mrf.mxu0
        %v2519 = vadd.f32 0.0, %v2518
        %v2520 = vpop.f32.mrf.mxu0
        %2521 = vmatprep.mubr.bf16.mxu0 0
        %2522 = vmatmul.mubr.bf16.gmra.mxu0 %v2450
        %v2523 = vpop.f32.mrf.mxu0
        %v2524 = vpop.f32.mrf.mxu0
        %v2525 = vpop.f32.mrf.mxu0
        %v2526 = vpop.f32.mrf.mxu0
        %2527 = vmatprep.mubr.bf16.mxu0 0
        %2528 = vmatmul.mubr.bf16.gmra.mxu0 %v2453
        %v2529 = vpop.f32.mrf.mxu0
        %v2530 = vpop.f32.mrf.mxu0
        %v2531 = vpop.f32.mrf.mxu0
        %v2532 = vpop.f32.mrf.mxu0
        %2533 = vmatprep.mubr.bf16.mxu0 0
        %2534 = vmatmul.mubr.bf16.gmra.mxu0 %v2456
        %v2535 = vpop.f32.mrf.mxu0
        %v2536 = vadd.f32 0.0, %v2535
        %v2537 = vpop.f32.mrf.mxu0
        %v2538 = vpop.f32.mrf.mxu0
        %v2539 = vadd.f32 0.0, %v2538
        %v2540 = vpop.f32.mrf.mxu0
        %2541 = vmatprep.mubr.bf16.mxu0 0
        %2542 = vmatmul.mubr.bf16.gmra.mxu0 %v2459
        %v2543 = vpop.f32.mrf.mxu0
        %v2544 = vadd.f32 0.0, %v2543
        %v2545 = vpop.f32.mrf.mxu0
        %v2546 = vpop.f32.mrf.mxu0
        %v2547 = vadd.f32 0.0, %v2546
        %v2548 = vpop.f32.mrf.mxu0
        %2549 = vmatprep.mubr.bf16.mxu0 0
        %2550 = vmatmul.mubr.bf16.gmra.mxu0 %v2462
        %v2551 = vpop.f32.mrf.mxu0
        %v2552 = vpop.f32.mrf.mxu0
        %v2553 = vpop.f32.mrf.mxu0
        %v2554 = vpop.f32.mrf.mxu0
        %2555 = vdwg.mxu0
        %v2556 = vadd.f32 %v2398, %v2508
        %v2557 = vadd.f32 %v2399, %v2511
        %v2558 = vadd.f32 %v2400, %v2516
        %v2559 = vadd.f32 %v2401, %v2519
        %v2560 = vadd.f32 %v2402, %v2536
        %v2561 = vadd.f32 %v2403, %v2539
        %v2562 = vadd.f32 %v2404, %v2544
        %v2563 = vadd.f32 %v2405, %v2547
        %s2564 = sadd.s32 %s1783, 2
        %s2565 = scalar_lea.vmem [#allocation2], %s2564
        %v2566 = vld [vmem:[%s2565] sm:$0xff]
        %v2567 = vld [vmem:[%s2565 + $0x8] sm:$0xff]
        %v2568 = vld [vmem:[%s2565 + $0x10] sm:$0xff]
        %v2569 = vld [vmem:[%s2565 + $0x18] sm:$0xff]
        %v2570 = vld [vmem:[%s2565 + $0x20] sm:$0xff]
        %v2571 = vld [vmem:[%s2565 + $0x28] sm:$0xff]
        %v2572 = vld [vmem:[%s2565 + $0x30] sm:$0xff]
        %v2573 = vld [vmem:[%s2565 + $0x38] sm:$0xff]
        %v2574 = vld [vmem:[%s2565 + $0x40] sm:$0xff]
        %v2575 = vld [vmem:[%s2565 + $0x48] sm:$0xff]
        %v2576 = vld [vmem:[%s2565 + $0x50] sm:$0xff]
        %v2577 = vld [vmem:[%s2565 + $0x58] sm:$0xff]
        %v2578 = vld [vmem:[%s2565 + $0x60] sm:$0xff]
        %v2579 = vld [vmem:[%s2565 + $0x68] sm:$0xff]
        %v2580 = vld [vmem:[%s2565 + $0x70] sm:$0xff]
        %v2581 = vld [vmem:[%s2565 + $0x78] sm:$0xff]
        %v2582 = vpack.c.bf16 %v2567, %v2566
        %v2583 = vpack.c.bf16 %v2569, %v2568
        %v2584 = vpack.c.bf16 %v2571, %v2570
        %v2585 = vpack.c.bf16 %v2573, %v2572
        %v2586 = vpack.c.bf16 %v2575, %v2574
        %v2587 = vpack.c.bf16 %v2577, %v2576
        %v2588 = vpack.c.bf16 %v2579, %v2578
        %v2589 = vpack.c.bf16 %v2581, %v2580
        %v2593 = vunpack.c.l.b16 %v1758
        %v2594 = vunpack.c.l.b16 %v1759
        %v2595 = vunpack.c.l.b16 %v1760
        %v2596 = vpack.c.b16 %v2594, %v2593
        %v2597 = vpack.c.b16 %v2595, %v2595
        %v2600 = vsel %vm1845, %v2582, 0
        %v2603 = vsel %vm1845, %v2583, 0
        %v2606 = vsel %vm1845, %v2584, 0
        %v2609 = vsel %vm1845, %v2585, 0
        %v2612 = vsel %vm1845, %v2586, 0
        %v2615 = vsel %vm1845, %v2587, 0
        %v2618 = vsel %vm1845, %v2588, 0
        %v2621 = vsel %vm1845, %v2589, 0
        %v2624 = vsel %vm1870, %v2597, 0
        %2626 = vmatprep.subr.bf16.mxu0 0
        %2627 = vmatpush1.bf16.msra.mxu0 0
        %2628 = vmatprep.subr.bf16.mxu0 0
        %2629 = vmatpush1.bf16.msra.mxu0 0
        %2630 = vmatprep.subr.bf16.mxu0 0
        %2631 = vmatpush1.bf16.msra.mxu0 0
        %2632 = vmatprep.subr.bf16.mxu0 0
        %2633 = vmatpush1.bf16.msra.mxu0 0
        %2634 = vmatprep.subr.bf16.mxu0 0
        %2635 = vmatpush1.bf16.msra.mxu0 0
        %2636 = vmatprep.subr.bf16.mxu0 0
        %2637 = vmatpush1.bf16.msra.mxu0 0
        %2638 = vmatprep.subr.bf16.mxu0 0
        %2639 = vmatpush1.bf16.msra.mxu0 %v2624
        %2640 = vmatprep.subr.bf16.mxu0 0
        %2641 = vmatpush1.bf16.msra.mxu0 %v2596
        %2642 = vmatprep.subr.bf16.mxu0 0
        %2643 = vmatpush2.bf16.msra.mxu0 0
        %2644 = vmatprep.subr.bf16.mxu0 0
        %2645 = vmatpush2.bf16.msra.mxu0 0
        %2646 = vmatprep.subr.bf16.mxu0 0
        %2647 = vmatpush2.bf16.msra.mxu0 0
        %2648 = vmatprep.subr.bf16.mxu0 0
        %2649 = vmatpush2.bf16.msra.mxu0 0
        %2650 = vmatprep.subr.bf16.mxu0 0
        %2651 = vmatpush2.bf16.msra.mxu0 0
        %2652 = vmatprep.subr.bf16.mxu0 0
        %2653 = vmatpush2.bf16.msra.mxu0 0
        %2654 = vmatprep.subr.bf16.mxu0 0
        %2655 = vmatpush2.bf16.msra.mxu0 0
        %2656 = vmatprep.subr.bf16.mxu0 0
        %2657 = vmatpush2.bf16.msra.mxu0 0
        %2658 = vmatprep.mubr.bf16.mxu0 0
        %2659 = vmatmul.mubr.bf16.gmra.mxu0 %v2600
        %v2660 = vpop.f32.mrf.mxu0
        %v2661 = vpop.f32.mrf.mxu0
        %v2662 = vpop.f32.mrf.mxu0
        %v2663 = vpop.f32.mrf.mxu0
        %2664 = vmatprep.mubr.bf16.mxu0 0
        %2665 = vmatmul.mubr.bf16.gmra.mxu0 %v2603
        %v2666 = vpop.f32.mrf.mxu0
        %v2667 = vadd.f32 0.0, %v2666
        %v2668 = vpop.f32.mrf.mxu0
        %v2669 = vpop.f32.mrf.mxu0
        %v2670 = vadd.f32 0.0, %v2669
        %v2671 = vpop.f32.mrf.mxu0
        %2672 = vmatprep.mubr.bf16.mxu0 0
        %2673 = vmatmul.mubr.bf16.gmra.mxu0 %v2606
        %v2674 = vpop.f32.mrf.mxu0
        %v2675 = vadd.f32 0.0, %v2674
        %v2676 = vpop.f32.mrf.mxu0
        %v2677 = vpop.f32.mrf.mxu0
        %v2678 = vadd.f32 0.0, %v2677
        %v2679 = vpop.f32.mrf.mxu0
        %2680 = vmatprep.mubr.bf16.mxu0 0
        %2681 = vmatmul.mubr.bf16.gmra.mxu0 %v2609
        %v2682 = vpop.f32.mrf.mxu0
        %v2683 = vpop.f32.mrf.mxu0
        %v2684 = vpop.f32.mrf.mxu0
        %v2685 = vpop.f32.mrf.mxu0
        %2686 = vmatprep.mubr.bf16.mxu0 0
        %2687 = vmatmul.mubr.bf16.gmra.mxu0 %v2612
        %v2688 = vpop.f32.mrf.mxu0
        %v2689 = vpop.f32.mrf.mxu0
        %v2690 = vpop.f32.mrf.mxu0
        %v2691 = vpop.f32.mrf.mxu0
        %2692 = vmatprep.mubr.bf16.mxu0 0
        %2693 = vmatmul.mubr.bf16.gmra.mxu0 %v2615
        %v2694 = vpop.f32.mrf.mxu0
        %v2695 = vadd.f32 0.0, %v2694
        %v2696 = vpop.f32.mrf.mxu0
        %v2697 = vpop.f32.mrf.mxu0
        %v2698 = vadd.f32 0.0, %v2697
        %v2699 = vpop.f32.mrf.mxu0
        %2700 = vmatprep.mubr.bf16.mxu0 0
        %2701 = vmatmul.mubr.bf16.gmra.mxu0 %v2618
        %v2702 = vpop.f32.mrf.mxu0
        %v2703 = vadd.f32 0.0, %v2702
        %v2704 = vpop.f32.mrf.mxu0
        %v2705 = vpop.f32.mrf.mxu0
        %v2706 = vadd.f32 0.0, %v2705
        %v2707 = vpop.f32.mrf.mxu0
        %2708 = vmatprep.mubr.bf16.mxu0 0
        %2709 = vmatmul.mubr.bf16.gmra.mxu0 %v2621
        %v2710 = vpop.f32.mrf.mxu0
        %v2711 = vpop.f32.mrf.mxu0
        %v2712 = vpop.f32.mrf.mxu0
        %v2713 = vpop.f32.mrf.mxu0
        %2714 = vdwg.mxu0
        %v2715 = vadd.f32 %v2556, %v2667
        %v2716 = vadd.f32 %v2557, %v2670
        %v2717 = vadd.f32 %v2558, %v2675
        %v2718 = vadd.f32 %v2559, %v2678
        %v2719 = vadd.f32 %v2560, %v2695
        %v2720 = vadd.f32 %v2561, %v2698
        %v2721 = vadd.f32 %v2562, %v2703
        %v2722 = vadd.f32 %v2563, %v2706
        %s2723 = sadd.s32 %s1783, 126
        %s2724 = scalar_lea.vmem [#allocation2], %s2723
        %v2725 = vld [vmem:[%s2724] sm:$0xff]
        %v2726 = vld [vmem:[%s2724 + $0x8] sm:$0xff]
        %v2727 = vld [vmem:[%s2724 + $0x10] sm:$0xff]
        %v2728 = vld [vmem:[%s2724 + $0x18] sm:$0xff]
        %v2729 = vld [vmem:[%s2724 + $0x20] sm:$0xff]
        %v2730 = vld [vmem:[%s2724 + $0x28] sm:$0xff]
        %v2731 = vld [vmem:[%s2724 + $0x30] sm:$0xff]
        %v2732 = vld [vmem:[%s2724 + $0x38] sm:$0xff]
        %v2733 = vld [vmem:[%s2724 + $0x40] sm:$0xff]
        %v2734 = vld [vmem:[%s2724 + $0x48] sm:$0xff]
        %v2735 = vld [vmem:[%s2724 + $0x50] sm:$0xff]
        %v2736 = vld [vmem:[%s2724 + $0x58] sm:$0xff]
        %v2737 = vld [vmem:[%s2724 + $0x60] sm:$0xff]
        %v2738 = vld [vmem:[%s2724 + $0x68] sm:$0xff]
        %v2739 = vld [vmem:[%s2724 + $0x70] sm:$0xff]
        %v2740 = vld [vmem:[%s2724 + $0x78] sm:$0xff]
        %v2741 = vpack.c.bf16 %v2726, %v2725
        %v2742 = vpack.c.bf16 %v2728, %v2727
        %v2743 = vpack.c.bf16 %v2730, %v2729
        %v2744 = vpack.c.bf16 %v2732, %v2731
        %v2745 = vpack.c.bf16 %v2734, %v2733
        %v2746 = vpack.c.bf16 %v2736, %v2735
        %v2747 = vpack.c.bf16 %v2738, %v2737
        %v2748 = vpack.c.bf16 %v2740, %v2739
        %v2752 = vunpack.c.l.b16 %v1762
        %v2753 = vunpack.c.l.b16 %v1763
        %v2754 = vunpack.c.l.b16 %v1764
        %v2755 = vpack.c.b16 %v2753, %v2752
        %v2756 = vpack.c.b16 %v2754, %v2754
        %v2759 = vsel %vm1845, %v2741, 0
        %v2762 = vsel %vm1845, %v2742, 0
        %v2765 = vsel %vm1845, %v2743, 0
        %v2768 = vsel %vm1845, %v2744, 0
        %v2771 = vsel %vm1845, %v2745, 0
        %v2774 = vsel %vm1845, %v2746, 0
        %v2777 = vsel %vm1845, %v2747, 0
        %v2780 = vsel %vm1845, %v2748, 0
        %v2783 = vsel %vm1870, %v2756, 0
        %2785 = vmatprep.subr.bf16.mxu0 0
        %2786 = vmatpush1.bf16.msra.mxu0 0
        %2787 = vmatprep.subr.bf16.mxu0 0
        %2788 = vmatpush1.bf16.msra.mxu0 0
        %2789 = vmatprep.subr.bf16.mxu0 0
        %2790 = vmatpush1.bf16.msra.mxu0 0
        %2791 = vmatprep.subr.bf16.mxu0 0
        %2792 = vmatpush1.bf16.msra.mxu0 0
        %2793 = vmatprep.subr.bf16.mxu0 0
        %2794 = vmatpush1.bf16.msra.mxu0 0
        %2795 = vmatprep.subr.bf16.mxu0 0
        %2796 = vmatpush1.bf16.msra.mxu0 0
        %2797 = vmatprep.subr.bf16.mxu0 0
        %2798 = vmatpush1.bf16.msra.mxu0 %v2783
        %2799 = vmatprep.subr.bf16.mxu0 0
        %2800 = vmatpush1.bf16.msra.mxu0 %v2755
        %2801 = vmatprep.subr.bf16.mxu0 0
        %2802 = vmatpush2.bf16.msra.mxu0 0
        %2803 = vmatprep.subr.bf16.mxu0 0
        %2804 = vmatpush2.bf16.msra.mxu0 0
        %2805 = vmatprep.subr.bf16.mxu0 0
        %2806 = vmatpush2.bf16.msra.mxu0 0
        %2807 = vmatprep.subr.bf16.mxu0 0
        %2808 = vmatpush2.bf16.msra.mxu0 0
        %2809 = vmatprep.subr.bf16.mxu0 0
        %2810 = vmatpush2.bf16.msra.mxu0 0
        %2811 = vmatprep.subr.bf16.mxu0 0
        %2812 = vmatpush2.bf16.msra.mxu0 0
        %2813 = vmatprep.subr.bf16.mxu0 0
        %2814 = vmatpush2.bf16.msra.mxu0 0
        %2815 = vmatprep.subr.bf16.mxu0 0
        %2816 = vmatpush2.bf16.msra.mxu0 0
        %2817 = vmatprep.mubr.bf16.mxu0 0
        %2818 = vmatmul.mubr.bf16.gmra.mxu0 %v2759
        %v2819 = vpop.f32.mrf.mxu0
        %v2820 = vpop.f32.mrf.mxu0
        %v2821 = vpop.f32.mrf.mxu0
        %v2822 = vpop.f32.mrf.mxu0
        %2823 = vmatprep.mubr.bf16.mxu0 0
        %2824 = vmatmul.mubr.bf16.gmra.mxu0 %v2762
        %v2825 = vpop.f32.mrf.mxu0
        %v2826 = vadd.f32 0.0, %v2825
        %v2827 = vpop.f32.mrf.mxu0
        %v2828 = vpop.f32.mrf.mxu0
        %v2829 = vadd.f32 0.0, %v2828
        %v2830 = vpop.f32.mrf.mxu0
        %2831 = vmatprep.mubr.bf16.mxu0 0
        %2832 = vmatmul.mubr.bf16.gmra.mxu0 %v2765
        %v2833 = vpop.f32.mrf.mxu0
        %v2834 = vadd.f32 0.0, %v2833
        %v2835 = vpop.f32.mrf.mxu0
        %v2836 = vpop.f32.mrf.mxu0
        %v2837 = vadd.f32 0.0, %v2836
        %v2838 = vpop.f32.mrf.mxu0
        %2839 = vmatprep.mubr.bf16.mxu0 0
        %2840 = vmatmul.mubr.bf16.gmra.mxu0 %v2768
        %v2841 = vpop.f32.mrf.mxu0
        %v2842 = vpop.f32.mrf.mxu0
        %v2843 = vpop.f32.mrf.mxu0
        %v2844 = vpop.f32.mrf.mxu0
        %2845 = vmatprep.mubr.bf16.mxu0 0
        %2846 = vmatmul.mubr.bf16.gmra.mxu0 %v2771
        %v2847 = vpop.f32.mrf.mxu0
        %v2848 = vpop.f32.mrf.mxu0
        %v2849 = vpop.f32.mrf.mxu0
        %v2850 = vpop.f32.mrf.mxu0
        %2851 = vmatprep.mubr.bf16.mxu0 0
        %2852 = vmatmul.mubr.bf16.gmra.mxu0 %v2774
        %v2853 = vpop.f32.mrf.mxu0
        %v2854 = vadd.f32 0.0, %v2853
        %v2855 = vpop.f32.mrf.mxu0
        %v2856 = vpop.f32.mrf.mxu0
        %v2857 = vadd.f32 0.0, %v2856
        %v2858 = vpop.f32.mrf.mxu0
        %2859 = vmatprep.mubr.bf16.mxu0 0
        %2860 = vmatmul.mubr.bf16.gmra.mxu0 %v2777
        %v2861 = vpop.f32.mrf.mxu0
        %v2862 = vadd.f32 0.0, %v2861
        %v2863 = vpop.f32.mrf.mxu0
        %v2864 = vpop.f32.mrf.mxu0
        %v2865 = vadd.f32 0.0, %v2864
        %v2866 = vpop.f32.mrf.mxu0
        %2867 = vmatprep.mubr.bf16.mxu0 0
        %2868 = vmatmul.mubr.bf16.gmra.mxu0 %v2780
        %v2869 = vpop.f32.mrf.mxu0
        %v2870 = vpop.f32.mrf.mxu0
        %v2871 = vpop.f32.mrf.mxu0
        %v2872 = vpop.f32.mrf.mxu0
        %2873 = vdwg.mxu0
        %v2874 = vadd.f32 %v2715, %v2826
        %v2875 = vadd.f32 %v2716, %v2829
        %v2876 = vadd.f32 %v2717, %v2834
        %v2877 = vadd.f32 %v2718, %v2837
        %v2878 = vadd.f32 %v2719, %v2854
        %v2879 = vadd.f32 %v2720, %v2857
        %v2880 = vadd.f32 %v2721, %v2862
        %v2881 = vadd.f32 %v2722, %v2865
        %s2882 = sadd.s32 %s1783, 128
        %s2883 = scalar_lea.vmem [#allocation2], %s2882
        %v2884 = vld [vmem:[%s2883] sm:$0xff]
        %v2885 = vld [vmem:[%s2883 + $0x8] sm:$0xff]
        %v2886 = vld [vmem:[%s2883 + $0x10] sm:$0xff]
        %v2887 = vld [vmem:[%s2883 + $0x18] sm:$0xff]
        %v2888 = vld [vmem:[%s2883 + $0x20] sm:$0xff]
        %v2889 = vld [vmem:[%s2883 + $0x28] sm:$0xff]
        %v2890 = vld [vmem:[%s2883 + $0x30] sm:$0xff]
        %v2891 = vld [vmem:[%s2883 + $0x38] sm:$0xff]
        %v2892 = vld [vmem:[%s2883 + $0x40] sm:$0xff]
        %v2893 = vld [vmem:[%s2883 + $0x48] sm:$0xff]
        %v2894 = vld [vmem:[%s2883 + $0x50] sm:$0xff]
        %v2895 = vld [vmem:[%s2883 + $0x58] sm:$0xff]
        %v2896 = vld [vmem:[%s2883 + $0x60] sm:$0xff]
        %v2897 = vld [vmem:[%s2883 + $0x68] sm:$0xff]
        %v2898 = vld [vmem:[%s2883 + $0x70] sm:$0xff]
        %v2899 = vld [vmem:[%s2883 + $0x78] sm:$0xff]
        %v2900 = vpack.c.bf16 %v2885, %v2884
        %v2901 = vpack.c.bf16 %v2887, %v2886
        %v2902 = vpack.c.bf16 %v2889, %v2888
        %v2903 = vpack.c.bf16 %v2891, %v2890
        %v2904 = vpack.c.bf16 %v2893, %v2892
        %v2905 = vpack.c.bf16 %v2895, %v2894
        %v2906 = vpack.c.bf16 %v2897, %v2896
        %v2907 = vpack.c.bf16 %v2899, %v2898
        %v2911 = vunpack.c.l.b16 %v1766
        %v2912 = vunpack.c.l.b16 %v1767
        %v2913 = vunpack.c.l.b16 %v1768
        %v2914 = vpack.c.b16 %v2912, %v2911
        %v2915 = vpack.c.b16 %v2913, %v2913
        %v2918 = vsel %vm1845, %v2900, 0
        %v2921 = vsel %vm1845, %v2901, 0
        %v2924 = vsel %vm1845, %v2902, 0
        %v2927 = vsel %vm1845, %v2903, 0
        %v2930 = vsel %vm1845, %v2904, 0
        %v2933 = vsel %vm1845, %v2905, 0
        %v2936 = vsel %vm1845, %v2906, 0
        %v2939 = vsel %vm1845, %v2907, 0
        %v2942 = vsel %vm1870, %v2915, 0
        %2944 = vmatprep.subr.bf16.mxu0 0
        %2945 = vmatpush1.bf16.msra.mxu0 0
        %2946 = vmatprep.subr.bf16.mxu0 0
        %2947 = vmatpush1.bf16.msra.mxu0 0
        %2948 = vmatprep.subr.bf16.mxu0 0
        %2949 = vmatpush1.bf16.msra.mxu0 0
        %2950 = vmatprep.subr.bf16.mxu0 0
        %2951 = vmatpush1.bf16.msra.mxu0 0
        %2952 = vmatprep.subr.bf16.mxu0 0
        %2953 = vmatpush1.bf16.msra.mxu0 0
        %2954 = vmatprep.subr.bf16.mxu0 0
        %2955 = vmatpush1.bf16.msra.mxu0 0
        %2956 = vmatprep.subr.bf16.mxu0 0
        %2957 = vmatpush1.bf16.msra.mxu0 %v2942
        %2958 = vmatprep.subr.bf16.mxu0 0
        %2959 = vmatpush1.bf16.msra.mxu0 %v2914
        %2960 = vmatprep.subr.bf16.mxu0 0
        %2961 = vmatpush2.bf16.msra.mxu0 0
        %2962 = vmatprep.subr.bf16.mxu0 0
        %2963 = vmatpush2.bf16.msra.mxu0 0
        %2964 = vmatprep.subr.bf16.mxu0 0
        %2965 = vmatpush2.bf16.msra.mxu0 0
        %2966 = vmatprep.subr.bf16.mxu0 0
        %2967 = vmatpush2.bf16.msra.mxu0 0
        %2968 = vmatprep.subr.bf16.mxu0 0
        %2969 = vmatpush2.bf16.msra.mxu0 0
        %2970 = vmatprep.subr.bf16.mxu0 0
        %2971 = vmatpush2.bf16.msra.mxu0 0
        %2972 = vmatprep.subr.bf16.mxu0 0
        %2973 = vmatpush2.bf16.msra.mxu0 0
        %2974 = vmatprep.subr.bf16.mxu0 0
        %2975 = vmatpush2.bf16.msra.mxu0 0
        %2976 = vmatprep.mubr.bf16.mxu0 0
        %2977 = vmatmul.mubr.bf16.gmra.mxu0 %v2918
        %v2978 = vpop.f32.mrf.mxu0
        %v2979 = vpop.f32.mrf.mxu0
        %v2980 = vpop.f32.mrf.mxu0
        %v2981 = vpop.f32.mrf.mxu0
        %2982 = vmatprep.mubr.bf16.mxu0 0
        %2983 = vmatmul.mubr.bf16.gmra.mxu0 %v2921
        %v2984 = vpop.f32.mrf.mxu0
        %v2985 = vadd.f32 0.0, %v2984
        %v2986 = vpop.f32.mrf.mxu0
        %v2987 = vpop.f32.mrf.mxu0
        %v2988 = vadd.f32 0.0, %v2987
        %v2989 = vpop.f32.mrf.mxu0
        %2990 = vmatprep.mubr.bf16.mxu0 0
        %2991 = vmatmul.mubr.bf16.gmra.mxu0 %v2924
        %v2992 = vpop.f32.mrf.mxu0
        %v2993 = vadd.f32 0.0, %v2992
        %v2994 = vpop.f32.mrf.mxu0
        %v2995 = vpop.f32.mrf.mxu0
        %v2996 = vadd.f32 0.0, %v2995
        %v2997 = vpop.f32.mrf.mxu0
        %2998 = vmatprep.mubr.bf16.mxu0 0
        %2999 = vmatmul.mubr.bf16.gmra.mxu0 %v2927
        %v3000 = vpop.f32.mrf.mxu0
        %v3001 = vpop.f32.mrf.mxu0
        %v3002 = vpop.f32.mrf.mxu0
        %v3003 = vpop.f32.mrf.mxu0
        %3004 = vmatprep.mubr.bf16.mxu0 0
        %3005 = vmatmul.mubr.bf16.gmra.mxu0 %v2930
        %v3006 = vpop.f32.mrf.mxu0
        %v3007 = vpop.f32.mrf.mxu0
        %v3008 = vpop.f32.mrf.mxu0
        %v3009 = vpop.f32.mrf.mxu0
        %3010 = vmatprep.mubr.bf16.mxu0 0
        %3011 = vmatmul.mubr.bf16.gmra.mxu0 %v2933
        %v3012 = vpop.f32.mrf.mxu0
        %v3013 = vadd.f32 0.0, %v3012
        %v3014 = vpop.f32.mrf.mxu0
        %v3015 = vpop.f32.mrf.mxu0
        %v3016 = vadd.f32 0.0, %v3015
        %v3017 = vpop.f32.mrf.mxu0
        %3018 = vmatprep.mubr.bf16.mxu0 0
        %3019 = vmatmul.mubr.bf16.gmra.mxu0 %v2936
        %v3020 = vpop.f32.mrf.mxu0
        %v3021 = vadd.f32 0.0, %v3020
        %v3022 = vpop.f32.mrf.mxu0
        %v3023 = vpop.f32.mrf.mxu0
        %v3024 = vadd.f32 0.0, %v3023
        %v3025 = vpop.f32.mrf.mxu0
        %3026 = vmatprep.mubr.bf16.mxu0 0
        %3027 = vmatmul.mubr.bf16.gmra.mxu0 %v2939
        %v3028 = vpop.f32.mrf.mxu0
        %v3029 = vpop.f32.mrf.mxu0
        %v3030 = vpop.f32.mrf.mxu0
        %v3031 = vpop.f32.mrf.mxu0
        %3032 = vdwg.mxu0
        %v3033 = vadd.f32 %v2874, %v2985
        %v3034 = vadd.f32 %v2875, %v2988
        %v3035 = vadd.f32 %v2876, %v2993
        %v3036 = vadd.f32 %v2877, %v2996
        %v3037 = vadd.f32 %v2878, %v3013
        %v3038 = vadd.f32 %v2879, %v3016
        %v3039 = vadd.f32 %v2880, %v3021
        %v3040 = vadd.f32 %v2881, %v3024
        %s3041 = sadd.s32 %s1783, 130
        %s3042 = scalar_lea.vmem [#allocation2], %s3041
        %v3043 = vld [vmem:[%s3042] sm:$0xff]
        %v3044 = vld [vmem:[%s3042 + $0x8] sm:$0xff]
        %v3045 = vld [vmem:[%s3042 + $0x10] sm:$0xff]
        %v3046 = vld [vmem:[%s3042 + $0x18] sm:$0xff]
        %v3047 = vld [vmem:[%s3042 + $0x20] sm:$0xff]
        %v3048 = vld [vmem:[%s3042 + $0x28] sm:$0xff]
        %v3049 = vld [vmem:[%s3042 + $0x30] sm:$0xff]
        %v3050 = vld [vmem:[%s3042 + $0x38] sm:$0xff]
        %v3051 = vld [vmem:[%s3042 + $0x40] sm:$0xff]
        %v3052 = vld [vmem:[%s3042 + $0x48] sm:$0xff]
        %v3053 = vld [vmem:[%s3042 + $0x50] sm:$0xff]
        %v3054 = vld [vmem:[%s3042 + $0x58] sm:$0xff]
        %v3055 = vld [vmem:[%s3042 + $0x60] sm:$0xff]
        %v3056 = vld [vmem:[%s3042 + $0x68] sm:$0xff]
        %v3057 = vld [vmem:[%s3042 + $0x70] sm:$0xff]
        %v3058 = vld [vmem:[%s3042 + $0x78] sm:$0xff]
        %v3059 = vpack.c.bf16 %v3044, %v3043
        %v3060 = vpack.c.bf16 %v3046, %v3045
        %v3061 = vpack.c.bf16 %v3048, %v3047
        %v3062 = vpack.c.bf16 %v3050, %v3049
        %v3063 = vpack.c.bf16 %v3052, %v3051
        %v3064 = vpack.c.bf16 %v3054, %v3053
        %v3065 = vpack.c.bf16 %v3056, %v3055
        %v3066 = vpack.c.bf16 %v3058, %v3057
        %v3070 = vunpack.c.l.b16 %v1770
        %v3071 = vunpack.c.l.b16 %v1771
        %v3072 = vunpack.c.l.b16 %v1772
        %v3073 = vpack.c.b16 %v3071, %v3070
        %v3074 = vpack.c.b16 %v3072, %v3072
        %v3077 = vsel %vm1845, %v3059, 0
        %v3080 = vsel %vm1845, %v3060, 0
        %v3083 = vsel %vm1845, %v3061, 0
        %v3086 = vsel %vm1845, %v3062, 0
        %v3089 = vsel %vm1845, %v3063, 0
        %v3092 = vsel %vm1845, %v3064, 0
        %v3095 = vsel %vm1845, %v3065, 0
        %v3098 = vsel %vm1845, %v3066, 0
        %v3101 = vsel %vm1870, %v3074, 0
        %3103 = vmatprep.subr.bf16.mxu0 0
        %3104 = vmatpush1.bf16.msra.mxu0 0
        %3105 = vmatprep.subr.bf16.mxu0 0
        %3106 = vmatpush1.bf16.msra.mxu0 0
        %3107 = vmatprep.subr.bf16.mxu0 0
        %3108 = vmatpush1.bf16.msra.mxu0 0
        %3109 = vmatprep.subr.bf16.mxu0 0
        %3110 = vmatpush1.bf16.msra.mxu0 0
        %3111 = vmatprep.subr.bf16.mxu0 0
        %3112 = vmatpush1.bf16.msra.mxu0 0
        %3113 = vmatprep.subr.bf16.mxu0 0
        %3114 = vmatpush1.bf16.msra.mxu0 0
        %3115 = vmatprep.subr.bf16.mxu0 0
        %3116 = vmatpush1.bf16.msra.mxu0 %v3101
        %3117 = vmatprep.subr.bf16.mxu0 0
        %3118 = vmatpush1.bf16.msra.mxu0 %v3073
        %3119 = vmatprep.subr.bf16.mxu0 0
        %3120 = vmatpush2.bf16.msra.mxu0 0
        %3121 = vmatprep.subr.bf16.mxu0 0
        %3122 = vmatpush2.bf16.msra.mxu0 0
        %3123 = vmatprep.subr.bf16.mxu0 0
        %3124 = vmatpush2.bf16.msra.mxu0 0
        %3125 = vmatprep.subr.bf16.mxu0 0
        %3126 = vmatpush2.bf16.msra.mxu0 0
        %3127 = vmatprep.subr.bf16.mxu0 0
        %3128 = vmatpush2.bf16.msra.mxu0 0
        %3129 = vmatprep.subr.bf16.mxu0 0
        %3130 = vmatpush2.bf16.msra.mxu0 0
        %3131 = vmatprep.subr.bf16.mxu0 0
        %3132 = vmatpush2.bf16.msra.mxu0 0
        %3133 = vmatprep.subr.bf16.mxu0 0
        %3134 = vmatpush2.bf16.msra.mxu0 0
        %3135 = vmatprep.mubr.bf16.mxu0 0
        %3136 = vmatmul.mubr.bf16.gmra.mxu0 %v3077
        %v3137 = vpop.f32.mrf.mxu0
        %v3138 = vpop.f32.mrf.mxu0
        %v3139 = vpop.f32.mrf.mxu0
        %v3140 = vpop.f32.mrf.mxu0
        %3141 = vmatprep.mubr.bf16.mxu0 0
        %3142 = vmatmul.mubr.bf16.gmra.mxu0 %v3080
        %v3143 = vpop.f32.mrf.mxu0
        %v3144 = vadd.f32 0.0, %v3143
        %v3145 = vpop.f32.mrf.mxu0
        %v3146 = vpop.f32.mrf.mxu0
        %v3147 = vadd.f32 0.0, %v3146
        %v3148 = vpop.f32.mrf.mxu0
        %3149 = vmatprep.mubr.bf16.mxu0 0
        %3150 = vmatmul.mubr.bf16.gmra.mxu0 %v3083
        %v3151 = vpop.f32.mrf.mxu0
        %v3152 = vadd.f32 0.0, %v3151
        %v3153 = vpop.f32.mrf.mxu0
        %v3154 = vpop.f32.mrf.mxu0
        %v3155 = vadd.f32 0.0, %v3154
        %v3156 = vpop.f32.mrf.mxu0
        %3157 = vmatprep.mubr.bf16.mxu0 0
        %3158 = vmatmul.mubr.bf16.gmra.mxu0 %v3086
        %v3159 = vpop.f32.mrf.mxu0
        %v3160 = vpop.f32.mrf.mxu0
        %v3161 = vpop.f32.mrf.mxu0
        %v3162 = vpop.f32.mrf.mxu0
        %3163 = vmatprep.mubr.bf16.mxu0 0
        %3164 = vmatmul.mubr.bf16.gmra.mxu0 %v3089
        %v3165 = vpop.f32.mrf.mxu0
        %v3166 = vpop.f32.mrf.mxu0
        %v3167 = vpop.f32.mrf.mxu0
        %v3168 = vpop.f32.mrf.mxu0
        %3169 = vmatprep.mubr.bf16.mxu0 0
        %3170 = vmatmul.mubr.bf16.gmra.mxu0 %v3092
        %v3171 = vpop.f32.mrf.mxu0
        %v3172 = vadd.f32 0.0, %v3171
        %v3173 = vpop.f32.mrf.mxu0
        %v3174 = vpop.f32.mrf.mxu0
        %v3175 = vadd.f32 0.0, %v3174
        %v3176 = vpop.f32.mrf.mxu0
        %3177 = vmatprep.mubr.bf16.mxu0 0
        %3178 = vmatmul.mubr.bf16.gmra.mxu0 %v3095
        %v3179 = vpop.f32.mrf.mxu0
        %v3180 = vadd.f32 0.0, %v3179
        %v3181 = vpop.f32.mrf.mxu0
        %v3182 = vpop.f32.mrf.mxu0
        %v3183 = vadd.f32 0.0, %v3182
        %v3184 = vpop.f32.mrf.mxu0
        %3185 = vmatprep.mubr.bf16.mxu0 0
        %3186 = vmatmul.mubr.bf16.gmra.mxu0 %v3098
        %v3187 = vpop.f32.mrf.mxu0
        %v3188 = vpop.f32.mrf.mxu0
        %v3189 = vpop.f32.mrf.mxu0
        %v3190 = vpop.f32.mrf.mxu0
        %3191 = vdwg.mxu0
        %v3192 = vadd.f32 %v3033, %v3144
        %v3193 = vadd.f32 %v3034, %v3147
        %v3194 = vadd.f32 %v3035, %v3152
        %v3195 = vadd.f32 %v3036, %v3155
        %v3196 = vadd.f32 %v3037, %v3172
        %v3197 = vadd.f32 %v3038, %v3175
        %v3198 = vadd.f32 %v3039, %v3180
        %v3199 = vadd.f32 %v3040, %v3183
        %v3200 = vlaneseq
        %v3201 = vshrl.u32 %v3200, 7
        %v3202 = vsub.s32 0, %v3201
        %v3203 = vrot.slane %v1773, %v3202
        %v3204 = vmul.f32 %v3203, %v3192
        %v3205 = vmul.f32 %v3203, %v3193
        %v3206 = vmul.f32 %v3203, %v3194
        %v3207 = vmul.f32 %v3203, %v3195
        %v3208 = vmul.f32 %v3203, %v3196
        %v3209 = vmul.f32 %v3203, %v3197
        %v3210 = vmul.f32 %v3203, %v3198
        %v3211 = vmul.f32 %v3203, %v3199
        %v3212 = vlaneseq
        %v3213 = vshrl.u32 %v3212, 7
        %v3214 = vsub.s32 0, %v3213
        %v3215 = vrot.slane %v1774, %v3214
        %v3216 = vadd.f32 %v3204, %v3215
        %v3217 = vadd.f32 %v3205, %v3215
        %v3218 = vadd.f32 %v3206, %v3215
        %v3219 = vadd.f32 %v3207, %v3215
        %v3220 = vadd.f32 %v3208, %v3215
        %v3221 = vadd.f32 %v3209, %v3215
        %v3222 = vadd.f32 %v3210, %v3215
        %v3223 = vadd.f32 %v3211, %v3215
        %v3224 = vmul.f32 %v3216, 0.2
        %v3225 = vmul.f32 %v3217, 0.2
        %v3226 = vmul.f32 %v3218, 0.2
        %v3227 = vmul.f32 %v3219, 0.2
        %v3228 = vmul.f32 %v3220, 0.2
        %v3229 = vmul.f32 %v3221, 0.2
        %v3230 = vmul.f32 %v3222, 0.2
        %v3231 = vmul.f32 %v3223, 0.2
        %v3232 = vmax.f32 %v3216, %v3224
        %v3233 = vmax.f32 %v3217, %v3225
        %v3234 = vmax.f32 %v3218, %v3226
        %v3235 = vmax.f32 %v3219, %v3227
        %v3236 = vmax.f32 %v3220, %v3228
        %v3237 = vmax.f32 %v3221, %v3229
        %v3238 = vmax.f32 %v3222, %v3230
        %v3239 = vmax.f32 %v3223, %v3231
        %s3240 = sadd.s32 %s1783, 16
        %s3241 = scalar_lea.vmem [#allocation3], %s3240
        %3242 = vst.msk [vmem:[%s3241] sm:$0xff] %vm1845, %v3232
        %3243 = vst.msk [vmem:[%s3241 + $0x8] sm:$0xff] %vm1845, %v3233
        %3244 = vst.msk [vmem:[%s3241 + $0x10] sm:$0xff] %vm1845, %v3234
        %3245 = vst.msk [vmem:[%s3241 + $0x18] sm:$0xff] %vm1845, %v3235
        %s3246 = sadd.s32 %s1783, 80
        %s3247 = scalar_lea.vmem [#allocation3], %s3246
        %3248 = vst.msk [vmem:[%s3247] sm:$0xff] %vm1845, %v3236
        %3249 = vst.msk [vmem:[%s3247 + $0x8] sm:$0xff] %vm1845, %v3237
        %3250 = vst.msk [vmem:[%s3247 + $0x10] sm:$0xff] %vm1845, %v3238
        %3251 = vst.msk [vmem:[%s3247 + $0x18] sm:$0xff] %vm1845, %v3239
      $region70: #{lrnet_forward.1} parent=43 // loop_footer
        %s1780 = sadd.s32 1, %s1776
      $region71: #{lrnet_forward.1} parent=43 // loop_footer_branch
        %1775 = sbr.rel target = $region67
      $region72: #{lrnet_forward.1} parent=43 // loop_exit
        _
      %s3252 = scalar_lea.vmem %s2, 108
      %v3253 = vld [vmem:[%s3252] sm:$0xf]
      %v3254 = vld [vmem:[%s3252 + $0x4] sm:$0xf]
      %v3255 = vld [vmem:[%s3252 + $0x8] sm:$0xf]
      %s3256 = scalar_lea.vmem %s2, 120
      %v3257 = vld [vmem:[%s3256] sm:$0xf]
      %v3258 = vld [vmem:[%s3256 + $0x4] sm:$0xf]
      %v3259 = vld [vmem:[%s3256 + $0x8] sm:$0xf]
      %s3260 = scalar_lea.vmem %s2, 132
      %v3261 = vld [vmem:[%s3260] sm:$0xf]
      %v3262 = vld [vmem:[%s3260 + $0x4] sm:$0xf]
      %v3263 = vld [vmem:[%s3260 + $0x8] sm:$0xf]
      %s3264 = scalar_lea.vmem %s2, 144
      %v3265 = vld [vmem:[%s3264] sm:$0xf]
      %v3266 = vld [vmem:[%s3264 + $0x4] sm:$0xf]
      %v3267 = vld [vmem:[%s3264 + $0x8] sm:$0xf]
      %s3268 = scalar_lea.vmem %s2, 156
      %v3269 = vld [vmem:[%s3268] sm:$0xf]
      %v3270 = vld [vmem:[%s3268 + $0x4] sm:$0xf]
      %v3271 = vld [vmem:[%s3268 + $0x8] sm:$0xf]
      %s3272 = scalar_lea.vmem %s2, 168
      %v3273 = vld [vmem:[%s3272] sm:$0xf]
      %v3274 = vld [vmem:[%s3272 + $0x4] sm:$0xf]
      %v3275 = vld [vmem:[%s3272 + $0x8] sm:$0xf]
      %s3276 = scalar_lea.vmem %s2, 180
      %v3277 = vld [vmem:[%s3276] sm:$0xf]
      %v3278 = vld [vmem:[%s3276 + $0x4] sm:$0xf]
      %v3279 = vld [vmem:[%s3276 + $0x8] sm:$0xf]
      %s3280 = scalar_lea.vmem %s2, 192
      %v3281 = vld [vmem:[%s3280] sm:$0xf]
      %v3282 = vld [vmem:[%s3280 + $0x4] sm:$0xf]
      %v3283 = vld [vmem:[%s3280 + $0x8] sm:$0xf]
      %s3284 = scalar_lea.vmem %s2, 204
      %v3285 = vld [vmem:[%s3284] sm:$0xf]
      %v3286 = vld [vmem:[%s3284 + $0x4] sm:$0xf]
      %v3287 = vld [vmem:[%s3284 + $0x8] sm:$0xf]
      %v3288 = vld [vmem:[%s3 + $0x4] sm:$0x1]
      %v3289 = vld [vmem:[%s3 + $0x5] sm:$0x1]
      loop: start=0, step=1, limit=16
      $region73: #{lrnet_forward.1} parent=43 // loop_pre_header
        _
      $region74: #{lrnet_forward.1} parent=43 // loop_header
        %s3291 = sphi 0, %s3295
        %p3292 = scmp.ge.s32.totalorder %s3291, 16
      $region75: #{lrnet_forward.1} parent=43 // loop_header_branch
        %3294 = sbr.rel (%p3292) target = $region79
      $region76: #{lrnet_forward.1} parent=43 // loop_body
        %s3296 = smul.u32 %s3291, 2
        %s3297 = sadd.s32 %s3296, 17
        %s3298 = smul.u32 %s3297, 64
        %s3299 = sadd.s32 %s3298, 4294967036
        %s3300 = scalar_lea.vmem [#allocation3], %s3299
        %v3301 = vld [vmem:[%s3300] sm:$0xff]
        %v3302 = vld [vmem:[%s3300 + $0x8] sm:$0xff]
        %v3303 = vld [vmem:[%s3300 + $0x10] sm:$0xff]
        %v3304 = vld [vmem:[%s3300 + $0x18] sm:$0xff]
        %v3305 = vld [vmem:[%s3300 + $0x20] sm:$0xff]
        %v3306 = vld [vmem:[%s3300 + $0x28] sm:$0xff]
        %v3307 = vld [vmem:[%s3300 + $0x30] sm:$0xff]
        %v3308 = vld [vmem:[%s3300 + $0x38] sm:$0xff]
        %v3309 = vld [vmem:[%s3300 + $0x40] sm:$0xff]
        %v3310 = vld [vmem:[%s3300 + $0x48] sm:$0xff]
        %v3311 = vld [vmem:[%s3300 + $0x50] sm:$0xff]
        %v3312 = vld [vmem:[%s3300 + $0x58] sm:$0xff]
        %v3313 = vld [vmem:[%s3300 + $0x60] sm:$0xff]
        %v3314 = vld [vmem:[%s3300 + $0x68] sm:$0xff]
        %v3315 = vld [vmem:[%s3300 + $0x70] sm:$0xff]
        %v3316 = vld [vmem:[%s3300 + $0x78] sm:$0xff]
        %v3317 = vpack.c.bf16 %v3302, %v3301
        %v3318 = vpack.c.bf16 %v3304, %v3303
        %v3319 = vpack.c.bf16 %v3306, %v3305
        %v3320 = vpack.c.bf16 %v3308, %v3307
        %v3321 = vpack.c.bf16 %v3310, %v3309
        %v3322 = vpack.c.bf16 %v3312, %v3311
        %v3323 = vpack.c.bf16 %v3314, %v3313
        %v3324 = vpack.c.bf16 %v3316, %v3315
        %s3325 = sadd.s32 %s3298, 4294967040
        %s3326 = scalar_lea.vmem [#allocation3], %s3325
        %v3327 = vld [vmem:[%s3326] sm:$0xff]
        %v3328 = vld [vmem:[%s3326 + $0x8] sm:$0xff]
        %v3329 = vld [vmem:[%s3326 + $0x10] sm:$0xff]
        %v3330 = vld [vmem:[%s3326 + $0x18] sm:$0xff]
        %v3331 = vld [vmem:[%s3326 + $0x20] sm:$0xff]
        %v3332 = vld [vmem:[%s3326 + $0x28] sm:$0xff]
        %v3333 = vld [vmem:[%s3326 + $0x30] sm:$0xff]
        %v3334 = vld [vmem:[%s3326 + $0x38] sm:$0xff]
        %v3335 = vld [vmem:[%s3326 + $0x40] sm:$0xff]
        %v3336 = vld [vmem:[%s3326 + $0x48] sm:$0xff]
        %v3337 = vld [vmem:[%s3326 + $0x50] sm:$0xff]
        %v3338 = vld [vmem:[%s3326 + $0x58] sm:$0xff]
        %v3339 = vld [vmem:[%s3326 + $0x60] sm:$0xff]
        %v3340 = vld [vmem:[%s3326 + $0x68] sm:$0xff]
        %v3341 = vld [vmem:[%s3326 + $0x70] sm:$0xff]
        %v3342 = vld [vmem:[%s3326 + $0x78] sm:$0xff]
        %v3343 = vpack.c.bf16 %v3328, %v3327
        %v3344 = vpack.c.bf16 %v3330, %v3329
        %v3345 = vpack.c.bf16 %v3332, %v3331
        %v3346 = vpack.c.bf16 %v3334, %v3333
        %v3347 = vpack.c.bf16 %v3336, %v3335
        %v3348 = vpack.c.bf16 %v3338, %v3337
        %v3349 = vpack.c.bf16 %v3340, %v3339
        %v3350 = vpack.c.bf16 %v3342, %v3341
        %v3354 = vunpack.c.l.b16 %v3257
        %v3355 = vunpack.c.l.b16 %v3258
        %v3356 = vunpack.c.l.b16 %v3259
        %v3357 = vpack.c.b16 %v3355, %v3354
        %v3358 = vpack.c.b16 %v3356, %v3356
        %vm3360 = vcmask 195584
        %v3362 = vsel %vm3360, %v3343, 0
        %v3365 = vsel %vm3360, %v3344, 0
        %v3368 = vsel %vm3360, %v3345, 0
        %v3371 = vsel %vm3360, %v3346, 0
        %v3374 = vsel %vm3360, %v3347, 0
        %v3377 = vsel %vm3360, %v3348, 0
        %v3380 = vsel %vm3360, %v3349, 0
        %v3383 = vsel %vm3360, %v3350, 0
        %vm3385 = vcmask 1043456
        %v3387 = vsel %vm3385, %v3358, 0
        %3389 = vmatprep.subr.bf16.mxu0 0
        %3390 = vmatpush1.bf16.msra.mxu0 0
        %3391 = vmatprep.subr.bf16.mxu0 0
        %3392 = vmatpush1.bf16.msra.mxu0 0
        %3393 = vmatprep.subr.bf16.mxu0 0
        %3394 = vmatpush1.bf16.msra.mxu0 0
        %3395 = vmatprep.subr.bf16.mxu0 0
        %3396 = vmatpush1.bf16.msra.mxu0 0
        %3397 = vmatprep.subr.bf16.mxu0 0
        %3398 = vmatpush1.bf16.msra.mxu0 0
        %3399 = vmatprep.subr.bf16.mxu0 0
        %3400 = vmatpush1.bf16.msra.mxu0 0
        %3401 = vmatprep.subr.bf16.mxu0 0
        %3402 = vmatpush1.bf16.msra.mxu0 %v3387
        %3403 = vmatprep.subr.bf16.mxu0 0
        %3404 = vmatpush1.bf16.msra.mxu0 %v3357
        %3405 = vmatprep.subr.bf16.mxu0 0
        %3406 = vmatpush2.bf16.msra.mxu0 0
        %3407 = vmatprep.subr.bf16.mxu0 0
        %3408 = vmatpush2.bf16.msra.mxu0 0
        %3409 = vmatprep.subr.bf16.mxu0 0
        %3410 = vmatpush2.bf16.msra.mxu0 0
        %3411 = vmatprep.subr.bf16.mxu0 0
        %3412 = vmatpush2.bf16.msra.mxu0 0
        %3413 = vmatprep.subr.bf16.mxu0 0
        %3414 = vmatpush2.bf16.msra.mxu0 0
        %3415 = vmatprep.subr.bf16.mxu0 0
        %3416 = vmatpush2.bf16.msra.mxu0 0
        %3417 = vmatprep.subr.bf16.mxu0 0
        %3418 = vmatpush2.bf16.msra.mxu0 0
        %3419 = vmatprep.subr.bf16.mxu0 0
        %3420 = vmatpush2.bf16.msra.mxu0 0
        %3421 = vmatprep.mubr.bf16.mxu0 0
        %3422 = vmatmul.mubr.bf16.gmra.mxu0 %v3362
        %v3423 = vpop.f32.mrf.mxu0
        %v3424 = vpop.f32.mrf.mxu0
        %v3425 = vpop.f32.mrf.mxu0
        %v3426 = vpop.f32.mrf.mxu0
        %3427 = vmatprep.mubr.bf16.mxu0 0
        %3428 = vmatmul.mubr.bf16.gmra.mxu0 %v3365
        %v3429 = vpop.f32.mrf.mxu0
        %v3430 = vadd.f32 0.0, %v3429
        %v3431 = vpop.f32.mrf.mxu0
        %v3432 = vpop.f32.mrf.mxu0
        %v3433 = vadd.f32 0.0, %v3432
        %v3434 = vpop.f32.mrf.mxu0
        %3435 = vmatprep.mubr.bf16.mxu0 0
        %3436 = vmatmul.mubr.bf16.gmra.mxu0 %v3368
        %v3437 = vpop.f32.mrf.mxu0
        %v3438 = vadd.f32 0.0, %v3437
        %v3439 = vpop.f32.mrf.mxu0
        %v3440 = vpop.f32.mrf.mxu0
        %v3441 = vadd.f32 0.0, %v3440
        %v3442 = vpop.f32.mrf.mxu0
        %3443 = vmatprep.mubr.bf16.mxu0 0
        %3444 = vmatmul.mubr.bf16.gmra.mxu0 %v3371
        %v3445 = vpop.f32.mrf.mxu0
        %v3446 = vpop.f32.mrf.mxu0
        %v3447 = vpop.f32.mrf.mxu0
        %v3448 = vpop.f32.mrf.mxu0
        %3449 = vmatprep.mubr.bf16.mxu0 0
        %3450 = vmatmul.mubr.bf16.gmra.mxu0 %v3374
        %v3451 = vpop.f32.mrf.mxu0
        %v3452 = vpop.f32.mrf.mxu0
        %v3453 = vpop.f32.mrf.mxu0
        %v3454 = vpop.f32.mrf.mxu0
        %3455 = vmatprep.mubr.bf16.mxu0 0
        %3456 = vmatmul.mubr.bf16.gmra.mxu0 %v3377
        %v3457 = vpop.f32.mrf.mxu0
        %v3458 = vadd.f32 0.0, %v3457
        %v3459 = vpop.f32.mrf.mxu0
        %v3460 = vpop.f32.mrf.mxu0
        %v3461 = vadd.f32 0.0, %v3460
        %v3462 = vpop.f32.mrf.mxu0
        %3463 = vmatprep.mubr.bf16.mxu0 0
        %3464 = vmatmul.mubr.bf16.gmra.mxu0 %v3380
        %v3465 = vpop.f32.mrf.mxu0
        %v3466 = vadd.f32 0.0, %v3465
        %v3467 = vpop.f32.mrf.mxu0
        %v3468 = vpop.f32.mrf.mxu0
        %v3469 = vadd.f32 0.0, %v3468
        %v3470 = vpop.f32.mrf.mxu0
        %3471 = vmatprep.mubr.bf16.mxu0 0
        %3472 = vmatmul.mubr.bf16.gmra.mxu0 %v3383
        %v3473 = vpop.f32.mrf.mxu0
        %v3474 = vpop.f32.mrf.mxu0
        %v3475 = vpop.f32.mrf.mxu0
        %v3476 = vpop.f32.mrf.mxu0
        %3477 = vdwg.mxu0
        %v3481 = vunpack.c.l.b16 %v3253
        %v3482 = vunpack.c.l.b16 %v3254
        %v3483 = vunpack.c.l.b16 %v3255
        %v3484 = vpack.c.b16 %v3482, %v3481
        %v3485 = vpack.c.b16 %v3483, %v3483
        %v3488 = vsel %vm3360, %v3317, 0
        %v3491 = vsel %vm3360, %v3318, 0
        %v3494 = vsel %vm3360, %v3319, 0
        %v3497 = vsel %vm3360, %v3320, 0
        %v3500 = vsel %vm3360, %v3321, 0
        %v3503 = vsel %vm3360, %v3322, 0
        %v3506 = vsel %vm3360, %v3323, 0
        %v3509 = vsel %vm3360, %v3324, 0
        %v3512 = vsel %vm3385, %v3485, 0
        %3514 = vmatprep.subr.bf16.mxu0 0
        %3515 = vmatpush1.bf16.msra.mxu0 0
        %3516 = vmatprep.subr.bf16.mxu0 0
        %3517 = vmatpush1.bf16.msra.mxu0 0
        %3518 = vmatprep.subr.bf16.mxu0 0
        %3519 = vmatpush1.bf16.msra.mxu0 0
        %3520 = vmatprep.subr.bf16.mxu0 0
        %3521 = vmatpush1.bf16.msra.mxu0 0
        %3522 = vmatprep.subr.bf16.mxu0 0
        %3523 = vmatpush1.bf16.msra.mxu0 0
        %3524 = vmatprep.subr.bf16.mxu0 0
        %3525 = vmatpush1.bf16.msra.mxu0 0
        %3526 = vmatprep.subr.bf16.mxu0 0
        %3527 = vmatpush1.bf16.msra.mxu0 %v3512
        %3528 = vmatprep.subr.bf16.mxu0 0
        %3529 = vmatpush1.bf16.msra.mxu0 %v3484
        %3530 = vmatprep.subr.bf16.mxu0 0
        %3531 = vmatpush2.bf16.msra.mxu0 0
        %3532 = vmatprep.subr.bf16.mxu0 0
        %3533 = vmatpush2.bf16.msra.mxu0 0
        %3534 = vmatprep.subr.bf16.mxu0 0
        %3535 = vmatpush2.bf16.msra.mxu0 0
        %3536 = vmatprep.subr.bf16.mxu0 0
        %3537 = vmatpush2.bf16.msra.mxu0 0
        %3538 = vmatprep.subr.bf16.mxu0 0
        %3539 = vmatpush2.bf16.msra.mxu0 0
        %3540 = vmatprep.subr.bf16.mxu0 0
        %3541 = vmatpush2.bf16.msra.mxu0 0
        %3542 = vmatprep.subr.bf16.mxu0 0
        %3543 = vmatpush2.bf16.msra.mxu0 0
        %3544 = vmatprep.subr.bf16.mxu0 0
        %3545 = vmatpush2.bf16.msra.mxu0 0
        %3546 = vmatprep.mubr.bf16.mxu0 0
        %3547 = vmatmul.mubr.bf16.gmra.mxu0 %v3488
        %v3548 = vpop.f32.mrf.mxu0
        %v3549 = vpop.f32.mrf.mxu0
        %v3550 = vpop.f32.mrf.mxu0
        %v3551 = vpop.f32.mrf.mxu0
        %3552 = vmatprep.mubr.bf16.mxu0 0
        %3553 = vmatmul.mubr.bf16.gmra.mxu0 %v3491
        %v3554 = vpop.f32.mrf.mxu0
        %v3555 = vadd.f32 %v3430, %v3554
        %v3556 = vpop.f32.mrf.mxu0
        %v3557 = vpop.f32.mrf.mxu0
        %v3558 = vadd.f32 %v3433, %v3557
        %v3559 = vpop.f32.mrf.mxu0
        %3560 = vmatprep.mubr.bf16.mxu0 0
        %3561 = vmatmul.mubr.bf16.gmra.mxu0 %v3494
        %v3562 = vpop.f32.mrf.mxu0
        %v3563 = vadd.f32 %v3438, %v3562
        %v3564 = vpop.f32.mrf.mxu0
        %v3565 = vpop.f32.mrf.mxu0
        %v3566 = vadd.f32 %v3441, %v3565
        %v3567 = vpop.f32.mrf.mxu0
        %3568 = vmatprep.mubr.bf16.mxu0 0
        %3569 = vmatmul.mubr.bf16.gmra.mxu0 %v3497
        %v3570 = vpop.f32.mrf.mxu0
        %v3571 = vpop.f32.mrf.mxu0
        %v3572 = vpop.f32.mrf.mxu0
        %v3573 = vpop.f32.mrf.mxu0
        %3574 = vmatprep.mubr.bf16.mxu0 0
        %3575 = vmatmul.mubr.bf16.gmra.mxu0 %v3500
        %v3576 = vpop.f32.mrf.mxu0
        %v3577 = vpop.f32.mrf.mxu0
        %v3578 = vpop.f32.mrf.mxu0
        %v3579 = vpop.f32.mrf.mxu0
        %3580 = vmatprep.mubr.bf16.mxu0 0
        %3581 = vmatmul.mubr.bf16.gmra.mxu0 %v3503
        %v3582 = vpop.f32.mrf.mxu0
        %v3583 = vadd.f32 %v3458, %v3582
        %v3584 = vpop.f32.mrf.mxu0
        %v3585 = vpop.f32.mrf.mxu0
        %v3586 = vadd.f32 %v3461, %v3585
        %v3587 = vpop.f32.mrf.mxu0
        %3588 = vmatprep.mubr.bf16.mxu0 0
        %3589 = vmatmul.mubr.bf16.gmra.mxu0 %v3506
        %v3590 = vpop.f32.mrf.mxu0
        %v3591 = vadd.f32 %v3466, %v3590
        %v3592 = vpop.f32.mrf.mxu0
        %v3593 = vpop.f32.mrf.mxu0
        %v3594 = vadd.f32 %v3469, %v3593
        %v3595 = vpop.f32.mrf.mxu0
        %3596 = vmatprep.mubr.bf16.mxu0 0
        %3597 = vmatmul.mubr.bf16.gmra.mxu0 %v3509
        %v3598 = vpop.f32.mrf.mxu0
        %v3599 = vpop.f32.mrf.mxu0
        %v3600 = vpop.f32.mrf.mxu0
        %v3601 = vpop.f32.mrf.mxu0
        %3602 = vdwg.mxu0
        %s3603 = sadd.s32 %s3298, 4294967044
        %s3604 = scalar_lea.vmem [#allocation3], %s3603
        %v3605 = vld [vmem:[%s3604] sm:$0xff]
        %v3606 = vld [vmem:[%s3604 + $0x8] sm:$0xff]
        %v3607 = vld [vmem:[%s3604 + $0x10] sm:$0xff]
        %v3608 = vld [vmem:[%s3604 + $0x18] sm:$0xff]
        %v3609 = vld [vmem:[%s3604 + $0x20] sm:$0xff]
        %v3610 = vld [vmem:[%s3604 + $0x28] sm:$0xff]
        %v3611 = vld [vmem:[%s3604 + $0x30] sm:$0xff]
        %v3612 = vld [vmem:[%s3604 + $0x38] sm:$0xff]
        %v3613 = vld [vmem:[%s3604 + $0x40] sm:$0xff]
        %v3614 = vld [vmem:[%s3604 + $0x48] sm:$0xff]
        %v3615 = vld [vmem:[%s3604 + $0x50] sm:$0xff]
        %v3616 = vld [vmem:[%s3604 + $0x58] sm:$0xff]
        %v3617 = vld [vmem:[%s3604 + $0x60] sm:$0xff]
        %v3618 = vld [vmem:[%s3604 + $0x68] sm:$0xff]
        %v3619 = vld [vmem:[%s3604 + $0x70] sm:$0xff]
        %v3620 = vld [vmem:[%s3604 + $0x78] sm:$0xff]
        %v3621 = vpack.c.bf16 %v3606, %v3605
        %v3622 = vpack.c.bf16 %v3608, %v3607
        %v3623 = vpack.c.bf16 %v3610, %v3609
        %v3624 = vpack.c.bf16 %v3612, %v3611
        %v3625 = vpack.c.bf16 %v3614, %v3613
        %v3626 = vpack.c.bf16 %v3616, %v3615
        %v3627 = vpack.c.bf16 %v3618, %v3617
        %v3628 = vpack.c.bf16 %v3620, %v3619
        %v3632 = vunpack.c.l.b16 %v3261
        %v3633 = vunpack.c.l.b16 %v3262
        %v3634 = vunpack.c.l.b16 %v3263
        %v3635 = vpack.c.b16 %v3633, %v3632
        %v3636 = vpack.c.b16 %v3634, %v3634
        %v3639 = vsel %vm3360, %v3621, 0
        %v3642 = vsel %vm3360, %v3622, 0
        %v3645 = vsel %vm3360, %v3623, 0
        %v3648 = vsel %vm3360, %v3624, 0
        %v3651 = vsel %vm3360, %v3625, 0
        %v3654 = vsel %vm3360, %v3626, 0
        %v3657 = vsel %vm3360, %v3627, 0
        %v3660 = vsel %vm3360, %v3628, 0
        %v3663 = vsel %vm3385, %v3636, 0
        %3665 = vmatprep.subr.bf16.mxu0 0
        %3666 = vmatpush1.bf16.msra.mxu0 0
        %3667 = vmatprep.subr.bf16.mxu0 0
        %3668 = vmatpush1.bf16.msra.mxu0 0
        %3669 = vmatprep.subr.bf16.mxu0 0
        %3670 = vmatpush1.bf16.msra.mxu0 0
        %3671 = vmatprep.subr.bf16.mxu0 0
        %3672 = vmatpush1.bf16.msra.mxu0 0
        %3673 = vmatprep.subr.bf16.mxu0 0
        %3674 = vmatpush1.bf16.msra.mxu0 0
        %3675 = vmatprep.subr.bf16.mxu0 0
        %3676 = vmatpush1.bf16.msra.mxu0 0
        %3677 = vmatprep.subr.bf16.mxu0 0
        %3678 = vmatpush1.bf16.msra.mxu0 %v3663
        %3679 = vmatprep.subr.bf16.mxu0 0
        %3680 = vmatpush1.bf16.msra.mxu0 %v3635
        %3681 = vmatprep.subr.bf16.mxu0 0
        %3682 = vmatpush2.bf16.msra.mxu0 0
        %3683 = vmatprep.subr.bf16.mxu0 0
        %3684 = vmatpush2.bf16.msra.mxu0 0
        %3685 = vmatprep.subr.bf16.mxu0 0
        %3686 = vmatpush2.bf16.msra.mxu0 0
        %3687 = vmatprep.subr.bf16.mxu0 0
        %3688 = vmatpush2.bf16.msra.mxu0 0
        %3689 = vmatprep.subr.bf16.mxu0 0
        %3690 = vmatpush2.bf16.msra.mxu0 0
        %3691 = vmatprep.subr.bf16.mxu0 0
        %3692 = vmatpush2.bf16.msra.mxu0 0
        %3693 = vmatprep.subr.bf16.mxu0 0
        %3694 = vmatpush2.bf16.msra.mxu0 0
        %3695 = vmatprep.subr.bf16.mxu0 0
        %3696 = vmatpush2.bf16.msra.mxu0 0
        %3697 = vmatprep.mubr.bf16.mxu0 0
        %3698 = vmatmul.mubr.bf16.gmra.mxu0 %v3639
        %v3699 = vpop.f32.mrf.mxu0
        %v3700 = vpop.f32.mrf.mxu0
        %v3701 = vpop.f32.mrf.mxu0
        %v3702 = vpop.f32.mrf.mxu0
        %3703 = vmatprep.mubr.bf16.mxu0 0
        %3704 = vmatmul.mubr.bf16.gmra.mxu0 %v3642
        %v3705 = vpop.f32.mrf.mxu0
        %v3706 = vadd.f32 0.0, %v3705
        %v3707 = vpop.f32.mrf.mxu0
        %v3708 = vpop.f32.mrf.mxu0
        %v3709 = vadd.f32 0.0, %v3708
        %v3710 = vpop.f32.mrf.mxu0
        %3711 = vmatprep.mubr.bf16.mxu0 0
        %3712 = vmatmul.mubr.bf16.gmra.mxu0 %v3645
        %v3713 = vpop.f32.mrf.mxu0
        %v3714 = vadd.f32 0.0, %v3713
        %v3715 = vpop.f32.mrf.mxu0
        %v3716 = vpop.f32.mrf.mxu0
        %v3717 = vadd.f32 0.0, %v3716
        %v3718 = vpop.f32.mrf.mxu0
        %3719 = vmatprep.mubr.bf16.mxu0 0
        %3720 = vmatmul.mubr.bf16.gmra.mxu0 %v3648
        %v3721 = vpop.f32.mrf.mxu0
        %v3722 = vpop.f32.mrf.mxu0
        %v3723 = vpop.f32.mrf.mxu0
        %v3724 = vpop.f32.mrf.mxu0
        %3725 = vmatprep.mubr.bf16.mxu0 0
        %3726 = vmatmul.mubr.bf16.gmra.mxu0 %v3651
        %v3727 = vpop.f32.mrf.mxu0
        %v3728 = vpop.f32.mrf.mxu0
        %v3729 = vpop.f32.mrf.mxu0
        %v3730 = vpop.f32.mrf.mxu0
        %3731 = vmatprep.mubr.bf16.mxu0 0
        %3732 = vmatmul.mubr.bf16.gmra.mxu0 %v3654
        %v3733 = vpop.f32.mrf.mxu0
        %v3734 = vadd.f32 0.0, %v3733
        %v3735 = vpop.f32.mrf.mxu0
        %v3736 = vpop.f32.mrf.mxu0
        %v3737 = vadd.f32 0.0, %v3736
        %v3738 = vpop.f32.mrf.mxu0
        %3739 = vmatprep.mubr.bf16.mxu0 0
        %3740 = vmatmul.mubr.bf16.gmra.mxu0 %v3657
        %v3741 = vpop.f32.mrf.mxu0
        %v3742 = vadd.f32 0.0, %v3741
        %v3743 = vpop.f32.mrf.mxu0
        %v3744 = vpop.f32.mrf.mxu0
        %v3745 = vadd.f32 0.0, %v3744
        %v3746 = vpop.f32.mrf.mxu0
        %3747 = vmatprep.mubr.bf16.mxu0 0
        %3748 = vmatmul.mubr.bf16.gmra.mxu0 %v3660
        %v3749 = vpop.f32.mrf.mxu0
        %v3750 = vpop.f32.mrf.mxu0
        %v3751 = vpop.f32.mrf.mxu0
        %v3752 = vpop.f32.mrf.mxu0
        %3753 = vdwg.mxu0
        %v3754 = vadd.f32 %v3555, %v3706
        %v3755 = vadd.f32 %v3558, %v3709
        %v3756 = vadd.f32 %v3563, %v3714
        %v3757 = vadd.f32 %v3566, %v3717
        %v3758 = vadd.f32 %v3583, %v3734
        %v3759 = vadd.f32 %v3586, %v3737
        %v3760 = vadd.f32 %v3591, %v3742
        %v3761 = vadd.f32 %v3594, %v3745
        %s3762 = sadd.s32 %s3298, 4294967292
        %s3763 = scalar_lea.vmem [#allocation3], %s3762
        %v3764 = vld [vmem:[%s3763] sm:$0xff]
        %v3765 = vld [vmem:[%s3763 + $0x8] sm:$0xff]
        %v3766 = vld [vmem:[%s3763 + $0x10] sm:$0xff]
        %v3767 = vld [vmem:[%s3763 + $0x18] sm:$0xff]
        %v3768 = vld [vmem:[%s3763 + $0x20] sm:$0xff]
        %v3769 = vld [vmem:[%s3763 + $0x28] sm:$0xff]
        %v3770 = vld [vmem:[%s3763 + $0x30] sm:$0xff]
        %v3771 = vld [vmem:[%s3763 + $0x38] sm:$0xff]
        %v3772 = vld [vmem:[%s3763 + $0x40] sm:$0xff]
        %v3773 = vld [vmem:[%s3763 + $0x48] sm:$0xff]
        %v3774 = vld [vmem:[%s3763 + $0x50] sm:$0xff]
        %v3775 = vld [vmem:[%s3763 + $0x58] sm:$0xff]
        %v3776 = vld [vmem:[%s3763 + $0x60] sm:$0xff]
        %v3777 = vld [vmem:[%s3763 + $0x68] sm:$0xff]
        %v3778 = vld [vmem:[%s3763 + $0x70] sm:$0xff]
        %v3779 = vld [vmem:[%s3763 + $0x78] sm:$0xff]
        %v3780 = vpack.c.bf16 %v3765, %v3764
        %v3781 = vpack.c.bf16 %v3767, %v3766
        %v3782 = vpack.c.bf16 %v3769, %v3768
        %v3783 = vpack.c.bf16 %v3771, %v3770
        %v3784 = vpack.c.bf16 %v3773, %v3772
        %v3785 = vpack.c.bf16 %v3775, %v3774
        %v3786 = vpack.c.bf16 %v3777, %v3776
        %v3787 = vpack.c.bf16 %v3779, %v3778
        %v3791 = vunpack.c.l.b16 %v3265
        %v3792 = vunpack.c.l.b16 %v3266
        %v3793 = vunpack.c.l.b16 %v3267
        %v3794 = vpack.c.b16 %v3792, %v3791
        %v3795 = vpack.c.b16 %v3793, %v3793
        %v3798 = vsel %vm3360, %v3780, 0
        %v3801 = vsel %vm3360, %v3781, 0
        %v3804 = vsel %vm3360, %v3782, 0
        %v3807 = vsel %vm3360, %v3783, 0
        %v3810 = vsel %vm3360, %v3784, 0
        %v3813 = vsel %vm3360, %v3785, 0
        %v3816 = vsel %vm3360, %v3786, 0
        %v3819 = vsel %vm3360, %v3787, 0
        %v3822 = vsel %vm3385, %v3795, 0
        %3824 = vmatprep.subr.bf16.mxu0 0
        %3825 = vmatpush1.bf16.msra.mxu0 0
        %3826 = vmatprep.subr.bf16.mxu0 0
        %3827 = vmatpush1.bf16.msra.mxu0 0
        %3828 = vmatprep.subr.bf16.mxu0 0
        %3829 = vmatpush1.bf16.msra.mxu0 0
        %3830 = vmatprep.subr.bf16.mxu0 0
        %3831 = vmatpush1.bf16.msra.mxu0 0
        %3832 = vmatprep.subr.bf16.mxu0 0
        %3833 = vmatpush1.bf16.msra.mxu0 0
        %3834 = vmatprep.subr.bf16.mxu0 0
        %3835 = vmatpush1.bf16.msra.mxu0 0
        %3836 = vmatprep.subr.bf16.mxu0 0
        %3837 = vmatpush1.bf16.msra.mxu0 %v3822
        %3838 = vmatprep.subr.bf16.mxu0 0
        %3839 = vmatpush1.bf16.msra.mxu0 %v3794
        %3840 = vmatprep.subr.bf16.mxu0 0
        %3841 = vmatpush2.bf16.msra.mxu0 0
        %3842 = vmatprep.subr.bf16.mxu0 0
        %3843 = vmatpush2.bf16.msra.mxu0 0
        %3844 = vmatprep.subr.bf16.mxu0 0
        %3845 = vmatpush2.bf16.msra.mxu0 0
        %3846 = vmatprep.subr.bf16.mxu0 0
        %3847 = vmatpush2.bf16.msra.mxu0 0
        %3848 = vmatprep.subr.bf16.mxu0 0
        %3849 = vmatpush2.bf16.msra.mxu0 0
        %3850 = vmatprep.subr.bf16.mxu0 0
        %3851 = vmatpush2.bf16.msra.mxu0 0
        %3852 = vmatprep.subr.bf16.mxu0 0
        %3853 = vmatpush2.bf16.msra.mxu0 0
        %3854 = vmatprep.subr.bf16.mxu0 0
        %3855 = vmatpush2.bf16.msra.mxu0 0
        %3856 = vmatprep.mubr.bf16.mxu0 0
        %3857 = vmatmul.mubr.bf16.gmra.mxu0 %v3798
        %v3858 = vpop.f32.mrf.mxu0
        %v3859 = vpop.f32.mrf.mxu0
        %v3860 = vpop.f32.mrf.mxu0
        %v3861 = vpop.f32.mrf.mxu0
        %3862 = vmatprep.mubr.bf16.mxu0 0
        %3863 = vmatmul.mubr.bf16.gmra.mxu0 %v3801
        %v3864 = vpop.f32.mrf.mxu0
        %v3865 = vadd.f32 0.0, %v3864
        %v3866 = vpop.f32.mrf.mxu0
        %v3867 = vpop.f32.mrf.mxu0
        %v3868 = vadd.f32 0.0, %v3867
        %v3869 = vpop.f32.mrf.mxu0
        %3870 = vmatprep.mubr.bf16.mxu0 0
        %3871 = vmatmul.mubr.bf16.gmra.mxu0 %v3804
        %v3872 = vpop.f32.mrf.mxu0
        %v3873 = vadd.f32 0.0, %v3872
        %v3874 = vpop.f32.mrf.mxu0
        %v3875 = vpop.f32.mrf.mxu0
        %v3876 = vadd.f32 0.0, %v3875
        %v3877 = vpop.f32.mrf.mxu0
        %3878 = vmatprep.mubr.bf16.mxu0 0
        %3879 = vmatmul.mubr.bf16.gmra.mxu0 %v3807
        %v3880 = vpop.f32.mrf.mxu0
        %v3881 = vpop.f32.mrf.mxu0
        %v3882 = vpop.f32.mrf.mxu0
        %v3883 = vpop.f32.mrf.mxu0
        %3884 = vmatprep.mubr.bf16.mxu0 0
        %3885 = vmatmul.mubr.bf16.gmra.mxu0 %v3810
        %v3886 = vpop.f32.mrf.mxu0
        %v3887 = vpop.f32.mrf.mxu0
        %v3888 = vpop.f32.mrf.mxu0
        %v3889 = vpop.f32.mrf.mxu0
        %3890 = vmatprep.mubr.bf16.mxu0 0
        %3891 = vmatmul.mubr.bf16.gmra.mxu0 %v3813
        %v3892 = vpop.f32.mrf.mxu0
        %v3893 = vadd.f32 0.0, %v3892
        %v3894 = vpop.f32.mrf.mxu0
        %v3895 = vpop.f32.mrf.mxu0
        %v3896 = vadd.f32 0.0, %v3895
        %v3897 = vpop.f32.mrf.mxu0
        %3898 = vmatprep.mubr.bf16.mxu0 0
        %3899 = vmatmul.mubr.bf16.gmra.mxu0 %v3816
        %v3900 = vpop.f32.mrf.mxu0
        %v3901 = vadd.f32 0.0, %v3900
        %v3902 = vpop.f32.mrf.mxu0
        %v3903 = vpop.f32.mrf.mxu0
        %v3904 = vadd.f32 0.0, %v3903
        %v3905 = vpop.f32.mrf.mxu0
        %3906 = vmatprep.mubr.bf16.mxu0 0
        %3907 = vmatmul.mubr.bf16.gmra.mxu0 %v3819
        %v3908 = vpop.f32.mrf.mxu0
        %v3909 = vpop.f32.mrf.mxu0
        %v3910 = vpop.f32.mrf.mxu0
        %v3911 = vpop.f32.mrf.mxu0
        %3912 = vdwg.mxu0
        %v3913 = vadd.f32 %v3754, %v3865
        %v3914 = vadd.f32 %v3755, %v3868
        %v3915 = vadd.f32 %v3756, %v3873
        %v3916 = vadd.f32 %v3757, %v3876
        %v3917 = vadd.f32 %v3758, %v3893
        %v3918 = vadd.f32 %v3759, %v3896
        %v3919 = vadd.f32 %v3760, %v3901
        %v3920 = vadd.f32 %v3761, %v3904
        %s3921 = scalar_lea.vmem [#allocation3], %s3298
        %v3922 = vld [vmem:[%s3921] sm:$0xff]
        %v3923 = vld [vmem:[%s3921 + $0x8] sm:$0xff]
        %v3924 = vld [vmem:[%s3921 + $0x10] sm:$0xff]
        %v3925 = vld [vmem:[%s3921 + $0x18] sm:$0xff]
        %v3926 = vld [vmem:[%s3921 + $0x20] sm:$0xff]
        %v3927 = vld [vmem:[%s3921 + $0x28] sm:$0xff]
        %v3928 = vld [vmem:[%s3921 + $0x30] sm:$0xff]
        %v3929 = vld [vmem:[%s3921 + $0x38] sm:$0xff]
        %v3930 = vld [vmem:[%s3921 + $0x40] sm:$0xff]
        %v3931 = vld [vmem:[%s3921 + $0x48] sm:$0xff]
        %v3932 = vld [vmem:[%s3921 + $0x50] sm:$0xff]
        %v3933 = vld [vmem:[%s3921 + $0x58] sm:$0xff]
        %v3934 = vld [vmem:[%s3921 + $0x60] sm:$0xff]
        %v3935 = vld [vmem:[%s3921 + $0x68] sm:$0xff]
        %v3936 = vld [vmem:[%s3921 + $0x70] sm:$0xff]
        %v3937 = vld [vmem:[%s3921 + $0x78] sm:$0xff]
        %v3938 = vpack.c.bf16 %v3923, %v3922
        %v3939 = vpack.c.bf16 %v3925, %v3924
        %v3940 = vpack.c.bf16 %v3927, %v3926
        %v3941 = vpack.c.bf16 %v3929, %v3928
        %v3942 = vpack.c.bf16 %v3931, %v3930
        %v3943 = vpack.c.bf16 %v3933, %v3932
        %v3944 = vpack.c.bf16 %v3935, %v3934
        %v3945 = vpack.c.bf16 %v3937, %v3936
        %v3949 = vunpack.c.l.b16 %v3269
        %v3950 = vunpack.c.l.b16 %v3270
        %v3951 = vunpack.c.l.b16 %v3271
        %v3952 = vpack.c.b16 %v3950, %v3949
        %v3953 = vpack.c.b16 %v3951, %v3951
        %v3956 = vsel %vm3360, %v3938, 0
        %v3959 = vsel %vm3360, %v3939, 0
        %v3962 = vsel %vm3360, %v3940, 0
        %v3965 = vsel %vm3360, %v3941, 0
        %v3968 = vsel %vm3360, %v3942, 0
        %v3971 = vsel %vm3360, %v3943, 0
        %v3974 = vsel %vm3360, %v3944, 0
        %v3977 = vsel %vm3360, %v3945, 0
        %v3980 = vsel %vm3385, %v3953, 0
        %3982 = vmatprep.subr.bf16.mxu0 0
        %3983 = vmatpush1.bf16.msra.mxu0 0
        %3984 = vmatprep.subr.bf16.mxu0 0
        %3985 = vmatpush1.bf16.msra.mxu0 0
        %3986 = vmatprep.subr.bf16.mxu0 0
        %3987 = vmatpush1.bf16.msra.mxu0 0
        %3988 = vmatprep.subr.bf16.mxu0 0
        %3989 = vmatpush1.bf16.msra.mxu0 0
        %3990 = vmatprep.subr.bf16.mxu0 0
        %3991 = vmatpush1.bf16.msra.mxu0 0
        %3992 = vmatprep.subr.bf16.mxu0 0
        %3993 = vmatpush1.bf16.msra.mxu0 0
        %3994 = vmatprep.subr.bf16.mxu0 0
        %3995 = vmatpush1.bf16.msra.mxu0 %v3980
        %3996 = vmatprep.subr.bf16.mxu0 0
        %3997 = vmatpush1.bf16.msra.mxu0 %v3952
        %3998 = vmatprep.subr.bf16.mxu0 0
        %3999 = vmatpush2.bf16.msra.mxu0 0
        %4000 = vmatprep.subr.bf16.mxu0 0
        %4001 = vmatpush2.bf16.msra.mxu0 0
        %4002 = vmatprep.subr.bf16.mxu0 0
        %4003 = vmatpush2.bf16.msra.mxu0 0
        %4004 = vmatprep.subr.bf16.mxu0 0
        %4005 = vmatpush2.bf16.msra.mxu0 0
        %4006 = vmatprep.subr.bf16.mxu0 0
        %4007 = vmatpush2.bf16.msra.mxu0 0
        %4008 = vmatprep.subr.bf16.mxu0 0
        %4009 = vmatpush2.bf16.msra.mxu0 0
        %4010 = vmatprep.subr.bf16.mxu0 0
        %4011 = vmatpush2.bf16.msra.mxu0 0
        %4012 = vmatprep.subr.bf16.mxu0 0
        %4013 = vmatpush2.bf16.msra.mxu0 0
        %4014 = vmatprep.mubr.bf16.mxu0 0
        %4015 = vmatmul.mubr.bf16.gmra.mxu0 %v3956
        %v4016 = vpop.f32.mrf.mxu0
        %v4017 = vpop.f32.mrf.mxu0
        %v4018 = vpop.f32.mrf.mxu0
        %v4019 = vpop.f32.mrf.mxu0
        %4020 = vmatprep.mubr.bf16.mxu0 0
        %4021 = vmatmul.mubr.bf16.gmra.mxu0 %v3959
        %v4022 = vpop.f32.mrf.mxu0
        %v4023 = vadd.f32 0.0, %v4022
        %v4024 = vpop.f32.mrf.mxu0
        %v4025 = vpop.f32.mrf.mxu0
        %v4026 = vadd.f32 0.0, %v4025
        %v4027 = vpop.f32.mrf.mxu0
        %4028 = vmatprep.mubr.bf16.mxu0 0
        %4029 = vmatmul.mubr.bf16.gmra.mxu0 %v3962
        %v4030 = vpop.f32.mrf.mxu0
        %v4031 = vadd.f32 0.0, %v4030
        %v4032 = vpop.f32.mrf.mxu0
        %v4033 = vpop.f32.mrf.mxu0
        %v4034 = vadd.f32 0.0, %v4033
        %v4035 = vpop.f32.mrf.mxu0
        %4036 = vmatprep.mubr.bf16.mxu0 0
        %4037 = vmatmul.mubr.bf16.gmra.mxu0 %v3965
        %v4038 = vpop.f32.mrf.mxu0
        %v4039 = vpop.f32.mrf.mxu0
        %v4040 = vpop.f32.mrf.mxu0
        %v4041 = vpop.f32.mrf.mxu0
        %4042 = vmatprep.mubr.bf16.mxu0 0
        %4043 = vmatmul.mubr.bf16.gmra.mxu0 %v3968
        %v4044 = vpop.f32.mrf.mxu0
        %v4045 = vpop.f32.mrf.mxu0
        %v4046 = vpop.f32.mrf.mxu0
        %v4047 = vpop.f32.mrf.mxu0
        %4048 = vmatprep.mubr.bf16.mxu0 0
        %4049 = vmatmul.mubr.bf16.gmra.mxu0 %v3971
        %v4050 = vpop.f32.mrf.mxu0
        %v4051 = vadd.f32 0.0, %v4050
        %v4052 = vpop.f32.mrf.mxu0
        %v4053 = vpop.f32.mrf.mxu0
        %v4054 = vadd.f32 0.0, %v4053
        %v4055 = vpop.f32.mrf.mxu0
        %4056 = vmatprep.mubr.bf16.mxu0 0
        %4057 = vmatmul.mubr.bf16.gmra.mxu0 %v3974
        %v4058 = vpop.f32.mrf.mxu0
        %v4059 = vadd.f32 0.0, %v4058
        %v4060 = vpop.f32.mrf.mxu0
        %v4061 = vpop.f32.mrf.mxu0
        %v4062 = vadd.f32 0.0, %v4061
        %v4063 = vpop.f32.mrf.mxu0
        %4064 = vmatprep.mubr.bf16.mxu0 0
        %4065 = vmatmul.mubr.bf16.gmra.mxu0 %v3977
        %v4066 = vpop.f32.mrf.mxu0
        %v4067 = vpop.f32.mrf.mxu0
        %v4068 = vpop.f32.mrf.mxu0
        %v4069 = vpop.f32.mrf.mxu0
        %4070 = vdwg.mxu0
        %v4071 = vadd.f32 %v3913, %v4023
        %v4072 = vadd.f32 %v3914, %v4026
        %v4073 = vadd.f32 %v3915, %v4031
        %v4074 = vadd.f32 %v3916, %v4034
        %v4075 = vadd.f32 %v3917, %v4051
        %v4076 = vadd.f32 %v3918, %v4054
        %v4077 = vadd.f32 %v3919, %v4059
        %v4078 = vadd.f32 %v3920, %v4062
        %s4079 = sadd.s32 %s3298, 4
        %s4080 = scalar_lea.vmem [#allocation3], %s4079
        %v4081 = vld [vmem:[%s4080] sm:$0xff]
        %v4082 = vld [vmem:[%s4080 + $0x8] sm:$0xff]
        %v4083 = vld [vmem:[%s4080 + $0x10] sm:$0xff]
        %v4084 = vld [vmem:[%s4080 + $0x18] sm:$0xff]
        %v4085 = vld [vmem:[%s4080 + $0x20] sm:$0xff]
        %v4086 = vld [vmem:[%s4080 + $0x28] sm:$0xff]
        %v4087 = vld [vmem:[%s4080 + $0x30] sm:$0xff]
        %v4088 = vld [vmem:[%s4080 + $0x38] sm:$0xff]
        %v4089 = vld [vmem:[%s4080 + $0x40] sm:$0xff]
        %v4090 = vld [vmem:[%s4080 + $0x48] sm:$0xff]
        %v4091 = vld [vmem:[%s4080 + $0x50] sm:$0xff]
        %v4092 = vld [vmem:[%s4080 + $0x58] sm:$0xff]
        %v4093 = vld [vmem:[%s4080 + $0x60] sm:$0xff]
        %v4094 = vld [vmem:[%s4080 + $0x68] sm:$0xff]
        %v4095 = vld [vmem:[%s4080 + $0x70] sm:$0xff]
        %v4096 = vld [vmem:[%s4080 + $0x78] sm:$0xff]
        %v4097 = vpack.c.bf16 %v4082, %v4081
        %v4098 = vpack.c.bf16 %v4084, %v4083
        %v4099 = vpack.c.bf16 %v4086, %v4085
        %v4100 = vpack.c.bf16 %v4088, %v4087
        %v4101 = vpack.c.bf16 %v4090, %v4089
        %v4102 = vpack.c.bf16 %v4092, %v4091
        %v4103 = vpack.c.bf16 %v4094, %v4093
        %v4104 = vpack.c.bf16 %v4096, %v4095
        %v4108 = vunpack.c.l.b16 %v3273
        %v4109 = vunpack.c.l.b16 %v3274
        %v4110 = vunpack.c.l.b16 %v3275
        %v4111 = vpack.c.b16 %v4109, %v4108
        %v4112 = vpack.c.b16 %v4110, %v4110
        %v4115 = vsel %vm3360, %v4097, 0
        %v4118 = vsel %vm3360, %v4098, 0
        %v4121 = vsel %vm3360, %v4099, 0
        %v4124 = vsel %vm3360, %v4100, 0
        %v4127 = vsel %vm3360, %v4101, 0
        %v4130 = vsel %vm3360, %v4102, 0
        %v4133 = vsel %vm3360, %v4103, 0
        %v4136 = vsel %vm3360, %v4104, 0
        %v4139 = vsel %vm3385, %v4112, 0
        %4141 = vmatprep.subr.bf16.mxu0 0
        %4142 = vmatpush1.bf16.msra.mxu0 0
        %4143 = vmatprep.subr.bf16.mxu0 0
        %4144 = vmatpush1.bf16.msra.mxu0 0
        %4145 = vmatprep.subr.bf16.mxu0 0
        %4146 = vmatpush1.bf16.msra.mxu0 0
        %4147 = vmatprep.subr.bf16.mxu0 0
        %4148 = vmatpush1.bf16.msra.mxu0 0
        %4149 = vmatprep.subr.bf16.mxu0 0
        %4150 = vmatpush1.bf16.msra.mxu0 0
        %4151 = vmatprep.subr.bf16.mxu0 0
        %4152 = vmatpush1.bf16.msra.mxu0 0
        %4153 = vmatprep.subr.bf16.mxu0 0
        %4154 = vmatpush1.bf16.msra.mxu0 %v4139
        %4155 = vmatprep.subr.bf16.mxu0 0
        %4156 = vmatpush1.bf16.msra.mxu0 %v4111
        %4157 = vmatprep.subr.bf16.mxu0 0
        %4158 = vmatpush2.bf16.msra.mxu0 0
        %4159 = vmatprep.subr.bf16.mxu0 0
        %4160 = vmatpush2.bf16.msra.mxu0 0
        %4161 = vmatprep.subr.bf16.mxu0 0
        %4162 = vmatpush2.bf16.msra.mxu0 0
        %4163 = vmatprep.subr.bf16.mxu0 0
        %4164 = vmatpush2.bf16.msra.mxu0 0
        %4165 = vmatprep.subr.bf16.mxu0 0
        %4166 = vmatpush2.bf16.msra.mxu0 0
        %4167 = vmatprep.subr.bf16.mxu0 0
        %4168 = vmatpush2.bf16.msra.mxu0 0
        %4169 = vmatprep.subr.bf16.mxu0 0
        %4170 = vmatpush2.bf16.msra.mxu0 0
        %4171 = vmatprep.subr.bf16.mxu0 0
        %4172 = vmatpush2.bf16.msra.mxu0 0
        %4173 = vmatprep.mubr.bf16.mxu0 0
        %4174 = vmatmul.mubr.bf16.gmra.mxu0 %v4115
        %v4175 = vpop.f32.mrf.mxu0
        %v4176 = vpop.f32.mrf.mxu0
        %v4177 = vpop.f32.mrf.mxu0
        %v4178 = vpop.f32.mrf.mxu0
        %4179 = vmatprep.mubr.bf16.mxu0 0
        %4180 = vmatmul.mubr.bf16.gmra.mxu0 %v4118
        %v4181 = vpop.f32.mrf.mxu0
        %v4182 = vadd.f32 0.0, %v4181
        %v4183 = vpop.f32.mrf.mxu0
        %v4184 = vpop.f32.mrf.mxu0
        %v4185 = vadd.f32 0.0, %v4184
        %v4186 = vpop.f32.mrf.mxu0
        %4187 = vmatprep.mubr.bf16.mxu0 0
        %4188 = vmatmul.mubr.bf16.gmra.mxu0 %v4121
        %v4189 = vpop.f32.mrf.mxu0
        %v4190 = vadd.f32 0.0, %v4189
        %v4191 = vpop.f32.mrf.mxu0
        %v4192 = vpop.f32.mrf.mxu0
        %v4193 = vadd.f32 0.0, %v4192
        %v4194 = vpop.f32.mrf.mxu0
        %4195 = vmatprep.mubr.bf16.mxu0 0
        %4196 = vmatmul.mubr.bf16.gmra.mxu0 %v4124
        %v4197 = vpop.f32.mrf.mxu0
        %v4198 = vpop.f32.mrf.mxu0
        %v4199 = vpop.f32.mrf.mxu0
        %v4200 = vpop.f32.mrf.mxu0
        %4201 = vmatprep.mubr.bf16.mxu0 0
        %4202 = vmatmul.mubr.bf16.gmra.mxu0 %v4127
        %v4203 = vpop.f32.mrf.mxu0
        %v4204 = vpop.f32.mrf.mxu0
        %v4205 = vpop.f32.mrf.mxu0
        %v4206 = vpop.f32.mrf.mxu0
        %4207 = vmatprep.mubr.bf16.mxu0 0
        %4208 = vmatmul.mubr.bf16.gmra.mxu0 %v4130
        %v4209 = vpop.f32.mrf.mxu0
        %v4210 = vadd.f32 0.0, %v4209
        %v4211 = vpop.f32.mrf.mxu0
        %v4212 = vpop.f32.mrf.mxu0
        %v4213 = vadd.f32 0.0, %v4212
        %v4214 = vpop.f32.mrf.mxu0
        %4215 = vmatprep.mubr.bf16.mxu0 0
        %4216 = vmatmul.mubr.bf16.gmra.mxu0 %v4133
        %v4217 = vpop.f32.mrf.mxu0
        %v4218 = vadd.f32 0.0, %v4217
        %v4219 = vpop.f32.mrf.mxu0
        %v4220 = vpop.f32.mrf.mxu0
        %v4221 = vadd.f32 0.0, %v4220
        %v4222 = vpop.f32.mrf.mxu0
        %4223 = vmatprep.mubr.bf16.mxu0 0
        %4224 = vmatmul.mubr.bf16.gmra.mxu0 %v4136
        %v4225 = vpop.f32.mrf.mxu0
        %v4226 = vpop.f32.mrf.mxu0
        %v4227 = vpop.f32.mrf.mxu0
        %v4228 = vpop.f32.mrf.mxu0
        %4229 = vdwg.mxu0
        %v4230 = vadd.f32 %v4071, %v4182
        %v4231 = vadd.f32 %v4072, %v4185
        %v4232 = vadd.f32 %v4073, %v4190
        %v4233 = vadd.f32 %v4074, %v4193
        %v4234 = vadd.f32 %v4075, %v4210
        %v4235 = vadd.f32 %v4076, %v4213
        %v4236 = vadd.f32 %v4077, %v4218
        %v4237 = vadd.f32 %v4078, %v4221
        %s4238 = sadd.s32 %s3298, 252
        %s4239 = scalar_lea.vmem [#allocation3], %s4238
        %v4240 = vld [vmem:[%s4239] sm:$0xff]
        %v4241 = vld [vmem:[%s4239 + $0x8] sm:$0xff]
        %v4242 = vld [vmem:[%s4239 + $0x10] sm:$0xff]
        %v4243 = vld [vmem:[%s4239 + $0x18] sm:$0xff]
        %v4244 = vld [vmem:[%s4239 + $0x20] sm:$0xff]
        %v4245 = vld [vmem:[%s4239 + $0x28] sm:$0xff]
        %v4246 = vld [vmem:[%s4239 + $0x30] sm:$0xff]
        %v4247 = vld [vmem:[%s4239 + $0x38] sm:$0xff]
        %v4248 = vld [vmem:[%s4239 + $0x40] sm:$0xff]
        %v4249 = vld [vmem:[%s4239 + $0x48] sm:$0xff]
        %v4250 = vld [vmem:[%s4239 + $0x50] sm:$0xff]
        %v4251 = vld [vmem:[%s4239 + $0x58] sm:$0xff]
        %v4252 = vld [vmem:[%s4239 + $0x60] sm:$0xff]
        %v4253 = vld [vmem:[%s4239 + $0x68] sm:$0xff]
        %v4254 = vld [vmem:[%s4239 + $0x70] sm:$0xff]
        %v4255 = vld [vmem:[%s4239 + $0x78] sm:$0xff]
        %v4256 = vpack.c.bf16 %v4241, %v4240
        %v4257 = vpack.c.bf16 %v4243, %v4242
        %v4258 = vpack.c.bf16 %v4245, %v4244
        %v4259 = vpack.c.bf16 %v4247, %v4246
        %v4260 = vpack.c.bf16 %v4249, %v4248
        %v4261 = vpack.c.bf16 %v4251, %v4250
        %v4262 = vpack.c.bf16 %v4253, %v4252
        %v4263 = vpack.c.bf16 %v4255, %v4254
        %v4267 = vunpack.c.l.b16 %v3277
        %v4268 = vunpack.c.l.b16 %v3278
        %v4269 = vunpack.c.l.b16 %v3279
        %v4270 = vpack.c.b16 %v4268, %v4267
        %v4271 = vpack.c.b16 %v4269, %v4269
        %v4274 = vsel %vm3360, %v4256, 0
        %v4277 = vsel %vm3360, %v4257, 0
        %v4280 = vsel %vm3360, %v4258, 0
        %v4283 = vsel %vm3360, %v4259, 0
        %v4286 = vsel %vm3360, %v4260, 0
        %v4289 = vsel %vm3360, %v4261, 0
        %v4292 = vsel %vm3360, %v4262, 0
        %v4295 = vsel %vm3360, %v4263, 0
        %v4298 = vsel %vm3385, %v4271, 0
        %4300 = vmatprep.subr.bf16.mxu0 0
        %4301 = vmatpush1.bf16.msra.mxu0 0
        %4302 = vmatprep.subr.bf16.mxu0 0
        %4303 = vmatpush1.bf16.msra.mxu0 0
        %4304 = vmatprep.subr.bf16.mxu0 0
        %4305 = vmatpush1.bf16.msra.mxu0 0
        %4306 = vmatprep.subr.bf16.mxu0 0
        %4307 = vmatpush1.bf16.msra.mxu0 0
        %4308 = vmatprep.subr.bf16.mxu0 0
        %4309 = vmatpush1.bf16.msra.mxu0 0
        %4310 = vmatprep.subr.bf16.mxu0 0
        %4311 = vmatpush1.bf16.msra.mxu0 0
        %4312 = vmatprep.subr.bf16.mxu0 0
        %4313 = vmatpush1.bf16.msra.mxu0 %v4298
        %4314 = vmatprep.subr.bf16.mxu0 0
        %4315 = vmatpush1.bf16.msra.mxu0 %v4270
        %4316 = vmatprep.subr.bf16.mxu0 0
        %4317 = vmatpush2.bf16.msra.mxu0 0
        %4318 = vmatprep.subr.bf16.mxu0 0
        %4319 = vmatpush2.bf16.msra.mxu0 0
        %4320 = vmatprep.subr.bf16.mxu0 0
        %4321 = vmatpush2.bf16.msra.mxu0 0
        %4322 = vmatprep.subr.bf16.mxu0 0
        %4323 = vmatpush2.bf16.msra.mxu0 0
        %4324 = vmatprep.subr.bf16.mxu0 0
        %4325 = vmatpush2.bf16.msra.mxu0 0
        %4326 = vmatprep.subr.bf16.mxu0 0
        %4327 = vmatpush2.bf16.msra.mxu0 0
        %4328 = vmatprep.subr.bf16.mxu0 0
        %4329 = vmatpush2.bf16.msra.mxu0 0
        %4330 = vmatprep.subr.bf16.mxu0 0
        %4331 = vmatpush2.bf16.msra.mxu0 0
        %4332 = vmatprep.mubr.bf16.mxu0 0
        %4333 = vmatmul.mubr.bf16.gmra.mxu0 %v4274
        %v4334 = vpop.f32.mrf.mxu0
        %v4335 = vpop.f32.mrf.mxu0
        %v4336 = vpop.f32.mrf.mxu0
        %v4337 = vpop.f32.mrf.mxu0
        %4338 = vmatprep.mubr.bf16.mxu0 0
        %4339 = vmatmul.mubr.bf16.gmra.mxu0 %v4277
        %v4340 = vpop.f32.mrf.mxu0
        %v4341 = vadd.f32 0.0, %v4340
        %v4342 = vpop.f32.mrf.mxu0
        %v4343 = vpop.f32.mrf.mxu0
        %v4344 = vadd.f32 0.0, %v4343
        %v4345 = vpop.f32.mrf.mxu0
        %4346 = vmatprep.mubr.bf16.mxu0 0
        %4347 = vmatmul.mubr.bf16.gmra.mxu0 %v4280
        %v4348 = vpop.f32.mrf.mxu0
        %v4349 = vadd.f32 0.0, %v4348
        %v4350 = vpop.f32.mrf.mxu0
        %v4351 = vpop.f32.mrf.mxu0
        %v4352 = vadd.f32 0.0, %v4351
        %v4353 = vpop.f32.mrf.mxu0
        %4354 = vmatprep.mubr.bf16.mxu0 0
        %4355 = vmatmul.mubr.bf16.gmra.mxu0 %v4283
        %v4356 = vpop.f32.mrf.mxu0
        %v4357 = vpop.f32.mrf.mxu0
        %v4358 = vpop.f32.mrf.mxu0
        %v4359 = vpop.f32.mrf.mxu0
        %4360 = vmatprep.mubr.bf16.mxu0 0
        %4361 = vmatmul.mubr.bf16.gmra.mxu0 %v4286
        %v4362 = vpop.f32.mrf.mxu0
        %v4363 = vpop.f32.mrf.mxu0
        %v4364 = vpop.f32.mrf.mxu0
        %v4365 = vpop.f32.mrf.mxu0
        %4366 = vmatprep.mubr.bf16.mxu0 0
        %4367 = vmatmul.mubr.bf16.gmra.mxu0 %v4289
        %v4368 = vpop.f32.mrf.mxu0
        %v4369 = vadd.f32 0.0, %v4368
        %v4370 = vpop.f32.mrf.mxu0
        %v4371 = vpop.f32.mrf.mxu0
        %v4372 = vadd.f32 0.0, %v4371
        %v4373 = vpop.f32.mrf.mxu0
        %4374 = vmatprep.mubr.bf16.mxu0 0
        %4375 = vmatmul.mubr.bf16.gmra.mxu0 %v4292
        %v4376 = vpop.f32.mrf.mxu0
        %v4377 = vadd.f32 0.0, %v4376
        %v4378 = vpop.f32.mrf.mxu0
        %v4379 = vpop.f32.mrf.mxu0
        %v4380 = vadd.f32 0.0, %v4379
        %v4381 = vpop.f32.mrf.mxu0
        %4382 = vmatprep.mubr.bf16.mxu0 0
        %4383 = vmatmul.mubr.bf16.gmra.mxu0 %v4295
        %v4384 = vpop.f32.mrf.mxu0
        %v4385 = vpop.f32.mrf.mxu0
        %v4386 = vpop.f32.mrf.mxu0
        %v4387 = vpop.f32.mrf.mxu0
        %4388 = vdwg.mxu0
        %v4389 = vadd.f32 %v4230, %v4341
        %v4390 = vadd.f32 %v4231, %v4344
        %v4391 = vadd.f32 %v4232, %v4349
        %v4392 = vadd.f32 %v4233, %v4352
        %v4393 = vadd.f32 %v4234, %v4369
        %v4394 = vadd.f32 %v4235, %v4372
        %v4395 = vadd.f32 %v4236, %v4377
        %v4396 = vadd.f32 %v4237, %v4380
        %s4397 = sadd.s32 %s3298, 256
        %s4398 = scalar_lea.vmem [#allocation3], %s4397
        %v4399 = vld [vmem:[%s4398] sm:$0xff]
        %v4400 = vld [vmem:[%s4398 + $0x8] sm:$0xff]
        %v4401 = vld [vmem:[%s4398 + $0x10] sm:$0xff]
        %v4402 = vld [vmem:[%s4398 + $0x18] sm:$0xff]
        %v4403 = vld [vmem:[%s4398 + $0x20] sm:$0xff]
        %v4404 = vld [vmem:[%s4398 + $0x28] sm:$0xff]
        %v4405 = vld [vmem:[%s4398 + $0x30] sm:$0xff]
        %v4406 = vld [vmem:[%s4398 + $0x38] sm:$0xff]
        %v4407 = vld [vmem:[%s4398 + $0x40] sm:$0xff]
        %v4408 = vld [vmem:[%s4398 + $0x48] sm:$0xff]
        %v4409 = vld [vmem:[%s4398 + $0x50] sm:$0xff]
        %v4410 = vld [vmem:[%s4398 + $0x58] sm:$0xff]
        %v4411 = vld [vmem:[%s4398 + $0x60] sm:$0xff]
        %v4412 = vld [vmem:[%s4398 + $0x68] sm:$0xff]
        %v4413 = vld [vmem:[%s4398 + $0x70] sm:$0xff]
        %v4414 = vld [vmem:[%s4398 + $0x78] sm:$0xff]
        %v4415 = vpack.c.bf16 %v4400, %v4399
        %v4416 = vpack.c.bf16 %v4402, %v4401
        %v4417 = vpack.c.bf16 %v4404, %v4403
        %v4418 = vpack.c.bf16 %v4406, %v4405
        %v4419 = vpack.c.bf16 %v4408, %v4407
        %v4420 = vpack.c.bf16 %v4410, %v4409
        %v4421 = vpack.c.bf16 %v4412, %v4411
        %v4422 = vpack.c.bf16 %v4414, %v4413
        %v4426 = vunpack.c.l.b16 %v3281
        %v4427 = vunpack.c.l.b16 %v3282
        %v4428 = vunpack.c.l.b16 %v3283
        %v4429 = vpack.c.b16 %v4427, %v4426
        %v4430 = vpack.c.b16 %v4428, %v4428
        %v4433 = vsel %vm3360, %v4415, 0
        %v4436 = vsel %vm3360, %v4416, 0
        %v4439 = vsel %vm3360, %v4417, 0
        %v4442 = vsel %vm3360, %v4418, 0
        %v4445 = vsel %vm3360, %v4419, 0
        %v4448 = vsel %vm3360, %v4420, 0
        %v4451 = vsel %vm3360, %v4421, 0
        %v4454 = vsel %vm3360, %v4422, 0
        %v4457 = vsel %vm3385, %v4430, 0
        %4459 = vmatprep.subr.bf16.mxu0 0
        %4460 = vmatpush1.bf16.msra.mxu0 0
        %4461 = vmatprep.subr.bf16.mxu0 0
        %4462 = vmatpush1.bf16.msra.mxu0 0
        %4463 = vmatprep.subr.bf16.mxu0 0
        %4464 = vmatpush1.bf16.msra.mxu0 0
        %4465 = vmatprep.subr.bf16.mxu0 0
        %4466 = vmatpush1.bf16.msra.mxu0 0
        %4467 = vmatprep.subr.bf16.mxu0 0
        %4468 = vmatpush1.bf16.msra.mxu0 0
        %4469 = vmatprep.subr.bf16.mxu0 0
        %4470 = vmatpush1.bf16.msra.mxu0 0
        %4471 = vmatprep.subr.bf16.mxu0 0
        %4472 = vmatpush1.bf16.msra.mxu0 %v4457
        %4473 = vmatprep.subr.bf16.mxu0 0
        %4474 = vmatpush1.bf16.msra.mxu0 %v4429
        %4475 = vmatprep.subr.bf16.mxu0 0
        %4476 = vmatpush2.bf16.msra.mxu0 0
        %4477 = vmatprep.subr.bf16.mxu0 0
        %4478 = vmatpush2.bf16.msra.mxu0 0
        %4479 = vmatprep.subr.bf16.mxu0 0
        %4480 = vmatpush2.bf16.msra.mxu0 0
        %4481 = vmatprep.subr.bf16.mxu0 0
        %4482 = vmatpush2.bf16.msra.mxu0 0
        %4483 = vmatprep.subr.bf16.mxu0 0
        %4484 = vmatpush2.bf16.msra.mxu0 0
        %4485 = vmatprep.subr.bf16.mxu0 0
        %4486 = vmatpush2.bf16.msra.mxu0 0
        %4487 = vmatprep.subr.bf16.mxu0 0
        %4488 = vmatpush2.bf16.msra.mxu0 0
        %4489 = vmatprep.subr.bf16.mxu0 0
        %4490 = vmatpush2.bf16.msra.mxu0 0
        %4491 = vmatprep.mubr.bf16.mxu0 0
        %4492 = vmatmul.mubr.bf16.gmra.mxu0 %v4433
        %v4493 = vpop.f32.mrf.mxu0
        %v4494 = vpop.f32.mrf.mxu0
        %v4495 = vpop.f32.mrf.mxu0
        %v4496 = vpop.f32.mrf.mxu0
        %4497 = vmatprep.mubr.bf16.mxu0 0
        %4498 = vmatmul.mubr.bf16.gmra.mxu0 %v4436
        %v4499 = vpop.f32.mrf.mxu0
        %v4500 = vadd.f32 0.0, %v4499
        %v4501 = vpop.f32.mrf.mxu0
        %v4502 = vpop.f32.mrf.mxu0
        %v4503 = vadd.f32 0.0, %v4502
        %v4504 = vpop.f32.mrf.mxu0
        %4505 = vmatprep.mubr.bf16.mxu0 0
        %4506 = vmatmul.mubr.bf16.gmra.mxu0 %v4439
        %v4507 = vpop.f32.mrf.mxu0
        %v4508 = vadd.f32 0.0, %v4507
        %v4509 = vpop.f32.mrf.mxu0
        %v4510 = vpop.f32.mrf.mxu0
        %v4511 = vadd.f32 0.0, %v4510
        %v4512 = vpop.f32.mrf.mxu0
        %4513 = vmatprep.mubr.bf16.mxu0 0
        %4514 = vmatmul.mubr.bf16.gmra.mxu0 %v4442
        %v4515 = vpop.f32.mrf.mxu0
        %v4516 = vpop.f32.mrf.mxu0
        %v4517 = vpop.f32.mrf.mxu0
        %v4518 = vpop.f32.mrf.mxu0
        %4519 = vmatprep.mubr.bf16.mxu0 0
        %4520 = vmatmul.mubr.bf16.gmra.mxu0 %v4445
        %v4521 = vpop.f32.mrf.mxu0
        %v4522 = vpop.f32.mrf.mxu0
        %v4523 = vpop.f32.mrf.mxu0
        %v4524 = vpop.f32.mrf.mxu0
        %4525 = vmatprep.mubr.bf16.mxu0 0
        %4526 = vmatmul.mubr.bf16.gmra.mxu0 %v4448
        %v4527 = vpop.f32.mrf.mxu0
        %v4528 = vadd.f32 0.0, %v4527
        %v4529 = vpop.f32.mrf.mxu0
        %v4530 = vpop.f32.mrf.mxu0
        %v4531 = vadd.f32 0.0, %v4530
        %v4532 = vpop.f32.mrf.mxu0
        %4533 = vmatprep.mubr.bf16.mxu0 0
        %4534 = vmatmul.mubr.bf16.gmra.mxu0 %v4451
        %v4535 = vpop.f32.mrf.mxu0
        %v4536 = vadd.f32 0.0, %v4535
        %v4537 = vpop.f32.mrf.mxu0
        %v4538 = vpop.f32.mrf.mxu0
        %v4539 = vadd.f32 0.0, %v4538
        %v4540 = vpop.f32.mrf.mxu0
        %4541 = vmatprep.mubr.bf16.mxu0 0
        %4542 = vmatmul.mubr.bf16.gmra.mxu0 %v4454
        %v4543 = vpop.f32.mrf.mxu0
        %v4544 = vpop.f32.mrf.mxu0
        %v4545 = vpop.f32.mrf.mxu0
        %v4546 = vpop.f32.mrf.mxu0
        %4547 = vdwg.mxu0
        %v4548 = vadd.f32 %v4389, %v4500
        %v4549 = vadd.f32 %v4390, %v4503
        %v4550 = vadd.f32 %v4391, %v4508
        %v4551 = vadd.f32 %v4392, %v4511
        %v4552 = vadd.f32 %v4393, %v4528
        %v4553 = vadd.f32 %v4394, %v4531
        %v4554 = vadd.f32 %v4395, %v4536
        %v4555 = vadd.f32 %v4396, %v4539
        %s4556 = sadd.s32 %s3298, 260
        %s4557 = scalar_lea.vmem [#allocation3], %s4556
        %v4558 = vld [vmem:[%s4557] sm:$0xff]
        %v4559 = vld [vmem:[%s4557 + $0x8] sm:$0xff]
        %v4560 = vld [vmem:[%s4557 + $0x10] sm:$0xff]
        %v4561 = vld [vmem:[%s4557 + $0x18] sm:$0xff]
        %v4562 = vld [vmem:[%s4557 + $0x20] sm:$0xff]
        %v4563 = vld [vmem:[%s4557 + $0x28] sm:$0xff]
        %v4564 = vld [vmem:[%s4557 + $0x30] sm:$0xff]
        %v4565 = vld [vmem:[%s4557 + $0x38] sm:$0xff]
        %v4566 = vld [vmem:[%s4557 + $0x40] sm:$0xff]
        %v4567 = vld [vmem:[%s4557 + $0x48] sm:$0xff]
        %v4568 = vld [vmem:[%s4557 + $0x50] sm:$0xff]
        %v4569 = vld [vmem:[%s4557 + $0x58] sm:$0xff]
        %v4570 = vld [vmem:[%s4557 + $0x60] sm:$0xff]
        %v4571 = vld [vmem:[%s4557 + $0x68] sm:$0xff]
        %v4572 = vld [vmem:[%s4557 + $0x70] sm:$0xff]
        %v4573 = vld [vmem:[%s4557 + $0x78] sm:$0xff]
        %v4574 = vpack.c.bf16 %v4559, %v4558
        %v4575 = vpack.c.bf16 %v4561, %v4560
        %v4576 = vpack.c.bf16 %v4563, %v4562
        %v4577 = vpack.c.bf16 %v4565, %v4564
        %v4578 = vpack.c.bf16 %v4567, %v4566
        %v4579 = vpack.c.bf16 %v4569, %v4568
        %v4580 = vpack.c.bf16 %v4571, %v4570
        %v4581 = vpack.c.bf16 %v4573, %v4572
        %v4585 = vunpack.c.l.b16 %v3285
        %v4586 = vunpack.c.l.b16 %v3286
        %v4587 = vunpack.c.l.b16 %v3287
        %v4588 = vpack.c.b16 %v4586, %v4585
        %v4589 = vpack.c.b16 %v4587, %v4587
        %v4592 = vsel %vm3360, %v4574, 0
        %v4595 = vsel %vm3360, %v4575, 0
        %v4598 = vsel %vm3360, %v4576, 0
        %v4601 = vsel %vm3360, %v4577, 0
        %v4604 = vsel %vm3360, %v4578, 0
        %v4607 = vsel %vm3360, %v4579, 0
        %v4610 = vsel %vm3360, %v4580, 0
        %v4613 = vsel %vm3360, %v4581, 0
        %v4616 = vsel %vm3385, %v4589, 0
        %4618 = vmatprep.subr.bf16.mxu0 0
        %4619 = vmatpush1.bf16.msra.mxu0 0
        %4620 = vmatprep.subr.bf16.mxu0 0
        %4621 = vmatpush1.bf16.msra.mxu0 0
        %4622 = vmatprep.subr.bf16.mxu0 0
        %4623 = vmatpush1.bf16.msra.mxu0 0
        %4624 = vmatprep.subr.bf16.mxu0 0
        %4625 = vmatpush1.bf16.msra.mxu0 0
        %4626 = vmatprep.subr.bf16.mxu0 0
        %4627 = vmatpush1.bf16.msra.mxu0 0
        %4628 = vmatprep.subr.bf16.mxu0 0
        %4629 = vmatpush1.bf16.msra.mxu0 0
        %4630 = vmatprep.subr.bf16.mxu0 0
        %4631 = vmatpush1.bf16.msra.mxu0 %v4616
        %4632 = vmatprep.subr.bf16.mxu0 0
        %4633 = vmatpush1.bf16.msra.mxu0 %v4588
        %4634 = vmatprep.subr.bf16.mxu0 0
        %4635 = vmatpush2.bf16.msra.mxu0 0
        %4636 = vmatprep.subr.bf16.mxu0 0
        %4637 = vmatpush2.bf16.msra.mxu0 0
        %4638 = vmatprep.subr.bf16.mxu0 0
        %4639 = vmatpush2.bf16.msra.mxu0 0
        %4640 = vmatprep.subr.bf16.mxu0 0
        %4641 = vmatpush2.bf16.msra.mxu0 0
        %4642 = vmatprep.subr.bf16.mxu0 0
        %4643 = vmatpush2.bf16.msra.mxu0 0
        %4644 = vmatprep.subr.bf16.mxu0 0
        %4645 = vmatpush2.bf16.msra.mxu0 0
        %4646 = vmatprep.subr.bf16.mxu0 0
        %4647 = vmatpush2.bf16.msra.mxu0 0
        %4648 = vmatprep.subr.bf16.mxu0 0
        %4649 = vmatpush2.bf16.msra.mxu0 0
        %4650 = vmatprep.mubr.bf16.mxu0 0
        %4651 = vmatmul.mubr.bf16.gmra.mxu0 %v4592
        %v4652 = vpop.f32.mrf.mxu0
        %v4653 = vpop.f32.mrf.mxu0
        %v4654 = vpop.f32.mrf.mxu0
        %v4655 = vpop.f32.mrf.mxu0
        %4656 = vmatprep.mubr.bf16.mxu0 0
        %4657 = vmatmul.mubr.bf16.gmra.mxu0 %v4595
        %v4658 = vpop.f32.mrf.mxu0
        %v4659 = vadd.f32 0.0, %v4658
        %v4660 = vpop.f32.mrf.mxu0
        %v4661 = vpop.f32.mrf.mxu0
        %v4662 = vadd.f32 0.0, %v4661
        %v4663 = vpop.f32.mrf.mxu0
        %4664 = vmatprep.mubr.bf16.mxu0 0
        %4665 = vmatmul.mubr.bf16.gmra.mxu0 %v4598
        %v4666 = vpop.f32.mrf.mxu0
        %v4667 = vadd.f32 0.0, %v4666
        %v4668 = vpop.f32.mrf.mxu0
        %v4669 = vpop.f32.mrf.mxu0
        %v4670 = vadd.f32 0.0, %v4669
        %v4671 = vpop.f32.mrf.mxu0
        %4672 = vmatprep.mubr.bf16.mxu0 0
        %4673 = vmatmul.mubr.bf16.gmra.mxu0 %v4601
        %v4674 = vpop.f32.mrf.mxu0
        %v4675 = vpop.f32.mrf.mxu0
        %v4676 = vpop.f32.mrf.mxu0
        %v4677 = vpop.f32.mrf.mxu0
        %4678 = vmatprep.mubr.bf16.mxu0 0
        %4679 = vmatmul.mubr.bf16.gmra.mxu0 %v4604
        %v4680 = vpop.f32.mrf.mxu0
        %v4681 = vpop.f32.mrf.mxu0
        %v4682 = vpop.f32.mrf.mxu0
        %v4683 = vpop.f32.mrf.mxu0
        %4684 = vmatprep.mubr.bf16.mxu0 0
        %4685 = vmatmul.mubr.bf16.gmra.mxu0 %v4607
        %v4686 = vpop.f32.mrf.mxu0
        %v4687 = vadd.f32 0.0, %v4686
        %v4688 = vpop.f32.mrf.mxu0
        %v4689 = vpop.f32.mrf.mxu0
        %v4690 = vadd.f32 0.0, %v4689
        %v4691 = vpop.f32.mrf.mxu0
        %4692 = vmatprep.mubr.bf16.mxu0 0
        %4693 = vmatmul.mubr.bf16.gmra.mxu0 %v4610
        %v4694 = vpop.f32.mrf.mxu0
        %v4695 = vadd.f32 0.0, %v4694
        %v4696 = vpop.f32.mrf.mxu0
        %v4697 = vpop.f32.mrf.mxu0
        %v4698 = vadd.f32 0.0, %v4697
        %v4699 = vpop.f32.mrf.mxu0
        %4700 = vmatprep.mubr.bf16.mxu0 0
        %4701 = vmatmul.mubr.bf16.gmra.mxu0 %v4613
        %v4702 = vpop.f32.mrf.mxu0
        %v4703 = vpop.f32.mrf.mxu0
        %v4704 = vpop.f32.mrf.mxu0
        %v4705 = vpop.f32.mrf.mxu0
        %4706 = vdwg.mxu0
        %v4707 = vadd.f32 %v4548, %v4659
        %v4708 = vadd.f32 %v4549, %v4662
        %v4709 = vadd.f32 %v4550, %v4667
        %v4710 = vadd.f32 %v4551, %v4670
        %v4711 = vadd.f32 %v4552, %v4687
        %v4712 = vadd.f32 %v4553, %v4690
        %v4713 = vadd.f32 %v4554, %v4695
        %v4714 = vadd.f32 %v4555, %v4698
        %v4715 = vlaneseq
        %v4716 = vshrl.u32 %v4715, 7
        %v4717 = vsub.s32 0, %v4716
        %v4718 = vrot.slane %v3288, %v4717
        %v4719 = vmul.f32 %v4718, %v4707
        %v4720 = vmul.f32 %v4718, %v4708
        %v4721 = vmul.f32 %v4718, %v4709
        %v4722 = vmul.f32 %v4718, %v4710
        %v4723 = vmul.f32 %v4718, %v4711
        %v4724 = vmul.f32 %v4718, %v4712
        %v4725 = vmul.f32 %v4718, %v4713
        %v4726 = vmul.f32 %v4718, %v4714
        %v4727 = vlaneseq
        %v4728 = vshrl.u32 %v4727, 7
        %v4729 = vsub.s32 0, %v4728
        %v4730 = vrot.slane %v3289, %v4729
        %v4731 = vadd.f32 %v4719, %v4730
        %v4732 = vadd.f32 %v4720, %v4730
        %v4733 = vadd.f32 %v4721, %v4730
        %v4734 = vadd.f32 %v4722, %v4730
        %v4735 = vadd.f32 %v4723, %v4730
        %v4736 = vadd.f32 %v4724, %v4730
        %v4737 = vadd.f32 %v4725, %v4730
        %v4738 = vadd.f32 %v4726, %v4730
        %v4739 = vmul.f32 %v4731, 0.2
        %v4740 = vmul.f32 %v4732, 0.2
        %v4741 = vmul.f32 %v4733, 0.2
        %v4742 = vmul.f32 %v4734, 0.2
        %v4743 = vmul.f32 %v4735, 0.2
        %v4744 = vmul.f32 %v4736, 0.2
        %v4745 = vmul.f32 %v4737, 0.2
        %v4746 = vmul.f32 %v4738, 0.2
        %v4747 = vmax.f32 %v4731, %v4739
        %v4748 = vmax.f32 %v4732, %v4740
        %v4749 = vmax.f32 %v4733, %v4741
        %v4750 = vmax.f32 %v4734, %v4742
        %v4751 = vmax.f32 %v4735, %v4743
        %v4752 = vmax.f32 %v4736, %v4744
        %v4753 = vmax.f32 %v4737, %v4745
        %v4754 = vmax.f32 %v4738, %v4746
        %s4755 = sadd.s32 %s3298, 16
        %s4756 = scalar_lea.vmem [#allocation2], %s4755
        %4757 = vst.msk [vmem:[%s4756] sm:$0xff] %vm3360, %v4747
        %4758 = vst.msk [vmem:[%s4756 + $0x8] sm:$0xff] %vm3360, %v4748
        %4759 = vst.msk [vmem:[%s4756 + $0x10] sm:$0xff] %vm3360, %v4749
        %4760 = vst.msk [vmem:[%s4756 + $0x18] sm:$0xff] %vm3360, %v4750
        %s4761 = sadd.s32 %s3298, 80
        %s4762 = scalar_lea.vmem [#allocation2], %s4761
        %4763 = vst.msk [vmem:[%s4762] sm:$0xff] %vm3360, %v4751
        %4764 = vst.msk [vmem:[%s4762 + $0x8] sm:$0xff] %vm3360, %v4752
        %4765 = vst.msk [vmem:[%s4762 + $0x10] sm:$0xff] %vm3360, %v4753
        %4766 = vst.msk [vmem:[%s4762 + $0x18] sm:$0xff] %vm3360, %v4754
      $region77: #{lrnet_forward.1} parent=43 // loop_footer
        %s3295 = sadd.s32 1, %s3291
      $region78: #{lrnet_forward.1} parent=43 // loop_footer_branch
        %3290 = sbr.rel target = $region74
      $region79: #{lrnet_forward.1} parent=43 // loop_exit
        _
      %s4767 = scalar_lea.vmem %s2, 216
      %v4768 = vld [vmem:[%s4767] sm:$0xf]
      %v4769 = vld [vmem:[%s4767 + $0x4] sm:$0xf]
      %v4770 = vld [vmem:[%s4767 + $0x8] sm:$0xf]
      %s4771 = scalar_lea.vmem %s2, 228
      %v4772 = vld [vmem:[%s4771] sm:$0xf]
      %v4773 = vld [vmem:[%s4771 + $0x4] sm:$0xf]
      %v4774 = vld [vmem:[%s4771 + $0x8] sm:$0xf]
      %s4775 = scalar_lea.vmem %s2, 240
      %v4776 = vld [vmem:[%s4775] sm:$0xf]
      %v4777 = vld [vmem:[%s4775 + $0x4] sm:$0xf]
      %v4778 = vld [vmem:[%s4775 + $0x8] sm:$0xf]
      %s4779 = scalar_lea.vmem %s2, 252
      %v4780 = vld [vmem:[%s4779] sm:$0xf]
      %v4781 = vld [vmem:[%s4779 + $0x4] sm:$0xf]
      %v4782 = vld [vmem:[%s4779 + $0x8] sm:$0xf]
      %s4783 = scalar_lea.vmem %s2, 264
      %v4784 = vld [vmem:[%s4783] sm:$0xf]
      %v4785 = vld [vmem:[%s4783 + $0x4] sm:$0xf]
      %v4786 = vld [vmem:[%s4783 + $0x8] sm:$0xf]
      %s4787 = scalar_lea.vmem %s2, 276
      %v4788 = vld [vmem:[%s4787] sm:$0xf]
      %v4789 = vld [vmem:[%s4787 + $0x4] sm:$0xf]
      %v4790 = vld [vmem:[%s4787 + $0x8] sm:$0xf]
      %s4791 = scalar_lea.vmem %s2, 288
      %v4792 = vld [vmem:[%s4791] sm:$0xf]
      %v4793 = vld [vmem:[%s4791 + $0x4] sm:$0xf]
      %v4794 = vld [vmem:[%s4791 + $0x8] sm:$0xf]
      %s4795 = scalar_lea.vmem %s2, 300
      %v4796 = vld [vmem:[%s4795] sm:$0xf]
      %v4797 = vld [vmem:[%s4795 + $0x4] sm:$0xf]
      %v4798 = vld [vmem:[%s4795 + $0x8] sm:$0xf]
      %s4799 = scalar_lea.vmem %s2, 312
      %v4800 = vld [vmem:[%s4799] sm:$0xf]
      %v4801 = vld [vmem:[%s4799 + $0x4] sm:$0xf]
      %v4802 = vld [vmem:[%s4799 + $0x8] sm:$0xf]
      %v4803 = vld [vmem:[%s3 + $0x6] sm:$0x1]
      %v4804 = vld [vmem:[%s3 + $0x7] sm:$0x1]
      loop: start=0, step=1, limit=16
      $region80: #{lrnet_forward.1} parent=43 // loop_pre_header
        _
      $region81: #{lrnet_forward.1} parent=43 // loop_header
        %s4806 = sphi 0, %s4810
        %p4807 = scmp.ge.s32.totalorder %s4806, 16
      $region82: #{lrnet_forward.1} parent=43 // loop_header_branch
        %4809 = sbr.rel (%p4807) target = $region86
      $region83: #{lrnet_forward.1} parent=43 // loop_body
        %s4811 = smul.u32 %s4806, 2
        %s4812 = sadd.s32 %s4811, 17
        %s4813 = smul.u32 %s4812, 64
        %s4814 = sadd.s32 %s4813, 4294966776
        %s4815 = scalar_lea.vmem [#allocation2], %s4814
        %v4816 = vld [vmem:[%s4815] sm:$0xff]
        %v4817 = vld [vmem:[%s4815 + $0x8] sm:$0xff]
        %v4818 = vld [vmem:[%s4815 + $0x10] sm:$0xff]
        %v4819 = vld [vmem:[%s4815 + $0x18] sm:$0xff]
        %v4820 = vld [vmem:[%s4815 + $0x20] sm:$0xff]
        %v4821 = vld [vmem:[%s4815 + $0x28] sm:$0xff]
        %v4822 = vld [vmem:[%s4815 + $0x30] sm:$0xff]
        %v4823 = vld [vmem:[%s4815 + $0x38] sm:$0xff]
        %v4824 = vld [vmem:[%s4815 + $0x40] sm:$0xff]
        %v4825 = vld [vmem:[%s4815 + $0x48] sm:$0xff]
        %v4826 = vld [vmem:[%s4815 + $0x50] sm:$0xff]
        %v4827 = vld [vmem:[%s4815 + $0x58] sm:$0xff]
        %v4828 = vld [vmem:[%s4815 + $0x60] sm:$0xff]
        %v4829 = vld [vmem:[%s4815 + $0x68] sm:$0xff]
        %v4830 = vld [vmem:[%s4815 + $0x70] sm:$0xff]
        %v4831 = vld [vmem:[%s4815 + $0x78] sm:$0xff]
        %v4832 = vpack.c.bf16 %v4817, %v4816
        %v4833 = vpack.c.bf16 %v4819, %v4818
        %v4834 = vpack.c.bf16 %v4821, %v4820
        %v4835 = vpack.c.bf16 %v4823, %v4822
        %v4836 = vpack.c.bf16 %v4825, %v4824
        %v4837 = vpack.c.bf16 %v4827, %v4826
        %v4838 = vpack.c.bf16 %v4829, %v4828
        %v4839 = vpack.c.bf16 %v4831, %v4830
        %s4840 = sadd.s32 %s4813, 4294966784
        %s4841 = scalar_lea.vmem [#allocation2], %s4840
        %v4842 = vld [vmem:[%s4841] sm:$0xff]
        %v4843 = vld [vmem:[%s4841 + $0x8] sm:$0xff]
        %v4844 = vld [vmem:[%s4841 + $0x10] sm:$0xff]
        %v4845 = vld [vmem:[%s4841 + $0x18] sm:$0xff]
        %v4846 = vld [vmem:[%s4841 + $0x20] sm:$0xff]
        %v4847 = vld [vmem:[%s4841 + $0x28] sm:$0xff]
        %v4848 = vld [vmem:[%s4841 + $0x30] sm:$0xff]
        %v4849 = vld [vmem:[%s4841 + $0x38] sm:$0xff]
        %v4850 = vld [vmem:[%s4841 + $0x40] sm:$0xff]
        %v4851 = vld [vmem:[%s4841 + $0x48] sm:$0xff]
        %v4852 = vld [vmem:[%s4841 + $0x50] sm:$0xff]
        %v4853 = vld [vmem:[%s4841 + $0x58] sm:$0xff]
        %v4854 = vld [vmem:[%s4841 + $0x60] sm:$0xff]
        %v4855 = vld [vmem:[%s4841 + $0x68] sm:$0xff]
        %v4856 = vld [vmem:[%s4841 + $0x70] sm:$0xff]
        %v4857 = vld [vmem:[%s4841 + $0x78] sm:$0xff]
        %v4858 = vpack.c.bf16 %v4843, %v4842
        %v4859 = vpack.c.bf16 %v4845, %v4844
        %v4860 = vpack.c.bf16 %v4847, %v4846
        %v4861 = vpack.c.bf16 %v4849, %v4848
        %v4862 = vpack.c.bf16 %v4851, %v4850
        %v4863 = vpack.c.bf16 %v4853, %v4852
        %v4864 = vpack.c.bf16 %v4855, %v4854
        %v4865 = vpack.c.bf16 %v4857, %v4856
        %v4869 = vunpack.c.l.b16 %v4772
        %v4870 = vunpack.c.l.b16 %v4773
        %v4871 = vunpack.c.l.b16 %v4774
        %v4872 = vpack.c.b16 %v4870, %v4869
        %v4873 = vpack.c.b16 %v4871, %v4871
        %vm4875 = vcmask 195584
        %v4877 = vsel %vm4875, %v4858, 0
        %v4880 = vsel %vm4875, %v4859, 0
        %v4883 = vsel %vm4875, %v4860, 0
        %v4886 = vsel %vm4875, %v4861, 0
        %v4889 = vsel %vm4875, %v4862, 0
        %v4892 = vsel %vm4875, %v4863, 0
        %v4895 = vsel %vm4875, %v4864, 0
        %v4898 = vsel %vm4875, %v4865, 0
        %vm4900 = vcmask 1043456
        %v4902 = vsel %vm4900, %v4873, 0
        %4904 = vmatprep.subr.bf16.mxu0 0
        %4905 = vmatpush1.bf16.msra.mxu0 0
        %4906 = vmatprep.subr.bf16.mxu0 0
        %4907 = vmatpush1.bf16.msra.mxu0 0
        %4908 = vmatprep.subr.bf16.mxu0 0
        %4909 = vmatpush1.bf16.msra.mxu0 0
        %4910 = vmatprep.subr.bf16.mxu0 0
        %4911 = vmatpush1.bf16.msra.mxu0 0
        %4912 = vmatprep.subr.bf16.mxu0 0
        %4913 = vmatpush1.bf16.msra.mxu0 0
        %4914 = vmatprep.subr.bf16.mxu0 0
        %4915 = vmatpush1.bf16.msra.mxu0 0
        %4916 = vmatprep.subr.bf16.mxu0 0
        %4917 = vmatpush1.bf16.msra.mxu0 %v4902
        %4918 = vmatprep.subr.bf16.mxu0 0
        %4919 = vmatpush1.bf16.msra.mxu0 %v4872
        %4920 = vmatprep.subr.bf16.mxu0 0
        %4921 = vmatpush2.bf16.msra.mxu0 0
        %4922 = vmatprep.subr.bf16.mxu0 0
        %4923 = vmatpush2.bf16.msra.mxu0 0
        %4924 = vmatprep.subr.bf16.mxu0 0
        %4925 = vmatpush2.bf16.msra.mxu0 0
        %4926 = vmatprep.subr.bf16.mxu0 0
        %4927 = vmatpush2.bf16.msra.mxu0 0
        %4928 = vmatprep.subr.bf16.mxu0 0
        %4929 = vmatpush2.bf16.msra.mxu0 0
        %4930 = vmatprep.subr.bf16.mxu0 0
        %4931 = vmatpush2.bf16.msra.mxu0 0
        %4932 = vmatprep.subr.bf16.mxu0 0
        %4933 = vmatpush2.bf16.msra.mxu0 0
        %4934 = vmatprep.subr.bf16.mxu0 0
        %4935 = vmatpush2.bf16.msra.mxu0 0
        %4936 = vmatprep.mubr.bf16.mxu0 0
        %4937 = vmatmul.mubr.bf16.gmra.mxu0 %v4877
        %v4938 = vpop.f32.mrf.mxu0
        %v4939 = vpop.f32.mrf.mxu0
        %v4940 = vpop.f32.mrf.mxu0
        %v4941 = vpop.f32.mrf.mxu0
        %4942 = vmatprep.mubr.bf16.mxu0 0
        %4943 = vmatmul.mubr.bf16.gmra.mxu0 %v4880
        %v4944 = vpop.f32.mrf.mxu0
        %v4945 = vadd.f32 0.0, %v4944
        %v4946 = vpop.f32.mrf.mxu0
        %v4947 = vpop.f32.mrf.mxu0
        %v4948 = vadd.f32 0.0, %v4947
        %v4949 = vpop.f32.mrf.mxu0
        %4950 = vmatprep.mubr.bf16.mxu0 0
        %4951 = vmatmul.mubr.bf16.gmra.mxu0 %v4883
        %v4952 = vpop.f32.mrf.mxu0
        %v4953 = vadd.f32 0.0, %v4952
        %v4954 = vpop.f32.mrf.mxu0
        %v4955 = vpop.f32.mrf.mxu0
        %v4956 = vadd.f32 0.0, %v4955
        %v4957 = vpop.f32.mrf.mxu0
        %4958 = vmatprep.mubr.bf16.mxu0 0
        %4959 = vmatmul.mubr.bf16.gmra.mxu0 %v4886
        %v4960 = vpop.f32.mrf.mxu0
        %v4961 = vpop.f32.mrf.mxu0
        %v4962 = vpop.f32.mrf.mxu0
        %v4963 = vpop.f32.mrf.mxu0
        %4964 = vmatprep.mubr.bf16.mxu0 0
        %4965 = vmatmul.mubr.bf16.gmra.mxu0 %v4889
        %v4966 = vpop.f32.mrf.mxu0
        %v4967 = vpop.f32.mrf.mxu0
        %v4968 = vpop.f32.mrf.mxu0
        %v4969 = vpop.f32.mrf.mxu0
        %4970 = vmatprep.mubr.bf16.mxu0 0
        %4971 = vmatmul.mubr.bf16.gmra.mxu0 %v4892
        %v4972 = vpop.f32.mrf.mxu0
        %v4973 = vadd.f32 0.0, %v4972
        %v4974 = vpop.f32.mrf.mxu0
        %v4975 = vpop.f32.mrf.mxu0
        %v4976 = vadd.f32 0.0, %v4975
        %v4977 = vpop.f32.mrf.mxu0
        %4978 = vmatprep.mubr.bf16.mxu0 0
        %4979 = vmatmul.mubr.bf16.gmra.mxu0 %v4895
        %v4980 = vpop.f32.mrf.mxu0
        %v4981 = vadd.f32 0.0, %v4980
        %v4982 = vpop.f32.mrf.mxu0
        %v4983 = vpop.f32.mrf.mxu0
        %v4984 = vadd.f32 0.0, %v4983
        %v4985 = vpop.f32.mrf.mxu0
        %4986 = vmatprep.mubr.bf16.mxu0 0
        %4987 = vmatmul.mubr.bf16.gmra.mxu0 %v4898
        %v4988 = vpop.f32.mrf.mxu0
        %v4989 = vpop.f32.mrf.mxu0
        %v4990 = vpop.f32.mrf.mxu0
        %v4991 = vpop.f32.mrf.mxu0
        %4992 = vdwg.mxu0
        %v4996 = vunpack.c.l.b16 %v4768
        %v4997 = vunpack.c.l.b16 %v4769
        %v4998 = vunpack.c.l.b16 %v4770
        %v4999 = vpack.c.b16 %v4997, %v4996
        %v5000 = vpack.c.b16 %v4998, %v4998
        %v5003 = vsel %vm4875, %v4832, 0
        %v5006 = vsel %vm4875, %v4833, 0
        %v5009 = vsel %vm4875, %v4834, 0
        %v5012 = vsel %vm4875, %v4835, 0
        %v5015 = vsel %vm4875, %v4836, 0
        %v5018 = vsel %vm4875, %v4837, 0
        %v5021 = vsel %vm4875, %v4838, 0
        %v5024 = vsel %vm4875, %v4839, 0
        %v5027 = vsel %vm4900, %v5000, 0
        %5029 = vmatprep.subr.bf16.mxu0 0
        %5030 = vmatpush1.bf16.msra.mxu0 0
        %5031 = vmatprep.subr.bf16.mxu0 0
        %5032 = vmatpush1.bf16.msra.mxu0 0
        %5033 = vmatprep.subr.bf16.mxu0 0
        %5034 = vmatpush1.bf16.msra.mxu0 0
        %5035 = vmatprep.subr.bf16.mxu0 0
        %5036 = vmatpush1.bf16.msra.mxu0 0
        %5037 = vmatprep.subr.bf16.mxu0 0
        %5038 = vmatpush1.bf16.msra.mxu0 0
        %5039 = vmatprep.subr.bf16.mxu0 0
        %5040 = vmatpush1.bf16.msra.mxu0 0
        %5041 = vmatprep.subr.bf16.mxu0 0
        %5042 = vmatpush1.bf16.msra.mxu0 %v5027
        %5043 = vmatprep.subr.bf16.mxu0 0
        %5044 = vmatpush1.bf16.msra.mxu0 %v4999
        %5045 = vmatprep.subr.bf16.mxu0 0
        %5046 = vmatpush2.bf16.msra.mxu0 0
        %5047 = vmatprep.subr.bf16.mxu0 0
        %5048 = vmatpush2.bf16.msra.mxu0 0
        %5049 = vmatprep.subr.bf16.mxu0 0
        %5050 = vmatpush2.bf16.msra.mxu0 0
        %5051 = vmatprep.subr.bf16.mxu0 0
        %5052 = vmatpush2.bf16.msra.mxu0 0
        %5053 = vmatprep.subr.bf16.mxu0 0
        %5054 = vmatpush2.bf16.msra.mxu0 0
        %5055 = vmatprep.subr.bf16.mxu0 0
        %5056 = vmatpush2.bf16.msra.mxu0 0
        %5057 = vmatprep.subr.bf16.mxu0 0
        %5058 = vmatpush2.bf16.msra.mxu0 0
        %5059 = vmatprep.subr.bf16.mxu0 0
        %5060 = vmatpush2.bf16.msra.mxu0 0
        %5061 = vmatprep.mubr.bf16.mxu0 0
        %5062 = vmatmul.mubr.bf16.gmra.mxu0 %v5003
        %v5063 = vpop.f32.mrf.mxu0
        %v5064 = vpop.f32.mrf.mxu0
        %v5065 = vpop.f32.mrf.mxu0
        %v5066 = vpop.f32.mrf.mxu0
        %5067 = vmatprep.mubr.bf16.mxu0 0
        %5068 = vmatmul.mubr.bf16.gmra.mxu0 %v5006
        %v5069 = vpop.f32.mrf.mxu0
        %v5070 = vadd.f32 %v4945, %v5069
        %v5071 = vpop.f32.mrf.mxu0
        %v5072 = vpop.f32.mrf.mxu0
        %v5073 = vadd.f32 %v4948, %v5072
        %v5074 = vpop.f32.mrf.mxu0
        %5075 = vmatprep.mubr.bf16.mxu0 0
        %5076 = vmatmul.mubr.bf16.gmra.mxu0 %v5009
        %v5077 = vpop.f32.mrf.mxu0
        %v5078 = vadd.f32 %v4953, %v5077
        %v5079 = vpop.f32.mrf.mxu0
        %v5080 = vpop.f32.mrf.mxu0
        %v5081 = vadd.f32 %v4956, %v5080
        %v5082 = vpop.f32.mrf.mxu0
        %5083 = vmatprep.mubr.bf16.mxu0 0
        %5084 = vmatmul.mubr.bf16.gmra.mxu0 %v5012
        %v5085 = vpop.f32.mrf.mxu0
        %v5086 = vpop.f32.mrf.mxu0
        %v5087 = vpop.f32.mrf.mxu0
        %v5088 = vpop.f32.mrf.mxu0
        %5089 = vmatprep.mubr.bf16.mxu0 0
        %5090 = vmatmul.mubr.bf16.gmra.mxu0 %v5015
        %v5091 = vpop.f32.mrf.mxu0
        %v5092 = vpop.f32.mrf.mxu0
        %v5093 = vpop.f32.mrf.mxu0
        %v5094 = vpop.f32.mrf.mxu0
        %5095 = vmatprep.mubr.bf16.mxu0 0
        %5096 = vmatmul.mubr.bf16.gmra.mxu0 %v5018
        %v5097 = vpop.f32.mrf.mxu0
        %v5098 = vadd.f32 %v4973, %v5097
        %v5099 = vpop.f32.mrf.mxu0
        %v5100 = vpop.f32.mrf.mxu0
        %v5101 = vadd.f32 %v4976, %v5100
        %v5102 = vpop.f32.mrf.mxu0
        %5103 = vmatprep.mubr.bf16.mxu0 0
        %5104 = vmatmul.mubr.bf16.gmra.mxu0 %v5021
        %v5105 = vpop.f32.mrf.mxu0
        %v5106 = vadd.f32 %v4981, %v5105
        %v5107 = vpop.f32.mrf.mxu0
        %v5108 = vpop.f32.mrf.mxu0
        %v5109 = vadd.f32 %v4984, %v5108
        %v5110 = vpop.f32.mrf.mxu0
        %5111 = vmatprep.mubr.bf16.mxu0 0
        %5112 = vmatmul.mubr.bf16.gmra.mxu0 %v5024
        %v5113 = vpop.f32.mrf.mxu0
        %v5114 = vpop.f32.mrf.mxu0
        %v5115 = vpop.f32.mrf.mxu0
        %v5116 = vpop.f32.mrf.mxu0
        %5117 = vdwg.mxu0
        %s5118 = sadd.s32 %s4813, 4294966792
        %s5119 = scalar_lea.vmem [#allocation2], %s5118
        %v5120 = vld [vmem:[%s5119] sm:$0xff]
        %v5121 = vld [vmem:[%s5119 + $0x8] sm:$0xff]
        %v5122 = vld [vmem:[%s5119 + $0x10] sm:$0xff]
        %v5123 = vld [vmem:[%s5119 + $0x18] sm:$0xff]
        %v5124 = vld [vmem:[%s5119 + $0x20] sm:$0xff]
        %v5125 = vld [vmem:[%s5119 + $0x28] sm:$0xff]
        %v5126 = vld [vmem:[%s5119 + $0x30] sm:$0xff]
        %v5127 = vld [vmem:[%s5119 + $0x38] sm:$0xff]
        %v5128 = vld [vmem:[%s5119 + $0x40] sm:$0xff]
        %v5129 = vld [vmem:[%s5119 + $0x48] sm:$0xff]
        %v5130 = vld [vmem:[%s5119 + $0x50] sm:$0xff]
        %v5131 = vld [vmem:[%s5119 + $0x58] sm:$0xff]
        %v5132 = vld [vmem:[%s5119 + $0x60] sm:$0xff]
        %v5133 = vld [vmem:[%s5119 + $0x68] sm:$0xff]
        %v5134 = vld [vmem:[%s5119 + $0x70] sm:$0xff]
        %v5135 = vld [vmem:[%s5119 + $0x78] sm:$0xff]
        %v5136 = vpack.c.bf16 %v5121, %v5120
        %v5137 = vpack.c.bf16 %v5123, %v5122
        %v5138 = vpack.c.bf16 %v5125, %v5124
        %v5139 = vpack.c.bf16 %v5127, %v5126
        %v5140 = vpack.c.bf16 %v5129, %v5128
        %v5141 = vpack.c.bf16 %v5131, %v5130
        %v5142 = vpack.c.bf16 %v5133, %v5132
        %v5143 = vpack.c.bf16 %v5135, %v5134
        %v5147 = vunpack.c.l.b16 %v4776
        %v5148 = vunpack.c.l.b16 %v4777
        %v5149 = vunpack.c.l.b16 %v4778
        %v5150 = vpack.c.b16 %v5148, %v5147
        %v5151 = vpack.c.b16 %v5149, %v5149
        %v5154 = vsel %vm4875, %v5136, 0
        %v5157 = vsel %vm4875, %v5137, 0
        %v5160 = vsel %vm4875, %v5138, 0
        %v5163 = vsel %vm4875, %v5139, 0
        %v5166 = vsel %vm4875, %v5140, 0
        %v5169 = vsel %vm4875, %v5141, 0
        %v5172 = vsel %vm4875, %v5142, 0
        %v5175 = vsel %vm4875, %v5143, 0
        %v5178 = vsel %vm4900, %v5151, 0
        %5180 = vmatprep.subr.bf16.mxu0 0
        %5181 = vmatpush1.bf16.msra.mxu0 0
        %5182 = vmatprep.subr.bf16.mxu0 0
        %5183 = vmatpush1.bf16.msra.mxu0 0
        %5184 = vmatprep.subr.bf16.mxu0 0
        %5185 = vmatpush1.bf16.msra.mxu0 0
        %5186 = vmatprep.subr.bf16.mxu0 0
        %5187 = vmatpush1.bf16.msra.mxu0 0
        %5188 = vmatprep.subr.bf16.mxu0 0
        %5189 = vmatpush1.bf16.msra.mxu0 0
        %5190 = vmatprep.subr.bf16.mxu0 0
        %5191 = vmatpush1.bf16.msra.mxu0 0
        %5192 = vmatprep.subr.bf16.mxu0 0
        %5193 = vmatpush1.bf16.msra.mxu0 %v5178
        %5194 = vmatprep.subr.bf16.mxu0 0
        %5195 = vmatpush1.bf16.msra.mxu0 %v5150
        %5196 = vmatprep.subr.bf16.mxu0 0
        %5197 = vmatpush2.bf16.msra.mxu0 0
        %5198 = vmatprep.subr.bf16.mxu0 0
        %5199 = vmatpush2.bf16.msra.mxu0 0
        %5200 = vmatprep.subr.bf16.mxu0 0
        %5201 = vmatpush2.bf16.msra.mxu0 0
        %5202 = vmatprep.subr.bf16.mxu0 0
        %5203 = vmatpush2.bf16.msra.mxu0 0
        %5204 = vmatprep.subr.bf16.mxu0 0
        %5205 = vmatpush2.bf16.msra.mxu0 0
        %5206 = vmatprep.subr.bf16.mxu0 0
        %5207 = vmatpush2.bf16.msra.mxu0 0
        %5208 = vmatprep.subr.bf16.mxu0 0
        %5209 = vmatpush2.bf16.msra.mxu0 0
        %5210 = vmatprep.subr.bf16.mxu0 0
        %5211 = vmatpush2.bf16.msra.mxu0 0
        %5212 = vmatprep.mubr.bf16.mxu0 0
        %5213 = vmatmul.mubr.bf16.gmra.mxu0 %v5154
        %v5214 = vpop.f32.mrf.mxu0
        %v5215 = vpop.f32.mrf.mxu0
        %v5216 = vpop.f32.mrf.mxu0
        %v5217 = vpop.f32.mrf.mxu0
        %5218 = vmatprep.mubr.bf16.mxu0 0
        %5219 = vmatmul.mubr.bf16.gmra.mxu0 %v5157
        %v5220 = vpop.f32.mrf.mxu0
        %v5221 = vadd.f32 0.0, %v5220
        %v5222 = vpop.f32.mrf.mxu0
        %v5223 = vpop.f32.mrf.mxu0
        %v5224 = vadd.f32 0.0, %v5223
        %v5225 = vpop.f32.mrf.mxu0
        %5226 = vmatprep.mubr.bf16.mxu0 0
        %5227 = vmatmul.mubr.bf16.gmra.mxu0 %v5160
        %v5228 = vpop.f32.mrf.mxu0
        %v5229 = vadd.f32 0.0, %v5228
        %v5230 = vpop.f32.mrf.mxu0
        %v5231 = vpop.f32.mrf.mxu0
        %v5232 = vadd.f32 0.0, %v5231
        %v5233 = vpop.f32.mrf.mxu0
        %5234 = vmatprep.mubr.bf16.mxu0 0
        %5235 = vmatmul.mubr.bf16.gmra.mxu0 %v5163
        %v5236 = vpop.f32.mrf.mxu0
        %v5237 = vpop.f32.mrf.mxu0
        %v5238 = vpop.f32.mrf.mxu0
        %v5239 = vpop.f32.mrf.mxu0
        %5240 = vmatprep.mubr.bf16.mxu0 0
        %5241 = vmatmul.mubr.bf16.gmra.mxu0 %v5166
        %v5242 = vpop.f32.mrf.mxu0
        %v5243 = vpop.f32.mrf.mxu0
        %v5244 = vpop.f32.mrf.mxu0
        %v5245 = vpop.f32.mrf.mxu0
        %5246 = vmatprep.mubr.bf16.mxu0 0
        %5247 = vmatmul.mubr.bf16.gmra.mxu0 %v5169
        %v5248 = vpop.f32.mrf.mxu0
        %v5249 = vadd.f32 0.0, %v5248
        %v5250 = vpop.f32.mrf.mxu0
        %v5251 = vpop.f32.mrf.mxu0
        %v5252 = vadd.f32 0.0, %v5251
        %v5253 = vpop.f32.mrf.mxu0
        %5254 = vmatprep.mubr.bf16.mxu0 0
        %5255 = vmatmul.mubr.bf16.gmra.mxu0 %v5172
        %v5256 = vpop.f32.mrf.mxu0
        %v5257 = vadd.f32 0.0, %v5256
        %v5258 = vpop.f32.mrf.mxu0
        %v5259 = vpop.f32.mrf.mxu0
        %v5260 = vadd.f32 0.0, %v5259
        %v5261 = vpop.f32.mrf.mxu0
        %5262 = vmatprep.mubr.bf16.mxu0 0
        %5263 = vmatmul.mubr.bf16.gmra.mxu0 %v5175
        %v5264 = vpop.f32.mrf.mxu0
        %v5265 = vpop.f32.mrf.mxu0
        %v5266 = vpop.f32.mrf.mxu0
        %v5267 = vpop.f32.mrf.mxu0
        %5268 = vdwg.mxu0
        %v5269 = vadd.f32 %v5070, %v5221
        %v5270 = vadd.f32 %v5073, %v5224
        %v5271 = vadd.f32 %v5078, %v5229
        %v5272 = vadd.f32 %v5081, %v5232
        %v5273 = vadd.f32 %v5098, %v5249
        %v5274 = vadd.f32 %v5101, %v5252
        %v5275 = vadd.f32 %v5106, %v5257
        %v5276 = vadd.f32 %v5109, %v5260
        %s5277 = sadd.s32 %s4813, 4294967288
        %s5278 = scalar_lea.vmem [#allocation2], %s5277
        %v5279 = vld [vmem:[%s5278] sm:$0xff]
        %v5280 = vld [vmem:[%s5278 + $0x8] sm:$0xff]
        %v5281 = vld [vmem:[%s5278 + $0x10] sm:$0xff]
        %v5282 = vld [vmem:[%s5278 + $0x18] sm:$0xff]
        %v5283 = vld [vmem:[%s5278 + $0x20] sm:$0xff]
        %v5284 = vld [vmem:[%s5278 + $0x28] sm:$0xff]
        %v5285 = vld [vmem:[%s5278 + $0x30] sm:$0xff]
        %v5286 = vld [vmem:[%s5278 + $0x38] sm:$0xff]
        %v5287 = vld [vmem:[%s5278 + $0x40] sm:$0xff]
        %v5288 = vld [vmem:[%s5278 + $0x48] sm:$0xff]
        %v5289 = vld [vmem:[%s5278 + $0x50] sm:$0xff]
        %v5290 = vld [vmem:[%s5278 + $0x58] sm:$0xff]
        %v5291 = vld [vmem:[%s5278 + $0x60] sm:$0xff]
        %v5292 = vld [vmem:[%s5278 + $0x68] sm:$0xff]
        %v5293 = vld [vmem:[%s5278 + $0x70] sm:$0xff]
        %v5294 = vld [vmem:[%s5278 + $0x78] sm:$0xff]
        %v5295 = vpack.c.bf16 %v5280, %v5279
        %v5296 = vpack.c.bf16 %v5282, %v5281
        %v5297 = vpack.c.bf16 %v5284, %v5283
        %v5298 = vpack.c.bf16 %v5286, %v5285
        %v5299 = vpack.c.bf16 %v5288, %v5287
        %v5300 = vpack.c.bf16 %v5290, %v5289
        %v5301 = vpack.c.bf16 %v5292, %v5291
        %v5302 = vpack.c.bf16 %v5294, %v5293
        %v5306 = vunpack.c.l.b16 %v4780
        %v5307 = vunpack.c.l.b16 %v4781
        %v5308 = vunpack.c.l.b16 %v4782
        %v5309 = vpack.c.b16 %v5307, %v5306
        %v5310 = vpack.c.b16 %v5308, %v5308
        %v5313 = vsel %vm4875, %v5295, 0
        %v5316 = vsel %vm4875, %v5296, 0
        %v5319 = vsel %vm4875, %v5297, 0
        %v5322 = vsel %vm4875, %v5298, 0
        %v5325 = vsel %vm4875, %v5299, 0
        %v5328 = vsel %vm4875, %v5300, 0
        %v5331 = vsel %vm4875, %v5301, 0
        %v5334 = vsel %vm4875, %v5302, 0
        %v5337 = vsel %vm4900, %v5310, 0
        %5339 = vmatprep.subr.bf16.mxu0 0
        %5340 = vmatpush1.bf16.msra.mxu0 0
        %5341 = vmatprep.subr.bf16.mxu0 0
        %5342 = vmatpush1.bf16.msra.mxu0 0
        %5343 = vmatprep.subr.bf16.mxu0 0
        %5344 = vmatpush1.bf16.msra.mxu0 0
        %5345 = vmatprep.subr.bf16.mxu0 0
        %5346 = vmatpush1.bf16.msra.mxu0 0
        %5347 = vmatprep.subr.bf16.mxu0 0
        %5348 = vmatpush1.bf16.msra.mxu0 0
        %5349 = vmatprep.subr.bf16.mxu0 0
        %5350 = vmatpush1.bf16.msra.mxu0 0
        %5351 = vmatprep.subr.bf16.mxu0 0
        %5352 = vmatpush1.bf16.msra.mxu0 %v5337
        %5353 = vmatprep.subr.bf16.mxu0 0
        %5354 = vmatpush1.bf16.msra.mxu0 %v5309
        %5355 = vmatprep.subr.bf16.mxu0 0
        %5356 = vmatpush2.bf16.msra.mxu0 0
        %5357 = vmatprep.subr.bf16.mxu0 0
        %5358 = vmatpush2.bf16.msra.mxu0 0
        %5359 = vmatprep.subr.bf16.mxu0 0
        %5360 = vmatpush2.bf16.msra.mxu0 0
        %5361 = vmatprep.subr.bf16.mxu0 0
        %5362 = vmatpush2.bf16.msra.mxu0 0
        %5363 = vmatprep.subr.bf16.mxu0 0
        %5364 = vmatpush2.bf16.msra.mxu0 0
        %5365 = vmatprep.subr.bf16.mxu0 0
        %5366 = vmatpush2.bf16.msra.mxu0 0
        %5367 = vmatprep.subr.bf16.mxu0 0
        %5368 = vmatpush2.bf16.msra.mxu0 0
        %5369 = vmatprep.subr.bf16.mxu0 0
        %5370 = vmatpush2.bf16.msra.mxu0 0
        %5371 = vmatprep.mubr.bf16.mxu0 0
        %5372 = vmatmul.mubr.bf16.gmra.mxu0 %v5313
        %v5373 = vpop.f32.mrf.mxu0
        %v5374 = vpop.f32.mrf.mxu0
        %v5375 = vpop.f32.mrf.mxu0
        %v5376 = vpop.f32.mrf.mxu0
        %5377 = vmatprep.mubr.bf16.mxu0 0
        %5378 = vmatmul.mubr.bf16.gmra.mxu0 %v5316
        %v5379 = vpop.f32.mrf.mxu0
        %v5380 = vadd.f32 0.0, %v5379
        %v5381 = vpop.f32.mrf.mxu0
        %v5382 = vpop.f32.mrf.mxu0
        %v5383 = vadd.f32 0.0, %v5382
        %v5384 = vpop.f32.mrf.mxu0
        %5385 = vmatprep.mubr.bf16.mxu0 0
        %5386 = vmatmul.mubr.bf16.gmra.mxu0 %v5319
        %v5387 = vpop.f32.mrf.mxu0
        %v5388 = vadd.f32 0.0, %v5387
        %v5389 = vpop.f32.mrf.mxu0
        %v5390 = vpop.f32.mrf.mxu0
        %v5391 = vadd.f32 0.0, %v5390
        %v5392 = vpop.f32.mrf.mxu0
        %5393 = vmatprep.mubr.bf16.mxu0 0
        %5394 = vmatmul.mubr.bf16.gmra.mxu0 %v5322
        %v5395 = vpop.f32.mrf.mxu0
        %v5396 = vpop.f32.mrf.mxu0
        %v5397 = vpop.f32.mrf.mxu0
        %v5398 = vpop.f32.mrf.mxu0
        %5399 = vmatprep.mubr.bf16.mxu0 0
        %5400 = vmatmul.mubr.bf16.gmra.mxu0 %v5325
        %v5401 = vpop.f32.mrf.mxu0
        %v5402 = vpop.f32.mrf.mxu0
        %v5403 = vpop.f32.mrf.mxu0
        %v5404 = vpop.f32.mrf.mxu0
        %5405 = vmatprep.mubr.bf16.mxu0 0
        %5406 = vmatmul.mubr.bf16.gmra.mxu0 %v5328
        %v5407 = vpop.f32.mrf.mxu0
        %v5408 = vadd.f32 0.0, %v5407
        %v5409 = vpop.f32.mrf.mxu0
        %v5410 = vpop.f32.mrf.mxu0
        %v5411 = vadd.f32 0.0, %v5410
        %v5412 = vpop.f32.mrf.mxu0
        %5413 = vmatprep.mubr.bf16.mxu0 0
        %5414 = vmatmul.mubr.bf16.gmra.mxu0 %v5331
        %v5415 = vpop.f32.mrf.mxu0
        %v5416 = vadd.f32 0.0, %v5415
        %v5417 = vpop.f32.mrf.mxu0
        %v5418 = vpop.f32.mrf.mxu0
        %v5419 = vadd.f32 0.0, %v5418
        %v5420 = vpop.f32.mrf.mxu0
        %5421 = vmatprep.mubr.bf16.mxu0 0
        %5422 = vmatmul.mubr.bf16.gmra.mxu0 %v5334
        %v5423 = vpop.f32.mrf.mxu0
        %v5424 = vpop.f32.mrf.mxu0
        %v5425 = vpop.f32.mrf.mxu0
        %v5426 = vpop.f32.mrf.mxu0
        %5427 = vdwg.mxu0
        %v5428 = vadd.f32 %v5269, %v5380
        %v5429 = vadd.f32 %v5270, %v5383
        %v5430 = vadd.f32 %v5271, %v5388
        %v5431 = vadd.f32 %v5272, %v5391
        %v5432 = vadd.f32 %v5273, %v5408
        %v5433 = vadd.f32 %v5274, %v5411
        %v5434 = vadd.f32 %v5275, %v5416
        %v5435 = vadd.f32 %v5276, %v5419
        %s5436 = scalar_lea.vmem [#allocation2], %s4813
        %v5437 = vld [vmem:[%s5436] sm:$0xff]
        %v5438 = vld [vmem:[%s5436 + $0x8] sm:$0xff]
        %v5439 = vld [vmem:[%s5436 + $0x10] sm:$0xff]
        %v5440 = vld [vmem:[%s5436 + $0x18] sm:$0xff]
        %v5441 = vld [vmem:[%s5436 + $0x20] sm:$0xff]
        %v5442 = vld [vmem:[%s5436 + $0x28] sm:$0xff]
        %v5443 = vld [vmem:[%s5436 + $0x30] sm:$0xff]
        %v5444 = vld [vmem:[%s5436 + $0x38] sm:$0xff]
        %v5445 = vld [vmem:[%s5436 + $0x40] sm:$0xff]
        %v5446 = vld [vmem:[%s5436 + $0x48] sm:$0xff]
        %v5447 = vld [vmem:[%s5436 + $0x50] sm:$0xff]
        %v5448 = vld [vmem:[%s5436 + $0x58] sm:$0xff]
        %v5449 = vld [vmem:[%s5436 + $0x60] sm:$0xff]
        %v5450 = vld [vmem:[%s5436 + $0x68] sm:$0xff]
        %v5451 = vld [vmem:[%s5436 + $0x70] sm:$0xff]
        %v5452 = vld [vmem:[%s5436 + $0x78] sm:$0xff]
        %v5453 = vpack.c.bf16 %v5438, %v5437
        %v5454 = vpack.c.bf16 %v5440, %v5439
        %v5455 = vpack.c.bf16 %v5442, %v5441
        %v5456 = vpack.c.bf16 %v5444, %v5443
        %v5457 = vpack.c.bf16 %v5446, %v5445
        %v5458 = vpack.c.bf16 %v5448, %v5447
        %v5459 = vpack.c.bf16 %v5450, %v5449
        %v5460 = vpack.c.bf16 %v5452, %v5451
        %v5464 = vunpack.c.l.b16 %v4784
        %v5465 = vunpack.c.l.b16 %v4785
        %v5466 = vunpack.c.l.b16 %v4786
        %v5467 = vpack.c.b16 %v5465, %v5464
        %v5468 = vpack.c.b16 %v5466, %v5466
        %v5471 = vsel %vm4875, %v5453, 0
        %v5474 = vsel %vm4875, %v5454, 0
        %v5477 = vsel %vm4875, %v5455, 0
        %v5480 = vsel %vm4875, %v5456, 0
        %v5483 = vsel %vm4875, %v5457, 0
        %v5486 = vsel %vm4875, %v5458, 0
        %v5489 = vsel %vm4875, %v5459, 0
        %v5492 = vsel %vm4875, %v5460, 0
        %v5495 = vsel %vm4900, %v5468, 0
        %5497 = vmatprep.subr.bf16.mxu0 0
        %5498 = vmatpush1.bf16.msra.mxu0 0
        %5499 = vmatprep.subr.bf16.mxu0 0
        %5500 = vmatpush1.bf16.msra.mxu0 0
        %5501 = vmatprep.subr.bf16.mxu0 0
        %5502 = vmatpush1.bf16.msra.mxu0 0
        %5503 = vmatprep.subr.bf16.mxu0 0
        %5504 = vmatpush1.bf16.msra.mxu0 0
        %5505 = vmatprep.subr.bf16.mxu0 0
        %5506 = vmatpush1.bf16.msra.mxu0 0
        %5507 = vmatprep.subr.bf16.mxu0 0
        %5508 = vmatpush1.bf16.msra.mxu0 0
        %5509 = vmatprep.subr.bf16.mxu0 0
        %5510 = vmatpush1.bf16.msra.mxu0 %v5495
        %5511 = vmatprep.subr.bf16.mxu0 0
        %5512 = vmatpush1.bf16.msra.mxu0 %v5467
        %5513 = vmatprep.subr.bf16.mxu0 0
        %5514 = vmatpush2.bf16.msra.mxu0 0
        %5515 = vmatprep.subr.bf16.mxu0 0
        %5516 = vmatpush2.bf16.msra.mxu0 0
        %5517 = vmatprep.subr.bf16.mxu0 0
        %5518 = vmatpush2.bf16.msra.mxu0 0
        %5519 = vmatprep.subr.bf16.mxu0 0
        %5520 = vmatpush2.bf16.msra.mxu0 0
        %5521 = vmatprep.subr.bf16.mxu0 0
        %5522 = vmatpush2.bf16.msra.mxu0 0
        %5523 = vmatprep.subr.bf16.mxu0 0
        %5524 = vmatpush2.bf16.msra.mxu0 0
        %5525 = vmatprep.subr.bf16.mxu0 0
        %5526 = vmatpush2.bf16.msra.mxu0 0
        %5527 = vmatprep.subr.bf16.mxu0 0
        %5528 = vmatpush2.bf16.msra.mxu0 0
        %5529 = vmatprep.mubr.bf16.mxu0 0
        %5530 = vmatmul.mubr.bf16.gmra.mxu0 %v5471
        %v5531 = vpop.f32.mrf.mxu0
        %v5532 = vpop.f32.mrf.mxu0
        %v5533 = vpop.f32.mrf.mxu0
        %v5534 = vpop.f32.mrf.mxu0
        %5535 = vmatprep.mubr.bf16.mxu0 0
        %5536 = vmatmul.mubr.bf16.gmra.mxu0 %v5474
        %v5537 = vpop.f32.mrf.mxu0
        %v5538 = vadd.f32 0.0, %v5537
        %v5539 = vpop.f32.mrf.mxu0
        %v5540 = vpop.f32.mrf.mxu0
        %v5541 = vadd.f32 0.0, %v5540
        %v5542 = vpop.f32.mrf.mxu0
        %5543 = vmatprep.mubr.bf16.mxu0 0
        %5544 = vmatmul.mubr.bf16.gmra.mxu0 %v5477
        %v5545 = vpop.f32.mrf.mxu0
        %v5546 = vadd.f32 0.0, %v5545
        %v5547 = vpop.f32.mrf.mxu0
        %v5548 = vpop.f32.mrf.mxu0
        %v5549 = vadd.f32 0.0, %v5548
        %v5550 = vpop.f32.mrf.mxu0
        %5551 = vmatprep.mubr.bf16.mxu0 0
        %5552 = vmatmul.mubr.bf16.gmra.mxu0 %v5480
        %v5553 = vpop.f32.mrf.mxu0
        %v5554 = vpop.f32.mrf.mxu0
        %v5555 = vpop.f32.mrf.mxu0
        %v5556 = vpop.f32.mrf.mxu0
        %5557 = vmatprep.mubr.bf16.mxu0 0
        %5558 = vmatmul.mubr.bf16.gmra.mxu0 %v5483
        %v5559 = vpop.f32.mrf.mxu0
        %v5560 = vpop.f32.mrf.mxu0
        %v5561 = vpop.f32.mrf.mxu0
        %v5562 = vpop.f32.mrf.mxu0
        %5563 = vmatprep.mubr.bf16.mxu0 0
        %5564 = vmatmul.mubr.bf16.gmra.mxu0 %v5486
        %v5565 = vpop.f32.mrf.mxu0
        %v5566 = vadd.f32 0.0, %v5565
        %v5567 = vpop.f32.mrf.mxu0
        %v5568 = vpop.f32.mrf.mxu0
        %v5569 = vadd.f32 0.0, %v5568
        %v5570 = vpop.f32.mrf.mxu0
        %5571 = vmatprep.mubr.bf16.mxu0 0
        %5572 = vmatmul.mubr.bf16.gmra.mxu0 %v5489
        %v5573 = vpop.f32.mrf.mxu0
        %v5574 = vadd.f32 0.0, %v5573
        %v5575 = vpop.f32.mrf.mxu0
        %v5576 = vpop.f32.mrf.mxu0
        %v5577 = vadd.f32 0.0, %v5576
        %v5578 = vpop.f32.mrf.mxu0
        %5579 = vmatprep.mubr.bf16.mxu0 0
        %5580 = vmatmul.mubr.bf16.gmra.mxu0 %v5492
        %v5581 = vpop.f32.mrf.mxu0
        %v5582 = vpop.f32.mrf.mxu0
        %v5583 = vpop.f32.mrf.mxu0
        %v5584 = vpop.f32.mrf.mxu0
        %5585 = vdwg.mxu0
        %v5586 = vadd.f32 %v5428, %v5538
        %v5587 = vadd.f32 %v5429, %v5541
        %v5588 = vadd.f32 %v5430, %v5546
        %v5589 = vadd.f32 %v5431, %v5549
        %v5590 = vadd.f32 %v5432, %v5566
        %v5591 = vadd.f32 %v5433, %v5569
        %v5592 = vadd.f32 %v5434, %v5574
        %v5593 = vadd.f32 %v5435, %v5577
        %s5594 = sadd.s32 %s4813, 8
        %s5595 = scalar_lea.vmem [#allocation2], %s5594
        %v5596 = vld [vmem:[%s5595] sm:$0xff]
        %v5597 = vld [vmem:[%s5595 + $0x8] sm:$0xff]
        %v5598 = vld [vmem:[%s5595 + $0x10] sm:$0xff]
        %v5599 = vld [vmem:[%s5595 + $0x18] sm:$0xff]
        %v5600 = vld [vmem:[%s5595 + $0x20] sm:$0xff]
        %v5601 = vld [vmem:[%s5595 + $0x28] sm:$0xff]
        %v5602 = vld [vmem:[%s5595 + $0x30] sm:$0xff]
        %v5603 = vld [vmem:[%s5595 + $0x38] sm:$0xff]
        %v5604 = vld [vmem:[%s5595 + $0x40] sm:$0xff]
        %v5605 = vld [vmem:[%s5595 + $0x48] sm:$0xff]
        %v5606 = vld [vmem:[%s5595 + $0x50] sm:$0xff]
        %v5607 = vld [vmem:[%s5595 + $0x58] sm:$0xff]
        %v5608 = vld [vmem:[%s5595 + $0x60] sm:$0xff]
        %v5609 = vld [vmem:[%s5595 + $0x68] sm:$0xff]
        %v5610 = vld [vmem:[%s5595 + $0x70] sm:$0xff]
        %v5611 = vld [vmem:[%s5595 + $0x78] sm:$0xff]
        %v5612 = vpack.c.bf16 %v5597, %v5596
        %v5613 = vpack.c.bf16 %v5599, %v5598
        %v5614 = vpack.c.bf16 %v5601, %v5600
        %v5615 = vpack.c.bf16 %v5603, %v5602
        %v5616 = vpack.c.bf16 %v5605, %v5604
        %v5617 = vpack.c.bf16 %v5607, %v5606
        %v5618 = vpack.c.bf16 %v5609, %v5608
        %v5619 = vpack.c.bf16 %v5611, %v5610
        %v5623 = vunpack.c.l.b16 %v4788
        %v5624 = vunpack.c.l.b16 %v4789
        %v5625 = vunpack.c.l.b16 %v4790
        %v5626 = vpack.c.b16 %v5624, %v5623
        %v5627 = vpack.c.b16 %v5625, %v5625
        %v5630 = vsel %vm4875, %v5612, 0
        %v5633 = vsel %vm4875, %v5613, 0
        %v5636 = vsel %vm4875, %v5614, 0
        %v5639 = vsel %vm4875, %v5615, 0
        %v5642 = vsel %vm4875, %v5616, 0
        %v5645 = vsel %vm4875, %v5617, 0
        %v5648 = vsel %vm4875, %v5618, 0
        %v5651 = vsel %vm4875, %v5619, 0
        %v5654 = vsel %vm4900, %v5627, 0
        %5656 = vmatprep.subr.bf16.mxu0 0
        %5657 = vmatpush1.bf16.msra.mxu0 0
        %5658 = vmatprep.subr.bf16.mxu0 0
        %5659 = vmatpush1.bf16.msra.mxu0 0
        %5660 = vmatprep.subr.bf16.mxu0 0
        %5661 = vmatpush1.bf16.msra.mxu0 0
        %5662 = vmatprep.subr.bf16.mxu0 0
        %5663 = vmatpush1.bf16.msra.mxu0 0
        %5664 = vmatprep.subr.bf16.mxu0 0
        %5665 = vmatpush1.bf16.msra.mxu0 0
        %5666 = vmatprep.subr.bf16.mxu0 0
        %5667 = vmatpush1.bf16.msra.mxu0 0
        %5668 = vmatprep.subr.bf16.mxu0 0
        %5669 = vmatpush1.bf16.msra.mxu0 %v5654
        %5670 = vmatprep.subr.bf16.mxu0 0
        %5671 = vmatpush1.bf16.msra.mxu0 %v5626
        %5672 = vmatprep.subr.bf16.mxu0 0
        %5673 = vmatpush2.bf16.msra.mxu0 0
        %5674 = vmatprep.subr.bf16.mxu0 0
        %5675 = vmatpush2.bf16.msra.mxu0 0
        %5676 = vmatprep.subr.bf16.mxu0 0
        %5677 = vmatpush2.bf16.msra.mxu0 0
        %5678 = vmatprep.subr.bf16.mxu0 0
        %5679 = vmatpush2.bf16.msra.mxu0 0
        %5680 = vmatprep.subr.bf16.mxu0 0
        %5681 = vmatpush2.bf16.msra.mxu0 0
        %5682 = vmatprep.subr.bf16.mxu0 0
        %5683 = vmatpush2.bf16.msra.mxu0 0
        %5684 = vmatprep.subr.bf16.mxu0 0
        %5685 = vmatpush2.bf16.msra.mxu0 0
        %5686 = vmatprep.subr.bf16.mxu0 0
        %5687 = vmatpush2.bf16.msra.mxu0 0
        %5688 = vmatprep.mubr.bf16.mxu0 0
        %5689 = vmatmul.mubr.bf16.gmra.mxu0 %v5630
        %v5690 = vpop.f32.mrf.mxu0
        %v5691 = vpop.f32.mrf.mxu0
        %v5692 = vpop.f32.mrf.mxu0
        %v5693 = vpop.f32.mrf.mxu0
        %5694 = vmatprep.mubr.bf16.mxu0 0
        %5695 = vmatmul.mubr.bf16.gmra.mxu0 %v5633
        %v5696 = vpop.f32.mrf.mxu0
        %v5697 = vadd.f32 0.0, %v5696
        %v5698 = vpop.f32.mrf.mxu0
        %v5699 = vpop.f32.mrf.mxu0
        %v5700 = vadd.f32 0.0, %v5699
        %v5701 = vpop.f32.mrf.mxu0
        %5702 = vmatprep.mubr.bf16.mxu0 0
        %5703 = vmatmul.mubr.bf16.gmra.mxu0 %v5636
        %v5704 = vpop.f32.mrf.mxu0
        %v5705 = vadd.f32 0.0, %v5704
        %v5706 = vpop.f32.mrf.mxu0
        %v5707 = vpop.f32.mrf.mxu0
        %v5708 = vadd.f32 0.0, %v5707
        %v5709 = vpop.f32.mrf.mxu0
        %5710 = vmatprep.mubr.bf16.mxu0 0
        %5711 = vmatmul.mubr.bf16.gmra.mxu0 %v5639
        %v5712 = vpop.f32.mrf.mxu0
        %v5713 = vpop.f32.mrf.mxu0
        %v5714 = vpop.f32.mrf.mxu0
        %v5715 = vpop.f32.mrf.mxu0
        %5716 = vmatprep.mubr.bf16.mxu0 0
        %5717 = vmatmul.mubr.bf16.gmra.mxu0 %v5642
        %v5718 = vpop.f32.mrf.mxu0
        %v5719 = vpop.f32.mrf.mxu0
        %v5720 = vpop.f32.mrf.mxu0
        %v5721 = vpop.f32.mrf.mxu0
        %5722 = vmatprep.mubr.bf16.mxu0 0
        %5723 = vmatmul.mubr.bf16.gmra.mxu0 %v5645
        %v5724 = vpop.f32.mrf.mxu0
        %v5725 = vadd.f32 0.0, %v5724
        %v5726 = vpop.f32.mrf.mxu0
        %v5727 = vpop.f32.mrf.mxu0
        %v5728 = vadd.f32 0.0, %v5727
        %v5729 = vpop.f32.mrf.mxu0
        %5730 = vmatprep.mubr.bf16.mxu0 0
        %5731 = vmatmul.mubr.bf16.gmra.mxu0 %v5648
        %v5732 = vpop.f32.mrf.mxu0
        %v5733 = vadd.f32 0.0, %v5732
        %v5734 = vpop.f32.mrf.mxu0
        %v5735 = vpop.f32.mrf.mxu0
        %v5736 = vadd.f32 0.0, %v5735
        %v5737 = vpop.f32.mrf.mxu0
        %5738 = vmatprep.mubr.bf16.mxu0 0
        %5739 = vmatmul.mubr.bf16.gmra.mxu0 %v5651
        %v5740 = vpop.f32.mrf.mxu0
        %v5741 = vpop.f32.mrf.mxu0
        %v5742 = vpop.f32.mrf.mxu0
        %v5743 = vpop.f32.mrf.mxu0
        %5744 = vdwg.mxu0
        %v5745 = vadd.f32 %v5586, %v5697
        %v5746 = vadd.f32 %v5587, %v5700
        %v5747 = vadd.f32 %v5588, %v5705
        %v5748 = vadd.f32 %v5589, %v5708
        %v5749 = vadd.f32 %v5590, %v5725
        %v5750 = vadd.f32 %v5591, %v5728
        %v5751 = vadd.f32 %v5592, %v5733
        %v5752 = vadd.f32 %v5593, %v5736
        %s5753 = sadd.s32 %s4813, 504
        %s5754 = scalar_lea.vmem [#allocation2], %s5753
        %v5755 = vld [vmem:[%s5754] sm:$0xff]
        %v5756 = vld [vmem:[%s5754 + $0x8] sm:$0xff]
        %v5757 = vld [vmem:[%s5754 + $0x10] sm:$0xff]
        %v5758 = vld [vmem:[%s5754 + $0x18] sm:$0xff]
        %v5759 = vld [vmem:[%s5754 + $0x20] sm:$0xff]
        %v5760 = vld [vmem:[%s5754 + $0x28] sm:$0xff]
        %v5761 = vld [vmem:[%s5754 + $0x30] sm:$0xff]
        %v5762 = vld [vmem:[%s5754 + $0x38] sm:$0xff]
        %v5763 = vld [vmem:[%s5754 + $0x40] sm:$0xff]
        %v5764 = vld [vmem:[%s5754 + $0x48] sm:$0xff]
        %v5765 = vld [vmem:[%s5754 + $0x50] sm:$0xff]
        %v5766 = vld [vmem:[%s5754 + $0x58] sm:$0xff]
        %v5767 = vld [vmem:[%s5754 + $0x60] sm:$0xff]
        %v5768 = vld [vmem:[%s5754 + $0x68] sm:$0xff]
        %v5769 = vld [vmem:[%s5754 + $0x70] sm:$0xff]
        %v5770 = vld [vmem:[%s5754 + $0x78] sm:$0xff]
        %v5771 = vpack.c.bf16 %v5756, %v5755
        %v5772 = vpack.c.bf16 %v5758, %v5757
        %v5773 = vpack.c.bf16 %v5760, %v5759
        %v5774 = vpack.c.bf16 %v5762, %v5761
        %v5775 = vpack.c.bf16 %v5764, %v5763
        %v5776 = vpack.c.bf16 %v5766, %v5765
        %v5777 = vpack.c.bf16 %v5768, %v5767
        %v5778 = vpack.c.bf16 %v5770, %v5769
        %v5782 = vunpack.c.l.b16 %v4792
        %v5783 = vunpack.c.l.b16 %v4793
        %v5784 = vunpack.c.l.b16 %v4794
        %v5785 = vpack.c.b16 %v5783, %v5782
        %v5786 = vpack.c.b16 %v5784, %v5784
        %v5789 = vsel %vm4875, %v5771, 0
        %v5792 = vsel %vm4875, %v5772, 0
        %v5795 = vsel %vm4875, %v5773, 0
        %v5798 = vsel %vm4875, %v5774, 0
        %v5801 = vsel %vm4875, %v5775, 0
        %v5804 = vsel %vm4875, %v5776, 0
        %v5807 = vsel %vm4875, %v5777, 0
        %v5810 = vsel %vm4875, %v5778, 0
        %v5813 = vsel %vm4900, %v5786, 0
        %5815 = vmatprep.subr.bf16.mxu0 0
        %5816 = vmatpush1.bf16.msra.mxu0 0
        %5817 = vmatprep.subr.bf16.mxu0 0
        %5818 = vmatpush1.bf16.msra.mxu0 0
        %5819 = vmatprep.subr.bf16.mxu0 0
        %5820 = vmatpush1.bf16.msra.mxu0 0
        %5821 = vmatprep.subr.bf16.mxu0 0
        %5822 = vmatpush1.bf16.msra.mxu0 0
        %5823 = vmatprep.subr.bf16.mxu0 0
        %5824 = vmatpush1.bf16.msra.mxu0 0
        %5825 = vmatprep.subr.bf16.mxu0 0
        %5826 = vmatpush1.bf16.msra.mxu0 0
        %5827 = vmatprep.subr.bf16.mxu0 0
        %5828 = vmatpush1.bf16.msra.mxu0 %v5813
        %5829 = vmatprep.subr.bf16.mxu0 0
        %5830 = vmatpush1.bf16.msra.mxu0 %v5785
        %5831 = vmatprep.subr.bf16.mxu0 0
        %5832 = vmatpush2.bf16.msra.mxu0 0
        %5833 = vmatprep.subr.bf16.mxu0 0
        %5834 = vmatpush2.bf16.msra.mxu0 0
        %5835 = vmatprep.subr.bf16.mxu0 0
        %5836 = vmatpush2.bf16.msra.mxu0 0
        %5837 = vmatprep.subr.bf16.mxu0 0
        %5838 = vmatpush2.bf16.msra.mxu0 0
        %5839 = vmatprep.subr.bf16.mxu0 0
        %5840 = vmatpush2.bf16.msra.mxu0 0
        %5841 = vmatprep.subr.bf16.mxu0 0
        %5842 = vmatpush2.bf16.msra.mxu0 0
        %5843 = vmatprep.subr.bf16.mxu0 0
        %5844 = vmatpush2.bf16.msra.mxu0 0
        %5845 = vmatprep.subr.bf16.mxu0 0
        %5846 = vmatpush2.bf16.msra.mxu0 0
        %5847 = vmatprep.mubr.bf16.mxu0 0
        %5848 = vmatmul.mubr.bf16.gmra.mxu0 %v5789
        %v5849 = vpop.f32.mrf.mxu0
        %v5850 = vpop.f32.mrf.mxu0
        %v5851 = vpop.f32.mrf.mxu0
        %v5852 = vpop.f32.mrf.mxu0
        %5853 = vmatprep.mubr.bf16.mxu0 0
        %5854 = vmatmul.mubr.bf16.gmra.mxu0 %v5792
        %v5855 = vpop.f32.mrf.mxu0
        %v5856 = vadd.f32 0.0, %v5855
        %v5857 = vpop.f32.mrf.mxu0
        %v5858 = vpop.f32.mrf.mxu0
        %v5859 = vadd.f32 0.0, %v5858
        %v5860 = vpop.f32.mrf.mxu0
        %5861 = vmatprep.mubr.bf16.mxu0 0
        %5862 = vmatmul.mubr.bf16.gmra.mxu0 %v5795
        %v5863 = vpop.f32.mrf.mxu0
        %v5864 = vadd.f32 0.0, %v5863
        %v5865 = vpop.f32.mrf.mxu0
        %v5866 = vpop.f32.mrf.mxu0
        %v5867 = vadd.f32 0.0, %v5866
        %v5868 = vpop.f32.mrf.mxu0
        %5869 = vmatprep.mubr.bf16.mxu0 0
        %5870 = vmatmul.mubr.bf16.gmra.mxu0 %v5798
        %v5871 = vpop.f32.mrf.mxu0
        %v5872 = vpop.f32.mrf.mxu0
        %v5873 = vpop.f32.mrf.mxu0
        %v5874 = vpop.f32.mrf.mxu0
        %5875 = vmatprep.mubr.bf16.mxu0 0
        %5876 = vmatmul.mubr.bf16.gmra.mxu0 %v5801
        %v5877 = vpop.f32.mrf.mxu0
        %v5878 = vpop.f32.mrf.mxu0
        %v5879 = vpop.f32.mrf.mxu0
        %v5880 = vpop.f32.mrf.mxu0
        %5881 = vmatprep.mubr.bf16.mxu0 0
        %5882 = vmatmul.mubr.bf16.gmra.mxu0 %v5804
        %v5883 = vpop.f32.mrf.mxu0
        %v5884 = vadd.f32 0.0, %v5883
        %v5885 = vpop.f32.mrf.mxu0
        %v5886 = vpop.f32.mrf.mxu0
        %v5887 = vadd.f32 0.0, %v5886
        %v5888 = vpop.f32.mrf.mxu0
        %5889 = vmatprep.mubr.bf16.mxu0 0
        %5890 = vmatmul.mubr.bf16.gmra.mxu0 %v5807
        %v5891 = vpop.f32.mrf.mxu0
        %v5892 = vadd.f32 0.0, %v5891
        %v5893 = vpop.f32.mrf.mxu0
        %v5894 = vpop.f32.mrf.mxu0
        %v5895 = vadd.f32 0.0, %v5894
        %v5896 = vpop.f32.mrf.mxu0
        %5897 = vmatprep.mubr.bf16.mxu0 0
        %5898 = vmatmul.mubr.bf16.gmra.mxu0 %v5810
        %v5899 = vpop.f32.mrf.mxu0
        %v5900 = vpop.f32.mrf.mxu0
        %v5901 = vpop.f32.mrf.mxu0
        %v5902 = vpop.f32.mrf.mxu0
        %5903 = vdwg.mxu0
        %v5904 = vadd.f32 %v5745, %v5856
        %v5905 = vadd.f32 %v5746, %v5859
        %v5906 = vadd.f32 %v5747, %v5864
        %v5907 = vadd.f32 %v5748, %v5867
        %v5908 = vadd.f32 %v5749, %v5884
        %v5909 = vadd.f32 %v5750, %v5887
        %v5910 = vadd.f32 %v5751, %v5892
        %v5911 = vadd.f32 %v5752, %v5895
        %s5912 = sadd.s32 %s4813, 512
        %s5913 = scalar_lea.vmem [#allocation2], %s5912
        %v5914 = vld [vmem:[%s5913] sm:$0xff]
        %v5915 = vld [vmem:[%s5913 + $0x8] sm:$0xff]
        %v5916 = vld [vmem:[%s5913 + $0x10] sm:$0xff]
        %v5917 = vld [vmem:[%s5913 + $0x18] sm:$0xff]
        %v5918 = vld [vmem:[%s5913 + $0x20] sm:$0xff]
        %v5919 = vld [vmem:[%s5913 + $0x28] sm:$0xff]
        %v5920 = vld [vmem:[%s5913 + $0x30] sm:$0xff]
        %v5921 = vld [vmem:[%s5913 + $0x38] sm:$0xff]
        %v5922 = vld [vmem:[%s5913 + $0x40] sm:$0xff]
        %v5923 = vld [vmem:[%s5913 + $0x48] sm:$0xff]
        %v5924 = vld [vmem:[%s5913 + $0x50] sm:$0xff]
        %v5925 = vld [vmem:[%s5913 + $0x58] sm:$0xff]
        %v5926 = vld [vmem:[%s5913 + $0x60] sm:$0xff]
        %v5927 = vld [vmem:[%s5913 + $0x68] sm:$0xff]
        %v5928 = vld [vmem:[%s5913 + $0x70] sm:$0xff]
        %v5929 = vld [vmem:[%s5913 + $0x78] sm:$0xff]
        %v5930 = vpack.c.bf16 %v5915, %v5914
        %v5931 = vpack.c.bf16 %v5917, %v5916
        %v5932 = vpack.c.bf16 %v5919, %v5918
        %v5933 = vpack.c.bf16 %v5921, %v5920
        %v5934 = vpack.c.bf16 %v5923, %v5922
        %v5935 = vpack.c.bf16 %v5925, %v5924
        %v5936 = vpack.c.bf16 %v5927, %v5926
        %v5937 = vpack.c.bf16 %v5929, %v5928
        %v5941 = vunpack.c.l.b16 %v4796
        %v5942 = vunpack.c.l.b16 %v4797
        %v5943 = vunpack.c.l.b16 %v4798
        %v5944 = vpack.c.b16 %v5942, %v5941
        %v5945 = vpack.c.b16 %v5943, %v5943
        %v5948 = vsel %vm4875, %v5930, 0
        %v5951 = vsel %vm4875, %v5931, 0
        %v5954 = vsel %vm4875, %v5932, 0
        %v5957 = vsel %vm4875, %v5933, 0
        %v5960 = vsel %vm4875, %v5934, 0
        %v5963 = vsel %vm4875, %v5935, 0
        %v5966 = vsel %vm4875, %v5936, 0
        %v5969 = vsel %vm4875, %v5937, 0
        %v5972 = vsel %vm4900, %v5945, 0
        %5974 = vmatprep.subr.bf16.mxu0 0
        %5975 = vmatpush1.bf16.msra.mxu0 0
        %5976 = vmatprep.subr.bf16.mxu0 0
        %5977 = vmatpush1.bf16.msra.mxu0 0
        %5978 = vmatprep.subr.bf16.mxu0 0
        %5979 = vmatpush1.bf16.msra.mxu0 0
        %5980 = vmatprep.subr.bf16.mxu0 0
        %5981 = vmatpush1.bf16.msra.mxu0 0
        %5982 = vmatprep.subr.bf16.mxu0 0
        %5983 = vmatpush1.bf16.msra.mxu0 0
        %5984 = vmatprep.subr.bf16.mxu0 0
        %5985 = vmatpush1.bf16.msra.mxu0 0
        %5986 = vmatprep.subr.bf16.mxu0 0
        %5987 = vmatpush1.bf16.msra.mxu0 %v5972
        %5988 = vmatprep.subr.bf16.mxu0 0
        %5989 = vmatpush1.bf16.msra.mxu0 %v5944
        %5990 = vmatprep.subr.bf16.mxu0 0
        %5991 = vmatpush2.bf16.msra.mxu0 0
        %5992 = vmatprep.subr.bf16.mxu0 0
        %5993 = vmatpush2.bf16.msra.mxu0 0
        %5994 = vmatprep.subr.bf16.mxu0 0
        %5995 = vmatpush2.bf16.msra.mxu0 0
        %5996 = vmatprep.subr.bf16.mxu0 0
        %5997 = vmatpush2.bf16.msra.mxu0 0
        %5998 = vmatprep.subr.bf16.mxu0 0
        %5999 = vmatpush2.bf16.msra.mxu0 0
        %6000 = vmatprep.subr.bf16.mxu0 0
        %6001 = vmatpush2.bf16.msra.mxu0 0
        %6002 = vmatprep.subr.bf16.mxu0 0
        %6003 = vmatpush2.bf16.msra.mxu0 0
        %6004 = vmatprep.subr.bf16.mxu0 0
        %6005 = vmatpush2.bf16.msra.mxu0 0
        %6006 = vmatprep.mubr.bf16.mxu0 0
        %6007 = vmatmul.mubr.bf16.gmra.mxu0 %v5948
        %v6008 = vpop.f32.mrf.mxu0
        %v6009 = vpop.f32.mrf.mxu0
        %v6010 = vpop.f32.mrf.mxu0
        %v6011 = vpop.f32.mrf.mxu0
        %6012 = vmatprep.mubr.bf16.mxu0 0
        %6013 = vmatmul.mubr.bf16.gmra.mxu0 %v5951
        %v6014 = vpop.f32.mrf.mxu0
        %v6015 = vadd.f32 0.0, %v6014
        %v6016 = vpop.f32.mrf.mxu0
        %v6017 = vpop.f32.mrf.mxu0
        %v6018 = vadd.f32 0.0, %v6017
        %v6019 = vpop.f32.mrf.mxu0
        %6020 = vmatprep.mubr.bf16.mxu0 0
        %6021 = vmatmul.mubr.bf16.gmra.mxu0 %v5954
        %v6022 = vpop.f32.mrf.mxu0
        %v6023 = vadd.f32 0.0, %v6022
        %v6024 = vpop.f32.mrf.mxu0
        %v6025 = vpop.f32.mrf.mxu0
        %v6026 = vadd.f32 0.0, %v6025
        %v6027 = vpop.f32.mrf.mxu0
        %6028 = vmatprep.mubr.bf16.mxu0 0
        %6029 = vmatmul.mubr.bf16.gmra.mxu0 %v5957
        %v6030 = vpop.f32.mrf.mxu0
        %v6031 = vpop.f32.mrf.mxu0
        %v6032 = vpop.f32.mrf.mxu0
        %v6033 = vpop.f32.mrf.mxu0
        %6034 = vmatprep.mubr.bf16.mxu0 0
        %6035 = vmatmul.mubr.bf16.gmra.mxu0 %v5960
        %v6036 = vpop.f32.mrf.mxu0
        %v6037 = vpop.f32.mrf.mxu0
        %v6038 = vpop.f32.mrf.mxu0
        %v6039 = vpop.f32.mrf.mxu0
        %6040 = vmatprep.mubr.bf16.mxu0 0
        %6041 = vmatmul.mubr.bf16.gmra.mxu0 %v5963
        %v6042 = vpop.f32.mrf.mxu0
        %v6043 = vadd.f32 0.0, %v6042
        %v6044 = vpop.f32.mrf.mxu0
        %v6045 = vpop.f32.mrf.mxu0
        %v6046 = vadd.f32 0.0, %v6045
        %v6047 = vpop.f32.mrf.mxu0
        %6048 = vmatprep.mubr.bf16.mxu0 0
        %6049 = vmatmul.mubr.bf16.gmra.mxu0 %v5966
        %v6050 = vpop.f32.mrf.mxu0
        %v6051 = vadd.f32 0.0, %v6050
        %v6052 = vpop.f32.mrf.mxu0
        %v6053 = vpop.f32.mrf.mxu0
        %v6054 = vadd.f32 0.0, %v6053
        %v6055 = vpop.f32.mrf.mxu0
        %6056 = vmatprep.mubr.bf16.mxu0 0
        %6057 = vmatmul.mubr.bf16.gmra.mxu0 %v5969
        %v6058 = vpop.f32.mrf.mxu0
        %v6059 = vpop.f32.mrf.mxu0
        %v6060 = vpop.f32.mrf.mxu0
        %v6061 = vpop.f32.mrf.mxu0
        %6062 = vdwg.mxu0
        %v6063 = vadd.f32 %v5904, %v6015
        %v6064 = vadd.f32 %v5905, %v6018
        %v6065 = vadd.f32 %v5906, %v6023
        %v6066 = vadd.f32 %v5907, %v6026
        %v6067 = vadd.f32 %v5908, %v6043
        %v6068 = vadd.f32 %v5909, %v6046
        %v6069 = vadd.f32 %v5910, %v6051
        %v6070 = vadd.f32 %v5911, %v6054
        %s6071 = sadd.s32 %s4813, 520
        %s6072 = scalar_lea.vmem [#allocation2], %s6071
        %v6073 = vld [vmem:[%s6072] sm:$0xff]
        %v6074 = vld [vmem:[%s6072 + $0x8] sm:$0xff]
        %v6075 = vld [vmem:[%s6072 + $0x10] sm:$0xff]
        %v6076 = vld [vmem:[%s6072 + $0x18] sm:$0xff]
        %v6077 = vld [vmem:[%s6072 + $0x20] sm:$0xff]
        %v6078 = vld [vmem:[%s6072 + $0x28] sm:$0xff]
        %v6079 = vld [vmem:[%s6072 + $0x30] sm:$0xff]
        %v6080 = vld [vmem:[%s6072 + $0x38] sm:$0xff]
        %v6081 = vld [vmem:[%s6072 + $0x40] sm:$0xff]
        %v6082 = vld [vmem:[%s6072 + $0x48] sm:$0xff]
        %v6083 = vld [vmem:[%s6072 + $0x50] sm:$0xff]
        %v6084 = vld [vmem:[%s6072 + $0x58] sm:$0xff]
        %v6085 = vld [vmem:[%s6072 + $0x60] sm:$0xff]
        %v6086 = vld [vmem:[%s6072 + $0x68] sm:$0xff]
        %v6087 = vld [vmem:[%s6072 + $0x70] sm:$0xff]
        %v6088 = vld [vmem:[%s6072 + $0x78] sm:$0xff]
        %v6089 = vpack.c.bf16 %v6074, %v6073
        %v6090 = vpack.c.bf16 %v6076, %v6075
        %v6091 = vpack.c.bf16 %v6078, %v6077
        %v6092 = vpack.c.bf16 %v6080, %v6079
        %v6093 = vpack.c.bf16 %v6082, %v6081
        %v6094 = vpack.c.bf16 %v6084, %v6083
        %v6095 = vpack.c.bf16 %v6086, %v6085
        %v6096 = vpack.c.bf16 %v6088, %v6087
        %v6100 = vunpack.c.l.b16 %v4800
        %v6101 = vunpack.c.l.b16 %v4801
        %v6102 = vunpack.c.l.b16 %v4802
        %v6103 = vpack.c.b16 %v6101, %v6100
        %v6104 = vpack.c.b16 %v6102, %v6102
        %v6107 = vsel %vm4875, %v6089, 0
        %v6110 = vsel %vm4875, %v6090, 0
        %v6113 = vsel %vm4875, %v6091, 0
        %v6116 = vsel %vm4875, %v6092, 0
        %v6119 = vsel %vm4875, %v6093, 0
        %v6122 = vsel %vm4875, %v6094, 0
        %v6125 = vsel %vm4875, %v6095, 0
        %v6128 = vsel %vm4875, %v6096, 0
        %v6131 = vsel %vm4900, %v6104, 0
        %6133 = vmatprep.subr.bf16.mxu0 0
        %6134 = vmatpush1.bf16.msra.mxu0 0
        %6135 = vmatprep.subr.bf16.mxu0 0
        %6136 = vmatpush1.bf16.msra.mxu0 0
        %6137 = vmatprep.subr.bf16.mxu0 0
        %6138 = vmatpush1.bf16.msra.mxu0 0
        %6139 = vmatprep.subr.bf16.mxu0 0
        %6140 = vmatpush1.bf16.msra.mxu0 0
        %6141 = vmatprep.subr.bf16.mxu0 0
        %6142 = vmatpush1.bf16.msra.mxu0 0
        %6143 = vmatprep.subr.bf16.mxu0 0
        %6144 = vmatpush1.bf16.msra.mxu0 0
        %6145 = vmatprep.subr.bf16.mxu0 0
        %6146 = vmatpush1.bf16.msra.mxu0 %v6131
        %6147 = vmatprep.subr.bf16.mxu0 0
        %6148 = vmatpush1.bf16.msra.mxu0 %v6103
        %6149 = vmatprep.subr.bf16.mxu0 0
        %6150 = vmatpush2.bf16.msra.mxu0 0
        %6151 = vmatprep.subr.bf16.mxu0 0
        %6152 = vmatpush2.bf16.msra.mxu0 0
        %6153 = vmatprep.subr.bf16.mxu0 0
        %6154 = vmatpush2.bf16.msra.mxu0 0
        %6155 = vmatprep.subr.bf16.mxu0 0
        %6156 = vmatpush2.bf16.msra.mxu0 0
        %6157 = vmatprep.subr.bf16.mxu0 0
        %6158 = vmatpush2.bf16.msra.mxu0 0
        %6159 = vmatprep.subr.bf16.mxu0 0
        %6160 = vmatpush2.bf16.msra.mxu0 0
        %6161 = vmatprep.subr.bf16.mxu0 0
        %6162 = vmatpush2.bf16.msra.mxu0 0
        %6163 = vmatprep.subr.bf16.mxu0 0
        %6164 = vmatpush2.bf16.msra.mxu0 0
        %6165 = vmatprep.mubr.bf16.mxu0 0
        %6166 = vmatmul.mubr.bf16.gmra.mxu0 %v6107
        %v6167 = vpop.f32.mrf.mxu0
        %v6168 = vpop.f32.mrf.mxu0
        %v6169 = vpop.f32.mrf.mxu0
        %v6170 = vpop.f32.mrf.mxu0
        %6171 = vmatprep.mubr.bf16.mxu0 0
        %6172 = vmatmul.mubr.bf16.gmra.mxu0 %v6110
        %v6173 = vpop.f32.mrf.mxu0
        %v6174 = vadd.f32 0.0, %v6173
        %v6175 = vpop.f32.mrf.mxu0
        %v6176 = vpop.f32.mrf.mxu0
        %v6177 = vadd.f32 0.0, %v6176
        %v6178 = vpop.f32.mrf.mxu0
        %6179 = vmatprep.mubr.bf16.mxu0 0
        %6180 = vmatmul.mubr.bf16.gmra.mxu0 %v6113
        %v6181 = vpop.f32.mrf.mxu0
        %v6182 = vadd.f32 0.0, %v6181
        %v6183 = vpop.f32.mrf.mxu0
        %v6184 = vpop.f32.mrf.mxu0
        %v6185 = vadd.f32 0.0, %v6184
        %v6186 = vpop.f32.mrf.mxu0
        %6187 = vmatprep.mubr.bf16.mxu0 0
        %6188 = vmatmul.mubr.bf16.gmra.mxu0 %v6116
        %v6189 = vpop.f32.mrf.mxu0
        %v6190 = vpop.f32.mrf.mxu0
        %v6191 = vpop.f32.mrf.mxu0
        %v6192 = vpop.f32.mrf.mxu0
        %6193 = vmatprep.mubr.bf16.mxu0 0
        %6194 = vmatmul.mubr.bf16.gmra.mxu0 %v6119
        %v6195 = vpop.f32.mrf.mxu0
        %v6196 = vpop.f32.mrf.mxu0
        %v6197 = vpop.f32.mrf.mxu0
        %v6198 = vpop.f32.mrf.mxu0
        %6199 = vmatprep.mubr.bf16.mxu0 0
        %6200 = vmatmul.mubr.bf16.gmra.mxu0 %v6122
        %v6201 = vpop.f32.mrf.mxu0
        %v6202 = vadd.f32 0.0, %v6201
        %v6203 = vpop.f32.mrf.mxu0
        %v6204 = vpop.f32.mrf.mxu0
        %v6205 = vadd.f32 0.0, %v6204
        %v6206 = vpop.f32.mrf.mxu0
        %6207 = vmatprep.mubr.bf16.mxu0 0
        %6208 = vmatmul.mubr.bf16.gmra.mxu0 %v6125
        %v6209 = vpop.f32.mrf.mxu0
        %v6210 = vadd.f32 0.0, %v6209
        %v6211 = vpop.f32.mrf.mxu0
        %v6212 = vpop.f32.mrf.mxu0
        %v6213 = vadd.f32 0.0, %v6212
        %v6214 = vpop.f32.mrf.mxu0
        %6215 = vmatprep.mubr.bf16.mxu0 0
        %6216 = vmatmul.mubr.bf16.gmra.mxu0 %v6128
        %v6217 = vpop.f32.mrf.mxu0
        %v6218 = vpop.f32.mrf.mxu0
        %v6219 = vpop.f32.mrf.mxu0
        %v6220 = vpop.f32.mrf.mxu0
        %6221 = vdwg.mxu0
        %v6222 = vadd.f32 %v6063, %v6174
        %v6223 = vadd.f32 %v6064, %v6177
        %v6224 = vadd.f32 %v6065, %v6182
        %v6225 = vadd.f32 %v6066, %v6185
        %v6226 = vadd.f32 %v6067, %v6202
        %v6227 = vadd.f32 %v6068, %v6205
        %v6228 = vadd.f32 %v6069, %v6210
        %v6229 = vadd.f32 %v6070, %v6213
        %v6230 = vlaneseq
        %v6231 = vshrl.u32 %v6230, 7
        %v6232 = vsub.s32 0, %v6231
        %v6233 = vrot.slane %v4803, %v6232
        %v6234 = vmul.f32 %v6233, %v6222
        %v6235 = vmul.f32 %v6233, %v6223
        %v6236 = vmul.f32 %v6233, %v6224
        %v6237 = vmul.f32 %v6233, %v6225
        %v6238 = vmul.f32 %v6233, %v6226
        %v6239 = vmul.f32 %v6233, %v6227
        %v6240 = vmul.f32 %v6233, %v6228
        %v6241 = vmul.f32 %v6233, %v6229
        %v6242 = vlaneseq
        %v6243 = vshrl.u32 %v6242, 7
        %v6244 = vsub.s32 0, %v6243
        %v6245 = vrot.slane %v4804, %v6244
        %v6246 = vadd.f32 %v6234, %v6245
        %v6247 = vadd.f32 %v6235, %v6245
        %v6248 = vadd.f32 %v6236, %v6245
        %v6249 = vadd.f32 %v6237, %v6245
        %v6250 = vadd.f32 %v6238, %v6245
        %v6251 = vadd.f32 %v6239, %v6245
        %v6252 = vadd.f32 %v6240, %v6245
        %v6253 = vadd.f32 %v6241, %v6245
        %v6254 = vmul.f32 %v6246, 0.2
        %v6255 = vmul.f32 %v6247, 0.2
        %v6256 = vmul.f32 %v6248, 0.2
        %v6257 = vmul.f32 %v6249, 0.2
        %v6258 = vmul.f32 %v6250, 0.2
        %v6259 = vmul.f32 %v6251, 0.2
        %v6260 = vmul.f32 %v6252, 0.2
        %v6261 = vmul.f32 %v6253, 0.2
        %v6262 = vmax.f32 %v6246, %v6254
        %v6263 = vmax.f32 %v6247, %v6255
        %v6264 = vmax.f32 %v6248, %v6256
        %v6265 = vmax.f32 %v6249, %v6257
        %v6266 = vmax.f32 %v6250, %v6258
        %v6267 = vmax.f32 %v6251, %v6259
        %v6268 = vmax.f32 %v6252, %v6260
        %v6269 = vmax.f32 %v6253, %v6261
        %s6270 = sadd.s32 %s4813, 16
        %s6271 = scalar_lea.vmem [#allocation3], %s6270
        %6272 = vst.msk [vmem:[%s6271] sm:$0xff] %vm4875, %v6262
        %6273 = vst.msk [vmem:[%s6271 + $0x8] sm:$0xff] %vm4875, %v6263
        %6274 = vst.msk [vmem:[%s6271 + $0x10] sm:$0xff] %vm4875, %v6264
        %6275 = vst.msk [vmem:[%s6271 + $0x18] sm:$0xff] %vm4875, %v6265
        %s6276 = sadd.s32 %s4813, 80
        %s6277 = scalar_lea.vmem [#allocation3], %s6276
        %6278 = vst.msk [vmem:[%s6277] sm:$0xff] %vm4875, %v6266
        %6279 = vst.msk [vmem:[%s6277 + $0x8] sm:$0xff] %vm4875, %v6267
        %6280 = vst.msk [vmem:[%s6277 + $0x10] sm:$0xff] %vm4875, %v6268
        %6281 = vst.msk [vmem:[%s6277 + $0x18] sm:$0xff] %vm4875, %v6269
      $region84: #{lrnet_forward.1} parent=43 // loop_footer
        %s4810 = sadd.s32 1, %s4806
      $region85: #{lrnet_forward.1} parent=43 // loop_footer_branch
        %4805 = sbr.rel target = $region81
      $region86: #{lrnet_forward.1} parent=43 // loop_exit
        _
      %s6282 = scalar_lea.vmem %s2, 324
      %v6283 = vld [vmem:[%s6282] sm:$0xf]
      %v6284 = vld [vmem:[%s6282 + $0x4] sm:$0xf]
      %v6285 = vld [vmem:[%s6282 + $0x8] sm:$0xf]
      %s6286 = scalar_lea.vmem %s2, 336
      %v6287 = vld [vmem:[%s6286] sm:$0xf]
      %v6288 = vld [vmem:[%s6286 + $0x4] sm:$0xf]
      %v6289 = vld [vmem:[%s6286 + $0x8] sm:$0xf]
      %s6290 = scalar_lea.vmem %s2, 348
      %v6291 = vld [vmem:[%s6290] sm:$0xf]
      %v6292 = vld [vmem:[%s6290 + $0x4] sm:$0xf]
      %v6293 = vld [vmem:[%s6290 + $0x8] sm:$0xf]
      %s6294 = scalar_lea.vmem %s2, 360
      %v6295 = vld [vmem:[%s6294] sm:$0xf]
      %v6296 = vld [vmem:[%s6294 + $0x4] sm:$0xf]
      %v6297 = vld [vmem:[%s6294 + $0x8] sm:$0xf]
      %s6298 = scalar_lea.vmem %s2, 372
      %v6299 = vld [vmem:[%s6298] sm:$0xf]
      %v6300 = vld [vmem:[%s6298 + $0x4] sm:$0xf]
      %v6301 = vld [vmem:[%s6298 + $0x8] sm:$0xf]
      %s6302 = scalar_lea.vmem %s2, 384
      %v6303 = vld [vmem:[%s6302] sm:$0xf]
      %v6304 = vld [vmem:[%s6302 + $0x4] sm:$0xf]
      %v6305 = vld [vmem:[%s6302 + $0x8] sm:$0xf]
      %s6306 = scalar_lea.vmem %s2, 396
      %v6307 = vld [vmem:[%s6306] sm:$0xf]
      %v6308 = vld [vmem:[%s6306 + $0x4] sm:$0xf]
      %v6309 = vld [vmem:[%s6306 + $0x8] sm:$0xf]
      %s6310 = scalar_lea.vmem %s2, 408
      %v6311 = vld [vmem:[%s6310] sm:$0xf]
      %v6312 = vld [vmem:[%s6310 + $0x4] sm:$0xf]
      %v6313 = vld [vmem:[%s6310 + $0x8] sm:$0xf]
      %s6314 = scalar_lea.vmem %s2, 420
      %v6315 = vld [vmem:[%s6314] sm:$0xf]
      %v6316 = vld [vmem:[%s6314 + $0x4] sm:$0xf]
      %v6317 = vld [vmem:[%s6314 + $0x8] sm:$0xf]
      %v6318 = vld [vmem:[%s3 + $0x8] sm:$0x1]
      %v6319 = vld [vmem:[%s3 + $0x9] sm:$0x1]
      loop: start=0, step=1, limit=16
      $region87: #{lrnet_forward.1} parent=43 // loop_pre_header
        _
      $region88: #{lrnet_forward.1} parent=43 // loop_header
        %s6321 = sphi 0, %s6325
        %p6322 = scmp.ge.s32.totalorder %s6321, 16
      $region89: #{lrnet_forward.1} parent=43 // loop_header_branch
        %6324 = sbr.rel (%p6322) target = $region93
      $region90: #{lrnet_forward.1} parent=43 // loop_body
        %s6326 = smul.u32 %s6321, 2
        %s6327 = sadd.s32 %s6326, 17
        %s6328 = smul.u32 %s6327, 64
        %s6329 = sadd.s32 %s6328, 4294966256
        %s6330 = scalar_lea.vmem [#allocation3], %s6329
        %v6331 = vld [vmem:[%s6330] sm:$0xff]
        %v6332 = vld [vmem:[%s6330 + $0x8] sm:$0xff]
        %v6333 = vld [vmem:[%s6330 + $0x10] sm:$0xff]
        %v6334 = vld [vmem:[%s6330 + $0x18] sm:$0xff]
        %v6335 = vld [vmem:[%s6330 + $0x20] sm:$0xff]
        %v6336 = vld [vmem:[%s6330 + $0x28] sm:$0xff]
        %v6337 = vld [vmem:[%s6330 + $0x30] sm:$0xff]
        %v6338 = vld [vmem:[%s6330 + $0x38] sm:$0xff]
        %v6339 = vld [vmem:[%s6330 + $0x40] sm:$0xff]
        %v6340 = vld [vmem:[%s6330 + $0x48] sm:$0xff]
        %v6341 = vld [vmem:[%s6330 + $0x50] sm:$0xff]
        %v6342 = vld [vmem:[%s6330 + $0x58] sm:$0xff]
        %v6343 = vld [vmem:[%s6330 + $0x60] sm:$0xff]
        %v6344 = vld [vmem:[%s6330 + $0x68] sm:$0xff]
        %v6345 = vld [vmem:[%s6330 + $0x70] sm:$0xff]
        %v6346 = vld [vmem:[%s6330 + $0x78] sm:$0xff]
        %v6347 = vpack.c.bf16 %v6332, %v6331
        %v6348 = vpack.c.bf16 %v6334, %v6333
        %v6349 = vpack.c.bf16 %v6336, %v6335
        %v6350 = vpack.c.bf16 %v6338, %v6337
        %v6351 = vpack.c.bf16 %v6340, %v6339
        %v6352 = vpack.c.bf16 %v6342, %v6341
        %v6353 = vpack.c.bf16 %v6344, %v6343
        %v6354 = vpack.c.bf16 %v6346, %v6345
        %s6355 = sadd.s32 %s6328, 4294966272
        %s6356 = scalar_lea.vmem [#allocation3], %s6355
        %v6357 = vld [vmem:[%s6356] sm:$0xff]
        %v6358 = vld [vmem:[%s6356 + $0x8] sm:$0xff]
        %v6359 = vld [vmem:[%s6356 + $0x10] sm:$0xff]
        %v6360 = vld [vmem:[%s6356 + $0x18] sm:$0xff]
        %v6361 = vld [vmem:[%s6356 + $0x20] sm:$0xff]
        %v6362 = vld [vmem:[%s6356 + $0x28] sm:$0xff]
        %v6363 = vld [vmem:[%s6356 + $0x30] sm:$0xff]
        %v6364 = vld [vmem:[%s6356 + $0x38] sm:$0xff]
        %v6365 = vld [vmem:[%s6356 + $0x40] sm:$0xff]
        %v6366 = vld [vmem:[%s6356 + $0x48] sm:$0xff]
        %v6367 = vld [vmem:[%s6356 + $0x50] sm:$0xff]
        %v6368 = vld [vmem:[%s6356 + $0x58] sm:$0xff]
        %v6369 = vld [vmem:[%s6356 + $0x60] sm:$0xff]
        %v6370 = vld [vmem:[%s6356 + $0x68] sm:$0xff]
        %v6371 = vld [vmem:[%s6356 + $0x70] sm:$0xff]
        %v6372 = vld [vmem:[%s6356 + $0x78] sm:$0xff]
        %v6373 = vpack.c.bf16 %v6358, %v6357
        %v6374 = vpack.c.bf16 %v6360, %v6359
        %v6375 = vpack.c.bf16 %v6362, %v6361
        %v6376 = vpack.c.bf16 %v6364, %v6363
        %v6377 = vpack.c.bf16 %v6366, %v6365
        %v6378 = vpack.c.bf16 %v6368, %v6367
        %v6379 = vpack.c.bf16 %v6370, %v6369
        %v6380 = vpack.c.bf16 %v6372, %v6371
        %v6384 = vunpack.c.l.b16 %v6287
        %v6385 = vunpack.c.l.b16 %v6288
        %v6386 = vunpack.c.l.b16 %v6289
        %v6387 = vpack.c.b16 %v6385, %v6384
        %v6388 = vpack.c.b16 %v6386, %v6386
        %vm6390 = vcmask 195584
        %v6392 = vsel %vm6390, %v6373, 0
        %v6395 = vsel %vm6390, %v6374, 0
        %v6398 = vsel %vm6390, %v6375, 0
        %v6401 = vsel %vm6390, %v6376, 0
        %v6404 = vsel %vm6390, %v6377, 0
        %v6407 = vsel %vm6390, %v6378, 0
        %v6410 = vsel %vm6390, %v6379, 0
        %v6413 = vsel %vm6390, %v6380, 0
        %vm6415 = vcmask 1043456
        %v6417 = vsel %vm6415, %v6388, 0
        %6419 = vmatprep.subr.bf16.mxu0 0
        %6420 = vmatpush1.bf16.msra.mxu0 0
        %6421 = vmatprep.subr.bf16.mxu0 0
        %6422 = vmatpush1.bf16.msra.mxu0 0
        %6423 = vmatprep.subr.bf16.mxu0 0
        %6424 = vmatpush1.bf16.msra.mxu0 0
        %6425 = vmatprep.subr.bf16.mxu0 0
        %6426 = vmatpush1.bf16.msra.mxu0 0
        %6427 = vmatprep.subr.bf16.mxu0 0
        %6428 = vmatpush1.bf16.msra.mxu0 0
        %6429 = vmatprep.subr.bf16.mxu0 0
        %6430 = vmatpush1.bf16.msra.mxu0 0
        %6431 = vmatprep.subr.bf16.mxu0 0
        %6432 = vmatpush1.bf16.msra.mxu0 %v6417
        %6433 = vmatprep.subr.bf16.mxu0 0
        %6434 = vmatpush1.bf16.msra.mxu0 %v6387
        %6435 = vmatprep.subr.bf16.mxu0 0
        %6436 = vmatpush2.bf16.msra.mxu0 0
        %6437 = vmatprep.subr.bf16.mxu0 0
        %6438 = vmatpush2.bf16.msra.mxu0 0
        %6439 = vmatprep.subr.bf16.mxu0 0
        %6440 = vmatpush2.bf16.msra.mxu0 0
        %6441 = vmatprep.subr.bf16.mxu0 0
        %6442 = vmatpush2.bf16.msra.mxu0 0
        %6443 = vmatprep.subr.bf16.mxu0 0
        %6444 = vmatpush2.bf16.msra.mxu0 0
        %6445 = vmatprep.subr.bf16.mxu0 0
        %6446 = vmatpush2.bf16.msra.mxu0 0
        %6447 = vmatprep.subr.bf16.mxu0 0
        %6448 = vmatpush2.bf16.msra.mxu0 0
        %6449 = vmatprep.subr.bf16.mxu0 0
        %6450 = vmatpush2.bf16.msra.mxu0 0
        %6451 = vmatprep.mubr.bf16.mxu0 0
        %6452 = vmatmul.mubr.bf16.gmra.mxu0 %v6392
        %v6453 = vpop.f32.mrf.mxu0
        %v6454 = vpop.f32.mrf.mxu0
        %v6455 = vpop.f32.mrf.mxu0
        %v6456 = vpop.f32.mrf.mxu0
        %6457 = vmatprep.mubr.bf16.mxu0 0
        %6458 = vmatmul.mubr.bf16.gmra.mxu0 %v6395
        %v6459 = vpop.f32.mrf.mxu0
        %v6460 = vadd.f32 0.0, %v6459
        %v6461 = vpop.f32.mrf.mxu0
        %v6462 = vpop.f32.mrf.mxu0
        %v6463 = vadd.f32 0.0, %v6462
        %v6464 = vpop.f32.mrf.mxu0
        %6465 = vmatprep.mubr.bf16.mxu0 0
        %6466 = vmatmul.mubr.bf16.gmra.mxu0 %v6398
        %v6467 = vpop.f32.mrf.mxu0
        %v6468 = vadd.f32 0.0, %v6467
        %v6469 = vpop.f32.mrf.mxu0
        %v6470 = vpop.f32.mrf.mxu0
        %v6471 = vadd.f32 0.0, %v6470
        %v6472 = vpop.f32.mrf.mxu0
        %6473 = vmatprep.mubr.bf16.mxu0 0
        %6474 = vmatmul.mubr.bf16.gmra.mxu0 %v6401
        %v6475 = vpop.f32.mrf.mxu0
        %v6476 = vpop.f32.mrf.mxu0
        %v6477 = vpop.f32.mrf.mxu0
        %v6478 = vpop.f32.mrf.mxu0
        %6479 = vmatprep.mubr.bf16.mxu0 0
        %6480 = vmatmul.mubr.bf16.gmra.mxu0 %v6404
        %v6481 = vpop.f32.mrf.mxu0
        %v6482 = vpop.f32.mrf.mxu0
        %v6483 = vpop.f32.mrf.mxu0
        %v6484 = vpop.f32.mrf.mxu0
        %6485 = vmatprep.mubr.bf16.mxu0 0
        %6486 = vmatmul.mubr.bf16.gmra.mxu0 %v6407
        %v6487 = vpop.f32.mrf.mxu0
        %v6488 = vadd.f32 0.0, %v6487
        %v6489 = vpop.f32.mrf.mxu0
        %v6490 = vpop.f32.mrf.mxu0
        %v6491 = vadd.f32 0.0, %v6490
        %v6492 = vpop.f32.mrf.mxu0
        %6493 = vmatprep.mubr.bf16.mxu0 0
        %6494 = vmatmul.mubr.bf16.gmra.mxu0 %v6410
        %v6495 = vpop.f32.mrf.mxu0
        %v6496 = vadd.f32 0.0, %v6495
        %v6497 = vpop.f32.mrf.mxu0
        %v6498 = vpop.f32.mrf.mxu0
        %v6499 = vadd.f32 0.0, %v6498
        %v6500 = vpop.f32.mrf.mxu0
        %6501 = vmatprep.mubr.bf16.mxu0 0
        %6502 = vmatmul.mubr.bf16.gmra.mxu0 %v6413
        %v6503 = vpop.f32.mrf.mxu0
        %v6504 = vpop.f32.mrf.mxu0
        %v6505 = vpop.f32.mrf.mxu0
        %v6506 = vpop.f32.mrf.mxu0
        %6507 = vdwg.mxu0
        %v6511 = vunpack.c.l.b16 %v6283
        %v6512 = vunpack.c.l.b16 %v6284
        %v6513 = vunpack.c.l.b16 %v6285
        %v6514 = vpack.c.b16 %v6512, %v6511
        %v6515 = vpack.c.b16 %v6513, %v6513
        %v6518 = vsel %vm6390, %v6347, 0
        %v6521 = vsel %vm6390, %v6348, 0
        %v6524 = vsel %vm6390, %v6349, 0
        %v6527 = vsel %vm6390, %v6350, 0
        %v6530 = vsel %vm6390, %v6351, 0
        %v6533 = vsel %vm6390, %v6352, 0
        %v6536 = vsel %vm6390, %v6353, 0
        %v6539 = vsel %vm6390, %v6354, 0
        %v6542 = vsel %vm6415, %v6515, 0
        %6544 = vmatprep.subr.bf16.mxu0 0
        %6545 = vmatpush1.bf16.msra.mxu0 0
        %6546 = vmatprep.subr.bf16.mxu0 0
        %6547 = vmatpush1.bf16.msra.mxu0 0
        %6548 = vmatprep.subr.bf16.mxu0 0
        %6549 = vmatpush1.bf16.msra.mxu0 0
        %6550 = vmatprep.subr.bf16.mxu0 0
        %6551 = vmatpush1.bf16.msra.mxu0 0
        %6552 = vmatprep.subr.bf16.mxu0 0
        %6553 = vmatpush1.bf16.msra.mxu0 0
        %6554 = vmatprep.subr.bf16.mxu0 0
        %6555 = vmatpush1.bf16.msra.mxu0 0
        %6556 = vmatprep.subr.bf16.mxu0 0
        %6557 = vmatpush1.bf16.msra.mxu0 %v6542
        %6558 = vmatprep.subr.bf16.mxu0 0
        %6559 = vmatpush1.bf16.msra.mxu0 %v6514
        %6560 = vmatprep.subr.bf16.mxu0 0
        %6561 = vmatpush2.bf16.msra.mxu0 0
        %6562 = vmatprep.subr.bf16.mxu0 0
        %6563 = vmatpush2.bf16.msra.mxu0 0
        %6564 = vmatprep.subr.bf16.mxu0 0
        %6565 = vmatpush2.bf16.msra.mxu0 0
        %6566 = vmatprep.subr.bf16.mxu0 0
        %6567 = vmatpush2.bf16.msra.mxu0 0
        %6568 = vmatprep.subr.bf16.mxu0 0
        %6569 = vmatpush2.bf16.msra.mxu0 0
        %6570 = vmatprep.subr.bf16.mxu0 0
        %6571 = vmatpush2.bf16.msra.mxu0 0
        %6572 = vmatprep.subr.bf16.mxu0 0
        %6573 = vmatpush2.bf16.msra.mxu0 0
        %6574 = vmatprep.subr.bf16.mxu0 0
        %6575 = vmatpush2.bf16.msra.mxu0 0
        %6576 = vmatprep.mubr.bf16.mxu0 0
        %6577 = vmatmul.mubr.bf16.gmra.mxu0 %v6518
        %v6578 = vpop.f32.mrf.mxu0
        %v6579 = vpop.f32.mrf.mxu0
        %v6580 = vpop.f32.mrf.mxu0
        %v6581 = vpop.f32.mrf.mxu0
        %6582 = vmatprep.mubr.bf16.mxu0 0
        %6583 = vmatmul.mubr.bf16.gmra.mxu0 %v6521
        %v6584 = vpop.f32.mrf.mxu0
        %v6585 = vadd.f32 %v6460, %v6584
        %v6586 = vpop.f32.mrf.mxu0
        %v6587 = vpop.f32.mrf.mxu0
        %v6588 = vadd.f32 %v6463, %v6587
        %v6589 = vpop.f32.mrf.mxu0
        %6590 = vmatprep.mubr.bf16.mxu0 0
        %6591 = vmatmul.mubr.bf16.gmra.mxu0 %v6524
        %v6592 = vpop.f32.mrf.mxu0
        %v6593 = vadd.f32 %v6468, %v6592
        %v6594 = vpop.f32.mrf.mxu0
        %v6595 = vpop.f32.mrf.mxu0
        %v6596 = vadd.f32 %v6471, %v6595
        %v6597 = vpop.f32.mrf.mxu0
        %6598 = vmatprep.mubr.bf16.mxu0 0
        %6599 = vmatmul.mubr.bf16.gmra.mxu0 %v6527
        %v6600 = vpop.f32.mrf.mxu0
        %v6601 = vpop.f32.mrf.mxu0
        %v6602 = vpop.f32.mrf.mxu0
        %v6603 = vpop.f32.mrf.mxu0
        %6604 = vmatprep.mubr.bf16.mxu0 0
        %6605 = vmatmul.mubr.bf16.gmra.mxu0 %v6530
        %v6606 = vpop.f32.mrf.mxu0
        %v6607 = vpop.f32.mrf.mxu0
        %v6608 = vpop.f32.mrf.mxu0
        %v6609 = vpop.f32.mrf.mxu0
        %6610 = vmatprep.mubr.bf16.mxu0 0
        %6611 = vmatmul.mubr.bf16.gmra.mxu0 %v6533
        %v6612 = vpop.f32.mrf.mxu0
        %v6613 = vadd.f32 %v6488, %v6612
        %v6614 = vpop.f32.mrf.mxu0
        %v6615 = vpop.f32.mrf.mxu0
        %v6616 = vadd.f32 %v6491, %v6615
        %v6617 = vpop.f32.mrf.mxu0
        %6618 = vmatprep.mubr.bf16.mxu0 0
        %6619 = vmatmul.mubr.bf16.gmra.mxu0 %v6536
        %v6620 = vpop.f32.mrf.mxu0
        %v6621 = vadd.f32 %v6496, %v6620
        %v6622 = vpop.f32.mrf.mxu0
        %v6623 = vpop.f32.mrf.mxu0
        %v6624 = vadd.f32 %v6499, %v6623
        %v6625 = vpop.f32.mrf.mxu0
        %6626 = vmatprep.mubr.bf16.mxu0 0
        %6627 = vmatmul.mubr.bf16.gmra.mxu0 %v6539
        %v6628 = vpop.f32.mrf.mxu0
        %v6629 = vpop.f32.mrf.mxu0
        %v6630 = vpop.f32.mrf.mxu0
        %v6631 = vpop.f32.mrf.mxu0
        %6632 = vdwg.mxu0
        %s6633 = sadd.s32 %s6328, 4294966288
        %s6634 = scalar_lea.vmem [#allocation3], %s6633
        %v6635 = vld [vmem:[%s6634] sm:$0xff]
        %v6636 = vld [vmem:[%s6634 + $0x8] sm:$0xff]
        %v6637 = vld [vmem:[%s6634 + $0x10] sm:$0xff]
        %v6638 = vld [vmem:[%s6634 + $0x18] sm:$0xff]
        %v6639 = vld [vmem:[%s6634 + $0x20] sm:$0xff]
        %v6640 = vld [vmem:[%s6634 + $0x28] sm:$0xff]
        %v6641 = vld [vmem:[%s6634 + $0x30] sm:$0xff]
        %v6642 = vld [vmem:[%s6634 + $0x38] sm:$0xff]
        %v6643 = vld [vmem:[%s6634 + $0x40] sm:$0xff]
        %v6644 = vld [vmem:[%s6634 + $0x48] sm:$0xff]
        %v6645 = vld [vmem:[%s6634 + $0x50] sm:$0xff]
        %v6646 = vld [vmem:[%s6634 + $0x58] sm:$0xff]
        %v6647 = vld [vmem:[%s6634 + $0x60] sm:$0xff]
        %v6648 = vld [vmem:[%s6634 + $0x68] sm:$0xff]
        %v6649 = vld [vmem:[%s6634 + $0x70] sm:$0xff]
        %v6650 = vld [vmem:[%s6634 + $0x78] sm:$0xff]
        %v6651 = vpack.c.bf16 %v6636, %v6635
        %v6652 = vpack.c.bf16 %v6638, %v6637
        %v6653 = vpack.c.bf16 %v6640, %v6639
        %v6654 = vpack.c.bf16 %v6642, %v6641
        %v6655 = vpack.c.bf16 %v6644, %v6643
        %v6656 = vpack.c.bf16 %v6646, %v6645
        %v6657 = vpack.c.bf16 %v6648, %v6647
        %v6658 = vpack.c.bf16 %v6650, %v6649
        %v6662 = vunpack.c.l.b16 %v6291
        %v6663 = vunpack.c.l.b16 %v6292
        %v6664 = vunpack.c.l.b16 %v6293
        %v6665 = vpack.c.b16 %v6663, %v6662
        %v6666 = vpack.c.b16 %v6664, %v6664
        %v6669 = vsel %vm6390, %v6651, 0
        %v6672 = vsel %vm6390, %v6652, 0
        %v6675 = vsel %vm6390, %v6653, 0
        %v6678 = vsel %vm6390, %v6654, 0
        %v6681 = vsel %vm6390, %v6655, 0
        %v6684 = vsel %vm6390, %v6656, 0
        %v6687 = vsel %vm6390, %v6657, 0
        %v6690 = vsel %vm6390, %v6658, 0
        %v6693 = vsel %vm6415, %v6666, 0
        %6695 = vmatprep.subr.bf16.mxu0 0
        %6696 = vmatpush1.bf16.msra.mxu0 0
        %6697 = vmatprep.subr.bf16.mxu0 0
        %6698 = vmatpush1.bf16.msra.mxu0 0
        %6699 = vmatprep.subr.bf16.mxu0 0
        %6700 = vmatpush1.bf16.msra.mxu0 0
        %6701 = vmatprep.subr.bf16.mxu0 0
        %6702 = vmatpush1.bf16.msra.mxu0 0
        %6703 = vmatprep.subr.bf16.mxu0 0
        %6704 = vmatpush1.bf16.msra.mxu0 0
        %6705 = vmatprep.subr.bf16.mxu0 0
        %6706 = vmatpush1.bf16.msra.mxu0 0
        %6707 = vmatprep.subr.bf16.mxu0 0
        %6708 = vmatpush1.bf16.msra.mxu0 %v6693
        %6709 = vmatprep.subr.bf16.mxu0 0
        %6710 = vmatpush1.bf16.msra.mxu0 %v6665
        %6711 = vmatprep.subr.bf16.mxu0 0
        %6712 = vmatpush2.bf16.msra.mxu0 0
        %6713 = vmatprep.subr.bf16.mxu0 0
        %6714 = vmatpush2.bf16.msra.mxu0 0
        %6715 = vmatprep.subr.bf16.mxu0 0
        %6716 = vmatpush2.bf16.msra.mxu0 0
        %6717 = vmatprep.subr.bf16.mxu0 0
        %6718 = vmatpush2.bf16.msra.mxu0 0
        %6719 = vmatprep.subr.bf16.mxu0 0
        %6720 = vmatpush2.bf16.msra.mxu0 0
        %6721 = vmatprep.subr.bf16.mxu0 0
        %6722 = vmatpush2.bf16.msra.mxu0 0
        %6723 = vmatprep.subr.bf16.mxu0 0
        %6724 = vmatpush2.bf16.msra.mxu0 0
        %6725 = vmatprep.subr.bf16.mxu0 0
        %6726 = vmatpush2.bf16.msra.mxu0 0
        %6727 = vmatprep.mubr.bf16.mxu0 0
        %6728 = vmatmul.mubr.bf16.gmra.mxu0 %v6669
        %v6729 = vpop.f32.mrf.mxu0
        %v6730 = vpop.f32.mrf.mxu0
        %v6731 = vpop.f32.mrf.mxu0
        %v6732 = vpop.f32.mrf.mxu0
        %6733 = vmatprep.mubr.bf16.mxu0 0
        %6734 = vmatmul.mubr.bf16.gmra.mxu0 %v6672
        %v6735 = vpop.f32.mrf.mxu0
        %v6736 = vadd.f32 0.0, %v6735
        %v6737 = vpop.f32.mrf.mxu0
        %v6738 = vpop.f32.mrf.mxu0
        %v6739 = vadd.f32 0.0, %v6738
        %v6740 = vpop.f32.mrf.mxu0
        %6741 = vmatprep.mubr.bf16.mxu0 0
        %6742 = vmatmul.mubr.bf16.gmra.mxu0 %v6675
        %v6743 = vpop.f32.mrf.mxu0
        %v6744 = vadd.f32 0.0, %v6743
        %v6745 = vpop.f32.mrf.mxu0
        %v6746 = vpop.f32.mrf.mxu0
        %v6747 = vadd.f32 0.0, %v6746
        %v6748 = vpop.f32.mrf.mxu0
        %6749 = vmatprep.mubr.bf16.mxu0 0
        %6750 = vmatmul.mubr.bf16.gmra.mxu0 %v6678
        %v6751 = vpop.f32.mrf.mxu0
        %v6752 = vpop.f32.mrf.mxu0
        %v6753 = vpop.f32.mrf.mxu0
        %v6754 = vpop.f32.mrf.mxu0
        %6755 = vmatprep.mubr.bf16.mxu0 0
        %6756 = vmatmul.mubr.bf16.gmra.mxu0 %v6681
        %v6757 = vpop.f32.mrf.mxu0
        %v6758 = vpop.f32.mrf.mxu0
        %v6759 = vpop.f32.mrf.mxu0
        %v6760 = vpop.f32.mrf.mxu0
        %6761 = vmatprep.mubr.bf16.mxu0 0
        %6762 = vmatmul.mubr.bf16.gmra.mxu0 %v6684
        %v6763 = vpop.f32.mrf.mxu0
        %v6764 = vadd.f32 0.0, %v6763
        %v6765 = vpop.f32.mrf.mxu0
        %v6766 = vpop.f32.mrf.mxu0
        %v6767 = vadd.f32 0.0, %v6766
        %v6768 = vpop.f32.mrf.mxu0
        %6769 = vmatprep.mubr.bf16.mxu0 0
        %6770 = vmatmul.mubr.bf16.gmra.mxu0 %v6687
        %v6771 = vpop.f32.mrf.mxu0
        %v6772 = vadd.f32 0.0, %v6771
        %v6773 = vpop.f32.mrf.mxu0
        %v6774 = vpop.f32.mrf.mxu0
        %v6775 = vadd.f32 0.0, %v6774
        %v6776 = vpop.f32.mrf.mxu0
        %6777 = vmatprep.mubr.bf16.mxu0 0
        %6778 = vmatmul.mubr.bf16.gmra.mxu0 %v6690
        %v6779 = vpop.f32.mrf.mxu0
        %v6780 = vpop.f32.mrf.mxu0
        %v6781 = vpop.f32.mrf.mxu0
        %v6782 = vpop.f32.mrf.mxu0
        %6783 = vdwg.mxu0
        %v6784 = vadd.f32 %v6585, %v6736
        %v6785 = vadd.f32 %v6588, %v6739
        %v6786 = vadd.f32 %v6593, %v6744
        %v6787 = vadd.f32 %v6596, %v6747
        %v6788 = vadd.f32 %v6613, %v6764
        %v6789 = vadd.f32 %v6616, %v6767
        %v6790 = vadd.f32 %v6621, %v6772
        %v6791 = vadd.f32 %v6624, %v6775
        %s6792 = sadd.s32 %s6328, 4294967280
        %s6793 = scalar_lea.vmem [#allocation3], %s6792
        %v6794 = vld [vmem:[%s6793] sm:$0xff]
        %v6795 = vld [vmem:[%s6793 + $0x8] sm:$0xff]
        %v6796 = vld [vmem:[%s6793 + $0x10] sm:$0xff]
        %v6797 = vld [vmem:[%s6793 + $0x18] sm:$0xff]
        %v6798 = vld [vmem:[%s6793 + $0x20] sm:$0xff]
        %v6799 = vld [vmem:[%s6793 + $0x28] sm:$0xff]
        %v6800 = vld [vmem:[%s6793 + $0x30] sm:$0xff]
        %v6801 = vld [vmem:[%s6793 + $0x38] sm:$0xff]
        %v6802 = vld [vmem:[%s6793 + $0x40] sm:$0xff]
        %v6803 = vld [vmem:[%s6793 + $0x48] sm:$0xff]
        %v6804 = vld [vmem:[%s6793 + $0x50] sm:$0xff]
        %v6805 = vld [vmem:[%s6793 + $0x58] sm:$0xff]
        %v6806 = vld [vmem:[%s6793 + $0x60] sm:$0xff]
        %v6807 = vld [vmem:[%s6793 + $0x68] sm:$0xff]
        %v6808 = vld [vmem:[%s6793 + $0x70] sm:$0xff]
        %v6809 = vld [vmem:[%s6793 + $0x78] sm:$0xff]
        %v6810 = vpack.c.bf16 %v6795, %v6794
        %v6811 = vpack.c.bf16 %v6797, %v6796
        %v6812 = vpack.c.bf16 %v6799, %v6798
        %v6813 = vpack.c.bf16 %v6801, %v6800
        %v6814 = vpack.c.bf16 %v6803, %v6802
        %v6815 = vpack.c.bf16 %v6805, %v6804
        %v6816 = vpack.c.bf16 %v6807, %v6806
        %v6817 = vpack.c.bf16 %v6809, %v6808
        %v6821 = vunpack.c.l.b16 %v6295
        %v6822 = vunpack.c.l.b16 %v6296
        %v6823 = vunpack.c.l.b16 %v6297
        %v6824 = vpack.c.b16 %v6822, %v6821
        %v6825 = vpack.c.b16 %v6823, %v6823
        %v6828 = vsel %vm6390, %v6810, 0
        %v6831 = vsel %vm6390, %v6811, 0
        %v6834 = vsel %vm6390, %v6812, 0
        %v6837 = vsel %vm6390, %v6813, 0
        %v6840 = vsel %vm6390, %v6814, 0
        %v6843 = vsel %vm6390, %v6815, 0
        %v6846 = vsel %vm6390, %v6816, 0
        %v6849 = vsel %vm6390, %v6817, 0
        %v6852 = vsel %vm6415, %v6825, 0
        %6854 = vmatprep.subr.bf16.mxu0 0
        %6855 = vmatpush1.bf16.msra.mxu0 0
        %6856 = vmatprep.subr.bf16.mxu0 0
        %6857 = vmatpush1.bf16.msra.mxu0 0
        %6858 = vmatprep.subr.bf16.mxu0 0
        %6859 = vmatpush1.bf16.msra.mxu0 0
        %6860 = vmatprep.subr.bf16.mxu0 0
        %6861 = vmatpush1.bf16.msra.mxu0 0
        %6862 = vmatprep.subr.bf16.mxu0 0
        %6863 = vmatpush1.bf16.msra.mxu0 0
        %6864 = vmatprep.subr.bf16.mxu0 0
        %6865 = vmatpush1.bf16.msra.mxu0 0
        %6866 = vmatprep.subr.bf16.mxu0 0
        %6867 = vmatpush1.bf16.msra.mxu0 %v6852
        %6868 = vmatprep.subr.bf16.mxu0 0
        %6869 = vmatpush1.bf16.msra.mxu0 %v6824
        %6870 = vmatprep.subr.bf16.mxu0 0
        %6871 = vmatpush2.bf16.msra.mxu0 0
        %6872 = vmatprep.subr.bf16.mxu0 0
        %6873 = vmatpush2.bf16.msra.mxu0 0
        %6874 = vmatprep.subr.bf16.mxu0 0
        %6875 = vmatpush2.bf16.msra.mxu0 0
        %6876 = vmatprep.subr.bf16.mxu0 0
        %6877 = vmatpush2.bf16.msra.mxu0 0
        %6878 = vmatprep.subr.bf16.mxu0 0
        %6879 = vmatpush2.bf16.msra.mxu0 0
        %6880 = vmatprep.subr.bf16.mxu0 0
        %6881 = vmatpush2.bf16.msra.mxu0 0
        %6882 = vmatprep.subr.bf16.mxu0 0
        %6883 = vmatpush2.bf16.msra.mxu0 0
        %6884 = vmatprep.subr.bf16.mxu0 0
        %6885 = vmatpush2.bf16.msra.mxu0 0
        %6886 = vmatprep.mubr.bf16.mxu0 0
        %6887 = vmatmul.mubr.bf16.gmra.mxu0 %v6828
        %v6888 = vpop.f32.mrf.mxu0
        %v6889 = vpop.f32.mrf.mxu0
        %v6890 = vpop.f32.mrf.mxu0
        %v6891 = vpop.f32.mrf.mxu0
        %6892 = vmatprep.mubr.bf16.mxu0 0
        %6893 = vmatmul.mubr.bf16.gmra.mxu0 %v6831
        %v6894 = vpop.f32.mrf.mxu0
        %v6895 = vadd.f32 0.0, %v6894
        %v6896 = vpop.f32.mrf.mxu0
        %v6897 = vpop.f32.mrf.mxu0
        %v6898 = vadd.f32 0.0, %v6897
        %v6899 = vpop.f32.mrf.mxu0
        %6900 = vmatprep.mubr.bf16.mxu0 0
        %6901 = vmatmul.mubr.bf16.gmra.mxu0 %v6834
        %v6902 = vpop.f32.mrf.mxu0
        %v6903 = vadd.f32 0.0, %v6902
        %v6904 = vpop.f32.mrf.mxu0
        %v6905 = vpop.f32.mrf.mxu0
        %v6906 = vadd.f32 0.0, %v6905
        %v6907 = vpop.f32.mrf.mxu0
        %6908 = vmatprep.mubr.bf16.mxu0 0
        %6909 = vmatmul.mubr.bf16.gmra.mxu0 %v6837
        %v6910 = vpop.f32.mrf.mxu0
        %v6911 = vpop.f32.mrf.mxu0
        %v6912 = vpop.f32.mrf.mxu0
        %v6913 = vpop.f32.mrf.mxu0
        %6914 = vmatprep.mubr.bf16.mxu0 0
        %6915 = vmatmul.mubr.bf16.gmra.mxu0 %v6840
        %v6916 = vpop.f32.mrf.mxu0
        %v6917 = vpop.f32.mrf.mxu0
        %v6918 = vpop.f32.mrf.mxu0
        %v6919 = vpop.f32.mrf.mxu0
        %6920 = vmatprep.mubr.bf16.mxu0 0
        %6921 = vmatmul.mubr.bf16.gmra.mxu0 %v6843
        %v6922 = vpop.f32.mrf.mxu0
        %v6923 = vadd.f32 0.0, %v6922
        %v6924 = vpop.f32.mrf.mxu0
        %v6925 = vpop.f32.mrf.mxu0
        %v6926 = vadd.f32 0.0, %v6925
        %v6927 = vpop.f32.mrf.mxu0
        %6928 = vmatprep.mubr.bf16.mxu0 0
        %6929 = vmatmul.mubr.bf16.gmra.mxu0 %v6846
        %v6930 = vpop.f32.mrf.mxu0
        %v6931 = vadd.f32 0.0, %v6930
        %v6932 = vpop.f32.mrf.mxu0
        %v6933 = vpop.f32.mrf.mxu0
        %v6934 = vadd.f32 0.0, %v6933
        %v6935 = vpop.f32.mrf.mxu0
        %6936 = vmatprep.mubr.bf16.mxu0 0
        %6937 = vmatmul.mubr.bf16.gmra.mxu0 %v6849
        %v6938 = vpop.f32.mrf.mxu0
        %v6939 = vpop.f32.mrf.mxu0
        %v6940 = vpop.f32.mrf.mxu0
        %v6941 = vpop.f32.mrf.mxu0
        %6942 = vdwg.mxu0
        %v6943 = vadd.f32 %v6784, %v6895
        %v6944 = vadd.f32 %v6785, %v6898
        %v6945 = vadd.f32 %v6786, %v6903
        %v6946 = vadd.f32 %v6787, %v6906
        %v6947 = vadd.f32 %v6788, %v6923
        %v6948 = vadd.f32 %v6789, %v6926
        %v6949 = vadd.f32 %v6790, %v6931
        %v6950 = vadd.f32 %v6791, %v6934
        %s6951 = scalar_lea.vmem [#allocation3], %s6328
        %v6952 = vld [vmem:[%s6951] sm:$0xff]
        %v6953 = vld [vmem:[%s6951 + $0x8] sm:$0xff]
        %v6954 = vld [vmem:[%s6951 + $0x10] sm:$0xff]
        %v6955 = vld [vmem:[%s6951 + $0x18] sm:$0xff]
        %v6956 = vld [vmem:[%s6951 + $0x20] sm:$0xff]
        %v6957 = vld [vmem:[%s6951 + $0x28] sm:$0xff]
        %v6958 = vld [vmem:[%s6951 + $0x30] sm:$0xff]
        %v6959 = vld [vmem:[%s6951 + $0x38] sm:$0xff]
        %v6960 = vld [vmem:[%s6951 + $0x40] sm:$0xff]
        %v6961 = vld [vmem:[%s6951 + $0x48] sm:$0xff]
        %v6962 = vld [vmem:[%s6951 + $0x50] sm:$0xff]
        %v6963 = vld [vmem:[%s6951 + $0x58] sm:$0xff]
        %v6964 = vld [vmem:[%s6951 + $0x60] sm:$0xff]
        %v6965 = vld [vmem:[%s6951 + $0x68] sm:$0xff]
        %v6966 = vld [vmem:[%s6951 + $0x70] sm:$0xff]
        %v6967 = vld [vmem:[%s6951 + $0x78] sm:$0xff]
        %v6968 = vpack.c.bf16 %v6953, %v6952
        %v6969 = vpack.c.bf16 %v6955, %v6954
        %v6970 = vpack.c.bf16 %v6957, %v6956
        %v6971 = vpack.c.bf16 %v6959, %v6958
        %v6972 = vpack.c.bf16 %v6961, %v6960
        %v6973 = vpack.c.bf16 %v6963, %v6962
        %v6974 = vpack.c.bf16 %v6965, %v6964
        %v6975 = vpack.c.bf16 %v6967, %v6966
        %v6979 = vunpack.c.l.b16 %v6299
        %v6980 = vunpack.c.l.b16 %v6300
        %v6981 = vunpack.c.l.b16 %v6301
        %v6982 = vpack.c.b16 %v6980, %v6979
        %v6983 = vpack.c.b16 %v6981, %v6981
        %v6986 = vsel %vm6390, %v6968, 0
        %v6989 = vsel %vm6390, %v6969, 0
        %v6992 = vsel %vm6390, %v6970, 0
        %v6995 = vsel %vm6390, %v6971, 0
        %v6998 = vsel %vm6390, %v6972, 0
        %v7001 = vsel %vm6390, %v6973, 0
        %v7004 = vsel %vm6390, %v6974, 0
        %v7007 = vsel %vm6390, %v6975, 0
        %v7010 = vsel %vm6415, %v6983, 0
        %7012 = vmatprep.subr.bf16.mxu0 0
        %7013 = vmatpush1.bf16.msra.mxu0 0
        %7014 = vmatprep.subr.bf16.mxu0 0
        %7015 = vmatpush1.bf16.msra.mxu0 0
        %7016 = vmatprep.subr.bf16.mxu0 0
        %7017 = vmatpush1.bf16.msra.mxu0 0
        %7018 = vmatprep.subr.bf16.mxu0 0
        %7019 = vmatpush1.bf16.msra.mxu0 0
        %7020 = vmatprep.subr.bf16.mxu0 0
        %7021 = vmatpush1.bf16.msra.mxu0 0
        %7022 = vmatprep.subr.bf16.mxu0 0
        %7023 = vmatpush1.bf16.msra.mxu0 0
        %7024 = vmatprep.subr.bf16.mxu0 0
        %7025 = vmatpush1.bf16.msra.mxu0 %v7010
        %7026 = vmatprep.subr.bf16.mxu0 0
        %7027 = vmatpush1.bf16.msra.mxu0 %v6982
        %7028 = vmatprep.subr.bf16.mxu0 0
        %7029 = vmatpush2.bf16.msra.mxu0 0
        %7030 = vmatprep.subr.bf16.mxu0 0
        %7031 = vmatpush2.bf16.msra.mxu0 0
        %7032 = vmatprep.subr.bf16.mxu0 0
        %7033 = vmatpush2.bf16.msra.mxu0 0
        %7034 = vmatprep.subr.bf16.mxu0 0
        %7035 = vmatpush2.bf16.msra.mxu0 0
        %7036 = vmatprep.subr.bf16.mxu0 0
        %7037 = vmatpush2.bf16.msra.mxu0 0
        %7038 = vmatprep.subr.bf16.mxu0 0
        %7039 = vmatpush2.bf16.msra.mxu0 0
        %7040 = vmatprep.subr.bf16.mxu0 0
        %7041 = vmatpush2.bf16.msra.mxu0 0
        %7042 = vmatprep.subr.bf16.mxu0 0
        %7043 = vmatpush2.bf16.msra.mxu0 0
        %7044 = vmatprep.mubr.bf16.mxu0 0
        %7045 = vmatmul.mubr.bf16.gmra.mxu0 %v6986
        %v7046 = vpop.f32.mrf.mxu0
        %v7047 = vpop.f32.mrf.mxu0
        %v7048 = vpop.f32.mrf.mxu0
        %v7049 = vpop.f32.mrf.mxu0
        %7050 = vmatprep.mubr.bf16.mxu0 0
        %7051 = vmatmul.mubr.bf16.gmra.mxu0 %v6989
        %v7052 = vpop.f32.mrf.mxu0
        %v7053 = vadd.f32 0.0, %v7052
        %v7054 = vpop.f32.mrf.mxu0
        %v7055 = vpop.f32.mrf.mxu0
        %v7056 = vadd.f32 0.0, %v7055
        %v7057 = vpop.f32.mrf.mxu0
        %7058 = vmatprep.mubr.bf16.mxu0 0
        %7059 = vmatmul.mubr.bf16.gmra.mxu0 %v6992
        %v7060 = vpop.f32.mrf.mxu0
        %v7061 = vadd.f32 0.0, %v7060
        %v7062 = vpop.f32.mrf.mxu0
        %v7063 = vpop.f32.mrf.mxu0
        %v7064 = vadd.f32 0.0, %v7063
        %v7065 = vpop.f32.mrf.mxu0
        %7066 = vmatprep.mubr.bf16.mxu0 0
        %7067 = vmatmul.mubr.bf16.gmra.mxu0 %v6995
        %v7068 = vpop.f32.mrf.mxu0
        %v7069 = vpop.f32.mrf.mxu0
        %v7070 = vpop.f32.mrf.mxu0
        %v7071 = vpop.f32.mrf.mxu0
        %7072 = vmatprep.mubr.bf16.mxu0 0
        %7073 = vmatmul.mubr.bf16.gmra.mxu0 %v6998
        %v7074 = vpop.f32.mrf.mxu0
        %v7075 = vpop.f32.mrf.mxu0
        %v7076 = vpop.f32.mrf.mxu0
        %v7077 = vpop.f32.mrf.mxu0
        %7078 = vmatprep.mubr.bf16.mxu0 0
        %7079 = vmatmul.mubr.bf16.gmra.mxu0 %v7001
        %v7080 = vpop.f32.mrf.mxu0
        %v7081 = vadd.f32 0.0, %v7080
        %v7082 = vpop.f32.mrf.mxu0
        %v7083 = vpop.f32.mrf.mxu0
        %v7084 = vadd.f32 0.0, %v7083
        %v7085 = vpop.f32.mrf.mxu0
        %7086 = vmatprep.mubr.bf16.mxu0 0
        %7087 = vmatmul.mubr.bf16.gmra.mxu0 %v7004
        %v7088 = vpop.f32.mrf.mxu0
        %v7089 = vadd.f32 0.0, %v7088
        %v7090 = vpop.f32.mrf.mxu0
        %v7091 = vpop.f32.mrf.mxu0
        %v7092 = vadd.f32 0.0, %v7091
        %v7093 = vpop.f32.mrf.mxu0
        %7094 = vmatprep.mubr.bf16.mxu0 0
        %7095 = vmatmul.mubr.bf16.gmra.mxu0 %v7007
        %v7096 = vpop.f32.mrf.mxu0
        %v7097 = vpop.f32.mrf.mxu0
        %v7098 = vpop.f32.mrf.mxu0
        %v7099 = vpop.f32.mrf.mxu0
        %7100 = vdwg.mxu0
        %v7101 = vadd.f32 %v6943, %v7053
        %v7102 = vadd.f32 %v6944, %v7056
        %v7103 = vadd.f32 %v6945, %v7061
        %v7104 = vadd.f32 %v6946, %v7064
        %v7105 = vadd.f32 %v6947, %v7081
        %v7106 = vadd.f32 %v6948, %v7084
        %v7107 = vadd.f32 %v6949, %v7089
        %v7108 = vadd.f32 %v6950, %v7092
        %s7109 = sadd.s32 %s6328, 16
        %s7110 = scalar_lea.vmem [#allocation3], %s7109
        %v7111 = vld [vmem:[%s7110] sm:$0xff]
        %v7112 = vld [vmem:[%s7110 + $0x8] sm:$0xff]
        %v7113 = vld [vmem:[%s7110 + $0x10] sm:$0xff]
        %v7114 = vld [vmem:[%s7110 + $0x18] sm:$0xff]
        %v7115 = vld [vmem:[%s7110 + $0x20] sm:$0xff]
        %v7116 = vld [vmem:[%s7110 + $0x28] sm:$0xff]
        %v7117 = vld [vmem:[%s7110 + $0x30] sm:$0xff]
        %v7118 = vld [vmem:[%s7110 + $0x38] sm:$0xff]
        %v7119 = vld [vmem:[%s7110 + $0x40] sm:$0xff]
        %v7120 = vld [vmem:[%s7110 + $0x48] sm:$0xff]
        %v7121 = vld [vmem:[%s7110 + $0x50] sm:$0xff]
        %v7122 = vld [vmem:[%s7110 + $0x58] sm:$0xff]
        %v7123 = vld [vmem:[%s7110 + $0x60] sm:$0xff]
        %v7124 = vld [vmem:[%s7110 + $0x68] sm:$0xff]
        %v7125 = vld [vmem:[%s7110 + $0x70] sm:$0xff]
        %v7126 = vld [vmem:[%s7110 + $0x78] sm:$0xff]
        %v7127 = vpack.c.bf16 %v7112, %v7111
        %v7128 = vpack.c.bf16 %v7114, %v7113
        %v7129 = vpack.c.bf16 %v7116, %v7115
        %v7130 = vpack.c.bf16 %v7118, %v7117
        %v7131 = vpack.c.bf16 %v7120, %v7119
        %v7132 = vpack.c.bf16 %v7122, %v7121
        %v7133 = vpack.c.bf16 %v7124, %v7123
        %v7134 = vpack.c.bf16 %v7126, %v7125
        %v7138 = vunpack.c.l.b16 %v6303
        %v7139 = vunpack.c.l.b16 %v6304
        %v7140 = vunpack.c.l.b16 %v6305
        %v7141 = vpack.c.b16 %v7139, %v7138
        %v7142 = vpack.c.b16 %v7140, %v7140
        %v7145 = vsel %vm6390, %v7127, 0
        %v7148 = vsel %vm6390, %v7128, 0
        %v7151 = vsel %vm6390, %v7129, 0
        %v7154 = vsel %vm6390, %v7130, 0
        %v7157 = vsel %vm6390, %v7131, 0
        %v7160 = vsel %vm6390, %v7132, 0
        %v7163 = vsel %vm6390, %v7133, 0
        %v7166 = vsel %vm6390, %v7134, 0
        %v7169 = vsel %vm6415, %v7142, 0
        %7171 = vmatprep.subr.bf16.mxu0 0
        %7172 = vmatpush1.bf16.msra.mxu0 0
        %7173 = vmatprep.subr.bf16.mxu0 0
        %7174 = vmatpush1.bf16.msra.mxu0 0
        %7175 = vmatprep.subr.bf16.mxu0 0
        %7176 = vmatpush1.bf16.msra.mxu0 0
        %7177 = vmatprep.subr.bf16.mxu0 0
        %7178 = vmatpush1.bf16.msra.mxu0 0
        %7179 = vmatprep.subr.bf16.mxu0 0
        %7180 = vmatpush1.bf16.msra.mxu0 0
        %7181 = vmatprep.subr.bf16.mxu0 0
        %7182 = vmatpush1.bf16.msra.mxu0 0
        %7183 = vmatprep.subr.bf16.mxu0 0
        %7184 = vmatpush1.bf16.msra.mxu0 %v7169
        %7185 = vmatprep.subr.bf16.mxu0 0
        %7186 = vmatpush1.bf16.msra.mxu0 %v7141
        %7187 = vmatprep.subr.bf16.mxu0 0
        %7188 = vmatpush2.bf16.msra.mxu0 0
        %7189 = vmatprep.subr.bf16.mxu0 0
        %7190 = vmatpush2.bf16.msra.mxu0 0
        %7191 = vmatprep.subr.bf16.mxu0 0
        %7192 = vmatpush2.bf16.msra.mxu0 0
        %7193 = vmatprep.subr.bf16.mxu0 0
        %7194 = vmatpush2.bf16.msra.mxu0 0
        %7195 = vmatprep.subr.bf16.mxu0 0
        %7196 = vmatpush2.bf16.msra.mxu0 0
        %7197 = vmatprep.subr.bf16.mxu0 0
        %7198 = vmatpush2.bf16.msra.mxu0 0
        %7199 = vmatprep.subr.bf16.mxu0 0
        %7200 = vmatpush2.bf16.msra.mxu0 0
        %7201 = vmatprep.subr.bf16.mxu0 0
        %7202 = vmatpush2.bf16.msra.mxu0 0
        %7203 = vmatprep.mubr.bf16.mxu0 0
        %7204 = vmatmul.mubr.bf16.gmra.mxu0 %v7145
        %v7205 = vpop.f32.mrf.mxu0
        %v7206 = vpop.f32.mrf.mxu0
        %v7207 = vpop.f32.mrf.mxu0
        %v7208 = vpop.f32.mrf.mxu0
        %7209 = vmatprep.mubr.bf16.mxu0 0
        %7210 = vmatmul.mubr.bf16.gmra.mxu0 %v7148
        %v7211 = vpop.f32.mrf.mxu0
        %v7212 = vadd.f32 0.0, %v7211
        %v7213 = vpop.f32.mrf.mxu0
        %v7214 = vpop.f32.mrf.mxu0
        %v7215 = vadd.f32 0.0, %v7214
        %v7216 = vpop.f32.mrf.mxu0
        %7217 = vmatprep.mubr.bf16.mxu0 0
        %7218 = vmatmul.mubr.bf16.gmra.mxu0 %v7151
        %v7219 = vpop.f32.mrf.mxu0
        %v7220 = vadd.f32 0.0, %v7219
        %v7221 = vpop.f32.mrf.mxu0
        %v7222 = vpop.f32.mrf.mxu0
        %v7223 = vadd.f32 0.0, %v7222
        %v7224 = vpop.f32.mrf.mxu0
        %7225 = vmatprep.mubr.bf16.mxu0 0
        %7226 = vmatmul.mubr.bf16.gmra.mxu0 %v7154
        %v7227 = vpop.f32.mrf.mxu0
        %v7228 = vpop.f32.mrf.mxu0
        %v7229 = vpop.f32.mrf.mxu0
        %v7230 = vpop.f32.mrf.mxu0
        %7231 = vmatprep.mubr.bf16.mxu0 0
        %7232 = vmatmul.mubr.bf16.gmra.mxu0 %v7157
        %v7233 = vpop.f32.mrf.mxu0
        %v7234 = vpop.f32.mrf.mxu0
        %v7235 = vpop.f32.mrf.mxu0
        %v7236 = vpop.f32.mrf.mxu0
        %7237 = vmatprep.mubr.bf16.mxu0 0
        %7238 = vmatmul.mubr.bf16.gmra.mxu0 %v7160
        %v7239 = vpop.f32.mrf.mxu0
        %v7240 = vadd.f32 0.0, %v7239
        %v7241 = vpop.f32.mrf.mxu0
        %v7242 = vpop.f32.mrf.mxu0
        %v7243 = vadd.f32 0.0, %v7242
        %v7244 = vpop.f32.mrf.mxu0
        %7245 = vmatprep.mubr.bf16.mxu0 0
        %7246 = vmatmul.mubr.bf16.gmra.mxu0 %v7163
        %v7247 = vpop.f32.mrf.mxu0
        %v7248 = vadd.f32 0.0, %v7247
        %v7249 = vpop.f32.mrf.mxu0
        %v7250 = vpop.f32.mrf.mxu0
        %v7251 = vadd.f32 0.0, %v7250
        %v7252 = vpop.f32.mrf.mxu0
        %7253 = vmatprep.mubr.bf16.mxu0 0
        %7254 = vmatmul.mubr.bf16.gmra.mxu0 %v7166
        %v7255 = vpop.f32.mrf.mxu0
        %v7256 = vpop.f32.mrf.mxu0
        %v7257 = vpop.f32.mrf.mxu0
        %v7258 = vpop.f32.mrf.mxu0
        %7259 = vdwg.mxu0
        %v7260 = vadd.f32 %v7101, %v7212
        %v7261 = vadd.f32 %v7102, %v7215
        %v7262 = vadd.f32 %v7103, %v7220
        %v7263 = vadd.f32 %v7104, %v7223
        %v7264 = vadd.f32 %v7105, %v7240
        %v7265 = vadd.f32 %v7106, %v7243
        %v7266 = vadd.f32 %v7107, %v7248
        %v7267 = vadd.f32 %v7108, %v7251
        %s7268 = sadd.s32 %s6328, 1008
        %s7269 = scalar_lea.vmem [#allocation3], %s7268
        %v7270 = vld [vmem:[%s7269] sm:$0xff]
        %v7271 = vld [vmem:[%s7269 + $0x8] sm:$0xff]
        %v7272 = vld [vmem:[%s7269 + $0x10] sm:$0xff]
        %v7273 = vld [vmem:[%s7269 + $0x18] sm:$0xff]
        %v7274 = vld [vmem:[%s7269 + $0x20] sm:$0xff]
        %v7275 = vld [vmem:[%s7269 + $0x28] sm:$0xff]
        %v7276 = vld [vmem:[%s7269 + $0x30] sm:$0xff]
        %v7277 = vld [vmem:[%s7269 + $0x38] sm:$0xff]
        %v7278 = vld [vmem:[%s7269 + $0x40] sm:$0xff]
        %v7279 = vld [vmem:[%s7269 + $0x48] sm:$0xff]
        %v7280 = vld [vmem:[%s7269 + $0x50] sm:$0xff]
        %v7281 = vld [vmem:[%s7269 + $0x58] sm:$0xff]
        %v7282 = vld [vmem:[%s7269 + $0x60] sm:$0xff]
        %v7283 = vld [vmem:[%s7269 + $0x68] sm:$0xff]
        %v7284 = vld [vmem:[%s7269 + $0x70] sm:$0xff]
        %v7285 = vld [vmem:[%s7269 + $0x78] sm:$0xff]
        %v7286 = vpack.c.bf16 %v7271, %v7270
        %v7287 = vpack.c.bf16 %v7273, %v7272
        %v7288 = vpack.c.bf16 %v7275, %v7274
        %v7289 = vpack.c.bf16 %v7277, %v7276
        %v7290 = vpack.c.bf16 %v7279, %v7278
        %v7291 = vpack.c.bf16 %v7281, %v7280
        %v7292 = vpack.c.bf16 %v7283, %v7282
        %v7293 = vpack.c.bf16 %v7285, %v7284
        %v7297 = vunpack.c.l.b16 %v6307
        %v7298 = vunpack.c.l.b16 %v6308
        %v7299 = vunpack.c.l.b16 %v6309
        %v7300 = vpack.c.b16 %v7298, %v7297
        %v7301 = vpack.c.b16 %v7299, %v7299
        %v7304 = vsel %vm6390, %v7286, 0
        %v7307 = vsel %vm6390, %v7287, 0
        %v7310 = vsel %vm6390, %v7288, 0
        %v7313 = vsel %vm6390, %v7289, 0
        %v7316 = vsel %vm6390, %v7290, 0
        %v7319 = vsel %vm6390, %v7291, 0
        %v7322 = vsel %vm6390, %v7292, 0
        %v7325 = vsel %vm6390, %v7293, 0
        %v7328 = vsel %vm6415, %v7301, 0
        %7330 = vmatprep.subr.bf16.mxu0 0
        %7331 = vmatpush1.bf16.msra.mxu0 0
        %7332 = vmatprep.subr.bf16.mxu0 0
        %7333 = vmatpush1.bf16.msra.mxu0 0
        %7334 = vmatprep.subr.bf16.mxu0 0
        %7335 = vmatpush1.bf16.msra.mxu0 0
        %7336 = vmatprep.subr.bf16.mxu0 0
        %7337 = vmatpush1.bf16.msra.mxu0 0
        %7338 = vmatprep.subr.bf16.mxu0 0
        %7339 = vmatpush1.bf16.msra.mxu0 0
        %7340 = vmatprep.subr.bf16.mxu0 0
        %7341 = vmatpush1.bf16.msra.mxu0 0
        %7342 = vmatprep.subr.bf16.mxu0 0
        %7343 = vmatpush1.bf16.msra.mxu0 %v7328
        %7344 = vmatprep.subr.bf16.mxu0 0
        %7345 = vmatpush1.bf16.msra.mxu0 %v7300
        %7346 = vmatprep.subr.bf16.mxu0 0
        %7347 = vmatpush2.bf16.msra.mxu0 0
        %7348 = vmatprep.subr.bf16.mxu0 0
        %7349 = vmatpush2.bf16.msra.mxu0 0
        %7350 = vmatprep.subr.bf16.mxu0 0
        %7351 = vmatpush2.bf16.msra.mxu0 0
        %7352 = vmatprep.subr.bf16.mxu0 0
        %7353 = vmatpush2.bf16.msra.mxu0 0
        %7354 = vmatprep.subr.bf16.mxu0 0
        %7355 = vmatpush2.bf16.msra.mxu0 0
        %7356 = vmatprep.subr.bf16.mxu0 0
        %7357 = vmatpush2.bf16.msra.mxu0 0
        %7358 = vmatprep.subr.bf16.mxu0 0
        %7359 = vmatpush2.bf16.msra.mxu0 0
        %7360 = vmatprep.subr.bf16.mxu0 0
        %7361 = vmatpush2.bf16.msra.mxu0 0
        %7362 = vmatprep.mubr.bf16.mxu0 0
        %7363 = vmatmul.mubr.bf16.gmra.mxu0 %v7304
        %v7364 = vpop.f32.mrf.mxu0
        %v7365 = vpop.f32.mrf.mxu0
        %v7366 = vpop.f32.mrf.mxu0
        %v7367 = vpop.f32.mrf.mxu0
        %7368 = vmatprep.mubr.bf16.mxu0 0
        %7369 = vmatmul.mubr.bf16.gmra.mxu0 %v7307
        %v7370 = vpop.f32.mrf.mxu0
        %v7371 = vadd.f32 0.0, %v7370
        %v7372 = vpop.f32.mrf.mxu0
        %v7373 = vpop.f32.mrf.mxu0
        %v7374 = vadd.f32 0.0, %v7373
        %v7375 = vpop.f32.mrf.mxu0
        %7376 = vmatprep.mubr.bf16.mxu0 0
        %7377 = vmatmul.mubr.bf16.gmra.mxu0 %v7310
        %v7378 = vpop.f32.mrf.mxu0
        %v7379 = vadd.f32 0.0, %v7378
        %v7380 = vpop.f32.mrf.mxu0
        %v7381 = vpop.f32.mrf.mxu0
        %v7382 = vadd.f32 0.0, %v7381
        %v7383 = vpop.f32.mrf.mxu0
        %7384 = vmatprep.mubr.bf16.mxu0 0
        %7385 = vmatmul.mubr.bf16.gmra.mxu0 %v7313
        %v7386 = vpop.f32.mrf.mxu0
        %v7387 = vpop.f32.mrf.mxu0
        %v7388 = vpop.f32.mrf.mxu0
        %v7389 = vpop.f32.mrf.mxu0
        %7390 = vmatprep.mubr.bf16.mxu0 0
        %7391 = vmatmul.mubr.bf16.gmra.mxu0 %v7316
        %v7392 = vpop.f32.mrf.mxu0
        %v7393 = vpop.f32.mrf.mxu0
        %v7394 = vpop.f32.mrf.mxu0
        %v7395 = vpop.f32.mrf.mxu0
        %7396 = vmatprep.mubr.bf16.mxu0 0
        %7397 = vmatmul.mubr.bf16.gmra.mxu0 %v7319
        %v7398 = vpop.f32.mrf.mxu0
        %v7399 = vadd.f32 0.0, %v7398
        %v7400 = vpop.f32.mrf.mxu0
        %v7401 = vpop.f32.mrf.mxu0
        %v7402 = vadd.f32 0.0, %v7401
        %v7403 = vpop.f32.mrf.mxu0
        %7404 = vmatprep.mubr.bf16.mxu0 0
        %7405 = vmatmul.mubr.bf16.gmra.mxu0 %v7322
        %v7406 = vpop.f32.mrf.mxu0
        %v7407 = vadd.f32 0.0, %v7406
        %v7408 = vpop.f32.mrf.mxu0
        %v7409 = vpop.f32.mrf.mxu0
        %v7410 = vadd.f32 0.0, %v7409
        %v7411 = vpop.f32.mrf.mxu0
        %7412 = vmatprep.mubr.bf16.mxu0 0
        %7413 = vmatmul.mubr.bf16.gmra.mxu0 %v7325
        %v7414 = vpop.f32.mrf.mxu0
        %v7415 = vpop.f32.mrf.mxu0
        %v7416 = vpop.f32.mrf.mxu0
        %v7417 = vpop.f32.mrf.mxu0
        %7418 = vdwg.mxu0
        %v7419 = vadd.f32 %v7260, %v7371
        %v7420 = vadd.f32 %v7261, %v7374
        %v7421 = vadd.f32 %v7262, %v7379
        %v7422 = vadd.f32 %v7263, %v7382
        %v7423 = vadd.f32 %v7264, %v7399
        %v7424 = vadd.f32 %v7265, %v7402
        %v7425 = vadd.f32 %v7266, %v7407
        %v7426 = vadd.f32 %v7267, %v7410
        %s7427 = sadd.s32 %s6328, 1024
        %s7428 = scalar_lea.vmem [#allocation3], %s7427
        %v7429 = vld [vmem:[%s7428] sm:$0xff]
        %v7430 = vld [vmem:[%s7428 + $0x8] sm:$0xff]
        %v7431 = vld [vmem:[%s7428 + $0x10] sm:$0xff]
        %v7432 = vld [vmem:[%s7428 + $0x18] sm:$0xff]
        %v7433 = vld [vmem:[%s7428 + $0x20] sm:$0xff]
        %v7434 = vld [vmem:[%s7428 + $0x28] sm:$0xff]
        %v7435 = vld [vmem:[%s7428 + $0x30] sm:$0xff]
        %v7436 = vld [vmem:[%s7428 + $0x38] sm:$0xff]
        %v7437 = vld [vmem:[%s7428 + $0x40] sm:$0xff]
        %v7438 = vld [vmem:[%s7428 + $0x48] sm:$0xff]
        %v7439 = vld [vmem:[%s7428 + $0x50] sm:$0xff]
        %v7440 = vld [vmem:[%s7428 + $0x58] sm:$0xff]
        %v7441 = vld [vmem:[%s7428 + $0x60] sm:$0xff]
        %v7442 = vld [vmem:[%s7428 + $0x68] sm:$0xff]
        %v7443 = vld [vmem:[%s7428 + $0x70] sm:$0xff]
        %v7444 = vld [vmem:[%s7428 + $0x78] sm:$0xff]
        %v7445 = vpack.c.bf16 %v7430, %v7429
        %v7446 = vpack.c.bf16 %v7432, %v7431
        %v7447 = vpack.c.bf16 %v7434, %v7433
        %v7448 = vpack.c.bf16 %v7436, %v7435
        %v7449 = vpack.c.bf16 %v7438, %v7437
        %v7450 = vpack.c.bf16 %v7440, %v7439
        %v7451 = vpack.c.bf16 %v7442, %v7441
        %v7452 = vpack.c.bf16 %v7444, %v7443
        %v7456 = vunpack.c.l.b16 %v6311
        %v7457 = vunpack.c.l.b16 %v6312
        %v7458 = vunpack.c.l.b16 %v6313
        %v7459 = vpack.c.b16 %v7457, %v7456
        %v7460 = vpack.c.b16 %v7458, %v7458
        %v7463 = vsel %vm6390, %v7445, 0
        %v7466 = vsel %vm6390, %v7446, 0
        %v7469 = vsel %vm6390, %v7447, 0
        %v7472 = vsel %vm6390, %v7448, 0
        %v7475 = vsel %vm6390, %v7449, 0
        %v7478 = vsel %vm6390, %v7450, 0
        %v7481 = vsel %vm6390, %v7451, 0
        %v7484 = vsel %vm6390, %v7452, 0
        %v7487 = vsel %vm6415, %v7460, 0
        %7489 = vmatprep.subr.bf16.mxu0 0
        %7490 = vmatpush1.bf16.msra.mxu0 0
        %7491 = vmatprep.subr.bf16.mxu0 0
        %7492 = vmatpush1.bf16.msra.mxu0 0
        %7493 = vmatprep.subr.bf16.mxu0 0
        %7494 = vmatpush1.bf16.msra.mxu0 0
        %7495 = vmatprep.subr.bf16.mxu0 0
        %7496 = vmatpush1.bf16.msra.mxu0 0
        %7497 = vmatprep.subr.bf16.mxu0 0
        %7498 = vmatpush1.bf16.msra.mxu0 0
        %7499 = vmatprep.subr.bf16.mxu0 0
        %7500 = vmatpush1.bf16.msra.mxu0 0
        %7501 = vmatprep.subr.bf16.mxu0 0
        %7502 = vmatpush1.bf16.msra.mxu0 %v7487
        %7503 = vmatprep.subr.bf16.mxu0 0
        %7504 = vmatpush1.bf16.msra.mxu0 %v7459
        %7505 = vmatprep.subr.bf16.mxu0 0
        %7506 = vmatpush2.bf16.msra.mxu0 0
        %7507 = vmatprep.subr.bf16.mxu0 0
        %7508 = vmatpush2.bf16.msra.mxu0 0
        %7509 = vmatprep.subr.bf16.mxu0 0
        %7510 = vmatpush2.bf16.msra.mxu0 0
        %7511 = vmatprep.subr.bf16.mxu0 0
        %7512 = vmatpush2.bf16.msra.mxu0 0
        %7513 = vmatprep.subr.bf16.mxu0 0
        %7514 = vmatpush2.bf16.msra.mxu0 0
        %7515 = vmatprep.subr.bf16.mxu0 0
        %7516 = vmatpush2.bf16.msra.mxu0 0
        %7517 = vmatprep.subr.bf16.mxu0 0
        %7518 = vmatpush2.bf16.msra.mxu0 0
        %7519 = vmatprep.subr.bf16.mxu0 0
        %7520 = vmatpush2.bf16.msra.mxu0 0
        %7521 = vmatprep.mubr.bf16.mxu0 0
        %7522 = vmatmul.mubr.bf16.gmra.mxu0 %v7463
        %v7523 = vpop.f32.mrf.mxu0
        %v7524 = vpop.f32.mrf.mxu0
        %v7525 = vpop.f32.mrf.mxu0
        %v7526 = vpop.f32.mrf.mxu0
        %7527 = vmatprep.mubr.bf16.mxu0 0
        %7528 = vmatmul.mubr.bf16.gmra.mxu0 %v7466
        %v7529 = vpop.f32.mrf.mxu0
        %v7530 = vadd.f32 0.0, %v7529
        %v7531 = vpop.f32.mrf.mxu0
        %v7532 = vpop.f32.mrf.mxu0
        %v7533 = vadd.f32 0.0, %v7532
        %v7534 = vpop.f32.mrf.mxu0
        %7535 = vmatprep.mubr.bf16.mxu0 0
        %7536 = vmatmul.mubr.bf16.gmra.mxu0 %v7469
        %v7537 = vpop.f32.mrf.mxu0
        %v7538 = vadd.f32 0.0, %v7537
        %v7539 = vpop.f32.mrf.mxu0
        %v7540 = vpop.f32.mrf.mxu0
        %v7541 = vadd.f32 0.0, %v7540
        %v7542 = vpop.f32.mrf.mxu0
        %7543 = vmatprep.mubr.bf16.mxu0 0
        %7544 = vmatmul.mubr.bf16.gmra.mxu0 %v7472
        %v7545 = vpop.f32.mrf.mxu0
        %v7546 = vpop.f32.mrf.mxu0
        %v7547 = vpop.f32.mrf.mxu0
        %v7548 = vpop.f32.mrf.mxu0
        %7549 = vmatprep.mubr.bf16.mxu0 0
        %7550 = vmatmul.mubr.bf16.gmra.mxu0 %v7475
        %v7551 = vpop.f32.mrf.mxu0
        %v7552 = vpop.f32.mrf.mxu0
        %v7553 = vpop.f32.mrf.mxu0
        %v7554 = vpop.f32.mrf.mxu0
        %7555 = vmatprep.mubr.bf16.mxu0 0
        %7556 = vmatmul.mubr.bf16.gmra.mxu0 %v7478
        %v7557 = vpop.f32.mrf.mxu0
        %v7558 = vadd.f32 0.0, %v7557
        %v7559 = vpop.f32.mrf.mxu0
        %v7560 = vpop.f32.mrf.mxu0
        %v7561 = vadd.f32 0.0, %v7560
        %v7562 = vpop.f32.mrf.mxu0
        %7563 = vmatprep.mubr.bf16.mxu0 0
        %7564 = vmatmul.mubr.bf16.gmra.mxu0 %v7481
        %v7565 = vpop.f32.mrf.mxu0
        %v7566 = vadd.f32 0.0, %v7565
        %v7567 = vpop.f32.mrf.mxu0
        %v7568 = vpop.f32.mrf.mxu0
        %v7569 = vadd.f32 0.0, %v7568
        %v7570 = vpop.f32.mrf.mxu0
        %7571 = vmatprep.mubr.bf16.mxu0 0
        %7572 = vmatmul.mubr.bf16.gmra.mxu0 %v7484
        %v7573 = vpop.f32.mrf.mxu0
        %v7574 = vpop.f32.mrf.mxu0
        %v7575 = vpop.f32.mrf.mxu0
        %v7576 = vpop.f32.mrf.mxu0
        %7577 = vdwg.mxu0
        %v7578 = vadd.f32 %v7419, %v7530
        %v7579 = vadd.f32 %v7420, %v7533
        %v7580 = vadd.f32 %v7421, %v7538
        %v7581 = vadd.f32 %v7422, %v7541
        %v7582 = vadd.f32 %v7423, %v7558
        %v7583 = vadd.f32 %v7424, %v7561
        %v7584 = vadd.f32 %v7425, %v7566
        %v7585 = vadd.f32 %v7426, %v7569
        %s7586 = sadd.s32 %s6328, 1040
        %s7587 = scalar_lea.vmem [#allocation3], %s7586
        %v7588 = vld [vmem:[%s7587] sm:$0xff]
        %v7589 = vld [vmem:[%s7587 + $0x8] sm:$0xff]
        %v7590 = vld [vmem:[%s7587 + $0x10] sm:$0xff]
        %v7591 = vld [vmem:[%s7587 + $0x18] sm:$0xff]
        %v7592 = vld [vmem:[%s7587 + $0x20] sm:$0xff]
        %v7593 = vld [vmem:[%s7587 + $0x28] sm:$0xff]
        %v7594 = vld [vmem:[%s7587 + $0x30] sm:$0xff]
        %v7595 = vld [vmem:[%s7587 + $0x38] sm:$0xff]
        %v7596 = vld [vmem:[%s7587 + $0x40] sm:$0xff]
        %v7597 = vld [vmem:[%s7587 + $0x48] sm:$0xff]
        %v7598 = vld [vmem:[%s7587 + $0x50] sm:$0xff]
        %v7599 = vld [vmem:[%s7587 + $0x58] sm:$0xff]
        %v7600 = vld [vmem:[%s7587 + $0x60] sm:$0xff]
        %v7601 = vld [vmem:[%s7587 + $0x68] sm:$0xff]
        %v7602 = vld [vmem:[%s7587 + $0x70] sm:$0xff]
        %v7603 = vld [vmem:[%s7587 + $0x78] sm:$0xff]
        %v7604 = vpack.c.bf16 %v7589, %v7588
        %v7605 = vpack.c.bf16 %v7591, %v7590
        %v7606 = vpack.c.bf16 %v7593, %v7592
        %v7607 = vpack.c.bf16 %v7595, %v7594
        %v7608 = vpack.c.bf16 %v7597, %v7596
        %v7609 = vpack.c.bf16 %v7599, %v7598
        %v7610 = vpack.c.bf16 %v7601, %v7600
        %v7611 = vpack.c.bf16 %v7603, %v7602
        %v7615 = vunpack.c.l.b16 %v6315
        %v7616 = vunpack.c.l.b16 %v6316
        %v7617 = vunpack.c.l.b16 %v6317
        %v7618 = vpack.c.b16 %v7616, %v7615
        %v7619 = vpack.c.b16 %v7617, %v7617
        %v7622 = vsel %vm6390, %v7604, 0
        %v7625 = vsel %vm6390, %v7605, 0
        %v7628 = vsel %vm6390, %v7606, 0
        %v7631 = vsel %vm6390, %v7607, 0
        %v7634 = vsel %vm6390, %v7608, 0
        %v7637 = vsel %vm6390, %v7609, 0
        %v7640 = vsel %vm6390, %v7610, 0
        %v7643 = vsel %vm6390, %v7611, 0
        %v7646 = vsel %vm6415, %v7619, 0
        %7648 = vmatprep.subr.bf16.mxu0 0
        %7649 = vmatpush1.bf16.msra.mxu0 0
        %7650 = vmatprep.subr.bf16.mxu0 0
        %7651 = vmatpush1.bf16.msra.mxu0 0
        %7652 = vmatprep.subr.bf16.mxu0 0
        %7653 = vmatpush1.bf16.msra.mxu0 0
        %7654 = vmatprep.subr.bf16.mxu0 0
        %7655 = vmatpush1.bf16.msra.mxu0 0
        %7656 = vmatprep.subr.bf16.mxu0 0
        %7657 = vmatpush1.bf16.msra.mxu0 0
        %7658 = vmatprep.subr.bf16.mxu0 0
        %7659 = vmatpush1.bf16.msra.mxu0 0
        %7660 = vmatprep.subr.bf16.mxu0 0
        %7661 = vmatpush1.bf16.msra.mxu0 %v7646
        %7662 = vmatprep.subr.bf16.mxu0 0
        %7663 = vmatpush1.bf16.msra.mxu0 %v7618
        %7664 = vmatprep.subr.bf16.mxu0 0
        %7665 = vmatpush2.bf16.msra.mxu0 0
        %7666 = vmatprep.subr.bf16.mxu0 0
        %7667 = vmatpush2.bf16.msra.mxu0 0
        %7668 = vmatprep.subr.bf16.mxu0 0
        %7669 = vmatpush2.bf16.msra.mxu0 0
        %7670 = vmatprep.subr.bf16.mxu0 0
        %7671 = vmatpush2.bf16.msra.mxu0 0
        %7672 = vmatprep.subr.bf16.mxu0 0
        %7673 = vmatpush2.bf16.msra.mxu0 0
        %7674 = vmatprep.subr.bf16.mxu0 0
        %7675 = vmatpush2.bf16.msra.mxu0 0
        %7676 = vmatprep.subr.bf16.mxu0 0
        %7677 = vmatpush2.bf16.msra.mxu0 0
        %7678 = vmatprep.subr.bf16.mxu0 0
        %7679 = vmatpush2.bf16.msra.mxu0 0
        %7680 = vmatprep.mubr.bf16.mxu0 0
        %7681 = vmatmul.mubr.bf16.gmra.mxu0 %v7622
        %v7682 = vpop.f32.mrf.mxu0
        %v7683 = vpop.f32.mrf.mxu0
        %v7684 = vpop.f32.mrf.mxu0
        %v7685 = vpop.f32.mrf.mxu0
        %7686 = vmatprep.mubr.bf16.mxu0 0
        %7687 = vmatmul.mubr.bf16.gmra.mxu0 %v7625
        %v7688 = vpop.f32.mrf.mxu0
        %v7689 = vadd.f32 0.0, %v7688
        %v7690 = vpop.f32.mrf.mxu0
        %v7691 = vpop.f32.mrf.mxu0
        %v7692 = vadd.f32 0.0, %v7691
        %v7693 = vpop.f32.mrf.mxu0
        %7694 = vmatprep.mubr.bf16.mxu0 0
        %7695 = vmatmul.mubr.bf16.gmra.mxu0 %v7628
        %v7696 = vpop.f32.mrf.mxu0
        %v7697 = vadd.f32 0.0, %v7696
        %v7698 = vpop.f32.mrf.mxu0
        %v7699 = vpop.f32.mrf.mxu0
        %v7700 = vadd.f32 0.0, %v7699
        %v7701 = vpop.f32.mrf.mxu0
        %7702 = vmatprep.mubr.bf16.mxu0 0
        %7703 = vmatmul.mubr.bf16.gmra.mxu0 %v7631
        %v7704 = vpop.f32.mrf.mxu0
        %v7705 = vpop.f32.mrf.mxu0
        %v7706 = vpop.f32.mrf.mxu0
        %v7707 = vpop.f32.mrf.mxu0
        %7708 = vmatprep.mubr.bf16.mxu0 0
        %7709 = vmatmul.mubr.bf16.gmra.mxu0 %v7634
        %v7710 = vpop.f32.mrf.mxu0
        %v7711 = vpop.f32.mrf.mxu0
        %v7712 = vpop.f32.mrf.mxu0
        %v7713 = vpop.f32.mrf.mxu0
        %7714 = vmatprep.mubr.bf16.mxu0 0
        %7715 = vmatmul.mubr.bf16.gmra.mxu0 %v7637
        %v7716 = vpop.f32.mrf.mxu0
        %v7717 = vadd.f32 0.0, %v7716
        %v7718 = vpop.f32.mrf.mxu0
        %v7719 = vpop.f32.mrf.mxu0
        %v7720 = vadd.f32 0.0, %v7719
        %v7721 = vpop.f32.mrf.mxu0
        %7722 = vmatprep.mubr.bf16.mxu0 0
        %7723 = vmatmul.mubr.bf16.gmra.mxu0 %v7640
        %v7724 = vpop.f32.mrf.mxu0
        %v7725 = vadd.f32 0.0, %v7724
        %v7726 = vpop.f32.mrf.mxu0
        %v7727 = vpop.f32.mrf.mxu0
        %v7728 = vadd.f32 0.0, %v7727
        %v7729 = vpop.f32.mrf.mxu0
        %7730 = vmatprep.mubr.bf16.mxu0 0
        %7731 = vmatmul.mubr.bf16.gmra.mxu0 %v7643
        %v7732 = vpop.f32.mrf.mxu0
        %v7733 = vpop.f32.mrf.mxu0
        %v7734 = vpop.f32.mrf.mxu0
        %v7735 = vpop.f32.mrf.mxu0
        %7736 = vdwg.mxu0
        %v7737 = vadd.f32 %v7578, %v7689
        %v7738 = vadd.f32 %v7579, %v7692
        %v7739 = vadd.f32 %v7580, %v7697
        %v7740 = vadd.f32 %v7581, %v7700
        %v7741 = vadd.f32 %v7582, %v7717
        %v7742 = vadd.f32 %v7583, %v7720
        %v7743 = vadd.f32 %v7584, %v7725
        %v7744 = vadd.f32 %v7585, %v7728
        %v7745 = vlaneseq
        %v7746 = vshrl.u32 %v7745, 7
        %v7747 = vsub.s32 0, %v7746
        %v7748 = vrot.slane %v6318, %v7747
        %v7749 = vmul.f32 %v7748, %v7737
        %v7750 = vmul.f32 %v7748, %v7738
        %v7751 = vmul.f32 %v7748, %v7739
        %v7752 = vmul.f32 %v7748, %v7740
        %v7753 = vmul.f32 %v7748, %v7741
        %v7754 = vmul.f32 %v7748, %v7742
        %v7755 = vmul.f32 %v7748, %v7743
        %v7756 = vmul.f32 %v7748, %v7744
        %v7757 = vlaneseq
        %v7758 = vshrl.u32 %v7757, 7
        %v7759 = vsub.s32 0, %v7758
        %v7760 = vrot.slane %v6319, %v7759
        %v7761 = vadd.f32 %v7749, %v7760
        %v7762 = vadd.f32 %v7750, %v7760
        %v7763 = vadd.f32 %v7751, %v7760
        %v7764 = vadd.f32 %v7752, %v7760
        %v7765 = vadd.f32 %v7753, %v7760
        %v7766 = vadd.f32 %v7754, %v7760
        %v7767 = vadd.f32 %v7755, %v7760
        %v7768 = vadd.f32 %v7756, %v7760
        %v7769 = vmul.f32 %v7761, 0.2
        %v7770 = vmul.f32 %v7762, 0.2
        %v7771 = vmul.f32 %v7763, 0.2
        %v7772 = vmul.f32 %v7764, 0.2
        %v7773 = vmul.f32 %v7765, 0.2
        %v7774 = vmul.f32 %v7766, 0.2
        %v7775 = vmul.f32 %v7767, 0.2
        %v7776 = vmul.f32 %v7768, 0.2
        %v7777 = vmax.f32 %v7761, %v7769
        %v7778 = vmax.f32 %v7762, %v7770
        %v7779 = vmax.f32 %v7763, %v7771
        %v7780 = vmax.f32 %v7764, %v7772
        %v7781 = vmax.f32 %v7765, %v7773
        %v7782 = vmax.f32 %v7766, %v7774
        %v7783 = vmax.f32 %v7767, %v7775
        %v7784 = vmax.f32 %v7768, %v7776
        %s7785 = scalar_lea.vmem [#allocation2], %s7109
        %7786 = vst.msk [vmem:[%s7785] sm:$0xff] %vm6390, %v7777
        %7787 = vst.msk [vmem:[%s7785 + $0x8] sm:$0xff] %vm6390, %v7778
        %7788 = vst.msk [vmem:[%s7785 + $0x10] sm:$0xff] %vm6390, %v7779
        %7789 = vst.msk [vmem:[%s7785 + $0x18] sm:$0xff] %vm6390, %v7780
        %s7790 = sadd.s32 %s6328, 80
        %s7791 = scalar_lea.vmem [#allocation2], %s7790
        %7792 = vst.msk [vmem:[%s7791] sm:$0xff] %vm6390, %v7781
        %7793 = vst.msk [vmem:[%s7791 + $0x8] sm:$0xff] %vm6390, %v7782
        %7794 = vst.msk [vmem:[%s7791 + $0x10] sm:$0xff] %vm6390, %v7783
        %7795 = vst.msk [vmem:[%s7791 + $0x18] sm:$0xff] %vm6390, %v7784
      $region91: #{lrnet_forward.1} parent=43 // loop_footer
        %s6325 = sadd.s32 1, %s6321
      $region92: #{lrnet_forward.1} parent=43 // loop_footer_branch
        %6320 = sbr.rel target = $region88
      $region93: #{lrnet_forward.1} parent=43 // loop_exit
        _
      %s7796 = scalar_lea.vmem %s2, 432
      %v7797 = vld [vmem:[%s7796] sm:$0xf]
      %v7798 = vld [vmem:[%s7796 + $0x4] sm:$0xf]
      %v7799 = vld [vmem:[%s7796 + $0x8] sm:$0xf]
      %s7800 = scalar_lea.vmem %s2, 444
      %v7801 = vld [vmem:[%s7800] sm:$0xf]
      %v7802 = vld [vmem:[%s7800 + $0x4] sm:$0xf]
      %v7803 = vld [vmem:[%s7800 + $0x8] sm:$0xf]
      %s7804 = scalar_lea.vmem %s2, 456
      %v7805 = vld [vmem:[%s7804] sm:$0xf]
      %v7806 = vld [vmem:[%s7804 + $0x4] sm:$0xf]
      %v7807 = vld [vmem:[%s7804 + $0x8] sm:$0xf]
      %s7808 = scalar_lea.vmem %s2, 468
      %v7809 = vld [vmem:[%s7808] sm:$0xf]
      %v7810 = vld [vmem:[%s7808 + $0x4] sm:$0xf]
      %v7811 = vld [vmem:[%s7808 + $0x8] sm:$0xf]
      %s7812 = scalar_lea.vmem %s2, 480
      %v7813 = vld [vmem:[%s7812] sm:$0xf]
      %v7814 = vld [vmem:[%s7812 + $0x4] sm:$0xf]
      %v7815 = vld [vmem:[%s7812 + $0x8] sm:$0xf]
      %s7816 = scalar_lea.vmem %s2, 492
      %v7817 = vld [vmem:[%s7816] sm:$0xf]
      %v7818 = vld [vmem:[%s7816 + $0x4] sm:$0xf]
      %v7819 = vld [vmem:[%s7816 + $0x8] sm:$0xf]
      %s7820 = scalar_lea.vmem %s2, 504
      %v7821 = vld [vmem:[%s7820] sm:$0xf]
      %v7822 = vld [vmem:[%s7820 + $0x4] sm:$0xf]
      %v7823 = vld [vmem:[%s7820 + $0x8] sm:$0xf]
      %s7824 = scalar_lea.vmem %s2, 516
      %v7825 = vld [vmem:[%s7824] sm:$0xf]
      %v7826 = vld [vmem:[%s7824 + $0x4] sm:$0xf]
      %v7827 = vld [vmem:[%s7824 + $0x8] sm:$0xf]
      %s7828 = scalar_lea.vmem %s2, 528
      %v7829 = vld [vmem:[%s7828] sm:$0xf]
      %v7830 = vld [vmem:[%s7828 + $0x4] sm:$0xf]
      %v7831 = vld [vmem:[%s7828 + $0x8] sm:$0xf]
      %v7832 = vld [vmem:[%s3 + $0xa] sm:$0x1]
      %v7833 = vld [vmem:[%s3 + $0xb] sm:$0x1]
      %v7834 = vld [vmem:[%s4] sm:$0xf]
      %v7835 = vld [vmem:[%s4 + $0x4] sm:$0xf]
      %v7836 = vld [vmem:[%s4 + $0x8] sm:$0xf]
      %v7837 = vld [vmem:[%s5] sm:$0x1]
      loop: start=0, step=1, limit=16
      $region94: #{lrnet_forward.1} parent=43 // loop_pre_header
        _
      $region95: #{lrnet_forward.1} parent=43 // loop_header
        %s7839 = sphi 0, %s7843
        %p7840 = scmp.ge.s32.totalorder %s7839, 16
      $region96: #{lrnet_forward.1} parent=43 // loop_header_branch
        %7842 = sbr.rel (%p7840) target = $region100
      $region97: #{lrnet_forward.1} parent=43 // loop_body
        %s7844 = smul.u32 %s7839, 2
        %s7845 = sadd.s32 %s7844, 17
        %s7846 = smul.u32 %s7845, 64
        %s7847 = sadd.s32 %s7846, 4294967231
        %s7848 = scalar_lea.vmem [#allocation2], %s7847
        %v7849 = vld [vmem:[%s7848] sm:$0xff]
        %v7850 = vld [vmem:[%s7848 + $0x8] sm:$0xff]
        %v7851 = vld [vmem:[%s7848 + $0x10] sm:$0xff]
        %v7852 = vld [vmem:[%s7848 + $0x18] sm:$0xff]
        %v7853 = vld [vmem:[%s7848 + $0x20] sm:$0xff]
        %v7854 = vld [vmem:[%s7848 + $0x28] sm:$0xff]
        %v7855 = vld [vmem:[%s7848 + $0x30] sm:$0xff]
        %v7856 = vld [vmem:[%s7848 + $0x38] sm:$0xff]
        %v7857 = vld [vmem:[%s7848 + $0x40] sm:$0xff]
        %v7858 = vld [vmem:[%s7848 + $0x48] sm:$0xff]
        %v7859 = vld [vmem:[%s7848 + $0x50] sm:$0xff]
        %v7860 = vld [vmem:[%s7848 + $0x58] sm:$0xff]
        %v7861 = vld [vmem:[%s7848 + $0x60] sm:$0xff]
        %v7862 = vld [vmem:[%s7848 + $0x68] sm:$0xff]
        %v7863 = vld [vmem:[%s7848 + $0x70] sm:$0xff]
        %v7864 = vld [vmem:[%s7848 + $0x78] sm:$0xff]
        %v7865 = vpack.c.bf16 %v7850, %v7849
        %v7866 = vpack.c.bf16 %v7852, %v7851
        %v7867 = vpack.c.bf16 %v7854, %v7853
        %v7868 = vpack.c.bf16 %v7856, %v7855
        %v7869 = vpack.c.bf16 %v7858, %v7857
        %v7870 = vpack.c.bf16 %v7860, %v7859
        %v7871 = vpack.c.bf16 %v7862, %v7861
        %v7872 = vpack.c.bf16 %v7864, %v7863
        %s7873 = sadd.s32 %s7846, 4294967232
        %s7874 = scalar_lea.vmem [#allocation2], %s7873
        %v7875 = vld [vmem:[%s7874] sm:$0xff]
        %v7876 = vld [vmem:[%s7874 + $0x8] sm:$0xff]
        %v7877 = vld [vmem:[%s7874 + $0x10] sm:$0xff]
        %v7878 = vld [vmem:[%s7874 + $0x18] sm:$0xff]
        %v7879 = vld [vmem:[%s7874 + $0x20] sm:$0xff]
        %v7880 = vld [vmem:[%s7874 + $0x28] sm:$0xff]
        %v7881 = vld [vmem:[%s7874 + $0x30] sm:$0xff]
        %v7882 = vld [vmem:[%s7874 + $0x38] sm:$0xff]
        %v7883 = vld [vmem:[%s7874 + $0x40] sm:$0xff]
        %v7884 = vld [vmem:[%s7874 + $0x48] sm:$0xff]
        %v7885 = vld [vmem:[%s7874 + $0x50] sm:$0xff]
        %v7886 = vld [vmem:[%s7874 + $0x58] sm:$0xff]
        %v7887 = vld [vmem:[%s7874 + $0x60] sm:$0xff]
        %v7888 = vld [vmem:[%s7874 + $0x68] sm:$0xff]
        %v7889 = vld [vmem:[%s7874 + $0x70] sm:$0xff]
        %v7890 = vld [vmem:[%s7874 + $0x78] sm:$0xff]
        %v7891 = vpack.c.bf16 %v7876, %v7875
        %v7892 = vpack.c.bf16 %v7878, %v7877
        %v7893 = vpack.c.bf16 %v7880, %v7879
        %v7894 = vpack.c.bf16 %v7882, %v7881
        %v7895 = vpack.c.bf16 %v7884, %v7883
        %v7896 = vpack.c.bf16 %v7886, %v7885
        %v7897 = vpack.c.bf16 %v7888, %v7887
        %v7898 = vpack.c.bf16 %v7890, %v7889
        %v7902 = vunpack.c.l.b16 %v7801
        %v7903 = vunpack.c.l.b16 %v7802
        %v7904 = vunpack.c.l.b16 %v7803
        %v7905 = vpack.c.b16 %v7903, %v7902
        %v7906 = vpack.c.b16 %v7904, %v7904
        %vm7908 = vcmask 195584
        %v7910 = vsel %vm7908, %v7891, 0
        %v7913 = vsel %vm7908, %v7892, 0
        %v7916 = vsel %vm7908, %v7893, 0
        %v7919 = vsel %vm7908, %v7894, 0
        %v7922 = vsel %vm7908, %v7895, 0
        %v7925 = vsel %vm7908, %v7896, 0
        %v7928 = vsel %vm7908, %v7897, 0
        %v7931 = vsel %vm7908, %v7898, 0
        %vm7933 = vcmask 1043456
        %v7935 = vsel %vm7933, %v7906, 0
        %7937 = vmatprep.subr.bf16.mxu0 0
        %7938 = vmatpush1.bf16.msra.mxu0 0
        %7939 = vmatprep.subr.bf16.mxu0 0
        %7940 = vmatpush1.bf16.msra.mxu0 0
        %7941 = vmatprep.subr.bf16.mxu0 0
        %7942 = vmatpush1.bf16.msra.mxu0 0
        %7943 = vmatprep.subr.bf16.mxu0 0
        %7944 = vmatpush1.bf16.msra.mxu0 0
        %7945 = vmatprep.subr.bf16.mxu0 0
        %7946 = vmatpush1.bf16.msra.mxu0 0
        %7947 = vmatprep.subr.bf16.mxu0 0
        %7948 = vmatpush1.bf16.msra.mxu0 0
        %7949 = vmatprep.subr.bf16.mxu0 0
        %7950 = vmatpush1.bf16.msra.mxu0 %v7935
        %7951 = vmatprep.subr.bf16.mxu0 0
        %7952 = vmatpush1.bf16.msra.mxu0 %v7905
        %7953 = vmatprep.subr.bf16.mxu0 0
        %7954 = vmatpush2.bf16.msra.mxu0 0
        %7955 = vmatprep.subr.bf16.mxu0 0
        %7956 = vmatpush2.bf16.msra.mxu0 0
        %7957 = vmatprep.subr.bf16.mxu0 0
        %7958 = vmatpush2.bf16.msra.mxu0 0
        %7959 = vmatprep.subr.bf16.mxu0 0
        %7960 = vmatpush2.bf16.msra.mxu0 0
        %7961 = vmatprep.subr.bf16.mxu0 0
        %7962 = vmatpush2.bf16.msra.mxu0 0
        %7963 = vmatprep.subr.bf16.mxu0 0
        %7964 = vmatpush2.bf16.msra.mxu0 0
        %7965 = vmatprep.subr.bf16.mxu0 0
        %7966 = vmatpush2.bf16.msra.mxu0 0
        %7967 = vmatprep.subr.bf16.mxu0 0
        %7968 = vmatpush2.bf16.msra.mxu0 0
        %7969 = vmatprep.mubr.bf16.mxu0 0
        %7970 = vmatmul.mubr.bf16.gmra.mxu0 %v7910
        %v7971 = vpop.f32.mrf.mxu0
        %v7972 = vadd.f32 0.0, %v7971
        %v7973 = vpop.f32.mrf.mxu0
        %v7974 = vpop.f32.mrf.mxu0
        %v7975 = vadd.f32 0.0, %v7974
        %v7976 = vpop.f32.mrf.mxu0
        %7977 = vmatprep.mubr.bf16.mxu0 0
        %7978 = vmatmul.mubr.bf16.gmra.mxu0 %v7913
        %v7979 = vpop.f32.mrf.mxu0
        %v7980 = vadd.f32 0.0, %v7979
        %v7981 = vpop.f32.mrf.mxu0
        %v7982 = vpop.f32.mrf.mxu0
        %v7983 = vadd.f32 0.0, %v7982
        %v7984 = vpop.f32.mrf.mxu0
        %7985 = vmatprep.mubr.bf16.mxu0 0
        %7986 = vmatmul.mubr.bf16.gmra.mxu0 %v7916
        %v7987 = vpop.f32.mrf.mxu0
        %v7988 = vadd.f32 0.0, %v7987
        %v7989 = vpop.f32.mrf.mxu0
        %v7990 = vpop.f32.mrf.mxu0
        %v7991 = vadd.f32 0.0, %v7990
        %v7992 = vpop.f32.mrf.mxu0
        %7993 = vmatprep.mubr.bf16.mxu0 0
        %7994 = vmatmul.mubr.bf16.gmra.mxu0 %v7919
        %v7995 = vpop.f32.mrf.mxu0
        %v7996 = vadd.f32 0.0, %v7995
        %v7997 = vpop.f32.mrf.mxu0
        %v7998 = vpop.f32.mrf.mxu0
        %v7999 = vadd.f32 0.0, %v7998
        %v8000 = vpop.f32.mrf.mxu0
        %8001 = vmatprep.mubr.bf16.mxu0 0
        %8002 = vmatmul.mubr.bf16.gmra.mxu0 %v7922
        %v8003 = vpop.f32.mrf.mxu0
        %v8004 = vadd.f32 0.0, %v8003
        %v8005 = vpop.f32.mrf.mxu0
        %v8006 = vpop.f32.mrf.mxu0
        %v8007 = vadd.f32 0.0, %v8006
        %v8008 = vpop.f32.mrf.mxu0
        %8009 = vmatprep.mubr.bf16.mxu0 0
        %8010 = vmatmul.mubr.bf16.gmra.mxu0 %v7925
        %v8011 = vpop.f32.mrf.mxu0
        %v8012 = vadd.f32 0.0, %v8011
        %v8013 = vpop.f32.mrf.mxu0
        %v8014 = vpop.f32.mrf.mxu0
        %v8015 = vadd.f32 0.0, %v8014
        %v8016 = vpop.f32.mrf.mxu0
        %8017 = vmatprep.mubr.bf16.mxu0 0
        %8018 = vmatmul.mubr.bf16.gmra.mxu0 %v7928
        %v8019 = vpop.f32.mrf.mxu0
        %v8020 = vadd.f32 0.0, %v8019
        %v8021 = vpop.f32.mrf.mxu0
        %v8022 = vpop.f32.mrf.mxu0
        %v8023 = vadd.f32 0.0, %v8022
        %v8024 = vpop.f32.mrf.mxu0
        %8025 = vmatprep.mubr.bf16.mxu0 0
        %8026 = vmatmul.mubr.bf16.gmra.mxu0 %v7931
        %v8027 = vpop.f32.mrf.mxu0
        %v8028 = vadd.f32 0.0, %v8027
        %v8029 = vpop.f32.mrf.mxu0
        %v8030 = vpop.f32.mrf.mxu0
        %v8031 = vadd.f32 0.0, %v8030
        %v8032 = vpop.f32.mrf.mxu0
        %8033 = vdwg.mxu0
        %v8037 = vunpack.c.l.b16 %v7797
        %v8038 = vunpack.c.l.b16 %v7798
        %v8039 = vunpack.c.l.b16 %v7799
        %v8040 = vpack.c.b16 %v8038, %v8037
        %v8041 = vpack.c.b16 %v8039, %v8039
        %v8044 = vsel %vm7908, %v7865, 0
        %v8047 = vsel %vm7908, %v7866, 0
        %v8050 = vsel %vm7908, %v7867, 0
        %v8053 = vsel %vm7908, %v7868, 0
        %v8056 = vsel %vm7908, %v7869, 0
        %v8059 = vsel %vm7908, %v7870, 0
        %v8062 = vsel %vm7908, %v7871, 0
        %v8065 = vsel %vm7908, %v7872, 0
        %v8068 = vsel %vm7933, %v8041, 0
        %8070 = vmatprep.subr.bf16.mxu0 0
        %8071 = vmatpush1.bf16.msra.mxu0 0
        %8072 = vmatprep.subr.bf16.mxu0 0
        %8073 = vmatpush1.bf16.msra.mxu0 0
        %8074 = vmatprep.subr.bf16.mxu0 0
        %8075 = vmatpush1.bf16.msra.mxu0 0
        %8076 = vmatprep.subr.bf16.mxu0 0
        %8077 = vmatpush1.bf16.msra.mxu0 0
        %8078 = vmatprep.subr.bf16.mxu0 0
        %8079 = vmatpush1.bf16.msra.mxu0 0
        %8080 = vmatprep.subr.bf16.mxu0 0
        %8081 = vmatpush1.bf16.msra.mxu0 0
        %8082 = vmatprep.subr.bf16.mxu0 0
        %8083 = vmatpush1.bf16.msra.mxu0 %v8068
        %8084 = vmatprep.subr.bf16.mxu0 0
        %8085 = vmatpush1.bf16.msra.mxu0 %v8040
        %8086 = vmatprep.subr.bf16.mxu0 0
        %8087 = vmatpush2.bf16.msra.mxu0 0
        %8088 = vmatprep.subr.bf16.mxu0 0
        %8089 = vmatpush2.bf16.msra.mxu0 0
        %8090 = vmatprep.subr.bf16.mxu0 0
        %8091 = vmatpush2.bf16.msra.mxu0 0
        %8092 = vmatprep.subr.bf16.mxu0 0
        %8093 = vmatpush2.bf16.msra.mxu0 0
        %8094 = vmatprep.subr.bf16.mxu0 0
        %8095 = vmatpush2.bf16.msra.mxu0 0
        %8096 = vmatprep.subr.bf16.mxu0 0
        %8097 = vmatpush2.bf16.msra.mxu0 0
        %8098 = vmatprep.subr.bf16.mxu0 0
        %8099 = vmatpush2.bf16.msra.mxu0 0
        %8100 = vmatprep.subr.bf16.mxu0 0
        %8101 = vmatpush2.bf16.msra.mxu0 0
        %8102 = vmatprep.mubr.bf16.mxu0 0
        %8103 = vmatmul.mubr.bf16.gmra.mxu0 %v8044
        %v8104 = vpop.f32.mrf.mxu0
        %v8105 = vadd.f32 %v7972, %v8104
        %v8106 = vpop.f32.mrf.mxu0
        %v8107 = vpop.f32.mrf.mxu0
        %v8108 = vadd.f32 %v7975, %v8107
        %v8109 = vpop.f32.mrf.mxu0
        %8110 = vmatprep.mubr.bf16.mxu0 0
        %8111 = vmatmul.mubr.bf16.gmra.mxu0 %v8047
        %v8112 = vpop.f32.mrf.mxu0
        %v8113 = vadd.f32 %v7980, %v8112
        %v8114 = vpop.f32.mrf.mxu0
        %v8115 = vpop.f32.mrf.mxu0
        %v8116 = vadd.f32 %v7983, %v8115
        %v8117 = vpop.f32.mrf.mxu0
        %8118 = vmatprep.mubr.bf16.mxu0 0
        %8119 = vmatmul.mubr.bf16.gmra.mxu0 %v8050
        %v8120 = vpop.f32.mrf.mxu0
        %v8121 = vadd.f32 %v7988, %v8120
        %v8122 = vpop.f32.mrf.mxu0
        %v8123 = vpop.f32.mrf.mxu0
        %v8124 = vadd.f32 %v7991, %v8123
        %v8125 = vpop.f32.mrf.mxu0
        %8126 = vmatprep.mubr.bf16.mxu0 0
        %8127 = vmatmul.mubr.bf16.gmra.mxu0 %v8053
        %v8128 = vpop.f32.mrf.mxu0
        %v8129 = vadd.f32 %v7996, %v8128
        %v8130 = vpop.f32.mrf.mxu0
        %v8131 = vpop.f32.mrf.mxu0
        %v8132 = vadd.f32 %v7999, %v8131
        %v8133 = vpop.f32.mrf.mxu0
        %8134 = vmatprep.mubr.bf16.mxu0 0
        %8135 = vmatmul.mubr.bf16.gmra.mxu0 %v8056
        %v8136 = vpop.f32.mrf.mxu0
        %v8137 = vadd.f32 %v8004, %v8136
        %v8138 = vpop.f32.mrf.mxu0
        %v8139 = vpop.f32.mrf.mxu0
        %v8140 = vadd.f32 %v8007, %v8139
        %v8141 = vpop.f32.mrf.mxu0
        %8142 = vmatprep.mubr.bf16.mxu0 0
        %8143 = vmatmul.mubr.bf16.gmra.mxu0 %v8059
        %v8144 = vpop.f32.mrf.mxu0
        %v8145 = vadd.f32 %v8012, %v8144
        %v8146 = vpop.f32.mrf.mxu0
        %v8147 = vpop.f32.mrf.mxu0
        %v8148 = vadd.f32 %v8015, %v8147
        %v8149 = vpop.f32.mrf.mxu0
        %8150 = vmatprep.mubr.bf16.mxu0 0
        %8151 = vmatmul.mubr.bf16.gmra.mxu0 %v8062
        %v8152 = vpop.f32.mrf.mxu0
        %v8153 = vadd.f32 %v8020, %v8152
        %v8154 = vpop.f32.mrf.mxu0
        %v8155 = vpop.f32.mrf.mxu0
        %v8156 = vadd.f32 %v8023, %v8155
        %v8157 = vpop.f32.mrf.mxu0
        %8158 = vmatprep.mubr.bf16.mxu0 0
        %8159 = vmatmul.mubr.bf16.gmra.mxu0 %v8065
        %v8160 = vpop.f32.mrf.mxu0
        %v8161 = vadd.f32 %v8028, %v8160
        %v8162 = vpop.f32.mrf.mxu0
        %v8163 = vpop.f32.mrf.mxu0
        %v8164 = vadd.f32 %v8031, %v8163
        %v8165 = vpop.f32.mrf.mxu0
        %8166 = vdwg.mxu0
        %s8167 = sadd.s32 %s7846, 4294967233
        %s8168 = scalar_lea.vmem [#allocation2], %s8167
        %v8169 = vld [vmem:[%s8168] sm:$0xff]
        %v8170 = vld [vmem:[%s8168 + $0x8] sm:$0xff]
        %v8171 = vld [vmem:[%s8168 + $0x10] sm:$0xff]
        %v8172 = vld [vmem:[%s8168 + $0x18] sm:$0xff]
        %v8173 = vld [vmem:[%s8168 + $0x20] sm:$0xff]
        %v8174 = vld [vmem:[%s8168 + $0x28] sm:$0xff]
        %v8175 = vld [vmem:[%s8168 + $0x30] sm:$0xff]
        %v8176 = vld [vmem:[%s8168 + $0x38] sm:$0xff]
        %v8177 = vld [vmem:[%s8168 + $0x40] sm:$0xff]
        %v8178 = vld [vmem:[%s8168 + $0x48] sm:$0xff]
        %v8179 = vld [vmem:[%s8168 + $0x50] sm:$0xff]
        %v8180 = vld [vmem:[%s8168 + $0x58] sm:$0xff]
        %v8181 = vld [vmem:[%s8168 + $0x60] sm:$0xff]
        %v8182 = vld [vmem:[%s8168 + $0x68] sm:$0xff]
        %v8183 = vld [vmem:[%s8168 + $0x70] sm:$0xff]
        %v8184 = vld [vmem:[%s8168 + $0x78] sm:$0xff]
        %v8185 = vpack.c.bf16 %v8170, %v8169
        %v8186 = vpack.c.bf16 %v8172, %v8171
        %v8187 = vpack.c.bf16 %v8174, %v8173
        %v8188 = vpack.c.bf16 %v8176, %v8175
        %v8189 = vpack.c.bf16 %v8178, %v8177
        %v8190 = vpack.c.bf16 %v8180, %v8179
        %v8191 = vpack.c.bf16 %v8182, %v8181
        %v8192 = vpack.c.bf16 %v8184, %v8183
        %v8196 = vunpack.c.l.b16 %v7805
        %v8197 = vunpack.c.l.b16 %v7806
        %v8198 = vunpack.c.l.b16 %v7807
        %v8199 = vpack.c.b16 %v8197, %v8196
        %v8200 = vpack.c.b16 %v8198, %v8198
        %v8203 = vsel %vm7908, %v8185, 0
        %v8206 = vsel %vm7908, %v8186, 0
        %v8209 = vsel %vm7908, %v8187, 0
        %v8212 = vsel %vm7908, %v8188, 0
        %v8215 = vsel %vm7908, %v8189, 0
        %v8218 = vsel %vm7908, %v8190, 0
        %v8221 = vsel %vm7908, %v8191, 0
        %v8224 = vsel %vm7908, %v8192, 0
        %v8227 = vsel %vm7933, %v8200, 0
        %8229 = vmatprep.subr.bf16.mxu0 0
        %8230 = vmatpush1.bf16.msra.mxu0 0
        %8231 = vmatprep.subr.bf16.mxu0 0
        %8232 = vmatpush1.bf16.msra.mxu0 0
        %8233 = vmatprep.subr.bf16.mxu0 0
        %8234 = vmatpush1.bf16.msra.mxu0 0
        %8235 = vmatprep.subr.bf16.mxu0 0
        %8236 = vmatpush1.bf16.msra.mxu0 0
        %8237 = vmatprep.subr.bf16.mxu0 0
        %8238 = vmatpush1.bf16.msra.mxu0 0
        %8239 = vmatprep.subr.bf16.mxu0 0
        %8240 = vmatpush1.bf16.msra.mxu0 0
        %8241 = vmatprep.subr.bf16.mxu0 0
        %8242 = vmatpush1.bf16.msra.mxu0 %v8227
        %8243 = vmatprep.subr.bf16.mxu0 0
        %8244 = vmatpush1.bf16.msra.mxu0 %v8199
        %8245 = vmatprep.subr.bf16.mxu0 0
        %8246 = vmatpush2.bf16.msra.mxu0 0
        %8247 = vmatprep.subr.bf16.mxu0 0
        %8248 = vmatpush2.bf16.msra.mxu0 0
        %8249 = vmatprep.subr.bf16.mxu0 0
        %8250 = vmatpush2.bf16.msra.mxu0 0
        %8251 = vmatprep.subr.bf16.mxu0 0
        %8252 = vmatpush2.bf16.msra.mxu0 0
        %8253 = vmatprep.subr.bf16.mxu0 0
        %8254 = vmatpush2.bf16.msra.mxu0 0
        %8255 = vmatprep.subr.bf16.mxu0 0
        %8256 = vmatpush2.bf16.msra.mxu0 0
        %8257 = vmatprep.subr.bf16.mxu0 0
        %8258 = vmatpush2.bf16.msra.mxu0 0
        %8259 = vmatprep.subr.bf16.mxu0 0
        %8260 = vmatpush2.bf16.msra.mxu0 0
        %8261 = vmatprep.mubr.bf16.mxu0 0
        %8262 = vmatmul.mubr.bf16.gmra.mxu0 %v8203
        %v8263 = vpop.f32.mrf.mxu0
        %v8264 = vadd.f32 0.0, %v8263
        %v8265 = vpop.f32.mrf.mxu0
        %v8266 = vpop.f32.mrf.mxu0
        %v8267 = vadd.f32 0.0, %v8266
        %v8268 = vpop.f32.mrf.mxu0
        %8269 = vmatprep.mubr.bf16.mxu0 0
        %8270 = vmatmul.mubr.bf16.gmra.mxu0 %v8206
        %v8271 = vpop.f32.mrf.mxu0
        %v8272 = vadd.f32 0.0, %v8271
        %v8273 = vpop.f32.mrf.mxu0
        %v8274 = vpop.f32.mrf.mxu0
        %v8275 = vadd.f32 0.0, %v8274
        %v8276 = vpop.f32.mrf.mxu0
        %8277 = vmatprep.mubr.bf16.mxu0 0
        %8278 = vmatmul.mubr.bf16.gmra.mxu0 %v8209
        %v8279 = vpop.f32.mrf.mxu0
        %v8280 = vadd.f32 0.0, %v8279
        %v8281 = vpop.f32.mrf.mxu0
        %v8282 = vpop.f32.mrf.mxu0
        %v8283 = vadd.f32 0.0, %v8282
        %v8284 = vpop.f32.mrf.mxu0
        %8285 = vmatprep.mubr.bf16.mxu0 0
        %8286 = vmatmul.mubr.bf16.gmra.mxu0 %v8212
        %v8287 = vpop.f32.mrf.mxu0
        %v8288 = vadd.f32 0.0, %v8287
        %v8289 = vpop.f32.mrf.mxu0
        %v8290 = vpop.f32.mrf.mxu0
        %v8291 = vadd.f32 0.0, %v8290
        %v8292 = vpop.f32.mrf.mxu0
        %8293 = vmatprep.mubr.bf16.mxu0 0
        %8294 = vmatmul.mubr.bf16.gmra.mxu0 %v8215
        %v8295 = vpop.f32.mrf.mxu0
        %v8296 = vadd.f32 0.0, %v8295
        %v8297 = vpop.f32.mrf.mxu0
        %v8298 = vpop.f32.mrf.mxu0
        %v8299 = vadd.f32 0.0, %v8298
        %v8300 = vpop.f32.mrf.mxu0
        %8301 = vmatprep.mubr.bf16.mxu0 0
        %8302 = vmatmul.mubr.bf16.gmra.mxu0 %v8218
        %v8303 = vpop.f32.mrf.mxu0
        %v8304 = vadd.f32 0.0, %v8303
        %v8305 = vpop.f32.mrf.mxu0
        %v8306 = vpop.f32.mrf.mxu0
        %v8307 = vadd.f32 0.0, %v8306
        %v8308 = vpop.f32.mrf.mxu0
        %8309 = vmatprep.mubr.bf16.mxu0 0
        %8310 = vmatmul.mubr.bf16.gmra.mxu0 %v8221
        %v8311 = vpop.f32.mrf.mxu0
        %v8312 = vadd.f32 0.0, %v8311
        %v8313 = vpop.f32.mrf.mxu0
        %v8314 = vpop.f32.mrf.mxu0
        %v8315 = vadd.f32 0.0, %v8314
        %v8316 = vpop.f32.mrf.mxu0
        %8317 = vmatprep.mubr.bf16.mxu0 0
        %8318 = vmatmul.mubr.bf16.gmra.mxu0 %v8224
        %v8319 = vpop.f32.mrf.mxu0
        %v8320 = vadd.f32 0.0, %v8319
        %v8321 = vpop.f32.mrf.mxu0
        %v8322 = vpop.f32.mrf.mxu0
        %v8323 = vadd.f32 0.0, %v8322
        %v8324 = vpop.f32.mrf.mxu0
        %8325 = vdwg.mxu0
        %v8326 = vadd.f32 %v8105, %v8264
        %v8327 = vadd.f32 %v8108, %v8267
        %v8328 = vadd.f32 %v8113, %v8272
        %v8329 = vadd.f32 %v8116, %v8275
        %v8330 = vadd.f32 %v8121, %v8280
        %v8331 = vadd.f32 %v8124, %v8283
        %v8332 = vadd.f32 %v8129, %v8288
        %v8333 = vadd.f32 %v8132, %v8291
        %v8334 = vadd.f32 %v8137, %v8296
        %v8335 = vadd.f32 %v8140, %v8299
        %v8336 = vadd.f32 %v8145, %v8304
        %v8337 = vadd.f32 %v8148, %v8307
        %v8338 = vadd.f32 %v8153, %v8312
        %v8339 = vadd.f32 %v8156, %v8315
        %v8340 = vadd.f32 %v8161, %v8320
        %v8341 = vadd.f32 %v8164, %v8323
        %s8342 = sadd.s32 %s7846, 4294967295
        %s8343 = scalar_lea.vmem [#allocation2], %s8342
        %v8344 = vld [vmem:[%s8343] sm:$0xff]
        %v8345 = vld [vmem:[%s8343 + $0x8] sm:$0xff]
        %v8346 = vld [vmem:[%s8343 + $0x10] sm:$0xff]
        %v8347 = vld [vmem:[%s8343 + $0x18] sm:$0xff]
        %v8348 = vld [vmem:[%s8343 + $0x20] sm:$0xff]
        %v8349 = vld [vmem:[%s8343 + $0x28] sm:$0xff]
        %v8350 = vld [vmem:[%s8343 + $0x30] sm:$0xff]
        %v8351 = vld [vmem:[%s8343 + $0x38] sm:$0xff]
        %v8352 = vld [vmem:[%s8343 + $0x40] sm:$0xff]
        %v8353 = vld [vmem:[%s8343 + $0x48] sm:$0xff]
        %v8354 = vld [vmem:[%s8343 + $0x50] sm:$0xff]
        %v8355 = vld [vmem:[%s8343 + $0x58] sm:$0xff]
        %v8356 = vld [vmem:[%s8343 + $0x60] sm:$0xff]
        %v8357 = vld [vmem:[%s8343 + $0x68] sm:$0xff]
        %v8358 = vld [vmem:[%s8343 + $0x70] sm:$0xff]
        %v8359 = vld [vmem:[%s8343 + $0x78] sm:$0xff]
        %v8360 = vpack.c.bf16 %v8345, %v8344
        %v8361 = vpack.c.bf16 %v8347, %v8346
        %v8362 = vpack.c.bf16 %v8349, %v8348
        %v8363 = vpack.c.bf16 %v8351, %v8350
        %v8364 = vpack.c.bf16 %v8353, %v8352
        %v8365 = vpack.c.bf16 %v8355, %v8354
        %v8366 = vpack.c.bf16 %v8357, %v8356
        %v8367 = vpack.c.bf16 %v8359, %v8358
        %v8371 = vunpack.c.l.b16 %v7809
        %v8372 = vunpack.c.l.b16 %v7810
        %v8373 = vunpack.c.l.b16 %v7811
        %v8374 = vpack.c.b16 %v8372, %v8371
        %v8375 = vpack.c.b16 %v8373, %v8373
        %v8378 = vsel %vm7908, %v8360, 0
        %v8381 = vsel %vm7908, %v8361, 0
        %v8384 = vsel %vm7908, %v8362, 0
        %v8387 = vsel %vm7908, %v8363, 0
        %v8390 = vsel %vm7908, %v8364, 0
        %v8393 = vsel %vm7908, %v8365, 0
        %v8396 = vsel %vm7908, %v8366, 0
        %v8399 = vsel %vm7908, %v8367, 0
        %v8402 = vsel %vm7933, %v8375, 0
        %8404 = vmatprep.subr.bf16.mxu0 0
        %8405 = vmatpush1.bf16.msra.mxu0 0
        %8406 = vmatprep.subr.bf16.mxu0 0
        %8407 = vmatpush1.bf16.msra.mxu0 0
        %8408 = vmatprep.subr.bf16.mxu0 0
        %8409 = vmatpush1.bf16.msra.mxu0 0
        %8410 = vmatprep.subr.bf16.mxu0 0
        %8411 = vmatpush1.bf16.msra.mxu0 0
        %8412 = vmatprep.subr.bf16.mxu0 0
        %8413 = vmatpush1.bf16.msra.mxu0 0
        %8414 = vmatprep.subr.bf16.mxu0 0
        %8415 = vmatpush1.bf16.msra.mxu0 0
        %8416 = vmatprep.subr.bf16.mxu0 0
        %8417 = vmatpush1.bf16.msra.mxu0 %v8402
        %8418 = vmatprep.subr.bf16.mxu0 0
        %8419 = vmatpush1.bf16.msra.mxu0 %v8374
        %8420 = vmatprep.subr.bf16.mxu0 0
        %8421 = vmatpush2.bf16.msra.mxu0 0
        %8422 = vmatprep.subr.bf16.mxu0 0
        %8423 = vmatpush2.bf16.msra.mxu0 0
        %8424 = vmatprep.subr.bf16.mxu0 0
        %8425 = vmatpush2.bf16.msra.mxu0 0
        %8426 = vmatprep.subr.bf16.mxu0 0
        %8427 = vmatpush2.bf16.msra.mxu0 0
        %8428 = vmatprep.subr.bf16.mxu0 0
        %8429 = vmatpush2.bf16.msra.mxu0 0
        %8430 = vmatprep.subr.bf16.mxu0 0
        %8431 = vmatpush2.bf16.msra.mxu0 0
        %8432 = vmatprep.subr.bf16.mxu0 0
        %8433 = vmatpush2.bf16.msra.mxu0 0
        %8434 = vmatprep.subr.bf16.mxu0 0
        %8435 = vmatpush2.bf16.msra.mxu0 0
        %8436 = vmatprep.mubr.bf16.mxu0 0
        %8437 = vmatmul.mubr.bf16.gmra.mxu0 %v8378
        %v8438 = vpop.f32.mrf.mxu0
        %v8439 = vadd.f32 0.0, %v8438
        %v8440 = vpop.f32.mrf.mxu0
        %v8441 = vpop.f32.mrf.mxu0
        %v8442 = vadd.f32 0.0, %v8441
        %v8443 = vpop.f32.mrf.mxu0
        %8444 = vmatprep.mubr.bf16.mxu0 0
        %8445 = vmatmul.mubr.bf16.gmra.mxu0 %v8381
        %v8446 = vpop.f32.mrf.mxu0
        %v8447 = vadd.f32 0.0, %v8446
        %v8448 = vpop.f32.mrf.mxu0
        %v8449 = vpop.f32.mrf.mxu0
        %v8450 = vadd.f32 0.0, %v8449
        %v8451 = vpop.f32.mrf.mxu0
        %8452 = vmatprep.mubr.bf16.mxu0 0
        %8453 = vmatmul.mubr.bf16.gmra.mxu0 %v8384
        %v8454 = vpop.f32.mrf.mxu0
        %v8455 = vadd.f32 0.0, %v8454
        %v8456 = vpop.f32.mrf.mxu0
        %v8457 = vpop.f32.mrf.mxu0
        %v8458 = vadd.f32 0.0, %v8457
        %v8459 = vpop.f32.mrf.mxu0
        %8460 = vmatprep.mubr.bf16.mxu0 0
        %8461 = vmatmul.mubr.bf16.gmra.mxu0 %v8387
        %v8462 = vpop.f32.mrf.mxu0
        %v8463 = vadd.f32 0.0, %v8462
        %v8464 = vpop.f32.mrf.mxu0
        %v8465 = vpop.f32.mrf.mxu0
        %v8466 = vadd.f32 0.0, %v8465
        %v8467 = vpop.f32.mrf.mxu0
        %8468 = vmatprep.mubr.bf16.mxu0 0
        %8469 = vmatmul.mubr.bf16.gmra.mxu0 %v8390
        %v8470 = vpop.f32.mrf.mxu0
        %v8471 = vadd.f32 0.0, %v8470
        %v8472 = vpop.f32.mrf.mxu0
        %v8473 = vpop.f32.mrf.mxu0
        %v8474 = vadd.f32 0.0, %v8473
        %v8475 = vpop.f32.mrf.mxu0
        %8476 = vmatprep.mubr.bf16.mxu0 0
        %8477 = vmatmul.mubr.bf16.gmra.mxu0 %v8393
        %v8478 = vpop.f32.mrf.mxu0
        %v8479 = vadd.f32 0.0, %v8478
        %v8480 = vpop.f32.mrf.mxu0
        %v8481 = vpop.f32.mrf.mxu0
        %v8482 = vadd.f32 0.0, %v8481
        %v8483 = vpop.f32.mrf.mxu0
        %8484 = vmatprep.mubr.bf16.mxu0 0
        %8485 = vmatmul.mubr.bf16.gmra.mxu0 %v8396
        %v8486 = vpop.f32.mrf.mxu0
        %v8487 = vadd.f32 0.0, %v8486
        %v8488 = vpop.f32.mrf.mxu0
        %v8489 = vpop.f32.mrf.mxu0
        %v8490 = vadd.f32 0.0, %v8489
        %v8491 = vpop.f32.mrf.mxu0
        %8492 = vmatprep.mubr.bf16.mxu0 0
        %8493 = vmatmul.mubr.bf16.gmra.mxu0 %v8399
        %v8494 = vpop.f32.mrf.mxu0
        %v8495 = vadd.f32 0.0, %v8494
        %v8496 = vpop.f32.mrf.mxu0
        %v8497 = vpop.f32.mrf.mxu0
        %v8498 = vadd.f32 0.0, %v8497
        %v8499 = vpop.f32.mrf.mxu0
        %8500 = vdwg.mxu0
        %v8501 = vadd.f32 %v8326, %v8439
        %v8502 = vadd.f32 %v8327, %v8442
        %v8503 = vadd.f32 %v8328, %v8447
        %v8504 = vadd.f32 %v8329, %v8450
        %v8505 = vadd.f32 %v8330, %v8455
        %v8506 = vadd.f32 %v8331, %v8458
        %v8507 = vadd.f32 %v8332, %v8463
        %v8508 = vadd.f32 %v8333, %v8466
        %v8509 = vadd.f32 %v8334, %v8471
        %v8510 = vadd.f32 %v8335, %v8474
        %v8511 = vadd.f32 %v8336, %v8479
        %v8512 = vadd.f32 %v8337, %v8482
        %v8513 = vadd.f32 %v8338, %v8487
        %v8514 = vadd.f32 %v8339, %v8490
        %v8515 = vadd.f32 %v8340, %v8495
        %v8516 = vadd.f32 %v8341, %v8498
        %s8517 = scalar_lea.vmem [#allocation2], %s7846
        %v8518 = vld [vmem:[%s8517] sm:$0xff]
        %v8519 = vld [vmem:[%s8517 + $0x8] sm:$0xff]
        %v8520 = vld [vmem:[%s8517 + $0x10] sm:$0xff]
        %v8521 = vld [vmem:[%s8517 + $0x18] sm:$0xff]
        %v8522 = vld [vmem:[%s8517 + $0x20] sm:$0xff]
        %v8523 = vld [vmem:[%s8517 + $0x28] sm:$0xff]
        %v8524 = vld [vmem:[%s8517 + $0x30] sm:$0xff]
        %v8525 = vld [vmem:[%s8517 + $0x38] sm:$0xff]
        %v8526 = vld [vmem:[%s8517 + $0x40] sm:$0xff]
        %v8527 = vld [vmem:[%s8517 + $0x48] sm:$0xff]
        %v8528 = vld [vmem:[%s8517 + $0x50] sm:$0xff]
        %v8529 = vld [vmem:[%s8517 + $0x58] sm:$0xff]
        %v8530 = vld [vmem:[%s8517 + $0x60] sm:$0xff]
        %v8531 = vld [vmem:[%s8517 + $0x68] sm:$0xff]
        %v8532 = vld [vmem:[%s8517 + $0x70] sm:$0xff]
        %v8533 = vld [vmem:[%s8517 + $0x78] sm:$0xff]
        %v8534 = vpack.c.bf16 %v8519, %v8518
        %v8535 = vpack.c.bf16 %v8521, %v8520
        %v8536 = vpack.c.bf16 %v8523, %v8522
        %v8537 = vpack.c.bf16 %v8525, %v8524
        %v8538 = vpack.c.bf16 %v8527, %v8526
        %v8539 = vpack.c.bf16 %v8529, %v8528
        %v8540 = vpack.c.bf16 %v8531, %v8530
        %v8541 = vpack.c.bf16 %v8533, %v8532
        %v8545 = vunpack.c.l.b16 %v7813
        %v8546 = vunpack.c.l.b16 %v7814
        %v8547 = vunpack.c.l.b16 %v7815
        %v8548 = vpack.c.b16 %v8546, %v8545
        %v8549 = vpack.c.b16 %v8547, %v8547
        %v8552 = vsel %vm7908, %v8534, 0
        %v8555 = vsel %vm7908, %v8535, 0
        %v8558 = vsel %vm7908, %v8536, 0
        %v8561 = vsel %vm7908, %v8537, 0
        %v8564 = vsel %vm7908, %v8538, 0
        %v8567 = vsel %vm7908, %v8539, 0
        %v8570 = vsel %vm7908, %v8540, 0
        %v8573 = vsel %vm7908, %v8541, 0
        %v8576 = vsel %vm7933, %v8549, 0
        %8578 = vmatprep.subr.bf16.mxu0 0
        %8579 = vmatpush1.bf16.msra.mxu0 0
        %8580 = vmatprep.subr.bf16.mxu0 0
        %8581 = vmatpush1.bf16.msra.mxu0 0
        %8582 = vmatprep.subr.bf16.mxu0 0
        %8583 = vmatpush1.bf16.msra.mxu0 0
        %8584 = vmatprep.subr.bf16.mxu0 0
        %8585 = vmatpush1.bf16.msra.mxu0 0
        %8586 = vmatprep.subr.bf16.mxu0 0
        %8587 = vmatpush1.bf16.msra.mxu0 0
        %8588 = vmatprep.subr.bf16.mxu0 0
        %8589 = vmatpush1.bf16.msra.mxu0 0
        %8590 = vmatprep.subr.bf16.mxu0 0
        %8591 = vmatpush1.bf16.msra.mxu0 %v8576
        %8592 = vmatprep.subr.bf16.mxu0 0
        %8593 = vmatpush1.bf16.msra.mxu0 %v8548
        %8594 = vmatprep.subr.bf16.mxu0 0
        %8595 = vmatpush2.bf16.msra.mxu0 0
        %8596 = vmatprep.subr.bf16.mxu0 0
        %8597 = vmatpush2.bf16.msra.mxu0 0
        %8598 = vmatprep.subr.bf16.mxu0 0
        %8599 = vmatpush2.bf16.msra.mxu0 0
        %8600 = vmatprep.subr.bf16.mxu0 0
        %8601 = vmatpush2.bf16.msra.mxu0 0
        %8602 = vmatprep.subr.bf16.mxu0 0
        %8603 = vmatpush2.bf16.msra.mxu0 0
        %8604 = vmatprep.subr.bf16.mxu0 0
        %8605 = vmatpush2.bf16.msra.mxu0 0
        %8606 = vmatprep.subr.bf16.mxu0 0
        %8607 = vmatpush2.bf16.msra.mxu0 0
        %8608 = vmatprep.subr.bf16.mxu0 0
        %8609 = vmatpush2.bf16.msra.mxu0 0
        %8610 = vmatprep.mubr.bf16.mxu0 0
        %8611 = vmatmul.mubr.bf16.gmra.mxu0 %v8552
        %v8612 = vpop.f32.mrf.mxu0
        %v8613 = vadd.f32 0.0, %v8612
        %v8614 = vpop.f32.mrf.mxu0
        %v8615 = vpop.f32.mrf.mxu0
        %v8616 = vadd.f32 0.0, %v8615
        %v8617 = vpop.f32.mrf.mxu0
        %8618 = vmatprep.mubr.bf16.mxu0 0
        %8619 = vmatmul.mubr.bf16.gmra.mxu0 %v8555
        %v8620 = vpop.f32.mrf.mxu0
        %v8621 = vadd.f32 0.0, %v8620
        %v8622 = vpop.f32.mrf.mxu0
        %v8623 = vpop.f32.mrf.mxu0
        %v8624 = vadd.f32 0.0, %v8623
        %v8625 = vpop.f32.mrf.mxu0
        %8626 = vmatprep.mubr.bf16.mxu0 0
        %8627 = vmatmul.mubr.bf16.gmra.mxu0 %v8558
        %v8628 = vpop.f32.mrf.mxu0
        %v8629 = vadd.f32 0.0, %v8628
        %v8630 = vpop.f32.mrf.mxu0
        %v8631 = vpop.f32.mrf.mxu0
        %v8632 = vadd.f32 0.0, %v8631
        %v8633 = vpop.f32.mrf.mxu0
        %8634 = vmatprep.mubr.bf16.mxu0 0
        %8635 = vmatmul.mubr.bf16.gmra.mxu0 %v8561
        %v8636 = vpop.f32.mrf.mxu0
        %v8637 = vadd.f32 0.0, %v8636
        %v8638 = vpop.f32.mrf.mxu0
        %v8639 = vpop.f32.mrf.mxu0
        %v8640 = vadd.f32 0.0, %v8639
        %v8641 = vpop.f32.mrf.mxu0
        %8642 = vmatprep.mubr.bf16.mxu0 0
        %8643 = vmatmul.mubr.bf16.gmra.mxu0 %v8564
        %v8644 = vpop.f32.mrf.mxu0
        %v8645 = vadd.f32 0.0, %v8644
        %v8646 = vpop.f32.mrf.mxu0
        %v8647 = vpop.f32.mrf.mxu0
        %v8648 = vadd.f32 0.0, %v8647
        %v8649 = vpop.f32.mrf.mxu0
        %8650 = vmatprep.mubr.bf16.mxu0 0
        %8651 = vmatmul.mubr.bf16.gmra.mxu0 %v8567
        %v8652 = vpop.f32.mrf.mxu0
        %v8653 = vadd.f32 0.0, %v8652
        %v8654 = vpop.f32.mrf.mxu0
        %v8655 = vpop.f32.mrf.mxu0
        %v8656 = vadd.f32 0.0, %v8655
        %v8657 = vpop.f32.mrf.mxu0
        %8658 = vmatprep.mubr.bf16.mxu0 0
        %8659 = vmatmul.mubr.bf16.gmra.mxu0 %v8570
        %v8660 = vpop.f32.mrf.mxu0
        %v8661 = vadd.f32 0.0, %v8660
        %v8662 = vpop.f32.mrf.mxu0
        %v8663 = vpop.f32.mrf.mxu0
        %v8664 = vadd.f32 0.0, %v8663
        %v8665 = vpop.f32.mrf.mxu0
        %8666 = vmatprep.mubr.bf16.mxu0 0
        %8667 = vmatmul.mubr.bf16.gmra.mxu0 %v8573
        %v8668 = vpop.f32.mrf.mxu0
        %v8669 = vadd.f32 0.0, %v8668
        %v8670 = vpop.f32.mrf.mxu0
        %v8671 = vpop.f32.mrf.mxu0
        %v8672 = vadd.f32 0.0, %v8671
        %v8673 = vpop.f32.mrf.mxu0
        %8674 = vdwg.mxu0
        %v8675 = vadd.f32 %v8501, %v8613
        %v8676 = vadd.f32 %v8502, %v8616
        %v8677 = vadd.f32 %v8503, %v8621
        %v8678 = vadd.f32 %v8504, %v8624
        %v8679 = vadd.f32 %v8505, %v8629
        %v8680 = vadd.f32 %v8506, %v8632
        %v8681 = vadd.f32 %v8507, %v8637
        %v8682 = vadd.f32 %v8508, %v8640
        %v8683 = vadd.f32 %v8509, %v8645
        %v8684 = vadd.f32 %v8510, %v8648
        %v8685 = vadd.f32 %v8511, %v8653
        %v8686 = vadd.f32 %v8512, %v8656
        %v8687 = vadd.f32 %v8513, %v8661
        %v8688 = vadd.f32 %v8514, %v8664
        %v8689 = vadd.f32 %v8515, %v8669
        %v8690 = vadd.f32 %v8516, %v8672
        %s8691 = sadd.s32 %s7846, 1
        %s8692 = scalar_lea.vmem [#allocation2], %s8691
        %v8693 = vld [vmem:[%s8692] sm:$0xff]
        %v8694 = vld [vmem:[%s8692 + $0x8] sm:$0xff]
        %v8695 = vld [vmem:[%s8692 + $0x10] sm:$0xff]
        %v8696 = vld [vmem:[%s8692 + $0x18] sm:$0xff]
        %v8697 = vld [vmem:[%s8692 + $0x20] sm:$0xff]
        %v8698 = vld [vmem:[%s8692 + $0x28] sm:$0xff]
        %v8699 = vld [vmem:[%s8692 + $0x30] sm:$0xff]
        %v8700 = vld [vmem:[%s8692 + $0x38] sm:$0xff]
        %v8701 = vld [vmem:[%s8692 + $0x40] sm:$0xff]
        %v8702 = vld [vmem:[%s8692 + $0x48] sm:$0xff]
        %v8703 = vld [vmem:[%s8692 + $0x50] sm:$0xff]
        %v8704 = vld [vmem:[%s8692 + $0x58] sm:$0xff]
        %v8705 = vld [vmem:[%s8692 + $0x60] sm:$0xff]
        %v8706 = vld [vmem:[%s8692 + $0x68] sm:$0xff]
        %v8707 = vld [vmem:[%s8692 + $0x70] sm:$0xff]
        %v8708 = vld [vmem:[%s8692 + $0x78] sm:$0xff]
        %v8709 = vpack.c.bf16 %v8694, %v8693
        %v8710 = vpack.c.bf16 %v8696, %v8695
        %v8711 = vpack.c.bf16 %v8698, %v8697
        %v8712 = vpack.c.bf16 %v8700, %v8699
        %v8713 = vpack.c.bf16 %v8702, %v8701
        %v8714 = vpack.c.bf16 %v8704, %v8703
        %v8715 = vpack.c.bf16 %v8706, %v8705
        %v8716 = vpack.c.bf16 %v8708, %v8707
        %v8720 = vunpack.c.l.b16 %v7817
        %v8721 = vunpack.c.l.b16 %v7818
        %v8722 = vunpack.c.l.b16 %v7819
        %v8723 = vpack.c.b16 %v8721, %v8720
        %v8724 = vpack.c.b16 %v8722, %v8722
        %v8727 = vsel %vm7908, %v8709, 0
        %v8730 = vsel %vm7908, %v8710, 0
        %v8733 = vsel %vm7908, %v8711, 0
        %v8736 = vsel %vm7908, %v8712, 0
        %v8739 = vsel %vm7908, %v8713, 0
        %v8742 = vsel %vm7908, %v8714, 0
        %v8745 = vsel %vm7908, %v8715, 0
        %v8748 = vsel %vm7908, %v8716, 0
        %v8751 = vsel %vm7933, %v8724, 0
        %8753 = vmatprep.subr.bf16.mxu0 0
        %8754 = vmatpush1.bf16.msra.mxu0 0
        %8755 = vmatprep.subr.bf16.mxu0 0
        %8756 = vmatpush1.bf16.msra.mxu0 0
        %8757 = vmatprep.subr.bf16.mxu0 0
        %8758 = vmatpush1.bf16.msra.mxu0 0
        %8759 = vmatprep.subr.bf16.mxu0 0
        %8760 = vmatpush1.bf16.msra.mxu0 0
        %8761 = vmatprep.subr.bf16.mxu0 0
        %8762 = vmatpush1.bf16.msra.mxu0 0
        %8763 = vmatprep.subr.bf16.mxu0 0
        %8764 = vmatpush1.bf16.msra.mxu0 0
        %8765 = vmatprep.subr.bf16.mxu0 0
        %8766 = vmatpush1.bf16.msra.mxu0 %v8751
        %8767 = vmatprep.subr.bf16.mxu0 0
        %8768 = vmatpush1.bf16.msra.mxu0 %v8723
        %8769 = vmatprep.subr.bf16.mxu0 0
        %8770 = vmatpush2.bf16.msra.mxu0 0
        %8771 = vmatprep.subr.bf16.mxu0 0
        %8772 = vmatpush2.bf16.msra.mxu0 0
        %8773 = vmatprep.subr.bf16.mxu0 0
        %8774 = vmatpush2.bf16.msra.mxu0 0
        %8775 = vmatprep.subr.bf16.mxu0 0
        %8776 = vmatpush2.bf16.msra.mxu0 0
        %8777 = vmatprep.subr.bf16.mxu0 0
        %8778 = vmatpush2.bf16.msra.mxu0 0
        %8779 = vmatprep.subr.bf16.mxu0 0
        %8780 = vmatpush2.bf16.msra.mxu0 0
        %8781 = vmatprep.subr.bf16.mxu0 0
        %8782 = vmatpush2.bf16.msra.mxu0 0
        %8783 = vmatprep.subr.bf16.mxu0 0
        %8784 = vmatpush2.bf16.msra.mxu0 0
        %8785 = vmatprep.mubr.bf16.mxu0 0
        %8786 = vmatmul.mubr.bf16.gmra.mxu0 %v8727
        %v8787 = vpop.f32.mrf.mxu0
        %v8788 = vadd.f32 0.0, %v8787
        %v8789 = vpop.f32.mrf.mxu0
        %v8790 = vpop.f32.mrf.mxu0
        %v8791 = vadd.f32 0.0, %v8790
        %v8792 = vpop.f32.mrf.mxu0
        %8793 = vmatprep.mubr.bf16.mxu0 0
        %8794 = vmatmul.mubr.bf16.gmra.mxu0 %v8730
        %v8795 = vpop.f32.mrf.mxu0
        %v8796 = vadd.f32 0.0, %v8795
        %v8797 = vpop.f32.mrf.mxu0
        %v8798 = vpop.f32.mrf.mxu0
        %v8799 = vadd.f32 0.0, %v8798
        %v8800 = vpop.f32.mrf.mxu0
        %8801 = vmatprep.mubr.bf16.mxu0 0
        %8802 = vmatmul.mubr.bf16.gmra.mxu0 %v8733
        %v8803 = vpop.f32.mrf.mxu0
        %v8804 = vadd.f32 0.0, %v8803
        %v8805 = vpop.f32.mrf.mxu0
        %v8806 = vpop.f32.mrf.mxu0
        %v8807 = vadd.f32 0.0, %v8806
        %v8808 = vpop.f32.mrf.mxu0
        %8809 = vmatprep.mubr.bf16.mxu0 0
        %8810 = vmatmul.mubr.bf16.gmra.mxu0 %v8736
        %v8811 = vpop.f32.mrf.mxu0
        %v8812 = vadd.f32 0.0, %v8811
        %v8813 = vpop.f32.mrf.mxu0
        %v8814 = vpop.f32.mrf.mxu0
        %v8815 = vadd.f32 0.0, %v8814
        %v8816 = vpop.f32.mrf.mxu0
        %8817 = vmatprep.mubr.bf16.mxu0 0
        %8818 = vmatmul.mubr.bf16.gmra.mxu0 %v8739
        %v8819 = vpop.f32.mrf.mxu0
        %v8820 = vadd.f32 0.0, %v8819
        %v8821 = vpop.f32.mrf.mxu0
        %v8822 = vpop.f32.mrf.mxu0
        %v8823 = vadd.f32 0.0, %v8822
        %v8824 = vpop.f32.mrf.mxu0
        %8825 = vmatprep.mubr.bf16.mxu0 0
        %8826 = vmatmul.mubr.bf16.gmra.mxu0 %v8742
        %v8827 = vpop.f32.mrf.mxu0
        %v8828 = vadd.f32 0.0, %v8827
        %v8829 = vpop.f32.mrf.mxu0
        %v8830 = vpop.f32.mrf.mxu0
        %v8831 = vadd.f32 0.0, %v8830
        %v8832 = vpop.f32.mrf.mxu0
        %8833 = vmatprep.mubr.bf16.mxu0 0
        %8834 = vmatmul.mubr.bf16.gmra.mxu0 %v8745
        %v8835 = vpop.f32.mrf.mxu0
        %v8836 = vadd.f32 0.0, %v8835
        %v8837 = vpop.f32.mrf.mxu0
        %v8838 = vpop.f32.mrf.mxu0
        %v8839 = vadd.f32 0.0, %v8838
        %v8840 = vpop.f32.mrf.mxu0
        %8841 = vmatprep.mubr.bf16.mxu0 0
        %8842 = vmatmul.mubr.bf16.gmra.mxu0 %v8748
        %v8843 = vpop.f32.mrf.mxu0
        %v8844 = vadd.f32 0.0, %v8843
        %v8845 = vpop.f32.mrf.mxu0
        %v8846 = vpop.f32.mrf.mxu0
        %v8847 = vadd.f32 0.0, %v8846
        %v8848 = vpop.f32.mrf.mxu0
        %8849 = vdwg.mxu0
        %v8850 = vadd.f32 %v8675, %v8788
        %v8851 = vadd.f32 %v8676, %v8791
        %v8852 = vadd.f32 %v8677, %v8796
        %v8853 = vadd.f32 %v8678, %v8799
        %v8854 = vadd.f32 %v8679, %v8804
        %v8855 = vadd.f32 %v8680, %v8807
        %v8856 = vadd.f32 %v8681, %v8812
        %v8857 = vadd.f32 %v8682, %v8815
        %v8858 = vadd.f32 %v8683, %v8820
        %v8859 = vadd.f32 %v8684, %v8823
        %v8860 = vadd.f32 %v8685, %v8828
        %v8861 = vadd.f32 %v8686, %v8831
        %v8862 = vadd.f32 %v8687, %v8836
        %v8863 = vadd.f32 %v8688, %v8839
        %v8864 = vadd.f32 %v8689, %v8844
        %v8865 = vadd.f32 %v8690, %v8847
        %s8866 = sadd.s32 %s7846, 63
        %s8867 = scalar_lea.vmem [#allocation2], %s8866
        %v8868 = vld [vmem:[%s8867] sm:$0xff]
        %v8869 = vld [vmem:[%s8867 + $0x8] sm:$0xff]
        %v8870 = vld [vmem:[%s8867 + $0x10] sm:$0xff]
        %v8871 = vld [vmem:[%s8867 + $0x18] sm:$0xff]
        %v8872 = vld [vmem:[%s8867 + $0x20] sm:$0xff]
        %v8873 = vld [vmem:[%s8867 + $0x28] sm:$0xff]
        %v8874 = vld [vmem:[%s8867 + $0x30] sm:$0xff]
        %v8875 = vld [vmem:[%s8867 + $0x38] sm:$0xff]
        %v8876 = vld [vmem:[%s8867 + $0x40] sm:$0xff]
        %v8877 = vld [vmem:[%s8867 + $0x48] sm:$0xff]
        %v8878 = vld [vmem:[%s8867 + $0x50] sm:$0xff]
        %v8879 = vld [vmem:[%s8867 + $0x58] sm:$0xff]
        %v8880 = vld [vmem:[%s8867 + $0x60] sm:$0xff]
        %v8881 = vld [vmem:[%s8867 + $0x68] sm:$0xff]
        %v8882 = vld [vmem:[%s8867 + $0x70] sm:$0xff]
        %v8883 = vld [vmem:[%s8867 + $0x78] sm:$0xff]
        %v8884 = vpack.c.bf16 %v8869, %v8868
        %v8885 = vpack.c.bf16 %v8871, %v8870
        %v8886 = vpack.c.bf16 %v8873, %v8872
        %v8887 = vpack.c.bf16 %v8875, %v8874
        %v8888 = vpack.c.bf16 %v8877, %v8876
        %v8889 = vpack.c.bf16 %v8879, %v8878
        %v8890 = vpack.c.bf16 %v8881, %v8880
        %v8891 = vpack.c.bf16 %v8883, %v8882
        %v8895 = vunpack.c.l.b16 %v7821
        %v8896 = vunpack.c.l.b16 %v7822
        %v8897 = vunpack.c.l.b16 %v7823
        %v8898 = vpack.c.b16 %v8896, %v8895
        %v8899 = vpack.c.b16 %v8897, %v8897
        %v8902 = vsel %vm7908, %v8884, 0
        %v8905 = vsel %vm7908, %v8885, 0
        %v8908 = vsel %vm7908, %v8886, 0
        %v8911 = vsel %vm7908, %v8887, 0
        %v8914 = vsel %vm7908, %v8888, 0
        %v8917 = vsel %vm7908, %v8889, 0
        %v8920 = vsel %vm7908, %v8890, 0
        %v8923 = vsel %vm7908, %v8891, 0
        %v8926 = vsel %vm7933, %v8899, 0
        %8928 = vmatprep.subr.bf16.mxu0 0
        %8929 = vmatpush1.bf16.msra.mxu0 0
        %8930 = vmatprep.subr.bf16.mxu0 0
        %8931 = vmatpush1.bf16.msra.mxu0 0
        %8932 = vmatprep.subr.bf16.mxu0 0
        %8933 = vmatpush1.bf16.msra.mxu0 0
        %8934 = vmatprep.subr.bf16.mxu0 0
        %8935 = vmatpush1.bf16.msra.mxu0 0
        %8936 = vmatprep.subr.bf16.mxu0 0
        %8937 = vmatpush1.bf16.msra.mxu0 0
        %8938 = vmatprep.subr.bf16.mxu0 0
        %8939 = vmatpush1.bf16.msra.mxu0 0
        %8940 = vmatprep.subr.bf16.mxu0 0
        %8941 = vmatpush1.bf16.msra.mxu0 %v8926
        %8942 = vmatprep.subr.bf16.mxu0 0
        %8943 = vmatpush1.bf16.msra.mxu0 %v8898
        %8944 = vmatprep.subr.bf16.mxu0 0
        %8945 = vmatpush2.bf16.msra.mxu0 0
        %8946 = vmatprep.subr.bf16.mxu0 0
        %8947 = vmatpush2.bf16.msra.mxu0 0
        %8948 = vmatprep.subr.bf16.mxu0 0
        %8949 = vmatpush2.bf16.msra.mxu0 0
        %8950 = vmatprep.subr.bf16.mxu0 0
        %8951 = vmatpush2.bf16.msra.mxu0 0
        %8952 = vmatprep.subr.bf16.mxu0 0
        %8953 = vmatpush2.bf16.msra.mxu0 0
        %8954 = vmatprep.subr.bf16.mxu0 0
        %8955 = vmatpush2.bf16.msra.mxu0 0
        %8956 = vmatprep.subr.bf16.mxu0 0
        %8957 = vmatpush2.bf16.msra.mxu0 0
        %8958 = vmatprep.subr.bf16.mxu0 0
        %8959 = vmatpush2.bf16.msra.mxu0 0
        %8960 = vmatprep.mubr.bf16.mxu0 0
        %8961 = vmatmul.mubr.bf16.gmra.mxu0 %v8902
        %v8962 = vpop.f32.mrf.mxu0
        %v8963 = vadd.f32 0.0, %v8962
        %v8964 = vpop.f32.mrf.mxu0
        %v8965 = vpop.f32.mrf.mxu0
        %v8966 = vadd.f32 0.0, %v8965
        %v8967 = vpop.f32.mrf.mxu0
        %8968 = vmatprep.mubr.bf16.mxu0 0
        %8969 = vmatmul.mubr.bf16.gmra.mxu0 %v8905
        %v8970 = vpop.f32.mrf.mxu0
        %v8971 = vadd.f32 0.0, %v8970
        %v8972 = vpop.f32.mrf.mxu0
        %v8973 = vpop.f32.mrf.mxu0
        %v8974 = vadd.f32 0.0, %v8973
        %v8975 = vpop.f32.mrf.mxu0
        %8976 = vmatprep.mubr.bf16.mxu0 0
        %8977 = vmatmul.mubr.bf16.gmra.mxu0 %v8908
        %v8978 = vpop.f32.mrf.mxu0
        %v8979 = vadd.f32 0.0, %v8978
        %v8980 = vpop.f32.mrf.mxu0
        %v8981 = vpop.f32.mrf.mxu0
        %v8982 = vadd.f32 0.0, %v8981
        %v8983 = vpop.f32.mrf.mxu0
        %8984 = vmatprep.mubr.bf16.mxu0 0
        %8985 = vmatmul.mubr.bf16.gmra.mxu0 %v8911
        %v8986 = vpop.f32.mrf.mxu0
        %v8987 = vadd.f32 0.0, %v8986
        %v8988 = vpop.f32.mrf.mxu0
        %v8989 = vpop.f32.mrf.mxu0
        %v8990 = vadd.f32 0.0, %v8989
        %v8991 = vpop.f32.mrf.mxu0
        %8992 = vmatprep.mubr.bf16.mxu0 0
        %8993 = vmatmul.mubr.bf16.gmra.mxu0 %v8914
        %v8994 = vpop.f32.mrf.mxu0
        %v8995 = vadd.f32 0.0, %v8994
        %v8996 = vpop.f32.mrf.mxu0
        %v8997 = vpop.f32.mrf.mxu0
        %v8998 = vadd.f32 0.0, %v8997
        %v8999 = vpop.f32.mrf.mxu0
        %9000 = vmatprep.mubr.bf16.mxu0 0
        %9001 = vmatmul.mubr.bf16.gmra.mxu0 %v8917
        %v9002 = vpop.f32.mrf.mxu0
        %v9003 = vadd.f32 0.0, %v9002
        %v9004 = vpop.f32.mrf.mxu0
        %v9005 = vpop.f32.mrf.mxu0
        %v9006 = vadd.f32 0.0, %v9005
        %v9007 = vpop.f32.mrf.mxu0
        %9008 = vmatprep.mubr.bf16.mxu0 0
        %9009 = vmatmul.mubr.bf16.gmra.mxu0 %v8920
        %v9010 = vpop.f32.mrf.mxu0
        %v9011 = vadd.f32 0.0, %v9010
        %v9012 = vpop.f32.mrf.mxu0
        %v9013 = vpop.f32.mrf.mxu0
        %v9014 = vadd.f32 0.0, %v9013
        %v9015 = vpop.f32.mrf.mxu0
        %9016 = vmatprep.mubr.bf16.mxu0 0
        %9017 = vmatmul.mubr.bf16.gmra.mxu0 %v8923
        %v9018 = vpop.f32.mrf.mxu0
        %v9019 = vadd.f32 0.0, %v9018
        %v9020 = vpop.f32.mrf.mxu0
        %v9021 = vpop.f32.mrf.mxu0
        %v9022 = vadd.f32 0.0, %v9021
        %v9023 = vpop.f32.mrf.mxu0
        %9024 = vdwg.mxu0
        %v9025 = vadd.f32 %v8850, %v8963
        %v9026 = vadd.f32 %v8851, %v8966
        %v9027 = vadd.f32 %v8852, %v8971
        %v9028 = vadd.f32 %v8853, %v8974
        %v9029 = vadd.f32 %v8854, %v8979
        %v9030 = vadd.f32 %v8855, %v8982
        %v9031 = vadd.f32 %v8856, %v8987
        %v9032 = vadd.f32 %v8857, %v8990
        %v9033 = vadd.f32 %v8858, %v8995
        %v9034 = vadd.f32 %v8859, %v8998
        %v9035 = vadd.f32 %v8860, %v9003
        %v9036 = vadd.f32 %v8861, %v9006
        %v9037 = vadd.f32 %v8862, %v9011
        %v9038 = vadd.f32 %v8863, %v9014
        %v9039 = vadd.f32 %v8864, %v9019
        %v9040 = vadd.f32 %v8865, %v9022
        %s9041 = sadd.s32 %s7846, 64
        %s9042 = scalar_lea.vmem [#allocation2], %s9041
        %v9043 = vld [vmem:[%s9042] sm:$0xff]
        %v9044 = vld [vmem:[%s9042 + $0x8] sm:$0xff]
        %v9045 = vld [vmem:[%s9042 + $0x10] sm:$0xff]
        %v9046 = vld [vmem:[%s9042 + $0x18] sm:$0xff]
        %v9047 = vld [vmem:[%s9042 + $0x20] sm:$0xff]
        %v9048 = vld [vmem:[%s9042 + $0x28] sm:$0xff]
        %v9049 = vld [vmem:[%s9042 + $0x30] sm:$0xff]
        %v9050 = vld [vmem:[%s9042 + $0x38] sm:$0xff]
        %v9051 = vld [vmem:[%s9042 + $0x40] sm:$0xff]
        %v9052 = vld [vmem:[%s9042 + $0x48] sm:$0xff]
        %v9053 = vld [vmem:[%s9042 + $0x50] sm:$0xff]
        %v9054 = vld [vmem:[%s9042 + $0x58] sm:$0xff]
        %v9055 = vld [vmem:[%s9042 + $0x60] sm:$0xff]
        %v9056 = vld [vmem:[%s9042 + $0x68] sm:$0xff]
        %v9057 = vld [vmem:[%s9042 + $0x70] sm:$0xff]
        %v9058 = vld [vmem:[%s9042 + $0x78] sm:$0xff]
        %v9059 = vpack.c.bf16 %v9044, %v9043
        %v9060 = vpack.c.bf16 %v9046, %v9045
        %v9061 = vpack.c.bf16 %v9048, %v9047
        %v9062 = vpack.c.bf16 %v9050, %v9049
        %v9063 = vpack.c.bf16 %v9052, %v9051
        %v9064 = vpack.c.bf16 %v9054, %v9053
        %v9065 = vpack.c.bf16 %v9056, %v9055
        %v9066 = vpack.c.bf16 %v9058, %v9057
        %v9070 = vunpack.c.l.b16 %v7825
        %v9071 = vunpack.c.l.b16 %v7826
        %v9072 = vunpack.c.l.b16 %v7827
        %v9073 = vpack.c.b16 %v9071, %v9070
        %v9074 = vpack.c.b16 %v9072, %v9072
        %v9077 = vsel %vm7908, %v9059, 0
        %v9080 = vsel %vm7908, %v9060, 0
        %v9083 = vsel %vm7908, %v9061, 0
        %v9086 = vsel %vm7908, %v9062, 0
        %v9089 = vsel %vm7908, %v9063, 0
        %v9092 = vsel %vm7908, %v9064, 0
        %v9095 = vsel %vm7908, %v9065, 0
        %v9098 = vsel %vm7908, %v9066, 0
        %v9101 = vsel %vm7933, %v9074, 0
        %9103 = vmatprep.subr.bf16.mxu0 0
        %9104 = vmatpush1.bf16.msra.mxu0 0
        %9105 = vmatprep.subr.bf16.mxu0 0
        %9106 = vmatpush1.bf16.msra.mxu0 0
        %9107 = vmatprep.subr.bf16.mxu0 0
        %9108 = vmatpush1.bf16.msra.mxu0 0
        %9109 = vmatprep.subr.bf16.mxu0 0
        %9110 = vmatpush1.bf16.msra.mxu0 0
        %9111 = vmatprep.subr.bf16.mxu0 0
        %9112 = vmatpush1.bf16.msra.mxu0 0
        %9113 = vmatprep.subr.bf16.mxu0 0
        %9114 = vmatpush1.bf16.msra.mxu0 0
        %9115 = vmatprep.subr.bf16.mxu0 0
        %9116 = vmatpush1.bf16.msra.mxu0 %v9101
        %9117 = vmatprep.subr.bf16.mxu0 0
        %9118 = vmatpush1.bf16.msra.mxu0 %v9073
        %9119 = vmatprep.subr.bf16.mxu0 0
        %9120 = vmatpush2.bf16.msra.mxu0 0
        %9121 = vmatprep.subr.bf16.mxu0 0
        %9122 = vmatpush2.bf16.msra.mxu0 0
        %9123 = vmatprep.subr.bf16.mxu0 0
        %9124 = vmatpush2.bf16.msra.mxu0 0
        %9125 = vmatprep.subr.bf16.mxu0 0
        %9126 = vmatpush2.bf16.msra.mxu0 0
        %9127 = vmatprep.subr.bf16.mxu0 0
        %9128 = vmatpush2.bf16.msra.mxu0 0
        %9129 = vmatprep.subr.bf16.mxu0 0
        %9130 = vmatpush2.bf16.msra.mxu0 0
        %9131 = vmatprep.subr.bf16.mxu0 0
        %9132 = vmatpush2.bf16.msra.mxu0 0
        %9133 = vmatprep.subr.bf16.mxu0 0
        %9134 = vmatpush2.bf16.msra.mxu0 0
        %9135 = vmatprep.mubr.bf16.mxu0 0
        %9136 = vmatmul.mubr.bf16.gmra.mxu0 %v9077
        %v9137 = vpop.f32.mrf.mxu0
        %v9138 = vadd.f32 0.0, %v9137
        %v9139 = vpop.f32.mrf.mxu0
        %v9140 = vpop.f32.mrf.mxu0
        %v9141 = vadd.f32 0.0, %v9140
        %v9142 = vpop.f32.mrf.mxu0
        %9143 = vmatprep.mubr.bf16.mxu0 0
        %9144 = vmatmul.mubr.bf16.gmra.mxu0 %v9080
        %v9145 = vpop.f32.mrf.mxu0
        %v9146 = vadd.f32 0.0, %v9145
        %v9147 = vpop.f32.mrf.mxu0
        %v9148 = vpop.f32.mrf.mxu0
        %v9149 = vadd.f32 0.0, %v9148
        %v9150 = vpop.f32.mrf.mxu0
        %9151 = vmatprep.mubr.bf16.mxu0 0
        %9152 = vmatmul.mubr.bf16.gmra.mxu0 %v9083
        %v9153 = vpop.f32.mrf.mxu0
        %v9154 = vadd.f32 0.0, %v9153
        %v9155 = vpop.f32.mrf.mxu0
        %v9156 = vpop.f32.mrf.mxu0
        %v9157 = vadd.f32 0.0, %v9156
        %v9158 = vpop.f32.mrf.mxu0
        %9159 = vmatprep.mubr.bf16.mxu0 0
        %9160 = vmatmul.mubr.bf16.gmra.mxu0 %v9086
        %v9161 = vpop.f32.mrf.mxu0
        %v9162 = vadd.f32 0.0, %v9161
        %v9163 = vpop.f32.mrf.mxu0
        %v9164 = vpop.f32.mrf.mxu0
        %v9165 = vadd.f32 0.0, %v9164
        %v9166 = vpop.f32.mrf.mxu0
        %9167 = vmatprep.mubr.bf16.mxu0 0
        %9168 = vmatmul.mubr.bf16.gmra.mxu0 %v9089
        %v9169 = vpop.f32.mrf.mxu0
        %v9170 = vadd.f32 0.0, %v9169
        %v9171 = vpop.f32.mrf.mxu0
        %v9172 = vpop.f32.mrf.mxu0
        %v9173 = vadd.f32 0.0, %v9172
        %v9174 = vpop.f32.mrf.mxu0
        %9175 = vmatprep.mubr.bf16.mxu0 0
        %9176 = vmatmul.mubr.bf16.gmra.mxu0 %v9092
        %v9177 = vpop.f32.mrf.mxu0
        %v9178 = vadd.f32 0.0, %v9177
        %v9179 = vpop.f32.mrf.mxu0
        %v9180 = vpop.f32.mrf.mxu0
        %v9181 = vadd.f32 0.0, %v9180
        %v9182 = vpop.f32.mrf.mxu0
        %9183 = vmatprep.mubr.bf16.mxu0 0
        %9184 = vmatmul.mubr.bf16.gmra.mxu0 %v9095
        %v9185 = vpop.f32.mrf.mxu0
        %v9186 = vadd.f32 0.0, %v9185
        %v9187 = vpop.f32.mrf.mxu0
        %v9188 = vpop.f32.mrf.mxu0
        %v9189 = vadd.f32 0.0, %v9188
        %v9190 = vpop.f32.mrf.mxu0
        %9191 = vmatprep.mubr.bf16.mxu0 0
        %9192 = vmatmul.mubr.bf16.gmra.mxu0 %v9098
        %v9193 = vpop.f32.mrf.mxu0
        %v9194 = vadd.f32 0.0, %v9193
        %v9195 = vpop.f32.mrf.mxu0
        %v9196 = vpop.f32.mrf.mxu0
        %v9197 = vadd.f32 0.0, %v9196
        %v9198 = vpop.f32.mrf.mxu0
        %9199 = vdwg.mxu0
        %v9200 = vadd.f32 %v9025, %v9138
        %v9201 = vadd.f32 %v9026, %v9141
        %v9202 = vadd.f32 %v9027, %v9146
        %v9203 = vadd.f32 %v9028, %v9149
        %v9204 = vadd.f32 %v9029, %v9154
        %v9205 = vadd.f32 %v9030, %v9157
        %v9206 = vadd.f32 %v9031, %v9162
        %v9207 = vadd.f32 %v9032, %v9165
        %v9208 = vadd.f32 %v9033, %v9170
        %v9209 = vadd.f32 %v9034, %v9173
        %v9210 = vadd.f32 %v9035, %v9178
        %v9211 = vadd.f32 %v9036, %v9181
        %v9212 = vadd.f32 %v9037, %v9186
        %v9213 = vadd.f32 %v9038, %v9189
        %v9214 = vadd.f32 %v9039, %v9194
        %v9215 = vadd.f32 %v9040, %v9197
        %s9216 = sadd.s32 %s7846, 65
        %s9217 = scalar_lea.vmem [#allocation2], %s9216
        %v9218 = vld [vmem:[%s9217] sm:$0xff]
        %v9219 = vld [vmem:[%s9217 + $0x8] sm:$0xff]
        %v9220 = vld [vmem:[%s9217 + $0x10] sm:$0xff]
        %v9221 = vld [vmem:[%s9217 + $0x18] sm:$0xff]
        %v9222 = vld [vmem:[%s9217 + $0x20] sm:$0xff]
        %v9223 = vld [vmem:[%s9217 + $0x28] sm:$0xff]
        %v9224 = vld [vmem:[%s9217 + $0x30] sm:$0xff]
        %v9225 = vld [vmem:[%s9217 + $0x38] sm:$0xff]
        %v9226 = vld [vmem:[%s9217 + $0x40] sm:$0xff]
        %v9227 = vld [vmem:[%s9217 + $0x48] sm:$0xff]
        %v9228 = vld [vmem:[%s9217 + $0x50] sm:$0xff]
        %v9229 = vld [vmem:[%s9217 + $0x58] sm:$0xff]
        %v9230 = vld [vmem:[%s9217 + $0x60] sm:$0xff]
        %v9231 = vld [vmem:[%s9217 + $0x68] sm:$0xff]
        %v9232 = vld [vmem:[%s9217 + $0x70] sm:$0xff]
        %v9233 = vld [vmem:[%s9217 + $0x78] sm:$0xff]
        %v9234 = vpack.c.bf16 %v9219, %v9218
        %v9235 = vpack.c.bf16 %v9221, %v9220
        %v9236 = vpack.c.bf16 %v9223, %v9222
        %v9237 = vpack.c.bf16 %v9225, %v9224
        %v9238 = vpack.c.bf16 %v9227, %v9226
        %v9239 = vpack.c.bf16 %v9229, %v9228
        %v9240 = vpack.c.bf16 %v9231, %v9230
        %v9241 = vpack.c.bf16 %v9233, %v9232
        %v9245 = vunpack.c.l.b16 %v7829
        %v9246 = vunpack.c.l.b16 %v7830
        %v9247 = vunpack.c.l.b16 %v7831
        %v9248 = vpack.c.b16 %v9246, %v9245
        %v9249 = vpack.c.b16 %v9247, %v9247
        %v9252 = vsel %vm7908, %v9234, 0
        %v9255 = vsel %vm7908, %v9235, 0
        %v9258 = vsel %vm7908, %v9236, 0
        %v9261 = vsel %vm7908, %v9237, 0
        %v9264 = vsel %vm7908, %v9238, 0
        %v9267 = vsel %vm7908, %v9239, 0
        %v9270 = vsel %vm7908, %v9240, 0
        %v9273 = vsel %vm7908, %v9241, 0
        %v9276 = vsel %vm7933, %v9249, 0
        %9278 = vmatprep.subr.bf16.mxu0 0
        %9279 = vmatpush1.bf16.msra.mxu0 0
        %9280 = vmatprep.subr.bf16.mxu0 0
        %9281 = vmatpush1.bf16.msra.mxu0 0
        %9282 = vmatprep.subr.bf16.mxu0 0
        %9283 = vmatpush1.bf16.msra.mxu0 0
        %9284 = vmatprep.subr.bf16.mxu0 0
        %9285 = vmatpush1.bf16.msra.mxu0 0
        %9286 = vmatprep.subr.bf16.mxu0 0
        %9287 = vmatpush1.bf16.msra.mxu0 0
        %9288 = vmatprep.subr.bf16.mxu0 0
        %9289 = vmatpush1.bf16.msra.mxu0 0
        %9290 = vmatprep.subr.bf16.mxu0 0
        %9291 = vmatpush1.bf16.msra.mxu0 %v9276
        %9292 = vmatprep.subr.bf16.mxu0 0
        %9293 = vmatpush1.bf16.msra.mxu0 %v9248
        %9294 = vmatprep.subr.bf16.mxu0 0
        %9295 = vmatpush2.bf16.msra.mxu0 0
        %9296 = vmatprep.subr.bf16.mxu0 0
        %9297 = vmatpush2.bf16.msra.mxu0 0
        %9298 = vmatprep.subr.bf16.mxu0 0
        %9299 = vmatpush2.bf16.msra.mxu0 0
        %9300 = vmatprep.subr.bf16.mxu0 0
        %9301 = vmatpush2.bf16.msra.mxu0 0
        %9302 = vmatprep.subr.bf16.mxu0 0
        %9303 = vmatpush2.bf16.msra.mxu0 0
        %9304 = vmatprep.subr.bf16.mxu0 0
        %9305 = vmatpush2.bf16.msra.mxu0 0
        %9306 = vmatprep.subr.bf16.mxu0 0
        %9307 = vmatpush2.bf16.msra.mxu0 0
        %9308 = vmatprep.subr.bf16.mxu0 0
        %9309 = vmatpush2.bf16.msra.mxu0 0
        %9310 = vmatprep.mubr.bf16.mxu0 0
        %9311 = vmatmul.mubr.bf16.gmra.mxu0 %v9252
        %v9312 = vpop.f32.mrf.mxu0
        %v9313 = vadd.f32 0.0, %v9312
        %v9314 = vpop.f32.mrf.mxu0
        %v9315 = vpop.f32.mrf.mxu0
        %v9316 = vadd.f32 0.0, %v9315
        %v9317 = vpop.f32.mrf.mxu0
        %9318 = vmatprep.mubr.bf16.mxu0 0
        %9319 = vmatmul.mubr.bf16.gmra.mxu0 %v9255
        %v9320 = vpop.f32.mrf.mxu0
        %v9321 = vadd.f32 0.0, %v9320
        %v9322 = vpop.f32.mrf.mxu0
        %v9323 = vpop.f32.mrf.mxu0
        %v9324 = vadd.f32 0.0, %v9323
        %v9325 = vpop.f32.mrf.mxu0
        %9326 = vmatprep.mubr.bf16.mxu0 0
        %9327 = vmatmul.mubr.bf16.gmra.mxu0 %v9258
        %v9328 = vpop.f32.mrf.mxu0
        %v9329 = vadd.f32 0.0, %v9328
        %v9330 = vpop.f32.mrf.mxu0
        %v9331 = vpop.f32.mrf.mxu0
        %v9332 = vadd.f32 0.0, %v9331
        %v9333 = vpop.f32.mrf.mxu0
        %9334 = vmatprep.mubr.bf16.mxu0 0
        %9335 = vmatmul.mubr.bf16.gmra.mxu0 %v9261
        %v9336 = vpop.f32.mrf.mxu0
        %v9337 = vadd.f32 0.0, %v9336
        %v9338 = vpop.f32.mrf.mxu0
        %v9339 = vpop.f32.mrf.mxu0
        %v9340 = vadd.f32 0.0, %v9339
        %v9341 = vpop.f32.mrf.mxu0
        %9342 = vmatprep.mubr.bf16.mxu0 0
        %9343 = vmatmul.mubr.bf16.gmra.mxu0 %v9264
        %v9344 = vpop.f32.mrf.mxu0
        %v9345 = vadd.f32 0.0, %v9344
        %v9346 = vpop.f32.mrf.mxu0
        %v9347 = vpop.f32.mrf.mxu0
        %v9348 = vadd.f32 0.0, %v9347
        %v9349 = vpop.f32.mrf.mxu0
        %9350 = vmatprep.mubr.bf16.mxu0 0
        %9351 = vmatmul.mubr.bf16.gmra.mxu0 %v9267
        %v9352 = vpop.f32.mrf.mxu0
        %v9353 = vadd.f32 0.0, %v9352
        %v9354 = vpop.f32.mrf.mxu0
        %v9355 = vpop.f32.mrf.mxu0
        %v9356 = vadd.f32 0.0, %v9355
        %v9357 = vpop.f32.mrf.mxu0
        %9358 = vmatprep.mubr.bf16.mxu0 0
        %9359 = vmatmul.mubr.bf16.gmra.mxu0 %v9270
        %v9360 = vpop.f32.mrf.mxu0
        %v9361 = vadd.f32 0.0, %v9360
        %v9362 = vpop.f32.mrf.mxu0
        %v9363 = vpop.f32.mrf.mxu0
        %v9364 = vadd.f32 0.0, %v9363
        %v9365 = vpop.f32.mrf.mxu0
        %9366 = vmatprep.mubr.bf16.mxu0 0
        %9367 = vmatmul.mubr.bf16.gmra.mxu0 %v9273
        %v9368 = vpop.f32.mrf.mxu0
        %v9369 = vadd.f32 0.0, %v9368
        %v9370 = vpop.f32.mrf.mxu0
        %v9371 = vpop.f32.mrf.mxu0
        %v9372 = vadd.f32 0.0, %v9371
        %v9373 = vpop.f32.mrf.mxu0
        %9374 = vdwg.mxu0
        %v9375 = vadd.f32 %v9200, %v9313
        %v9376 = vadd.f32 %v9201, %v9316
        %v9377 = vadd.f32 %v9202, %v9321
        %v9378 = vadd.f32 %v9203, %v9324
        %v9379 = vadd.f32 %v9204, %v9329
        %v9380 = vadd.f32 %v9205, %v9332
        %v9381 = vadd.f32 %v9206, %v9337
        %v9382 = vadd.f32 %v9207, %v9340
        %v9383 = vadd.f32 %v9208, %v9345
        %v9384 = vadd.f32 %v9209, %v9348
        %v9385 = vadd.f32 %v9210, %v9353
        %v9386 = vadd.f32 %v9211, %v9356
        %v9387 = vadd.f32 %v9212, %v9361
        %v9388 = vadd.f32 %v9213, %v9364
        %v9389 = vadd.f32 %v9214, %v9369
        %v9390 = vadd.f32 %v9215, %v9372
        %v9391 = vlaneseq
        %v9392 = vshrl.u32 %v9391, 7
        %v9393 = vsub.s32 0, %v9392
        %v9394 = vrot.slane %v7832, %v9393
        %v9395 = vmul.f32 %v9394, %v9375
        %v9396 = vmul.f32 %v9394, %v9376
        %v9397 = vmul.f32 %v9394, %v9377
        %v9398 = vmul.f32 %v9394, %v9378
        %v9399 = vmul.f32 %v9394, %v9379
        %v9400 = vmul.f32 %v9394, %v9380
        %v9401 = vmul.f32 %v9394, %v9381
        %v9402 = vmul.f32 %v9394, %v9382
        %v9403 = vmul.f32 %v9394, %v9383
        %v9404 = vmul.f32 %v9394, %v9384
        %v9405 = vmul.f32 %v9394, %v9385
        %v9406 = vmul.f32 %v9394, %v9386
        %v9407 = vmul.f32 %v9394, %v9387
        %v9408 = vmul.f32 %v9394, %v9388
        %v9409 = vmul.f32 %v9394, %v9389
        %v9410 = vmul.f32 %v9394, %v9390
        %v9411 = vlaneseq
        %v9412 = vshrl.u32 %v9411, 7
        %v9413 = vsub.s32 0, %v9412
        %v9414 = vrot.slane %v7833, %v9413
        %v9415 = vadd.f32 %v9395, %v9414
        %v9416 = vadd.f32 %v9396, %v9414
        %v9417 = vadd.f32 %v9397, %v9414
        %v9418 = vadd.f32 %v9398, %v9414
        %v9419 = vadd.f32 %v9399, %v9414
        %v9420 = vadd.f32 %v9400, %v9414
        %v9421 = vadd.f32 %v9401, %v9414
        %v9422 = vadd.f32 %v9402, %v9414
        %v9423 = vadd.f32 %v9403, %v9414
        %v9424 = vadd.f32 %v9404, %v9414
        %v9425 = vadd.f32 %v9405, %v9414
        %v9426 = vadd.f32 %v9406, %v9414
        %v9427 = vadd.f32 %v9407, %v9414
        %v9428 = vadd.f32 %v9408, %v9414
        %v9429 = vadd.f32 %v9409, %v9414
        %v9430 = vadd.f32 %v9410, %v9414
        %v9431 = vmul.f32 %v9415, 0.2
        %v9432 = vmul.f32 %v9416, 0.2
        %v9433 = vmul.f32 %v9417, 0.2
        %v9434 = vmul.f32 %v9418, 0.2
        %v9435 = vmul.f32 %v9419, 0.2
        %v9436 = vmul.f32 %v9420, 0.2
        %v9437 = vmul.f32 %v9421, 0.2
        %v9438 = vmul.f32 %v9422, 0.2
        %v9439 = vmul.f32 %v9423, 0.2
        %v9440 = vmul.f32 %v9424, 0.2
        %v9441 = vmul.f32 %v9425, 0.2
        %v9442 = vmul.f32 %v9426, 0.2
        %v9443 = vmul.f32 %v9427, 0.2
        %v9444 = vmul.f32 %v9428, 0.2
        %v9445 = vmul.f32 %v9429, 0.2
        %v9446 = vmul.f32 %v9430, 0.2
        %v9447 = vmax.f32 %v9415, %v9431
        %v9448 = vmax.f32 %v9416, %v9432
        %v9449 = vmax.f32 %v9417, %v9433
        %v9450 = vmax.f32 %v9418, %v9434
        %v9451 = vmax.f32 %v9419, %v9435
        %v9452 = vmax.f32 %v9420, %v9436
        %v9453 = vmax.f32 %v9421, %v9437
        %v9454 = vmax.f32 %v9422, %v9438
        %v9455 = vmax.f32 %v9423, %v9439
        %v9456 = vmax.f32 %v9424, %v9440
        %v9457 = vmax.f32 %v9425, %v9441
        %v9458 = vmax.f32 %v9426, %v9442
        %v9459 = vmax.f32 %v9427, %v9443
        %v9460 = vmax.f32 %v9428, %v9444
        %v9461 = vmax.f32 %v9429, %v9445
        %v9462 = vmax.f32 %v9430, %v9446
        %v9463 = vpack.c.bf16 %v9448, %v9447
        %v9464 = vpack.c.bf16 %v9450, %v9449
        %v9465 = vpack.c.bf16 %v9452, %v9451
        %v9466 = vpack.c.bf16 %v9454, %v9453
        %v9467 = vpack.c.bf16 %v9456, %v9455
        %v9468 = vpack.c.bf16 %v9458, %v9457
        %v9469 = vpack.c.bf16 %v9460, %v9459
        %v9470 = vpack.c.bf16 %v9462, %v9461
        %v9472 = vlaneseq
        %v9473 = vshrl.u32 %v9472, 7
        %v9474 = vsub.s32 0, %v9473
        %v9475 = vrot.slane %v7837, %v9474
        %v9480 = vunpack.c.l.b16 %v7834
        %v9481 = vunpack.c.l.b16 %v7835
        %v9482 = vunpack.c.l.b16 %v7836
        %v9483 = vpack.c.b16 %v9481, %v9480
        %v9484 = vpack.c.b16 %v9482, %v9482
        %v9487 = vsel %vm7908, %v9463, 0
        %v9490 = vsel %vm7908, %v9464, 0
        %v9493 = vsel %vm7908, %v9465, 0
        %v9496 = vsel %vm7908, %v9466, 0
        %v9499 = vsel %vm7908, %v9467, 0
        %v9502 = vsel %vm7908, %v9468, 0
        %v9505 = vsel %vm7908, %v9469, 0
        %v9508 = vsel %vm7908, %v9470, 0
        %v9511 = vsel %vm7933, %v9484, 0
        %9513 = vmatprep.subr.bf16.mxu0 0
        %9514 = vmatpush1.bf16.msra.mxu0 0
        %9515 = vmatprep.subr.bf16.mxu0 0
        %9516 = vmatpush1.bf16.msra.mxu0 0
        %9517 = vmatprep.subr.bf16.mxu0 0
        %9518 = vmatpush1.bf16.msra.mxu0 0
        %9519 = vmatprep.subr.bf16.mxu0 0
        %9520 = vmatpush1.bf16.msra.mxu0 0
        %9521 = vmatprep.subr.bf16.mxu0 0
        %9522 = vmatpush1.bf16.msra.mxu0 0
        %9523 = vmatprep.subr.bf16.mxu0 0
        %9524 = vmatpush1.bf16.msra.mxu0 0
        %9525 = vmatprep.subr.bf16.mxu0 0
        %9526 = vmatpush1.bf16.msra.mxu0 %v9511
        %9527 = vmatprep.subr.bf16.mxu0 0
        %9528 = vmatpush1.bf16.msra.mxu0 %v9483
        %9529 = vmatprep.subr.bf16.mxu0 0
        %9530 = vmatpush2.bf16.msra.mxu0 0
        %9531 = vmatprep.subr.bf16.mxu0 0
        %9532 = vmatpush2.bf16.msra.mxu0 0
        %9533 = vmatprep.subr.bf16.mxu0 0
        %9534 = vmatpush2.bf16.msra.mxu0 0
        %9535 = vmatprep.subr.bf16.mxu0 0
        %9536 = vmatpush2.bf16.msra.mxu0 0
        %9537 = vmatprep.subr.bf16.mxu0 0
        %9538 = vmatpush2.bf16.msra.mxu0 0
        %9539 = vmatprep.subr.bf16.mxu0 0
        %9540 = vmatpush2.bf16.msra.mxu0 0
        %9541 = vmatprep.subr.bf16.mxu0 0
        %9542 = vmatpush2.bf16.msra.mxu0 0
        %9543 = vmatprep.subr.bf16.mxu0 0
        %9544 = vmatpush2.bf16.msra.mxu0 0
        %9545 = vmatprep.mubr.bf16.mxu0 0
        %9546 = vmatmul.mubr.bf16.gmra.mxu0 %v9487
        %v9547 = vpop.f32.mrf.mxu0
        %v9548 = vpop.f32.mrf.mxu0
        %v9549 = vpop.f32.mrf.mxu0
        %v9550 = vpop.f32.mrf.mxu0
        %9551 = vmatprep.mubr.bf16.mxu0 0
        %9552 = vmatmul.mubr.bf16.gmra.mxu0 %v9490
        %v9553 = vpop.f32.mrf.mxu0
        %v9554 = vadd.f32 %v9475, %v9553
        %v9555 = vpop.f32.mrf.mxu0
        %v9556 = vpop.f32.mrf.mxu0
        %v9557 = vadd.f32 %v9475, %v9556
        %v9558 = vpop.f32.mrf.mxu0
        %9559 = vmatprep.mubr.bf16.mxu0 0
        %9560 = vmatmul.mubr.bf16.gmra.mxu0 %v9493
        %v9561 = vpop.f32.mrf.mxu0
        %v9562 = vadd.f32 %v9475, %v9561
        %v9563 = vpop.f32.mrf.mxu0
        %v9564 = vpop.f32.mrf.mxu0
        %v9565 = vadd.f32 %v9475, %v9564
        %v9566 = vpop.f32.mrf.mxu0
        %9567 = vmatprep.mubr.bf16.mxu0 0
        %9568 = vmatmul.mubr.bf16.gmra.mxu0 %v9496
        %v9569 = vpop.f32.mrf.mxu0
        %v9570 = vpop.f32.mrf.mxu0
        %v9571 = vpop.f32.mrf.mxu0
        %v9572 = vpop.f32.mrf.mxu0
        %9573 = vmatprep.mubr.bf16.mxu0 0
        %9574 = vmatmul.mubr.bf16.gmra.mxu0 %v9499
        %v9575 = vpop.f32.mrf.mxu0
        %v9576 = vpop.f32.mrf.mxu0
        %v9577 = vpop.f32.mrf.mxu0
        %v9578 = vpop.f32.mrf.mxu0
        %9579 = vmatprep.mubr.bf16.mxu0 0
        %9580 = vmatmul.mubr.bf16.gmra.mxu0 %v9502
        %v9581 = vpop.f32.mrf.mxu0
        %v9582 = vadd.f32 %v9475, %v9581
        %v9583 = vpop.f32.mrf.mxu0
        %v9584 = vpop.f32.mrf.mxu0
        %v9585 = vadd.f32 %v9475, %v9584
        %v9586 = vpop.f32.mrf.mxu0
        %9587 = vmatprep.mubr.bf16.mxu0 0
        %9588 = vmatmul.mubr.bf16.gmra.mxu0 %v9505
        %v9589 = vpop.f32.mrf.mxu0
        %v9590 = vadd.f32 %v9475, %v9589
        %v9591 = vpop.f32.mrf.mxu0
        %v9592 = vpop.f32.mrf.mxu0
        %v9593 = vadd.f32 %v9475, %v9592
        %v9594 = vpop.f32.mrf.mxu0
        %9595 = vmatprep.mubr.bf16.mxu0 0
        %9596 = vmatmul.mubr.bf16.gmra.mxu0 %v9508
        %v9597 = vpop.f32.mrf.mxu0
        %v9598 = vpop.f32.mrf.mxu0
        %v9599 = vpop.f32.mrf.mxu0
        %v9600 = vpop.f32.mrf.mxu0
        %9601 = vdwg.mxu0
        %s9602 = smul.u32 %s7839, 64
        %s9603 = scalar_lea.vmem %s251, %s9602
        %vm9604 = vcmask 23552
        %9605 = vst.msk [vmem:[%s9603] sm:$0xff] %vm9604, %v9554
        %9606 = vst.msk [vmem:[%s9603 + $0x8] sm:$0xff] %vm9604, %v9557
        %9607 = vst.msk [vmem:[%s9603 + $0x10] sm:$0xff] %vm9604, %v9562
        %9608 = vst.msk [vmem:[%s9603 + $0x18] sm:$0xff] %vm9604, %v9565
        %s9609 = sadd.s32 %s7844, 1
        %s9610 = smul.u32 %s9609, 32
        %s9611 = scalar_lea.vmem %s251, %s9610
        %9612 = vst.msk [vmem:[%s9611] sm:$0xff] %vm9604, %v9582
        %9613 = vst.msk [vmem:[%s9611 + $0x8] sm:$0xff] %vm9604, %v9585
        %9614 = vst.msk [vmem:[%s9611 + $0x10] sm:$0xff] %vm9604, %v9590
        %9615 = vst.msk [vmem:[%s9611 + $0x18] sm:$0xff] %vm9604, %v9593
      $region98: #{lrnet_forward.1} parent=43 // loop_footer
        %s7843 = sadd.s32 1, %s7839
      $region99: #{lrnet_forward.1} parent=43 // loop_footer_branch
        %7838 = sbr.rel target = $region95
      $region100: #{lrnet_forward.1} parent=43 // loop_exit
        _
      %p9616 = scmp.lt.s32.totalorder %s17, 1
      %s9617 = scalar_select %p9616, %s17, 1
      %s9618 = smul.addr %s9617, 128
      %s9619 = smul.addr %s9618, 8
      %s9620 = scalar_lea.vmem %s6, %s9619
      // Predicated region
      $region101: #{lrnet_forward.1} parent=43 // pred_check
        %p9621 = pneg %p166
      $region102: #{lrnet_forward.1} parent=43 // pred_check_branch
        %9623 = sbr.rel (%p9621) target = $region104
      $region103: #{lrnet_forward.1} parent=43 // pred_region
        _
      $region104: #{lrnet_forward.1} parent=43 // pred_fallthru
        _
    $region44: #{lrnet_forward.1} parent=5 // pred_fallthru
      _
    %p9624 = scmp.le.s32.totalorder 2, %s12
    // Predicated region
    $region105: #{lrnet_forward.1} parent=5 // pred_check
      %p9625 = pneg %p9624
    $region106: #{lrnet_forward.1} parent=5 // pred_check_branch
      %9627 = sbr.rel (%p9625) target = $region108
    $region107: #{lrnet_forward.1} parent=5 // pred_region
      %s9628 = ssub.s32 %s12, 2
      // Predicated region
      $region109: #{lrnet_forward.1} parent=107 // pred_check
        %p9629 = pneg %p172
      $region110: #{lrnet_forward.1} parent=107 // pred_check_branch
        %9631 = sbr.rel (%p9629) target = $region112
      $region111: #{lrnet_forward.1} parent=107 // pred_region
        %p9632 = scmp.lt.s32.totalorder %s18, 1
        %s9633 = scalar_select %p9632, %s18, 1
        %s9634 = smul.addr %s9633, 128
        %s9635 = smul.addr %s9634, 8
        %s9636 = scalar_lea.vmem %s6, %s9635
      $region112: #{lrnet_forward.1} parent=107 // pred_fallthru
        _
    $region108: #{lrnet_forward.1} parent=5 // pred_fallthru
      _
  $region6: #{lrnet_forward.1} parent=0 // loop_footer
    %s16 = sadd.s32 1, %s12
  $region7: #{lrnet_forward.1} parent=0 // loop_footer_branch
    %11 = sbr.rel target = $region3
  $region8: #{lrnet_forward.1} parent=0 // loop_exit
    _

</llo_original>
